<compile_context>
chip_gen: v5e
topology: v5e:2x2
jax: 0.10.0
libtpu: 0.0.40
codegen_flags: <defaults>
</compile_context>

<pallas_src>
import functools

import numpy as np
import jax
import jax.numpy as jnp
from jax.experimental import pallas as pl
from jax.experimental.pallas import tpu as pltpu


# ----------------------------------------------------------------------------- Pallas kernels
def _matmul_bias_kernel(a_ref, b_ref, bias_ref, o_ref, *, relu):
    """out = A @ B + bias, optional ReLU.  bf16 operands, f32 accumulate, bf16 store."""
    acc = jnp.dot(a_ref[...], b_ref[...], preferred_element_type=jnp.float32)
    y = acc + bias_ref[...]
    if relu:
        y = jnp.maximum(y, 0.0)
    o_ref[...] = y.astype(o_ref.dtype)


def _matmul_bias_res_kernel(a_ref, b_ref, bias_ref, r_ref, o_ref, *, relu):
    """out = A @ B + bias + residual, optional ReLU (fused BasicBlock tail)."""
    acc = jnp.dot(a_ref[...], b_ref[...], preferred_element_type=jnp.float32)
    y = acc + bias_ref[...] + r_ref[...].astype(jnp.float32)
    if relu:
        y = jnp.maximum(y, 0.0)
    o_ref[...] = y.astype(o_ref.dtype)


def _fc_logsoftmax_kernel(x_ref, w_ref, b_ref, o_ref):
    """logits = X @ W + b, then log_softmax over the class axis (no padded columns)."""
    logits = jnp.dot(x_ref[...], w_ref[...], preferred_element_type=jnp.float32) + b_ref[...]
    m = jnp.max(logits, axis=-1, keepdims=True)
    ex = jnp.exp(logits - m)
    lse = m + jnp.log(jnp.sum(ex, axis=-1, keepdims=True))
    o_ref[...] = (logits - lse).astype(o_ref.dtype)


# ----------------------------------------------------------------------------- kernel wrappers
def _choose_m_tiling(M):
    # Split big-M matmuls into 2 "parallel" tiles (lets v7x use both TensorCores);
    # small / oddly shaped M stays as a single full-extent block (always legal).
    if M >= 512 and M % 16 == 0:
        return M // 2, 2
    return M, 1


def matmul_bias_act(a, b, bias, residual=None, relu=True):
    """a: (M, K) bf16, b: (K, N) bf16 (BN scale pre-folded), bias: (N,) f32,
    residual: (M, N) bf16 or None.  Returns bf16 (M, N)."""
    M, K = a.shape
    _, N = b.shape
    tm, nm = _choose_m_tiling(M)
    bias2d = bias.reshape(1, N).astype(jnp.float32)

    in_specs = [
        pl.BlockSpec((tm, K), lambda i: (i, 0)),
        pl.BlockSpec((K, N), lambda i: (0, 0)),
        pl.BlockSpec((1, N), lambda i: (0, 0)),
    ]
    args = [a.astype(jnp.bfloat16), b, bias2d]
    if residual is not None:
        kernel = functools.partial(_matmul_bias_res_kernel, relu=relu)
        in_specs.append(pl.BlockSpec((tm, N), lambda i: (i, 0)))
        args.append(residual.astype(jnp.bfloat16))
    else:
        kernel = functools.partial(_matmul_bias_kernel, relu=relu)

    return pl.pallas_call(
        kernel,
        out_shape=jax.ShapeDtypeStruct((M, N), jnp.bfloat16),
        grid_spec=pltpu.PrefetchScalarGridSpec(
            num_scalar_prefetch=0,
            grid=(nm,),
            in_specs=in_specs,
            out_specs=pl.BlockSpec((tm, N), lambda i: (i, 0)),
        ),
        compiler_params=pltpu.CompilerParams(dimension_semantics=("parallel",)),
    )(*args)


def fc_log_softmax(x, w, b):
    """x: (B, 64) f32, w: (64, num_classes) bf16, b: (num_classes,) f32 -> f32 log-probs."""
    M, K = x.shape
    N = w.shape[1]
    return pl.pallas_call(
        _fc_logsoftmax_kernel,
        out_shape=jax.ShapeDtypeStruct((M, N), jnp.float32),
        grid_spec=pltpu.PrefetchScalarGridSpec(
            num_scalar_prefetch=0,
            grid=(1,),
            in_specs=[
                pl.BlockSpec((M, K), lambda i: (0, 0)),
                pl.BlockSpec((K, N), lambda i: (0, 0)),
                pl.BlockSpec((1, N), lambda i: (0, 0)),
            ],
            out_specs=pl.BlockSpec((M, N), lambda i: (0, 0)),
        ),
        compiler_params=pltpu.CompilerParams(dimension_semantics=("arbitrary",)),
    )(x.astype(jnp.bfloat16), w, b.reshape(1, N).astype(jnp.float32))


# ----------------------------------------------------------------------------- conv glue
def _im2col(x, kh, kw, stride, pad):
    """x: (B, H, W, C) -> (B*OH*OW, kh*kw*C) patch matrix (pure data movement)."""
    B, H, W, C = x.shape
    if pad:
        x = jnp.pad(x, ((0, 0), (pad, pad), (pad, pad), (0, 0)))
    OH = (H + 2 * pad - kh) // stride + 1
    OW = (W + 2 * pad - kw) // stride + 1
    if kh == 1 and kw == 1:
        patches = x[:, 0:(OH - 1) * stride + 1:stride, 0:(OW - 1) * stride + 1:stride, :]
        return patches.reshape(B * OH * OW, C), (B, OH, OW)
    cols = []
    for i in range(kh):
        for j in range(kw):
            cols.append(x[:, i:i + stride * OH:stride, j:j + stride * OW:stride, :])
    patches = jnp.concatenate(cols, axis=-1)  # (B, OH, OW, kh*kw*C)
    return patches.reshape(B * OH * OW, kh * kw * C), (B, OH, OW)


def conv_bn(x, p, *, kh, kw, stride, padding, relu, residual=None):
    """x: NHWC bf16, p = {'w': (kh*kw*cin, cout) bf16, 'b': (cout,) f32}."""
    patches, (B, OH, OW) = _im2col(x, kh, kw, stride, padding)
    cout = p["w"].shape[1]
    res = residual.reshape(B * OH * OW, cout) if residual is not None else None
    out = matmul_bias_act(patches, p["w"], p["b"], residual=res, relu=relu)
    return out.reshape(B, OH, OW, cout)


def _bilinear_matrix(in_size, out_size):
    """Separable bilinear-resize matrix, align_corners=True (built at trace time)."""
    m = np.zeros((out_size, in_size), np.float32)
    scale = (in_size - 1) / (out_size - 1) if out_size > 1 else 0.0
    for o in range(out_size):
        src = o * scale
        lo = int(np.floor(src))
        hi = min(lo + 1, in_size - 1)
        w = src - lo
        m[o, lo] += 1.0 - w
        m[o, hi] += w
    return jnp.asarray(m)


# ----------------------------------------------------------------------------- ResNet10 model
LAYER_CFG = ((16, 2, 1), (32, 2, 2), (64, 2, 2))  # (planes, blocks, stride)
_BN_EPS = 1e-5


def init_resnet10_params(key, num_classes):
    counter = [0]

    def next_key():
        counter[0] += 1
        return jax.random.fold_in(key, counter[0])

    def conv_bn_fused(kh, kw, cin, cout):
        fan_in = kh * kw * cin
        w = jax.random.normal(next_key(), (kh, kw, cin, cout), jnp.float32) * (2.0 / fan_in) ** 0.5
        # Eval-mode BN with PyTorch-default buffers/affine params:
        gamma = jnp.ones((cout,), jnp.float32)
        beta = jnp.zeros((cout,), jnp.float32)
        mean = jnp.zeros((cout,), jnp.float32)
        var = jnp.ones((cout,), jnp.float32)
        scale = gamma / jnp.sqrt(var + _BN_EPS)
        shift = beta - mean * scale
        w_mat = (w * scale).reshape(kh * kw * cin, cout).astype(jnp.bfloat16)
        return {"w": w_mat, "b": shift.astype(jnp.float32)}

    params = {"conv1": conv_bn_fused(3, 3, 1, 16)}
    in_c = 16
    layers = []
    for planes, nblocks, stride in LAYER_CFG:
        blocks = []
        for bi in range(nblocks):
            s = stride if bi == 0 else 1
            blk = {
                "conv1": conv_bn_fused(3, 3, in_c, planes),
                "conv2": conv_bn_fused(3, 3, planes, planes),
            }
            if s != 1 or in_c != planes:
                blk["shortcut"] = conv_bn_fused(1, 1, in_c, planes)
            blocks.append(blk)
            in_c = planes
        layers.append(blocks)
    params["layers"] = layers

    params["fc_w"] = (jax.random.normal(next_key(), (64, num_classes), jnp.float32)
                      * (1.0 / 64.0) ** 0.5).astype(jnp.bfloat16)
    params["fc_b"] = jnp.zeros((num_classes,), jnp.float32)
    return params


def basic_block(x, blk, stride):
    identity = x
    out = conv_bn(x, blk["conv1"], kh=3, kw=3, stride=stride, padding=1, relu=True)
    if "shortcut" in blk:
        identity = conv_bn(x, blk["shortcut"], kh=1, kw=1, stride=stride, padding=0, relu=False)
    # relu(bn2(conv2(out)) + shortcut(x)) -> residual + relu fused into the matmul epilogue
    out = conv_bn(out, blk["conv2"], kh=3, kw=3, stride=1, padding=1, relu=True,
                  residual=identity)
    return out


def resnet10_emnist_forward(params, x_nchw):
    B, C, H, W = x_nchw.shape
    # F.interpolate(size=(28, 28), mode='bilinear', align_corners=True) as separable matmuls
    Rh = _bilinear_matrix(H, 28)
    Rw = _bilinear_matrix(W, 28)
    x = jnp.einsum("oh,bchw,pw->bcop", Rh, x_nchw.astype(jnp.float32), Rw)
    x = jnp.transpose(x, (0, 2, 3, 1)).astype(jnp.bfloat16)  # NCHW -> NHWC, bf16

    x = conv_bn(x, params["conv1"], kh=3, kw=3, stride=1, padding=1, relu=True)
    for li, (_, nblocks, stride) in enumerate(LAYER_CFG):
        for bi in range(nblocks):
            s = stride if bi == 0 else 1
            x = basic_block(x, params["layers"][li][bi], s)

    feat = jnp.mean(x.astype(jnp.float32), axis=(1, 2))  # adaptive avg pool -> (B, 64)
    return fc_log_softmax(feat, params["fc_w"], params["fc_b"])


# ----------------------------------------------------------------------------- main
if __name__ == "__main__":
    num_classes = 47  # EMNIST balanced
    root = jax.random.PRNGKey(0)
    params = init_resnet10_params(jax.random.fold_in(root, 1), num_classes)
    x = jax.random.normal(jax.random.fold_in(root, 2), (2, 1, 28, 28), jnp.float32)

    fwd = jax.jit(resnet10_emnist_forward)
    out = jax.block_until_ready(fwd(params, x))

    assert out.shape == (2, num_classes), out.shape
    # log_softmax rows must exponentiate-sum to 1
    assert jnp.allclose(jnp.sum(jnp.exp(out), axis=1), 1.0, atol=1e-2)
    print("KERNEL_OK")
</pallas_src>

<mosaic_0001>
module attributes {stable_mosaic.version = 11 : i64} {
  func.func @_matmul_bias_kernel(%arg0: i32, %arg1: memref<784x9xbf16, #tpu.memory_space<vmem>>, %arg2: memref<9x16xbf16, #tpu.memory_space<vmem>>, %arg3: memref<1x16xf32, #tpu.memory_space<vmem>>, %arg4: memref<784x16xbf16, #tpu.memory_space<vmem>>) attributes {dimension_semantics = [#tpu.dimension_semantics<parallel>], iteration_bounds = array<i64: 2>, scalar_prefetch = 0 : i64, scratch_operands = 0 : i64, tpu.core_type = #tpu.core_type<tc>, window_params = [{transform_indices = @transform_0, window_bounds = array<i64: 784, 9>}, {pipeline_mode = #tpu.pipeline_mode<synchronous>, transform_indices = @transform_1, window_bounds = array<i64: 9, 16>}, {pipeline_mode = #tpu.pipeline_mode<synchronous>, transform_indices = @transform_2, window_bounds = array<i64: 1, 16>}, {transform_indices = @transform_3, window_bounds = array<i64: 784, 16>}]} {
    %c0 = arith.constant 0 : index
    %c0_0 = arith.constant 0 : index
    %0 = vector.load %arg1[%c0, %c0_0] : memref<784x9xbf16, #tpu.memory_space<vmem>>, vector<784x9xbf16>
    %c0_1 = arith.constant 0 : index
    %c0_2 = arith.constant 0 : index
    %1 = vector.load %arg2[%c0_1, %c0_2] : memref<9x16xbf16, #tpu.memory_space<vmem>>, vector<9x16xbf16>
    %cst = arith.constant dense<0.000000e+00> : vector<784x16xf32>
    %2 = tpu.matmul %0, %1, %cst {dimension_numbers = #tpu.dot_dimension_numbers<[1], [0], [0], [1], [0, 0, 1, 1], [], []>} : vector<784x9xbf16>, vector<9x16xbf16>, vector<784x16xf32> -> vector<784x16xf32>
    %c0_3 = arith.constant 0 : index
    %c0_4 = arith.constant 0 : index
    %3 = vector.load %arg3[%c0_3, %c0_4] : memref<1x16xf32, #tpu.memory_space<vmem>>, vector<1x16xf32>
    %4 = vector.broadcast %3 : vector<1x16xf32> to vector<784x16xf32>
    %5 = arith.addf %2, %4 : vector<784x16xf32>
    %cst_5 = arith.constant 0.000000e+00 : f32
    %6 = vector.broadcast %cst_5 : f32 to vector<784x16xf32>
    %7 = arith.maximumf %5, %6 : vector<784x16xf32>
    %8 = arith.truncf %7 : vector<784x16xf32> to vector<784x16xbf16>
    %c0_6 = arith.constant 0 : index
    %c0_7 = arith.constant 0 : index
    %9 = vector.load %arg4[%c0_6, %c0_7] : memref<784x16xbf16, #tpu.memory_space<vmem>>, vector<784x16xbf16>
    tpu.vector_store %arg4[%c0_6, %c0_7], %8 {strides = array<i32>} : memref<784x16xbf16, #tpu.memory_space<vmem>>, vector<784x16xbf16>,
    return
  }
  func.func @transform_0(%arg0: i32) -> (i32, i32) {
    %c0_i32 = arith.constant 0 : i32
    %c0_i32_0 = arith.constant 0 : i32
    return %arg0, %c0_i32 : i32, i32
  }
  func.func @transform_1(%arg0: i32) -> (i32, i32) {
    %c0_i32 = arith.constant 0 : i32
    %c0_i32_0 = arith.constant 0 : i32
    %c0_i32_1 = arith.constant 0 : i32
    return %c0_i32, %c0_i32_0 : i32, i32
  }
  func.func @transform_2(%arg0: i32) -> (i32, i32) {
    %c0_i32 = arith.constant 0 : i32
    %c0_i32_0 = arith.constant 0 : i32
    %c0_i32_1 = arith.constant 0 : i32
    return %c0_i32, %c0_i32_0 : i32, i32
  }
  func.func @transform_3(%arg0: i32) -> (i32, i32) {
    %c0_i32 = arith.constant 0 : i32
    %c0_i32_0 = arith.constant 0 : i32
    return %arg0, %c0_i32 : i32, i32
  }
}

module attributes {stable_mosaic.version = 11 : i64} {
  func.func @_matmul_bias_kernel(%arg0: i32, %arg1: memref<784x144xbf16, #tpu.memory_space<vmem>>, %arg2: memref<144x16xbf16, #tpu.memory_space<vmem>>, %arg3: memref<1x16xf32, #tpu.memory_space<vmem>>, %arg4: memref<784x16xbf16, #tpu.memory_space<vmem>>) attributes {dimension_semantics = [#tpu.dimension_semantics<parallel>], iteration_bounds = array<i64: 2>, scalar_prefetch = 0 : i64, scratch_operands = 0 : i64, tpu.core_type = #tpu.core_type<tc>, window_params = [{transform_indices = @transform_0, window_bounds = array<i64: 784, 144>}, {pipeline_mode = #tpu.pipeline_mode<synchronous>, transform_indices = @transform_1, window_bounds = array<i64: 144, 16>}, {pipeline_mode = #tpu.pipeline_mode<synchronous>, transform_indices = @transform_2, window_bounds = array<i64: 1, 16>}, {transform_indices = @transform_3, window_bounds = array<i64: 784, 16>}]} {
    %c0 = arith.constant 0 : index
    %c0_0 = arith.constant 0 : index
    %0 = vector.load %arg1[%c0, %c0_0] : memref<784x144xbf16, #tpu.memory_space<vmem>>, vector<784x144xbf16>
    %c0_1 = arith.constant 0 : index
    %c0_2 = arith.constant 0 : index
    %1 = vector.load %arg2[%c0_1, %c0_2] : memref<144x16xbf16, #tpu.memory_space<vmem>>, vector<144x16xbf16>
    %cst = arith.constant dense<0.000000e+00> : vector<784x16xf32>
    %2 = tpu.matmul %0, %1, %cst {dimension_numbers = #tpu.dot_dimension_numbers<[1], [0], [0], [1], [0, 0, 1, 1], [], []>} : vector<784x144xbf16>, vector<144x16xbf16>, vector<784x16xf32> -> vector<784x16xf32>
    %c0_3 = arith.constant 0 : index
    %c0_4 = arith.constant 0 : index
    %3 = vector.load %arg3[%c0_3, %c0_4] : memref<1x16xf32, #tpu.memory_space<vmem>>, vector<1x16xf32>
    %4 = vector.broadcast %3 : vector<1x16xf32> to vector<784x16xf32>
    %5 = arith.addf %2, %4 : vector<784x16xf32>
    %cst_5 = arith.constant 0.000000e+00 : f32
    %6 = vector.broadcast %cst_5 : f32 to vector<784x16xf32>
    %7 = arith.maximumf %5, %6 : vector<784x16xf32>
    %8 = arith.truncf %7 : vector<784x16xf32> to vector<784x16xbf16>
    %c0_6 = arith.constant 0 : index
    %c0_7 = arith.constant 0 : index
    %9 = vector.load %arg4[%c0_6, %c0_7] : memref<784x16xbf16, #tpu.memory_space<vmem>>, vector<784x16xbf16>
    tpu.vector_store %arg4[%c0_6, %c0_7], %8 {strides = array<i32>} : memref<784x16xbf16, #tpu.memory_space<vmem>>, vector<784x16xbf16>,
    return
  }
  func.func @transform_0(%arg0: i32) -> (i32, i32) {
    %c0_i32 = arith.constant 0 : i32
    %c0_i32_0 = arith.constant 0 : i32
    return %arg0, %c0_i32 : i32, i32
  }
  func.func @transform_1(%arg0: i32) -> (i32, i32) {
    %c0_i32 = arith.constant 0 : i32
    %c0_i32_0 = arith.constant 0 : i32
    %c0_i32_1 = arith.constant 0 : i32
    return %c0_i32, %c0_i32_0 : i32, i32
  }
  func.func @transform_2(%arg0: i32) -> (i32, i32) {
    %c0_i32 = arith.constant 0 : i32
    %c0_i32_0 = arith.constant 0 : i32
    %c0_i32_1 = arith.constant 0 : i32
    return %c0_i32, %c0_i32_0 : i32, i32
  }
  func.func @transform_3(%arg0: i32) -> (i32, i32) {
    %c0_i32 = arith.constant 0 : i32
    %c0_i32_0 = arith.constant 0 : i32
    return %arg0, %c0_i32 : i32, i32
  }
}

module attributes {stable_mosaic.version = 11 : i64} {
  func.func @_matmul_bias_res_kernel(%arg0: i32, %arg1: memref<784x144xbf16, #tpu.memory_space<vmem>>, %arg2: memref<144x16xbf16, #tpu.memory_space<vmem>>, %arg3: memref<1x16xf32, #tpu.memory_space<vmem>>, %arg4: memref<784x16xbf16, #tpu.memory_space<vmem>>, %arg5: memref<784x16xbf16, #tpu.memory_space<vmem>>) attributes {dimension_semantics = [#tpu.dimension_semantics<parallel>], iteration_bounds = array<i64: 2>, scalar_prefetch = 0 : i64, scratch_operands = 0 : i64, tpu.core_type = #tpu.core_type<tc>, window_params = [{transform_indices = @transform_0, window_bounds = array<i64: 784, 144>}, {pipeline_mode = #tpu.pipeline_mode<synchronous>, transform_indices = @transform_1, window_bounds = array<i64: 144, 16>}, {pipeline_mode = #tpu.pipeline_mode<synchronous>, transform_indices = @transform_2, window_bounds = array<i64: 1, 16>}, {transform_indices = @transform_3, window_bounds = array<i64: 784, 16>}, {transform_indices = @transform_4, window_bounds = array<i64: 784, 16>}]} {
    %c0 = arith.constant 0 : index
    %c0_0 = arith.constant 0 : index
    %0 = vector.load %arg1[%c0, %c0_0] : memref<784x144xbf16, #tpu.memory_space<vmem>>, vector<784x144xbf16>
    %c0_1 = arith.constant 0 : index
    %c0_2 = arith.constant 0 : index
    %1 = vector.load %arg2[%c0_1, %c0_2] : memref<144x16xbf16, #tpu.memory_space<vmem>>, vector<144x16xbf16>
    %cst = arith.constant dense<0.000000e+00> : vector<784x16xf32>
    %2 = tpu.matmul %0, %1, %cst {dimension_numbers = #tpu.dot_dimension_numbers<[1], [0], [0], [1], [0, 0, 1, 1], [], []>} : vector<784x144xbf16>, vector<144x16xbf16>, vector<784x16xf32> -> vector<784x16xf32>
    %c0_3 = arith.constant 0 : index
    %c0_4 = arith.constant 0 : index
    %3 = vector.load %arg3[%c0_3, %c0_4] : memref<1x16xf32, #tpu.memory_space<vmem>>, vector<1x16xf32>
    %4 = vector.broadcast %3 : vector<1x16xf32> to vector<784x16xf32>
    %5 = arith.addf %2, %4 : vector<784x16xf32>
    %c0_5 = arith.constant 0 : index
    %c0_6 = arith.constant 0 : index
    %6 = vector.load %arg4[%c0_5, %c0_6] : memref<784x16xbf16, #tpu.memory_space<vmem>>, vector<784x16xbf16>
    %7 = arith.extf %6 : vector<784x16xbf16> to vector<784x16xf32>
    %8 = arith.addf %5, %7 : vector<784x16xf32>
    %cst_7 = arith.constant 0.000000e+00 : f32
    %9 = vector.broadcast %cst_7 : f32 to vector<784x16xf32>
    %10 = arith.maximumf %8, %9 : vector<784x16xf32>
    %11 = arith.truncf %10 : vector<784x16xf32> to vector<784x16xbf16>
    %c0_8 = arith.constant 0 : index
    %c0_9 = arith.constant 0 : index
    %12 = vector.load %arg5[%c0_8, %c0_9] : memref<784x16xbf16, #tpu.memory_space<vmem>>, vector<784x16xbf16>
    tpu.vector_store %arg5[%c0_8, %c0_9], %11 {strides = array<i32>} : memref<784x16xbf16, #tpu.memory_space<vmem>>, vector<784x16xbf16>,
    return
  }
  func.func @transform_0(%arg0: i32) -> (i32, i32) {
    %c0_i32 = arith.constant 0 : i32
    %c0_i32_0 = arith.constant 0 : i32
    return %arg0, %c0_i32 : i32, i32
  }
  func.func @transform_1(%arg0: i32) -> (i32, i32) {
    %c0_i32 = arith.constant 0 : i32
    %c0_i32_0 = arith.constant 0 : i32
    %c0_i32_1 = arith.constant 0 : i32
    return %c0_i32, %c0_i32_0 : i32, i32
  }
  func.func @transform_2(%arg0: i32) -> (i32, i32) {
    %c0_i32 = arith.constant 0 : i32
    %c0_i32_0 = arith.constant 0 : i32
    %c0_i32_1 = arith.constant 0 : i32
    return %c0_i32, %c0_i32_0 : i32, i32
  }
  func.func @transform_3(%arg0: i32) -> (i32, i32) {
    %c0_i32 = arith.constant 0 : i32
    %c0_i32_0 = arith.constant 0 : i32
    return %arg0, %c0_i32 : i32, i32
  }
  func.func @transform_4(%arg0: i32) -> (i32, i32) {
    %c0_i32 = arith.constant 0 : i32
    %c0_i32_0 = arith.constant 0 : i32
    return %arg0, %c0_i32 : i32, i32
  }
}

module attributes {stable_mosaic.version = 11 : i64} {
  func.func @_matmul_bias_kernel(%arg0: i32, %arg1: memref<392x144xbf16, #tpu.memory_space<vmem>>, %arg2: memref<144x32xbf16, #tpu.memory_space<vmem>>, %arg3: memref<1x32xf32, #tpu.memory_space<vmem>>, %arg4: memref<392x32xbf16, #tpu.memory_space<vmem>>) attributes {dimension_semantics = [#tpu.dimension_semantics<parallel>], iteration_bounds = array<i64: 1>, scalar_prefetch = 0 : i64, scratch_operands = 0 : i64, tpu.core_type = #tpu.core_type<tc>, window_params = [{transform_indices = @transform_0, window_bounds = array<i64: 392, 144>}, {pipeline_mode = #tpu.pipeline_mode<synchronous>, transform_indices = @transform_1, window_bounds = array<i64: 144, 32>}, {pipeline_mode = #tpu.pipeline_mode<synchronous>, transform_indices = @transform_2, window_bounds = array<i64: 1, 32>}, {transform_indices = @transform_3, window_bounds = array<i64: 392, 32>}]} {
    %c0 = arith.constant 0 : index
    %c0_0 = arith.constant 0 : index
    %0 = vector.load %arg1[%c0, %c0_0] : memref<392x144xbf16, #tpu.memory_space<vmem>>, vector<392x144xbf16>
    %c0_1 = arith.constant 0 : index
    %c0_2 = arith.constant 0 : index
    %1 = vector.load %arg2[%c0_1, %c0_2] : memref<144x32xbf16, #tpu.memory_space<vmem>>, vector<144x32xbf16>
    %cst = arith.constant dense<0.000000e+00> : vector<392x32xf32>
    %2 = tpu.matmul %0, %1, %cst {dimension_numbers = #tpu.dot_dimension_numbers<[1], [0], [0], [1], [0, 0, 1, 1], [], []>} : vector<392x144xbf16>, vector<144x32xbf16>, vector<392x32xf32> -> vector<392x32xf32>
    %c0_3 = arith.constant 0 : index
    %c0_4 = arith.constant 0 : index
    %3 = vector.load %arg3[%c0_3, %c0_4] : memref<1x32xf32, #tpu.memory_space<vmem>>, vector<1x32xf32>
    %4 = vector.broadcast %3 : vector<1x32xf32> to vector<392x32xf32>
    %5 = arith.addf %2, %4 : vector<392x32xf32>
    %cst_5 = arith.constant 0.000000e+00 : f32
    %6 = vector.broadcast %cst_5 : f32 to vector<392x32xf32>
    %7 = arith.maximumf %5, %6 : vector<392x32xf32>
    %8 = arith.truncf %7 : vector<392x32xf32> to vector<392x32xbf16>
    %c0_6 = arith.constant 0 : index
    %c0_7 = arith.constant 0 : index
    %9 = vector.load %arg4[%c0_6, %c0_7] : memref<392x32xbf16, #tpu.memory_space<vmem>>, vector<392x32xbf16>
    tpu.vector_store %arg4[%c0_6, %c0_7], %8 {strides = array<i32>} : memref<392x32xbf16, #tpu.memory_space<vmem>>, vector<392x32xbf16>,
    return
  }
  func.func @transform_0(%arg0: i32) -> (i32, i32) {
    %c0_i32 = arith.constant 0 : i32
    %c0_i32_0 = arith.constant 0 : i32
    return %arg0, %c0_i32 : i32, i32
  }
  func.func @transform_1(%arg0: i32) -> (i32, i32) {
    %c0_i32 = arith.constant 0 : i32
    %c0_i32_0 = arith.constant 0 : i32
    %c0_i32_1 = arith.constant 0 : i32
    return %c0_i32, %c0_i32_0 : i32, i32
  }
  func.func @transform_2(%arg0: i32) -> (i32, i32) {
    %c0_i32 = arith.constant 0 : i32
    %c0_i32_0 = arith.constant 0 : i32
    %c0_i32_1 = arith.constant 0 : i32
    return %c0_i32, %c0_i32_0 : i32, i32
  }
  func.func @transform_3(%arg0: i32) -> (i32, i32) {
    %c0_i32 = arith.constant 0 : i32
    %c0_i32_0 = arith.constant 0 : i32
    return %arg0, %c0_i32 : i32, i32
  }
}

module attributes {stable_mosaic.version = 11 : i64} {
  func.func @_matmul_bias_kernel(%arg0: i32, %arg1: memref<392x16xbf16, #tpu.memory_space<vmem>>, %arg2: memref<16x32xbf16, #tpu.memory_space<vmem>>, %arg3: memref<1x32xf32, #tpu.memory_space<vmem>>, %arg4: memref<392x32xbf16, #tpu.memory_space<vmem>>) attributes {dimension_semantics = [#tpu.dimension_semantics<parallel>], iteration_bounds = array<i64: 1>, scalar_prefetch = 0 : i64, scratch_operands = 0 : i64, tpu.core_type = #tpu.core_type<tc>, window_params = [{transform_indices = @transform_0, window_bounds = array<i64: 392, 16>}, {pipeline_mode = #tpu.pipeline_mode<synchronous>, transform_indices = @transform_1, window_bounds = array<i64: 16, 32>}, {pipeline_mode = #tpu.pipeline_mode<synchronous>, transform_indices = @transform_2, window_bounds = array<i64: 1, 32>}, {transform_indices = @transform_3, window_bounds = array<i64: 392, 32>}]} {
    %c0 = arith.constant 0 : index
    %c0_0 = arith.constant 0 : index
    %0 = vector.load %arg1[%c0, %c0_0] : memref<392x16xbf16, #tpu.memory_space<vmem>>, vector<392x16xbf16>
    %c0_1 = arith.constant 0 : index
    %c0_2 = arith.constant 0 : index
    %1 = vector.load %arg2[%c0_1, %c0_2] : memref<16x32xbf16, #tpu.memory_space<vmem>>, vector<16x32xbf16>
    %cst = arith.constant dense<0.000000e+00> : vector<392x32xf32>
    %2 = tpu.matmul %0, %1, %cst {dimension_numbers = #tpu.dot_dimension_numbers<[1], [0], [0], [1], [0, 0, 1, 1], [], []>} : vector<392x16xbf16>, vector<16x32xbf16>, vector<392x32xf32> -> vector<392x32xf32>
    %c0_3 = arith.constant 0 : index
    %c0_4 = arith.constant 0 : index
    %3 = vector.load %arg3[%c0_3, %c0_4] : memref<1x32xf32, #tpu.memory_space<vmem>>, vector<1x32xf32>
    %4 = vector.broadcast %3 : vector<1x32xf32> to vector<392x32xf32>
    %5 = arith.addf %2, %4 : vector<392x32xf32>
    %6 = arith.truncf %5 : vector<392x32xf32> to vector<392x32xbf16>
    %c0_5 = arith.constant 0 : index
    %c0_6 = arith.constant 0 : index
    %7 = vector.load %arg4[%c0_5, %c0_6] : memref<392x32xbf16, #tpu.memory_space<vmem>>, vector<392x32xbf16>
    tpu.vector_store %arg4[%c0_5, %c0_6], %6 {strides = array<i32>} : memref<392x32xbf16, #tpu.memory_space<vmem>>, vector<392x32xbf16>,
    return
  }
  func.func @transform_0(%arg0: i32) -> (i32, i32) {
    %c0_i32 = arith.constant 0 : i32
    %c0_i32_0 = arith.constant 0 : i32
    return %arg0, %c0_i32 : i32, i32
  }
  func.func @transform_1(%arg0: i32) -> (i32, i32) {
    %c0_i32 = arith.constant 0 : i32
    %c0_i32_0 = arith.constant 0 : i32
    %c0_i32_1 = arith.constant 0 : i32
    return %c0_i32, %c0_i32_0 : i32, i32
  }
  func.func @transform_2(%arg0: i32) -> (i32, i32) {
    %c0_i32 = arith.constant 0 : i32
    %c0_i32_0 = arith.constant 0 : i32
    %c0_i32_1 = arith.constant 0 : i32
    return %c0_i32, %c0_i32_0 : i32, i32
  }
  func.func @transform_3(%arg0: i32) -> (i32, i32) {
    %c0_i32 = arith.constant 0 : i32
    %c0_i32_0 = arith.constant 0 : i32
    return %arg0, %c0_i32 : i32, i32
  }
}

module attributes {stable_mosaic.version = 11 : i64} {
  func.func @_matmul_bias_res_kernel(%arg0: i32, %arg1: memref<392x288xbf16, #tpu.memory_space<vmem>>, %arg2: memref<288x32xbf16, #tpu.memory_space<vmem>>, %arg3: memref<1x32xf32, #tpu.memory_space<vmem>>, %arg4: memref<392x32xbf16, #tpu.memory_space<vmem>>, %arg5: memref<392x32xbf16, #tpu.memory_space<vmem>>) attributes {dimension_semantics = [#tpu.dimension_semantics<parallel>], iteration_bounds = array<i64: 1>, scalar_prefetch = 0 : i64, scratch_operands = 0 : i64, tpu.core_type = #tpu.core_type<tc>, window_params = [{transform_indices = @transform_0, window_bounds = array<i64: 392, 288>}, {pipeline_mode = #tpu.pipeline_mode<synchronous>, transform_indices = @transform_1, window_bounds = array<i64: 288, 32>}, {pipeline_mode = #tpu.pipeline_mode<synchronous>, transform_indices = @transform_2, window_bounds = array<i64: 1, 32>}, {transform_indices = @transform_3, window_bounds = array<i64: 392, 32>}, {transform_indices = @transform_4, window_bounds = array<i64: 392, 32>}]} {
    %c0 = arith.constant 0 : index
    %c0_0 = arith.constant 0 : index
    %0 = vector.load %arg1[%c0, %c0_0] : memref<392x288xbf16, #tpu.memory_space<vmem>>, vector<392x288xbf16>
    %c0_1 = arith.constant 0 : index
    %c0_2 = arith.constant 0 : index
    %1 = vector.load %arg2[%c0_1, %c0_2] : memref<288x32xbf16, #tpu.memory_space<vmem>>, vector<288x32xbf16>
    %cst = arith.constant dense<0.000000e+00> : vector<392x32xf32>
    %2 = tpu.matmul %0, %1, %cst {dimension_numbers = #tpu.dot_dimension_numbers<[1], [0], [0], [1], [0, 0, 1, 1], [], []>} : vector<392x288xbf16>, vector<288x32xbf16>, vector<392x32xf32> -> vector<392x32xf32>
    %c0_3 = arith.constant 0 : index
    %c0_4 = arith.constant 0 : index
    %3 = vector.load %arg3[%c0_3, %c0_4] : memref<1x32xf32, #tpu.memory_space<vmem>>, vector<1x32xf32>
    %4 = vector.broadcast %3 : vector<1x32xf32> to vector<392x32xf32>
    %5 = arith.addf %2, %4 : vector<392x32xf32>
    %c0_5 = arith.constant 0 : index
    %c0_6 = arith.constant 0 : index
    %6 = vector.load %arg4[%c0_5, %c0_6] : memref<392x32xbf16, #tpu.memory_space<vmem>>, vector<392x32xbf16>
    %7 = arith.extf %6 : vector<392x32xbf16> to vector<392x32xf32>
    %8 = arith.addf %5, %7 : vector<392x32xf32>
    %cst_7 = arith.constant 0.000000e+00 : f32
    %9 = vector.broadcast %cst_7 : f32 to vector<392x32xf32>
    %10 = arith.maximumf %8, %9 : vector<392x32xf32>
    %11 = arith.truncf %10 : vector<392x32xf32> to vector<392x32xbf16>
    %c0_8 = arith.constant 0 : index
    %c0_9 = arith.constant 0 : index
    %12 = vector.load %arg5[%c0_8, %c0_9] : memref<392x32xbf16, #tpu.memory_space<vmem>>, vector<392x32xbf16>
    tpu.vector_store %arg5[%c0_8, %c0_9], %11 {strides = array<i32>} : memref<392x32xbf16, #tpu.memory_space<vmem>>, vector<392x32xbf16>,
    return
  }
  func.func @transform_0(%arg0: i32) -> (i32, i32) {
    %c0_i32 = arith.constant 0 : i32
    %c0_i32_0 = arith.constant 0 : i32
    return %arg0, %c0_i32 : i32, i32
  }
  func.func @transform_1(%arg0: i32) -> (i32, i32) {
    %c0_i32 = arith.constant 0 : i32
    %c0_i32_0 = arith.constant 0 : i32
    %c0_i32_1 = arith.constant 0 : i32
    return %c0_i32, %c0_i32_0 : i32, i32
  }
  func.func @transform_2(%arg0: i32) -> (i32, i32) {
    %c0_i32 = arith.constant 0 : i32
    %c0_i32_0 = arith.constant 0 : i32
    %c0_i32_1 = arith.constant 0 : i32
    return %c0_i32, %c0_i32_0 : i32, i32
  }
  func.func @transform_3(%arg0: i32) -> (i32, i32) {
    %c0_i32 = arith.constant 0 : i32
    %c0_i32_0 = arith.constant 0 : i32
    return %arg0, %c0_i32 : i32, i32
  }
  func.func @transform_4(%arg0: i32) -> (i32, i32) {
    %c0_i32 = arith.constant 0 : i32
    %c0_i32_0 = arith.constant 0 : i32
    return %arg0, %c0_i32 : i32, i32
  }
}

module attributes {stable_mosaic.version = 11 : i64} {
  func.func @_matmul_bias_kernel(%arg0: i32, %arg1: memref<392x288xbf16, #tpu.memory_space<vmem>>, %arg2: memref<288x32xbf16, #tpu.memory_space<vmem>>, %arg3: memref<1x32xf32, #tpu.memory_space<vmem>>, %arg4: memref<392x32xbf16, #tpu.memory_space<vmem>>) attributes {dimension_semantics = [#tpu.dimension_semantics<parallel>], iteration_bounds = array<i64: 1>, scalar_prefetch = 0 : i64, scratch_operands = 0 : i64, tpu.core_type = #tpu.core_type<tc>, window_params = [{transform_indices = @transform_0, window_bounds = array<i64: 392, 288>}, {pipeline_mode = #tpu.pipeline_mode<synchronous>, transform_indices = @transform_1, window_bounds = array<i64: 288, 32>}, {pipeline_mode = #tpu.pipeline_mode<synchronous>, transform_indices = @transform_2, window_bounds = array<i64: 1, 32>}, {transform_indices = @transform_3, window_bounds = array<i64: 392, 32>}]} {
    %c0 = arith.constant 0 : index
    %c0_0 = arith.constant 0 : index
    %0 = vector.load %arg1[%c0, %c0_0] : memref<392x288xbf16, #tpu.memory_space<vmem>>, vector<392x288xbf16>
    %c0_1 = arith.constant 0 : index
    %c0_2 = arith.constant 0 : index
    %1 = vector.load %arg2[%c0_1, %c0_2] : memref<288x32xbf16, #tpu.memory_space<vmem>>, vector<288x32xbf16>
    %cst = arith.constant dense<0.000000e+00> : vector<392x32xf32>
    %2 = tpu.matmul %0, %1, %cst {dimension_numbers = #tpu.dot_dimension_numbers<[1], [0], [0], [1], [0, 0, 1, 1], [], []>} : vector<392x288xbf16>, vector<288x32xbf16>, vector<392x32xf32> -> vector<392x32xf32>
    %c0_3 = arith.constant 0 : index
    %c0_4 = arith.constant 0 : index
    %3 = vector.load %arg3[%c0_3, %c0_4] : memref<1x32xf32, #tpu.memory_space<vmem>>, vector<1x32xf32>
    %4 = vector.broadcast %3 : vector<1x32xf32> to vector<392x32xf32>
    %5 = arith.addf %2, %4 : vector<392x32xf32>
    %cst_5 = arith.constant 0.000000e+00 : f32
    %6 = vector.broadcast %cst_5 : f32 to vector<392x32xf32>
    %7 = arith.maximumf %5, %6 : vector<392x32xf32>
    %8 = arith.truncf %7 : vector<392x32xf32> to vector<392x32xbf16>
    %c0_6 = arith.constant 0 : index
    %c0_7 = arith.constant 0 : index
    %9 = vector.load %arg4[%c0_6, %c0_7] : memref<392x32xbf16, #tpu.memory_space<vmem>>, vector<392x32xbf16>
    tpu.vector_store %arg4[%c0_6, %c0_7], %8 {strides = array<i32>} : memref<392x32xbf16, #tpu.memory_space<vmem>>, vector<392x32xbf16>,
    return
  }
  func.func @transform_0(%arg0: i32) -> (i32, i32) {
    %c0_i32 = arith.constant 0 : i32
    %c0_i32_0 = arith.constant 0 : i32
    return %arg0, %c0_i32 : i32, i32
  }
  func.func @transform_1(%arg0: i32) -> (i32, i32) {
    %c0_i32 = arith.constant 0 : i32
    %c0_i32_0 = arith.constant 0 : i32
    %c0_i32_1 = arith.constant 0 : i32
    return %c0_i32, %c0_i32_0 : i32, i32
  }
  func.func @transform_2(%arg0: i32) -> (i32, i32) {
    %c0_i32 = arith.constant 0 : i32
    %c0_i32_0 = arith.constant 0 : i32
    %c0_i32_1 = arith.constant 0 : i32
    return %c0_i32, %c0_i32_0 : i32, i32
  }
  func.func @transform_3(%arg0: i32) -> (i32, i32) {
    %c0_i32 = arith.constant 0 : i32
    %c0_i32_0 = arith.constant 0 : i32
    return %arg0, %c0_i32 : i32, i32
  }
}

module attributes {stable_mosaic.version = 11 : i64} {
  func.func @_matmul_bias_kernel(%arg0: i32, %arg1: memref<98x288xbf16, #tpu.memory_space<vmem>>, %arg2: memref<288x64xbf16, #tpu.memory_space<vmem>>, %arg3: memref<1x64xf32, #tpu.memory_space<vmem>>, %arg4: memref<98x64xbf16, #tpu.memory_space<vmem>>) attributes {dimension_semantics = [#tpu.dimension_semantics<parallel>], iteration_bounds = array<i64: 1>, scalar_prefetch = 0 : i64, scratch_operands = 0 : i64, tpu.core_type = #tpu.core_type<tc>, window_params = [{transform_indices = @transform_0, window_bounds = array<i64: 98, 288>}, {pipeline_mode = #tpu.pipeline_mode<synchronous>, transform_indices = @transform_1, window_bounds = array<i64: 288, 64>}, {pipeline_mode = #tpu.pipeline_mode<synchronous>, transform_indices = @transform_2, window_bounds = array<i64: 1, 64>}, {transform_indices = @transform_3, window_bounds = array<i64: 98, 64>}]} {
    %c0 = arith.constant 0 : index
    %c0_0 = arith.constant 0 : index
    %0 = vector.load %arg1[%c0, %c0_0] : memref<98x288xbf16, #tpu.memory_space<vmem>>, vector<98x288xbf16>
    %c0_1 = arith.constant 0 : index
    %c0_2 = arith.constant 0 : index
    %1 = vector.load %arg2[%c0_1, %c0_2] : memref<288x64xbf16, #tpu.memory_space<vmem>>, vector<288x64xbf16>
    %cst = arith.constant dense<0.000000e+00> : vector<98x64xf32>
    %2 = tpu.matmul %0, %1, %cst {dimension_numbers = #tpu.dot_dimension_numbers<[1], [0], [0], [1], [0, 0, 1, 1], [], []>} : vector<98x288xbf16>, vector<288x64xbf16>, vector<98x64xf32> -> vector<98x64xf32>
    %c0_3 = arith.constant 0 : index
    %c0_4 = arith.constant 0 : index
    %3 = vector.load %arg3[%c0_3, %c0_4] : memref<1x64xf32, #tpu.memory_space<vmem>>, vector<1x64xf32>
    %4 = vector.broadcast %3 : vector<1x64xf32> to vector<98x64xf32>
    %5 = arith.addf %2, %4 : vector<98x64xf32>
    %cst_5 = arith.constant 0.000000e+00 : f32
    %6 = vector.broadcast %cst_5 : f32 to vector<98x64xf32>
    %7 = arith.maximumf %5, %6 : vector<98x64xf32>
    %8 = arith.truncf %7 : vector<98x64xf32> to vector<98x64xbf16>
    %c0_6 = arith.constant 0 : index
    %c0_7 = arith.constant 0 : index
    %9 = vector.load %arg4[%c0_6, %c0_7] : memref<98x64xbf16, #tpu.memory_space<vmem>>, vector<98x64xbf16>
    tpu.vector_store %arg4[%c0_6, %c0_7], %8 {strides = array<i32>} : memref<98x64xbf16, #tpu.memory_space<vmem>>, vector<98x64xbf16>,
    return
  }
  func.func @transform_0(%arg0: i32) -> (i32, i32) {
    %c0_i32 = arith.constant 0 : i32
    %c0_i32_0 = arith.constant 0 : i32
    return %arg0, %c0_i32 : i32, i32
  }
  func.func @transform_1(%arg0: i32) -> (i32, i32) {
    %c0_i32 = arith.constant 0 : i32
    %c0_i32_0 = arith.constant 0 : i32
    %c0_i32_1 = arith.constant 0 : i32
    return %c0_i32, %c0_i32_0 : i32, i32
  }
  func.func @transform_2(%arg0: i32) -> (i32, i32) {
    %c0_i32 = arith.constant 0 : i32
    %c0_i32_0 = arith.constant 0 : i32
    %c0_i32_1 = arith.constant 0 : i32
    return %c0_i32, %c0_i32_0 : i32, i32
  }
  func.func @transform_3(%arg0: i32) -> (i32, i32) {
    %c0_i32 = arith.constant 0 : i32
    %c0_i32_0 = arith.constant 0 : i32
    return %arg0, %c0_i32 : i32, i32
  }
}

module attributes {stable_mosaic.version = 11 : i64} {
  func.func @_matmul_bias_kernel(%arg0: i32, %arg1: memref<98x32xbf16, #tpu.memory_space<vmem>>, %arg2: memref<32x64xbf16, #tpu.memory_space<vmem>>, %arg3: memref<1x64xf32, #tpu.memory_space<vmem>>, %arg4: memref<98x64xbf16, #tpu.memory_space<vmem>>) attributes {dimension_semantics = [#tpu.dimension_semantics<parallel>], iteration_bounds = array<i64: 1>, scalar_prefetch = 0 : i64, scratch_operands = 0 : i64, tpu.core_type = #tpu.core_type<tc>, window_params = [{transform_indices = @transform_0, window_bounds = array<i64: 98, 32>}, {pipeline_mode = #tpu.pipeline_mode<synchronous>, transform_indices = @transform_1, window_bounds = array<i64: 32, 64>}, {pipeline_mode = #tpu.pipeline_mode<synchronous>, transform_indices = @transform_2, window_bounds = array<i64: 1, 64>}, {transform_indices = @transform_3, window_bounds = array<i64: 98, 64>}]} {
    %c0 = arith.constant 0 : index
    %c0_0 = arith.constant 0 : index
    %0 = vector.load %arg1[%c0, %c0_0] : memref<98x32xbf16, #tpu.memory_space<vmem>>, vector<98x32xbf16>
    %c0_1 = arith.constant 0 : index
    %c0_2 = arith.constant 0 : index
    %1 = vector.load %arg2[%c0_1, %c0_2] : memref<32x64xbf16, #tpu.memory_space<vmem>>, vector<32x64xbf16>
    %cst = arith.constant dense<0.000000e+00> : vector<98x64xf32>
    %2 = tpu.matmul %0, %1, %cst {dimension_numbers = #tpu.dot_dimension_numbers<[1], [0], [0], [1], [0, 0, 1, 1], [], []>} : vector<98x32xbf16>, vector<32x64xbf16>, vector<98x64xf32> -> vector<98x64xf32>
    %c0_3 = arith.constant 0 : index
    %c0_4 = arith.constant 0 : index
    %3 = vector.load %arg3[%c0_3, %c0_4] : memref<1x64xf32, #tpu.memory_space<vmem>>, vector<1x64xf32>
    %4 = vector.broadcast %3 : vector<1x64xf32> to vector<98x64xf32>
    %5 = arith.addf %2, %4 : vector<98x64xf32>
    %6 = arith.truncf %5 : vector<98x64xf32> to vector<98x64xbf16>
    %c0_5 = arith.constant 0 : index
    %c0_6 = arith.constant 0 : index
    %7 = vector.load %arg4[%c0_5, %c0_6] : memref<98x64xbf16, #tpu.memory_space<vmem>>, vector<98x64xbf16>
    tpu.vector_store %arg4[%c0_5, %c0_6], %6 {strides = array<i32>} : memref<98x64xbf16, #tpu.memory_space<vmem>>, vector<98x64xbf16>,
    return
  }
  func.func @transform_0(%arg0: i32) -> (i32, i32) {
    %c0_i32 = arith.constant 0 : i32
    %c0_i32_0 = arith.constant 0 : i32
    return %arg0, %c0_i32 : i32, i32
  }
  func.func @transform_1(%arg0: i32) -> (i32, i32) {
    %c0_i32 = arith.constant 0 : i32
    %c0_i32_0 = arith.constant 0 : i32
    %c0_i32_1 = arith.constant 0 : i32
    return %c0_i32, %c0_i32_0 : i32, i32
  }
  func.func @transform_2(%arg0: i32) -> (i32, i32) {
    %c0_i32 = arith.constant 0 : i32
    %c0_i32_0 = arith.constant 0 : i32
    %c0_i32_1 = arith.constant 0 : i32
    return %c0_i32, %c0_i32_0 : i32, i32
  }
  func.func @transform_3(%arg0: i32) -> (i32, i32) {
    %c0_i32 = arith.constant 0 : i32
    %c0_i32_0 = arith.constant 0 : i32
    return %arg0, %c0_i32 : i32, i32
  }
}

module attributes {stable_mosaic.version = 11 : i64} {
  func.func @_matmul_bias_res_kernel(%arg0: i32, %arg1: memref<98x576xbf16, #tpu.memory_space<vmem>>, %arg2: memref<576x64xbf16, #tpu.memory_space<vmem>>, %arg3: memref<1x64xf32, #tpu.memory_space<vmem>>, %arg4: memref<98x64xbf16, #tpu.memory_space<vmem>>, %arg5: memref<98x64xbf16, #tpu.memory_space<vmem>>) attributes {dimension_semantics = [#tpu.dimension_semantics<parallel>], iteration_bounds = array<i64: 1>, scalar_prefetch = 0 : i64, scratch_operands = 0 : i64, tpu.core_type = #tpu.core_type<tc>, window_params = [{transform_indices = @transform_0, window_bounds = array<i64: 98, 576>}, {pipeline_mode = #tpu.pipeline_mode<synchronous>, transform_indices = @transform_1, window_bounds = array<i64: 576, 64>}, {pipeline_mode = #tpu.pipeline_mode<synchronous>, transform_indices = @transform_2, window_bounds = array<i64: 1, 64>}, {transform_indices = @transform_3, window_bounds = array<i64: 98, 64>}, {transform_indices = @transform_4, window_bounds = array<i64: 98, 64>}]} {
    %c0 = arith.constant 0 : index
    %c0_0 = arith.constant 0 : index
    %0 = vector.load %arg1[%c0, %c0_0] : memref<98x576xbf16, #tpu.memory_space<vmem>>, vector<98x576xbf16>
    %c0_1 = arith.constant 0 : index
    %c0_2 = arith.constant 0 : index
    %1 = vector.load %arg2[%c0_1, %c0_2] : memref<576x64xbf16, #tpu.memory_space<vmem>>, vector<576x64xbf16>
    %cst = arith.constant dense<0.000000e+00> : vector<98x64xf32>
    %2 = tpu.matmul %0, %1, %cst {dimension_numbers = #tpu.dot_dimension_numbers<[1], [0], [0], [1], [0, 0, 1, 1], [], []>} : vector<98x576xbf16>, vector<576x64xbf16>, vector<98x64xf32> -> vector<98x64xf32>
    %c0_3 = arith.constant 0 : index
    %c0_4 = arith.constant 0 : index
    %3 = vector.load %arg3[%c0_3, %c0_4] : memref<1x64xf32, #tpu.memory_space<vmem>>, vector<1x64xf32>
    %4 = vector.broadcast %3 : vector<1x64xf32> to vector<98x64xf32>
    %5 = arith.addf %2, %4 : vector<98x64xf32>
    %c0_5 = arith.constant 0 : index
    %c0_6 = arith.constant 0 : index
    %6 = vector.load %arg4[%c0_5, %c0_6] : memref<98x64xbf16, #tpu.memory_space<vmem>>, vector<98x64xbf16>
    %7 = arith.extf %6 : vector<98x64xbf16> to vector<98x64xf32>
    %8 = arith.addf %5, %7 : vector<98x64xf32>
    %cst_7 = arith.constant 0.000000e+00 : f32
    %9 = vector.broadcast %cst_7 : f32 to vector<98x64xf32>
    %10 = arith.maximumf %8, %9 : vector<98x64xf32>
    %11 = arith.truncf %10 : vector<98x64xf32> to vector<98x64xbf16>
    %c0_8 = arith.constant 0 : index
    %c0_9 = arith.constant 0 : index
    %12 = vector.load %arg5[%c0_8, %c0_9] : memref<98x64xbf16, #tpu.memory_space<vmem>>, vector<98x64xbf16>
    tpu.vector_store %arg5[%c0_8, %c0_9], %11 {strides = array<i32>} : memref<98x64xbf16, #tpu.memory_space<vmem>>, vector<98x64xbf16>,
    return
  }
  func.func @transform_0(%arg0: i32) -> (i32, i32) {
    %c0_i32 = arith.constant 0 : i32
    %c0_i32_0 = arith.constant 0 : i32
    return %arg0, %c0_i32 : i32, i32
  }
  func.func @transform_1(%arg0: i32) -> (i32, i32) {
    %c0_i32 = arith.constant 0 : i32
    %c0_i32_0 = arith.constant 0 : i32
    %c0_i32_1 = arith.constant 0 : i32
    return %c0_i32, %c0_i32_0 : i32, i32
  }
  func.func @transform_2(%arg0: i32) -> (i32, i32) {
    %c0_i32 = arith.constant 0 : i32
    %c0_i32_0 = arith.constant 0 : i32
    %c0_i32_1 = arith.constant 0 : i32
    return %c0_i32, %c0_i32_0 : i32, i32
  }
  func.func @transform_3(%arg0: i32) -> (i32, i32) {
    %c0_i32 = arith.constant 0 : i32
    %c0_i32_0 = arith.constant 0 : i32
    return %arg0, %c0_i32 : i32, i32
  }
  func.func @transform_4(%arg0: i32) -> (i32, i32) {
    %c0_i32 = arith.constant 0 : i32
    %c0_i32_0 = arith.constant 0 : i32
    return %arg0, %c0_i32 : i32, i32
  }
}

module attributes {stable_mosaic.version = 11 : i64} {
  func.func @_matmul_bias_kernel(%arg0: i32, %arg1: memref<98x576xbf16, #tpu.memory_space<vmem>>, %arg2: memref<576x64xbf16, #tpu.memory_space<vmem>>, %arg3: memref<1x64xf32, #tpu.memory_space<vmem>>, %arg4: memref<98x64xbf16, #tpu.memory_space<vmem>>) attributes {dimension_semantics = [#tpu.dimension_semantics<parallel>], iteration_bounds = array<i64: 1>, scalar_prefetch = 0 : i64, scratch_operands = 0 : i64, tpu.core_type = #tpu.core_type<tc>, window_params = [{transform_indices = @transform_0, window_bounds = array<i64: 98, 576>}, {pipeline_mode = #tpu.pipeline_mode<synchronous>, transform_indices = @transform_1, window_bounds = array<i64: 576, 64>}, {pipeline_mode = #tpu.pipeline_mode<synchronous>, transform_indices = @transform_2, window_bounds = array<i64: 1, 64>}, {transform_indices = @transform_3, window_bounds = array<i64: 98, 64>}]} {
    %c0 = arith.constant 0 : index
    %c0_0 = arith.constant 0 : index
    %0 = vector.load %arg1[%c0, %c0_0] : memref<98x576xbf16, #tpu.memory_space<vmem>>, vector<98x576xbf16>
    %c0_1 = arith.constant 0 : index
    %c0_2 = arith.constant 0 : index
    %1 = vector.load %arg2[%c0_1, %c0_2] : memref<576x64xbf16, #tpu.memory_space<vmem>>, vector<576x64xbf16>
    %cst = arith.constant dense<0.000000e+00> : vector<98x64xf32>
    %2 = tpu.matmul %0, %1, %cst {dimension_numbers = #tpu.dot_dimension_numbers<[1], [0], [0], [1], [0, 0, 1, 1], [], []>} : vector<98x576xbf16>, vector<576x64xbf16>, vector<98x64xf32> -> vector<98x64xf32>
    %c0_3 = arith.constant 0 : index
    %c0_4 = arith.constant 0 : index
    %3 = vector.load %arg3[%c0_3, %c0_4] : memref<1x64xf32, #tpu.memory_space<vmem>>, vector<1x64xf32>
    %4 = vector.broadcast %3 : vector<1x64xf32> to vector<98x64xf32>
    %5 = arith.addf %2, %4 : vector<98x64xf32>
    %cst_5 = arith.constant 0.000000e+00 : f32
    %6 = vector.broadcast %cst_5 : f32 to vector<98x64xf32>
    %7 = arith.maximumf %5, %6 : vector<98x64xf32>
    %8 = arith.truncf %7 : vector<98x64xf32> to vector<98x64xbf16>
    %c0_6 = arith.constant 0 : index
    %c0_7 = arith.constant 0 : index
    %9 = vector.load %arg4[%c0_6, %c0_7] : memref<98x64xbf16, #tpu.memory_space<vmem>>, vector<98x64xbf16>
    tpu.vector_store %arg4[%c0_6, %c0_7], %8 {strides = array<i32>} : memref<98x64xbf16, #tpu.memory_space<vmem>>, vector<98x64xbf16>,
    return
  }
  func.func @transform_0(%arg0: i32) -> (i32, i32) {
    %c0_i32 = arith.constant 0 : i32
    %c0_i32_0 = arith.constant 0 : i32
    return %arg0, %c0_i32 : i32, i32
  }
  func.func @transform_1(%arg0: i32) -> (i32, i32) {
    %c0_i32 = arith.constant 0 : i32
    %c0_i32_0 = arith.constant 0 : i32
    %c0_i32_1 = arith.constant 0 : i32
    return %c0_i32, %c0_i32_0 : i32, i32
  }
  func.func @transform_2(%arg0: i32) -> (i32, i32) {
    %c0_i32 = arith.constant 0 : i32
    %c0_i32_0 = arith.constant 0 : i32
    %c0_i32_1 = arith.constant 0 : i32
    return %c0_i32, %c0_i32_0 : i32, i32
  }
  func.func @transform_3(%arg0: i32) -> (i32, i32) {
    %c0_i32 = arith.constant 0 : i32
    %c0_i32_0 = arith.constant 0 : i32
    return %arg0, %c0_i32 : i32, i32
  }
}

module attributes {stable_mosaic.version = 11 : i64} {
  func.func @_fc_logsoftmax_kernel(%arg0: i32, %arg1: memref<2x64xbf16, #tpu.memory_space<vmem>>, %arg2: memref<64x47xbf16, #tpu.memory_space<vmem>>, %arg3: memref<1x47xf32, #tpu.memory_space<vmem>>, %arg4: memref<2x47xf32, #tpu.memory_space<vmem>>) attributes {dimension_semantics = [#tpu.dimension_semantics<arbitrary>], iteration_bounds = array<i64: 1>, scalar_prefetch = 0 : i64, scratch_operands = 0 : i64, tpu.core_type = #tpu.core_type<tc>, window_params = [{pipeline_mode = #tpu.pipeline_mode<synchronous>, transform_indices = @transform_0, window_bounds = array<i64: 2, 64>}, {pipeline_mode = #tpu.pipeline_mode<synchronous>, transform_indices = @transform_1, window_bounds = array<i64: 64, 47>}, {pipeline_mode = #tpu.pipeline_mode<synchronous>, transform_indices = @transform_2, window_bounds = array<i64: 1, 47>}, {pipeline_mode = #tpu.pipeline_mode<synchronous>, transform_indices = @transform_3, window_bounds = array<i64: 2, 47>}]} {
    %c0 = arith.constant 0 : index
    %c0_0 = arith.constant 0 : index
    %0 = vector.load %arg1[%c0, %c0_0] : memref<2x64xbf16, #tpu.memory_space<vmem>>, vector<2x64xbf16>
    %c0_1 = arith.constant 0 : index
    %c0_2 = arith.constant 0 : index
    %1 = vector.load %arg2[%c0_1, %c0_2] : memref<64x47xbf16, #tpu.memory_space<vmem>>, vector<64x47xbf16>
    %cst = arith.constant dense<0.000000e+00> : vector<2x47xf32>
    %2 = tpu.matmul %0, %1, %cst {dimension_numbers = #tpu.dot_dimension_numbers<[1], [0], [0], [1], [0, 0, 1, 1], [], []>} : vector<2x64xbf16>, vector<64x47xbf16>, vector<2x47xf32> -> vector<2x47xf32>
    %c0_3 = arith.constant 0 : index
    %c0_4 = arith.constant 0 : index
    %3 = vector.load %arg3[%c0_3, %c0_4] : memref<1x47xf32, #tpu.memory_space<vmem>>, vector<1x47xf32>
    %4 = vector.broadcast %3 : vector<1x47xf32> to vector<2x47xf32>
    %5 = arith.addf %2, %4 : vector<2x47xf32>
    %cst_5 = arith.constant dense<0xFF800000> : vector<2xf32>
    %6 = vector.multi_reduction <maximumf>, %5, %cst_5 [1] : vector<2x47xf32> to vector<2xf32>
    %7 = vector.shape_cast %6 : vector<2xf32> to vector<2x1xf32>
    %8 = vector.broadcast %7 : vector<2x1xf32> to vector<2x47xf32>
    %9 = arith.subf %5, %8 : vector<2x47xf32>
    %10 = math.exp %9 : vector<2x47xf32>
    %cst_6 = arith.constant dense<0.000000e+00> : vector<2xf32>
    %11 = vector.multi_reduction <add>, %10, %cst_6 [1] : vector<2x47xf32> to vector<2xf32>
    %12 = vector.shape_cast %11 : vector<2xf32> to vector<2x1xf32>
    %13 = math.log %12 : vector<2x1xf32>
    %14 = arith.addf %7, %13 : vector<2x1xf32>
    %15 = vector.broadcast %14 : vector<2x1xf32> to vector<2x47xf32>
    %16 = arith.subf %5, %15 : vector<2x47xf32>
    %c0_7 = arith.constant 0 : index
    %c0_8 = arith.constant 0 : index
    %17 = vector.load %arg4[%c0_7, %c0_8] : memref<2x47xf32, #tpu.memory_space<vmem>>, vector<2x47xf32>
    tpu.vector_store %arg4[%c0_7, %c0_8], %16 {strides = array<i32>} : memref<2x47xf32, #tpu.memory_space<vmem>>, vector<2x47xf32>,
    return
  }
  func.func @transform_0(%arg0: i32) -> (i32, i32) {
    %c0_i32 = arith.constant 0 : i32
    %c0_i32_0 = arith.constant 0 : i32
    %c0_i32_1 = arith.constant 0 : i32
    return %c0_i32, %c0_i32_0 : i32, i32
  }
  func.func @transform_1(%arg0: i32) -> (i32, i32) {
    %c0_i32 = arith.constant 0 : i32
    %c0_i32_0 = arith.constant 0 : i32
    %c0_i32_1 = arith.constant 0 : i32
    return %c0_i32, %c0_i32_0 : i32, i32
  }
  func.func @transform_2(%arg0: i32) -> (i32, i32) {
    %c0_i32 = arith.constant 0 : i32
    %c0_i32_0 = arith.constant 0 : i32
    %c0_i32_1 = arith.constant 0 : i32
    return %c0_i32, %c0_i32_0 : i32, i32
  }
  func.func @transform_3(%arg0: i32) -> (i32, i32) {
    %c0_i32 = arith.constant 0 : i32
    %c0_i32_0 = arith.constant 0 : i32
    %c0_i32_1 = arith.constant 0 : i32
    return %c0_i32, %c0_i32_0 : i32, i32
  }
}

</mosaic_0001>

<llo_original>
// kernel: resnet10_emnist_forward.16
$region0: #{resnet10_emnist_forward.16}
  #allocation0 [shape = 'u32[]', space=smem, size = 0x4, offset = 0x4, fixed_abs, tag = 'smem constant byte address 0x4 - core index']
  #allocation1 [shape = 'u32[72,128]{1,0:T(1,128)}', space=vmem, size = 0x9000, scoped, tag = 'internal scratch']
  %s0 = inlined_call_operand.vmem [shape: bf16[1568,9], index: 0, kind: input, shape index: {}]
  %s1 = inlined_call_operand.hbm [shape: bf16[9,16], index: 1, kind: input, shape index: {}]
  %s2 = inlined_call_operand.hbm [shape: f32[1,16], index: 2, kind: input, shape index: {}]
  %s3 = inlined_call_operand.vmem [shape: bf16[1568,16], index: 3, kind: output, shape index: {}]
  %s4 = sld [smem:[#allocation0]]
  $region53: #{resnet10_emnist_forward.16} parent=0
    _
  %s6 = ssub.s32 1, %s4
  %s7 = scalar_select 0, %s6, %s4
  $region1: #{resnet10_emnist_forward.16} parent=0
    #allocation2 [shape = 'u8[4096]{0}', space=vmem, size = 0x1000, scoped, tag = 'input window, operand 1, single buffered']
    #allocation3 [shape = 's32[2]{0}', space=sflag, size = 0x8, scoped, tag = 'scoped memory for resnet10_emnist_forward.16']
    #allocation4 [shape = 'u8[512]{0}', space=vmem, size = 0x400, scoped, tag = 'input window, operand 2, single buffered']
    #allocation5 [shape = 's32[1]{0}', space=sflag, size = 0x4, scoped, tag = 'scoped memory for resnet10_emnist_forward.16']
    %8 = vsyncpa [#allocation3], 0
    %9 = vsyncpa [#allocation5], 0
    loop: start=0, step=1, limit=4
    $region2: #{resnet10_emnist_forward.16} parent=1 // loop_pre_header
      _
    $region3: #{resnet10_emnist_forward.16} parent=1 // loop_header
      %s11 = sphi 0, %s15
      %p12 = scmp.ge.s32.totalorder %s11, 4
      %s21 = sphi 0, %s23
      %s24 = sphi 0, %s21
      %s25 = sphi 0, %s24
      %s41 = sphi 0, %s25
      %s45 = sphi 0, %s45
      %s47 = sphi 0, %s45
      %s48 = sphi 0, %s47
      %s62 = sphi 0, %s48
      %s66 = sphi 0, %s66
      %s68 = sphi 0, %s66
      %s69 = sphi 0, %s68
      %s83 = sphi 0, %s69
      %s89 = sphi 0, %s91
      %s92 = sphi 0, %s89
      %s93 = sphi 0, %s92
      %s109 = sphi 0, %s93
    $region4: #{resnet10_emnist_forward.16} parent=1 // loop_header_branch
      %14 = sbr.rel (%p12) target = $region8
    $region5: #{resnet10_emnist_forward.16} parent=1 // loop_body
      %s16 = ssub.s32 %s11, 1
      %s17 = ssub.s32 %s11, 2
      %s18 = sadd.s32 %s11, 1
      %s19 = ssub.s32 %s11, %s18
      %p20 = scmp.eq.s32.totalorder %s19, 0
      %s22 = sadd.s32 %s21, 1
      %s23 = scalar_select %p20, %s21, %s22
      %p26 = pneg %p20
      %p27 = scmp.eq.s32.totalorder %s11, 1
      %p28 = por %p26, %p27
      %p29 = scmp.ne.s32.totalorder %s21, %s24
      %p30 = scmp.eq.s32.totalorder %s11, 0
      %p31 = por %p29, %p30
      %p32 = scmp.ne.s32.totalorder %s21, %s24
      %p33 = scmp.eq.s32.totalorder %s16, 1
      %p34 = por %p32, %p33
      %p35 = scmp.ne.s32.totalorder %s24, %s25
      %p36 = scmp.eq.s32.totalorder %s16, 0
      %p37 = por %p35, %p36
      %p38 = scmp.ne.s32.totalorder %s24, %s25
      %p39 = scmp.eq.s32.totalorder %s17, 1
      %p40 = por %p38, %p39
      %p42 = scmp.ne.s32.totalorder %s25, %s41
      %p43 = scmp.eq.s32.totalorder %s17, 0
      %p44 = por %p42, %p43
      %s46 = sadd.s32 %s45, 1
      %p49 = scmp.eq.s32.totalorder %s11, 1
      %p50 = scmp.ne.s32.totalorder %s45, %s47
      %p51 = scmp.eq.s32.totalorder %s11, 0
      %p52 = por %p50, %p51
      %p53 = scmp.ne.s32.totalorder %s45, %s47
      %p54 = scmp.eq.s32.totalorder %s16, 1
      %p55 = por %p53, %p54
      %p56 = scmp.ne.s32.totalorder %s47, %s48
      %p57 = scmp.eq.s32.totalorder %s16, 0
      %p58 = por %p56, %p57
      %p59 = scmp.ne.s32.totalorder %s47, %s48
      %p60 = scmp.eq.s32.totalorder %s17, 1
      %p61 = por %p59, %p60
      %p63 = scmp.ne.s32.totalorder %s48, %s62
      %p64 = scmp.eq.s32.totalorder %s17, 0
      %p65 = por %p63, %p64
      %s67 = sadd.s32 %s66, 1
      %p70 = scmp.eq.s32.totalorder %s11, 1
      %p71 = scmp.ne.s32.totalorder %s66, %s68
      %p72 = scmp.eq.s32.totalorder %s11, 0
      %p73 = por %p71, %p72
      %p74 = scmp.ne.s32.totalorder %s66, %s68
      %p75 = scmp.eq.s32.totalorder %s16, 1
      %p76 = por %p74, %p75
      %p77 = scmp.ne.s32.totalorder %s68, %s69
      %p78 = scmp.eq.s32.totalorder %s16, 0
      %p79 = por %p77, %p78
      %p80 = scmp.ne.s32.totalorder %s68, %s69
      %p81 = scmp.eq.s32.totalorder %s17, 1
      %p82 = por %p80, %p81
      %p84 = scmp.ne.s32.totalorder %s69, %s83
      %p85 = scmp.eq.s32.totalorder %s17, 0
      %p86 = por %p84, %p85
      %s87 = ssub.s32 %s11, %s18
      %p88 = scmp.eq.s32.totalorder %s87, 0
      %s90 = sadd.s32 %s89, 1
      %s91 = scalar_select %p88, %s89, %s90
      %p94 = pneg %p88
      %p95 = scmp.eq.s32.totalorder %s11, 1
      %p96 = por %p94, %p95
      %p97 = scmp.ne.s32.totalorder %s89, %s92
      %p98 = scmp.eq.s32.totalorder %s11, 0
      %p99 = por %p97, %p98
      %p100 = scmp.ne.s32.totalorder %s89, %s92
      %p101 = scmp.eq.s32.totalorder %s16, 1
      %p102 = por %p100, %p101
      %p103 = scmp.ne.s32.totalorder %s92, %s93
      %p104 = scmp.eq.s32.totalorder %s16, 0
      %p105 = por %p103, %p104
      %p106 = scmp.ne.s32.totalorder %s92, %s93
      %p107 = scmp.eq.s32.totalorder %s17, 1
      %p108 = por %p106, %p107
      %p110 = scmp.ne.s32.totalorder %s93, %s109
      %p111 = scmp.eq.s32.totalorder %s17, 0
      %p112 = por %p110, %p111
      %p113 = scmp.le.s32.totalorder 1, %s11
      %p114 = scmp.lt.s32.totalorder %s11, 3
      %p115 = pnand %p113, %p114
      %p116 = pneg %p115
      // Predicated region
      $region9: #{resnet10_emnist_forward.16} parent=5 // pred_check
        _
      $region10: #{resnet10_emnist_forward.16} parent=5 // pred_check_branch
        %118 = sbr.rel (%p115) target = $region12
      $region11: #{resnet10_emnist_forward.16} parent=5 // pred_region
        %s119 = ssub.s32 %s11, 1
        // Predicated region
        $region13: #{resnet10_emnist_forward.16} parent=11 // pred_check
          %p120 = pneg %p58
        $region14: #{resnet10_emnist_forward.16} parent=11 // pred_check_branch
          %122 = sbr.rel (%p120) target = $region16
        $region15: #{resnet10_emnist_forward.16} parent=11 // pred_region
          %124 = vsyncadd [#allocation3], 0
          %s125 = sshll.u32 %s1, 4
          %s126 = int_to_ptr.hbm [resolvable:$true] %s125
          %s127 = sshll.u32 [#allocation2], 4
          %s128 = int_to_ptr.vmem [resolvable:$true] %s127
          %133 = dma.hbm_to_vmem [thread:$0]  %s126, 128, %s128, [#allocation3], 64, 64, 4
        $region16: #{resnet10_emnist_forward.16} parent=11 // pred_fallthru
          _
        // Predicated region
        $region17: #{resnet10_emnist_forward.16} parent=11 // pred_check
          %p134 = pneg %p79
        $region18: #{resnet10_emnist_forward.16} parent=11 // pred_check_branch
          %136 = sbr.rel (%p134) target = $region20
        $region19: #{resnet10_emnist_forward.16} parent=11 // pred_region
          %138 = vsyncadd [#allocation5], 0
          %s140 = sshll.u32 %s2, 4
          %s141 = int_to_ptr.hbm [resolvable:$true] %s140
          %s142 = sshll.u32 [#allocation4], 4
          %s143 = int_to_ptr.vmem [resolvable:$true] %s142
          %145 = dma.hbm_to_vmem [thread:$0]  %s141, 16, %s143, [#allocation5]
        $region20: #{resnet10_emnist_forward.16} parent=11 // pred_fallthru
          _
      $region12: #{resnet10_emnist_forward.16} parent=5 // pred_fallthru
        _
      %p146 = scmp.lt.s32.totalorder %s11, 2
      // Predicated region
      $region21: #{resnet10_emnist_forward.16} parent=5 // pred_check
        %p147 = pneg %p146
      $region22: #{resnet10_emnist_forward.16} parent=5 // pred_check_branch
        %149 = sbr.rel (%p147) target = $region24
      $region23: #{resnet10_emnist_forward.16} parent=5 // pred_region
        // Predicated region
        $region25: #{resnet10_emnist_forward.16} parent=23 // pred_check
          %p150 = pneg %p31
        $region26: #{resnet10_emnist_forward.16} parent=23 // pred_check_branch
          %152 = sbr.rel (%p150) target = $region28
        $region27: #{resnet10_emnist_forward.16} parent=23 // pred_region
          %s153 = smul.u32 98, %s11
          %p154 = scmp.lt.s32.totalorder %s153, 195
          %s155 = scalar_select %p154, %s153, 195
          %s156 = smul.addr %s155, 4
          %s157 = scalar_lea.vmem %s0, %s156
          %s158 = smul.u32 98, %s11
        $region28: #{resnet10_emnist_forward.16} parent=23 // pred_fallthru
          _
      $region24: #{resnet10_emnist_forward.16} parent=5 // pred_fallthru
        _
      %p159 = scmp.le.s32.totalorder 1, %s11
      %p160 = scmp.lt.s32.totalorder %s11, 3
      %p161 = pnand %p159, %p160
      %p162 = pneg %p161
      // Predicated region
      $region29: #{resnet10_emnist_forward.16} parent=5 // pred_check
        _
      $region30: #{resnet10_emnist_forward.16} parent=5 // pred_check_branch
        %164 = sbr.rel (%p161) target = $region32
      $region31: #{resnet10_emnist_forward.16} parent=5 // pred_region
        %s165 = ssub.s32 %s11, 1
        // Predicated region
        $region33: #{resnet10_emnist_forward.16} parent=31 // pred_check
          %p166 = pneg %p58
        $region34: #{resnet10_emnist_forward.16} parent=31 // pred_check_branch
          %168 = sbr.rel (%p166) target = $region36
        $region35: #{resnet10_emnist_forward.16} parent=31 // pred_region
          %170 = dma.done [#allocation3], 128
        $region36: #{resnet10_emnist_forward.16} parent=31 // pred_fallthru
          _
        // Predicated region
        $region37: #{resnet10_emnist_forward.16} parent=31 // pred_check
          %p171 = pneg %p79
        $region38: #{resnet10_emnist_forward.16} parent=31 // pred_check_branch
          %173 = sbr.rel (%p171) target = $region40
        $region39: #{resnet10_emnist_forward.16} parent=31 // pred_region
          %175 = dma.done [#allocation5], 16
        $region40: #{resnet10_emnist_forward.16} parent=31 // pred_fallthru
          _
        %s176 = smul.u32 98, %s16
        %p177 = scmp.lt.s32.totalorder %s176, 195
        %s178 = scalar_select %p177, %s176, 195
        %s179 = smul.addr %s178, 4
        %s180 = scalar_lea.vmem %s0, %s179
        %p181 = pneg %p37
        %p182 = pneg %p34
        %p183 = pneg %p58
        %p184 = pneg %p55
        %p185 = pneg %p79
        %p186 = pneg %p76
        %p187 = pneg %p105
        %p188 = pneg %p102
        %s189 = smul.u32 98, %s16
        %p190 = scmp.lt.s32.totalorder %s189, 195
        %s191 = scalar_select %p190, %s189, 195
        %s192 = smul.addr %s191, 4
        %s193 = scalar_lea.vmem %s3, %s192
        %s194 = smul.u32 98, %s16
        %p195 = scmp.lt.s32.totalorder %s194, 195
        %s196 = scalar_select %p195, %s194, 195
        %s197 = smul.addr %s196, 4
        %s198 = scalar_lea.vmem %s0, %s197
        %s199 = smul.u32 98, %s16
        %s200 = smul.u32 98, %s16
        %p201 = scmp.lt.s32.totalorder %s200, 195
        %s202 = scalar_select %p201, %s200, 195
        %s203 = smul.addr %s202, 4
        %s204 = scalar_lea.vmem %s3, %s203
        %s205 = smul.u32 98, %s16
        %v207 = vld [vmem:[%s198] sm:$0xf]
        %v208 = vld [vmem:[%s198 + $0x4] sm:$0xf]
        %v209 = vld [vmem:[%s198 + $0x8] sm:$0xf]
        %v210 = vld [vmem:[%s198 + $0xc] sm:$0xf]
        %v211 = vld [vmem:[%s198 + $0x10] sm:$0xf]
        %v212 = vld [vmem:[%s198 + $0x14] sm:$0xf]
        %v213 = vld [vmem:[%s198 + $0x18] sm:$0xf]
        %v214 = vld [vmem:[%s198 + $0x1c] sm:$0xf]
        %v215 = vld [vmem:[%s198 + $0x20] sm:$0xf]
        %v216 = vld [vmem:[%s198 + $0x24] sm:$0xf]
        %v217 = vld [vmem:[%s198 + $0x28] sm:$0xf]
        %v218 = vld [vmem:[%s198 + $0x2c] sm:$0xf]
        %v219 = vld [vmem:[%s198 + $0x30] sm:$0xf]
        %v220 = vld [vmem:[%s198 + $0x34] sm:$0xf]
        %v221 = vld [vmem:[%s198 + $0x38] sm:$0xf]
        %v222 = vld [vmem:[%s198 + $0x3c] sm:$0xf]
        %v223 = vld [vmem:[%s198 + $0x40] sm:$0xf]
        %v224 = vld [vmem:[%s198 + $0x44] sm:$0xf]
        %v225 = vld [vmem:[%s198 + $0x48] sm:$0xf]
        %v226 = vld [vmem:[%s198 + $0x4c] sm:$0xf]
        %v227 = vld [vmem:[%s198 + $0x50] sm:$0xf]
        %v228 = vld [vmem:[%s198 + $0x54] sm:$0xf]
        %v229 = vld [vmem:[%s198 + $0x58] sm:$0xf]
        %v230 = vld [vmem:[%s198 + $0x5c] sm:$0xf]
        %v231 = vld [vmem:[%s198 + $0x60] sm:$0xf]
        %v232 = vld [vmem:[%s198 + $0x64] sm:$0xf]
        %v233 = vld [vmem:[%s198 + $0x68] sm:$0xf]
        %v234 = vld [vmem:[%s198 + $0x6c] sm:$0xf]
        %v235 = vld [vmem:[%s198 + $0x70] sm:$0xf]
        %v236 = vld [vmem:[%s198 + $0x74] sm:$0xf]
        %v237 = vld [vmem:[%s198 + $0x78] sm:$0xf]
        %v238 = vld [vmem:[%s198 + $0x7c] sm:$0xf]
        %v239 = vld [vmem:[%s198 + $0x80] sm:$0xf]
        %v240 = vld [vmem:[%s198 + $0x84] sm:$0xf]
        %v241 = vld [vmem:[%s198 + $0x88] sm:$0xf]
        %v242 = vld [vmem:[%s198 + $0x8c] sm:$0xf]
        %v243 = vld [vmem:[%s198 + $0x90] sm:$0xf]
        %v244 = vld [vmem:[%s198 + $0x94] sm:$0xf]
        %v245 = vld [vmem:[%s198 + $0x98] sm:$0xf]
        %v246 = vld [vmem:[%s198 + $0x9c] sm:$0xf]
        %v247 = vld [vmem:[%s198 + $0xa0] sm:$0xf]
        %v248 = vld [vmem:[%s198 + $0xa4] sm:$0xf]
        %v249 = vld [vmem:[%s198 + $0xa8] sm:$0xf]
        %v250 = vld [vmem:[%s198 + $0xac] sm:$0xf]
        %v251 = vld [vmem:[%s198 + $0xb0] sm:$0xf]
        %v252 = vld [vmem:[%s198 + $0xb4] sm:$0xf]
        %v253 = vld [vmem:[%s198 + $0xb8] sm:$0xf]
        %v254 = vld [vmem:[%s198 + $0xbc] sm:$0xf]
        %v255 = vld [vmem:[%s198 + $0xc0] sm:$0xf]
        %v256 = vld [vmem:[%s198 + $0xc4] sm:$0xf]
        %v257 = vld [vmem:[%s198 + $0xc8] sm:$0xf]
        %v258 = vld [vmem:[%s198 + $0xcc] sm:$0xf]
        %v259 = vld [vmem:[%s198 + $0xd0] sm:$0xf]
        %v260 = vld [vmem:[%s198 + $0xd4] sm:$0xf]
        %v261 = vld [vmem:[%s198 + $0xd8] sm:$0xf]
        %v262 = vld [vmem:[%s198 + $0xdc] sm:$0xf]
        %v263 = vld [vmem:[%s198 + $0xe0] sm:$0xf]
        %v264 = vld [vmem:[%s198 + $0xe4] sm:$0xf]
        %v265 = vld [vmem:[%s198 + $0xe8] sm:$0xf]
        %v266 = vld [vmem:[%s198 + $0xec] sm:$0xf]
        %v267 = vld [vmem:[%s198 + $0xf0] sm:$0xf]
        %v268 = vld [vmem:[%s198 + $0xf4] sm:$0xf]
        %v269 = vld [vmem:[%s198 + $0xf8] sm:$0xf]
        %v270 = vld [vmem:[%s198 + $0xfc] sm:$0xf]
        %v271 = vld [vmem:[%s198 + $0x100] sm:$0xf]
        %v272 = vld [vmem:[%s198 + $0x104] sm:$0xf]
        %v273 = vld [vmem:[%s198 + $0x108] sm:$0xf]
        %v274 = vld [vmem:[%s198 + $0x10c] sm:$0xf]
        %v275 = vld [vmem:[%s198 + $0x110] sm:$0xf]
        %v276 = vld [vmem:[%s198 + $0x114] sm:$0xf]
        %v277 = vld [vmem:[%s198 + $0x118] sm:$0xf]
        %v278 = vld [vmem:[%s198 + $0x11c] sm:$0xf]
        %v279 = vld [vmem:[%s198 + $0x120] sm:$0xf]
        %v280 = vld [vmem:[%s198 + $0x124] sm:$0xf]
        %v281 = vld [vmem:[%s198 + $0x128] sm:$0xf]
        %v282 = vld [vmem:[%s198 + $0x12c] sm:$0xf]
        %v283 = vld [vmem:[%s198 + $0x130] sm:$0xf]
        %v284 = vld [vmem:[%s198 + $0x134] sm:$0xf]
        %v285 = vld [vmem:[%s198 + $0x138] sm:$0xf]
        %v286 = vld [vmem:[%s198 + $0x13c] sm:$0xf]
        %v287 = vld [vmem:[%s198 + $0x140] sm:$0xf]
        %v288 = vld [vmem:[%s198 + $0x144] sm:$0xf]
        %v289 = vld [vmem:[%s198 + $0x148] sm:$0xf]
        %v290 = vld [vmem:[%s198 + $0x14c] sm:$0xf]
        %v291 = vld [vmem:[%s198 + $0x150] sm:$0xf]
        %v292 = vld [vmem:[%s198 + $0x154] sm:$0xf]
        %v293 = vld [vmem:[%s198 + $0x158] sm:$0xf]
        %v294 = vld [vmem:[%s198 + $0x15c] sm:$0xf]
        %v295 = vld [vmem:[%s198 + $0x160] sm:$0xf]
        %v296 = vld [vmem:[%s198 + $0x164] sm:$0xf]
        %v297 = vld [vmem:[%s198 + $0x168] sm:$0xf]
        %v298 = vld [vmem:[%s198 + $0x16c] sm:$0xf]
        %v299 = vld [vmem:[%s198 + $0x170] sm:$0xf]
        %v300 = vld [vmem:[%s198 + $0x174] sm:$0xf]
        %v301 = vld [vmem:[%s198 + $0x178] sm:$0xf]
        %v302 = vld [vmem:[%s198 + $0x17c] sm:$0xf]
        %v303 = vld [vmem:[%s198 + $0x180] sm:$0xf]
        %v304 = vld [vmem:[%s198 + $0x184] sm:$0xf]
        %v305 = vld [vmem:[#allocation2] sm:$0xf]
        %v306 = vld [vmem:[#allocation2 + $0x4] sm:$0x1]
        %v307 = vld [vmem:[#allocation4] sm:$0x1]
        %v309 = vperm.slane %v307, 0
        %v409 = vunpack.c.l.b16 %v207
        %v410 = vunpack.c.l.b16 %v208
        %v411 = vunpack.c.l.b16 %v209
        %v412 = vunpack.c.l.b16 %v210
        %v413 = vunpack.c.l.b16 %v211
        %v414 = vunpack.c.l.b16 %v212
        %v415 = vunpack.c.l.b16 %v213
        %v416 = vunpack.c.l.b16 %v214
        %v417 = vunpack.c.l.b16 %v215
        %v418 = vunpack.c.l.b16 %v216
        %v419 = vunpack.c.l.b16 %v217
        %v420 = vunpack.c.l.b16 %v218
        %v421 = vunpack.c.l.b16 %v219
        %v422 = vunpack.c.l.b16 %v220
        %v423 = vunpack.c.l.b16 %v221
        %v424 = vunpack.c.l.b16 %v222
        %v425 = vunpack.c.l.b16 %v223
        %v426 = vunpack.c.l.b16 %v224
        %v427 = vunpack.c.l.b16 %v225
        %v428 = vunpack.c.l.b16 %v226
        %v429 = vunpack.c.l.b16 %v227
        %v430 = vunpack.c.l.b16 %v228
        %v431 = vunpack.c.l.b16 %v229
        %v432 = vunpack.c.l.b16 %v230
        %v433 = vunpack.c.l.b16 %v231
        %v434 = vunpack.c.l.b16 %v232
        %v435 = vunpack.c.l.b16 %v233
        %v436 = vunpack.c.l.b16 %v234
        %v437 = vunpack.c.l.b16 %v235
        %v438 = vunpack.c.l.b16 %v236
        %v439 = vunpack.c.l.b16 %v237
        %v440 = vunpack.c.l.b16 %v238
        %v441 = vunpack.c.l.b16 %v239
        %v442 = vunpack.c.l.b16 %v240
        %v443 = vunpack.c.l.b16 %v241
        %v444 = vunpack.c.l.b16 %v242
        %v445 = vunpack.c.l.b16 %v243
        %v446 = vunpack.c.l.b16 %v244
        %v447 = vunpack.c.l.b16 %v245
        %v448 = vunpack.c.l.b16 %v246
        %v449 = vunpack.c.l.b16 %v247
        %v450 = vunpack.c.l.b16 %v248
        %v451 = vunpack.c.l.b16 %v249
        %v452 = vunpack.c.l.b16 %v250
        %v453 = vunpack.c.l.b16 %v251
        %v454 = vunpack.c.l.b16 %v252
        %v455 = vunpack.c.l.b16 %v253
        %v456 = vunpack.c.l.b16 %v254
        %v457 = vunpack.c.l.b16 %v255
        %v458 = vunpack.c.l.b16 %v256
        %v459 = vunpack.c.l.b16 %v257
        %v460 = vunpack.c.l.b16 %v258
        %v461 = vunpack.c.l.b16 %v259
        %v462 = vunpack.c.l.b16 %v260
        %v463 = vunpack.c.l.b16 %v261
        %v464 = vunpack.c.l.b16 %v262
        %v465 = vunpack.c.l.b16 %v263
        %v466 = vunpack.c.l.b16 %v264
        %v467 = vunpack.c.l.b16 %v265
        %v468 = vunpack.c.l.b16 %v266
        %v469 = vunpack.c.l.b16 %v267
        %v470 = vunpack.c.l.b16 %v268
        %v471 = vunpack.c.l.b16 %v269
        %v472 = vunpack.c.l.b16 %v270
        %v473 = vunpack.c.l.b16 %v271
        %v474 = vunpack.c.l.b16 %v272
        %v475 = vunpack.c.l.b16 %v273
        %v476 = vunpack.c.l.b16 %v274
        %v477 = vunpack.c.l.b16 %v275
        %v478 = vunpack.c.l.b16 %v276
        %v479 = vunpack.c.l.b16 %v277
        %v480 = vunpack.c.l.b16 %v278
        %v481 = vunpack.c.l.b16 %v279
        %v482 = vunpack.c.l.b16 %v280
        %v483 = vunpack.c.l.b16 %v281
        %v484 = vunpack.c.l.b16 %v282
        %v485 = vunpack.c.l.b16 %v283
        %v486 = vunpack.c.l.b16 %v284
        %v487 = vunpack.c.l.b16 %v285
        %v488 = vunpack.c.l.b16 %v286
        %v489 = vunpack.c.l.b16 %v287
        %v490 = vunpack.c.l.b16 %v288
        %v491 = vunpack.c.l.b16 %v289
        %v492 = vunpack.c.l.b16 %v290
        %v493 = vunpack.c.l.b16 %v291
        %v494 = vunpack.c.l.b16 %v292
        %v495 = vunpack.c.l.b16 %v293
        %v496 = vunpack.c.l.b16 %v294
        %v497 = vunpack.c.l.b16 %v295
        %v498 = vunpack.c.l.b16 %v296
        %v499 = vunpack.c.l.b16 %v297
        %v500 = vunpack.c.l.b16 %v298
        %v501 = vunpack.c.l.b16 %v299
        %v502 = vunpack.c.l.b16 %v300
        %v503 = vunpack.c.l.b16 %v301
        %v504 = vunpack.c.l.b16 %v302
        %v505 = vunpack.c.l.b16 %v303
        %v506 = vunpack.c.l.b16 %v304
        %v507 = vpack.c.b16 %v410, %v409
        %v508 = vpack.c.b16 %v412, %v411
        %v509 = vpack.c.b16 %v414, %v413
        %v510 = vpack.c.b16 %v416, %v415
        %v511 = vpack.c.b16 %v418, %v417
        %v512 = vpack.c.b16 %v420, %v419
        %v513 = vpack.c.b16 %v422, %v421
        %v514 = vpack.c.b16 %v424, %v423
        %v515 = vpack.c.b16 %v426, %v425
        %v516 = vpack.c.b16 %v428, %v427
        %v517 = vpack.c.b16 %v430, %v429
        %v518 = vpack.c.b16 %v432, %v431
        %v519 = vpack.c.b16 %v434, %v433
        %v520 = vpack.c.b16 %v436, %v435
        %v521 = vpack.c.b16 %v438, %v437
        %v522 = vpack.c.b16 %v440, %v439
        %v523 = vpack.c.b16 %v442, %v441
        %v524 = vpack.c.b16 %v444, %v443
        %v525 = vpack.c.b16 %v446, %v445
        %v526 = vpack.c.b16 %v448, %v447
        %v527 = vpack.c.b16 %v450, %v449
        %v528 = vpack.c.b16 %v452, %v451
        %v529 = vpack.c.b16 %v454, %v453
        %v530 = vpack.c.b16 %v456, %v455
        %v531 = vpack.c.b16 %v458, %v457
        %v532 = vpack.c.b16 %v460, %v459
        %v533 = vpack.c.b16 %v462, %v461
        %v534 = vpack.c.b16 %v464, %v463
        %v535 = vpack.c.b16 %v466, %v465
        %v536 = vpack.c.b16 %v468, %v467
        %v537 = vpack.c.b16 %v470, %v469
        %v538 = vpack.c.b16 %v472, %v471
        %v539 = vpack.c.b16 %v474, %v473
        %v540 = vpack.c.b16 %v476, %v475
        %v541 = vpack.c.b16 %v478, %v477
        %v542 = vpack.c.b16 %v480, %v479
        %v543 = vpack.c.b16 %v482, %v481
        %v544 = vpack.c.b16 %v484, %v483
        %v545 = vpack.c.b16 %v486, %v485
        %v546 = vpack.c.b16 %v488, %v487
        %v547 = vpack.c.b16 %v490, %v489
        %v548 = vpack.c.b16 %v492, %v491
        %v549 = vpack.c.b16 %v494, %v493
        %v550 = vpack.c.b16 %v496, %v495
        %v551 = vpack.c.b16 %v498, %v497
        %v552 = vpack.c.b16 %v500, %v499
        %v553 = vpack.c.b16 %v502, %v501
        %v554 = vpack.c.b16 %v504, %v503
        %v555 = vpack.c.b16 %v506, %v505
        %v558 = vunpack.c.l.b16 %v305
        %v559 = vunpack.c.l.b16 %v306
        %v560 = vpack.c.b16 %v559, %v558
        %vm561 = vcmask 72704
        %v563 = vsel %vm561, %v507, 0
        %v566 = vsel %vm561, %v508, 0
        %v569 = vsel %vm561, %v509, 0
        %v572 = vsel %vm561, %v510, 0
        %v575 = vsel %vm561, %v511, 0
        %v578 = vsel %vm561, %v512, 0
        %v581 = vsel %vm561, %v513, 0
        %v584 = vsel %vm561, %v514, 0
        %v587 = vsel %vm561, %v515, 0
        %v590 = vsel %vm561, %v516, 0
        %v593 = vsel %vm561, %v517, 0
        %v596 = vsel %vm561, %v518, 0
        %v599 = vsel %vm561, %v519, 0
        %v602 = vsel %vm561, %v520, 0
        %v605 = vsel %vm561, %v521, 0
        %v608 = vsel %vm561, %v522, 0
        %v611 = vsel %vm561, %v523, 0
        %v614 = vsel %vm561, %v524, 0
        %v617 = vsel %vm561, %v525, 0
        %v620 = vsel %vm561, %v526, 0
        %v623 = vsel %vm561, %v527, 0
        %v626 = vsel %vm561, %v528, 0
        %v629 = vsel %vm561, %v529, 0
        %v632 = vsel %vm561, %v530, 0
        %v635 = vsel %vm561, %v531, 0
        %v638 = vsel %vm561, %v532, 0
        %v641 = vsel %vm561, %v533, 0
        %v644 = vsel %vm561, %v534, 0
        %v647 = vsel %vm561, %v535, 0
        %v650 = vsel %vm561, %v536, 0
        %v653 = vsel %vm561, %v537, 0
        %v656 = vsel %vm561, %v538, 0
        %v659 = vsel %vm561, %v539, 0
        %v662 = vsel %vm561, %v540, 0
        %v665 = vsel %vm561, %v541, 0
        %v668 = vsel %vm561, %v542, 0
        %v671 = vsel %vm561, %v543, 0
        %v674 = vsel %vm561, %v544, 0
        %v677 = vsel %vm561, %v545, 0
        %v680 = vsel %vm561, %v546, 0
        %v683 = vsel %vm561, %v547, 0
        %v686 = vsel %vm561, %v548, 0
        %v689 = vsel %vm561, %v549, 0
        %v692 = vsel %vm561, %v550, 0
        %v695 = vsel %vm561, %v551, 0
        %v698 = vsel %vm561, %v552, 0
        %v701 = vsel %vm561, %v553, 0
        %v704 = vsel %vm561, %v554, 0
        %v707 = vsel %vm561, %v555, 0
        %vm709 = vcmask 1043456
        %vm710 = vcmask 1044480
        %v711 = vsel %vm709, 4294967295, 65535
        %v712 = vsel %vm710, %v711, 0
        %v714 = vand.u32 %v560, %v712
        %716 = vmatpush.bf16.msra.mxu0 0
        %717 = vmatpush.bf16.msra.mxu0 0
        %718 = vmatpush.bf16.msra.mxu0 0
        %719 = vmatpush.bf16.msra.mxu0 0
        %720 = vmatpush.bf16.msra.mxu0 0
        %721 = vmatpush.bf16.msra.mxu0 0
        %722 = vmatpush.bf16.msra.mxu0 0
        %723 = vmatpush.bf16.msra.mxu0 %v714
        %724 = vmatmul.bf16.gmra.mxu0 %v563
        %v725 = vpop.f32.mrf.mxu0
        %v726 = vadd.f32 %v309, %v725
        %v727 = vpop.f32.mrf.mxu0
        %v728 = vadd.f32 %v309, %v727
        %729 = vmatmul.bf16.gmra.mxu0 %v566
        %v730 = vpop.f32.mrf.mxu0
        %v731 = vadd.f32 %v309, %v730
        %v732 = vpop.f32.mrf.mxu0
        %v733 = vadd.f32 %v309, %v732
        %734 = vmatmul.bf16.gmra.mxu0 %v569
        %v735 = vpop.f32.mrf.mxu0
        %v736 = vadd.f32 %v309, %v735
        %v737 = vpop.f32.mrf.mxu0
        %v738 = vadd.f32 %v309, %v737
        %739 = vmatmul.bf16.gmra.mxu0 %v572
        %v740 = vpop.f32.mrf.mxu0
        %v741 = vadd.f32 %v309, %v740
        %v742 = vpop.f32.mrf.mxu0
        %v743 = vadd.f32 %v309, %v742
        %744 = vmatmul.bf16.gmra.mxu0 %v575
        %v745 = vpop.f32.mrf.mxu0
        %v746 = vadd.f32 %v309, %v745
        %v747 = vpop.f32.mrf.mxu0
        %v748 = vadd.f32 %v309, %v747
        %749 = vmatmul.bf16.gmra.mxu0 %v578
        %v750 = vpop.f32.mrf.mxu0
        %v751 = vadd.f32 %v309, %v750
        %v752 = vpop.f32.mrf.mxu0
        %v753 = vadd.f32 %v309, %v752
        %754 = vmatmul.bf16.gmra.mxu0 %v581
        %v755 = vpop.f32.mrf.mxu0
        %v756 = vadd.f32 %v309, %v755
        %v757 = vpop.f32.mrf.mxu0
        %v758 = vadd.f32 %v309, %v757
        %759 = vmatmul.bf16.gmra.mxu0 %v584
        %v760 = vpop.f32.mrf.mxu0
        %v761 = vadd.f32 %v309, %v760
        %v762 = vpop.f32.mrf.mxu0
        %v763 = vadd.f32 %v309, %v762
        %764 = vmatmul.bf16.gmra.mxu0 %v587
        %v765 = vpop.f32.mrf.mxu0
        %v766 = vadd.f32 %v309, %v765
        %v767 = vpop.f32.mrf.mxu0
        %v768 = vadd.f32 %v309, %v767
        %769 = vmatmul.bf16.gmra.mxu0 %v590
        %v770 = vpop.f32.mrf.mxu0
        %v771 = vadd.f32 %v309, %v770
        %v772 = vpop.f32.mrf.mxu0
        %v773 = vadd.f32 %v309, %v772
        %774 = vmatmul.bf16.gmra.mxu0 %v593
        %v775 = vpop.f32.mrf.mxu0
        %v776 = vadd.f32 %v309, %v775
        %v777 = vpop.f32.mrf.mxu0
        %v778 = vadd.f32 %v309, %v777
        %779 = vmatmul.bf16.gmra.mxu0 %v596
        %v780 = vpop.f32.mrf.mxu0
        %v781 = vadd.f32 %v309, %v780
        %v782 = vpop.f32.mrf.mxu0
        %v783 = vadd.f32 %v309, %v782
        %784 = vmatmul.bf16.gmra.mxu0 %v599
        %v785 = vpop.f32.mrf.mxu0
        %v786 = vadd.f32 %v309, %v785
        %v787 = vpop.f32.mrf.mxu0
        %v788 = vadd.f32 %v309, %v787
        %789 = vmatmul.bf16.gmra.mxu0 %v602
        %v790 = vpop.f32.mrf.mxu0
        %v791 = vadd.f32 %v309, %v790
        %v792 = vpop.f32.mrf.mxu0
        %v793 = vadd.f32 %v309, %v792
        %794 = vmatmul.bf16.gmra.mxu0 %v605
        %v795 = vpop.f32.mrf.mxu0
        %v796 = vadd.f32 %v309, %v795
        %v797 = vpop.f32.mrf.mxu0
        %v798 = vadd.f32 %v309, %v797
        %799 = vmatmul.bf16.gmra.mxu0 %v608
        %v800 = vpop.f32.mrf.mxu0
        %v801 = vadd.f32 %v309, %v800
        %v802 = vpop.f32.mrf.mxu0
        %v803 = vadd.f32 %v309, %v802
        %804 = vmatmul.bf16.gmra.mxu0 %v611
        %v805 = vpop.f32.mrf.mxu0
        %v806 = vadd.f32 %v309, %v805
        %v807 = vpop.f32.mrf.mxu0
        %v808 = vadd.f32 %v309, %v807
        %809 = vmatmul.bf16.gmra.mxu0 %v614
        %v810 = vpop.f32.mrf.mxu0
        %v811 = vadd.f32 %v309, %v810
        %v812 = vpop.f32.mrf.mxu0
        %v813 = vadd.f32 %v309, %v812
        %814 = vmatmul.bf16.gmra.mxu0 %v617
        %v815 = vpop.f32.mrf.mxu0
        %v816 = vadd.f32 %v309, %v815
        %v817 = vpop.f32.mrf.mxu0
        %v818 = vadd.f32 %v309, %v817
        %819 = vmatmul.bf16.gmra.mxu0 %v620
        %v820 = vpop.f32.mrf.mxu0
        %v821 = vadd.f32 %v309, %v820
        %v822 = vpop.f32.mrf.mxu0
        %v823 = vadd.f32 %v309, %v822
        %824 = vmatmul.bf16.gmra.mxu0 %v623
        %v825 = vpop.f32.mrf.mxu0
        %v826 = vadd.f32 %v309, %v825
        %v827 = vpop.f32.mrf.mxu0
        %v828 = vadd.f32 %v309, %v827
        %829 = vmatmul.bf16.gmra.mxu0 %v626
        %v830 = vpop.f32.mrf.mxu0
        %v831 = vadd.f32 %v309, %v830
        %v832 = vpop.f32.mrf.mxu0
        %v833 = vadd.f32 %v309, %v832
        %834 = vmatmul.bf16.gmra.mxu0 %v629
        %v835 = vpop.f32.mrf.mxu0
        %v836 = vadd.f32 %v309, %v835
        %v837 = vpop.f32.mrf.mxu0
        %v838 = vadd.f32 %v309, %v837
        %839 = vmatmul.bf16.gmra.mxu0 %v632
        %v840 = vpop.f32.mrf.mxu0
        %v841 = vadd.f32 %v309, %v840
        %v842 = vpop.f32.mrf.mxu0
        %v843 = vadd.f32 %v309, %v842
        %844 = vmatmul.bf16.gmra.mxu0 %v635
        %v845 = vpop.f32.mrf.mxu0
        %v846 = vadd.f32 %v309, %v845
        %v847 = vpop.f32.mrf.mxu0
        %v848 = vadd.f32 %v309, %v847
        %849 = vmatmul.bf16.gmra.mxu0 %v638
        %v850 = vpop.f32.mrf.mxu0
        %v851 = vadd.f32 %v309, %v850
        %v852 = vpop.f32.mrf.mxu0
        %v853 = vadd.f32 %v309, %v852
        %854 = vmatmul.bf16.gmra.mxu0 %v641
        %v855 = vpop.f32.mrf.mxu0
        %v856 = vadd.f32 %v309, %v855
        %v857 = vpop.f32.mrf.mxu0
        %v858 = vadd.f32 %v309, %v857
        %859 = vmatmul.bf16.gmra.mxu0 %v644
        %v860 = vpop.f32.mrf.mxu0
        %v861 = vadd.f32 %v309, %v860
        %v862 = vpop.f32.mrf.mxu0
        %v863 = vadd.f32 %v309, %v862
        %864 = vmatmul.bf16.gmra.mxu0 %v647
        %v865 = vpop.f32.mrf.mxu0
        %v866 = vadd.f32 %v309, %v865
        %v867 = vpop.f32.mrf.mxu0
        %v868 = vadd.f32 %v309, %v867
        %869 = vmatmul.bf16.gmra.mxu0 %v650
        %v870 = vpop.f32.mrf.mxu0
        %v871 = vadd.f32 %v309, %v870
        %v872 = vpop.f32.mrf.mxu0
        %v873 = vadd.f32 %v309, %v872
        %874 = vmatmul.bf16.gmra.mxu0 %v653
        %v875 = vpop.f32.mrf.mxu0
        %v876 = vadd.f32 %v309, %v875
        %v877 = vpop.f32.mrf.mxu0
        %v878 = vadd.f32 %v309, %v877
        %879 = vmatmul.bf16.gmra.mxu0 %v656
        %v880 = vpop.f32.mrf.mxu0
        %v881 = vadd.f32 %v309, %v880
        %v882 = vpop.f32.mrf.mxu0
        %v883 = vadd.f32 %v309, %v882
        %884 = vmatmul.bf16.gmra.mxu0 %v659
        %v885 = vpop.f32.mrf.mxu0
        %v886 = vadd.f32 %v309, %v885
        %v887 = vpop.f32.mrf.mxu0
        %v888 = vadd.f32 %v309, %v887
        %889 = vmatmul.bf16.gmra.mxu0 %v662
        %v890 = vpop.f32.mrf.mxu0
        %v891 = vadd.f32 %v309, %v890
        %v892 = vpop.f32.mrf.mxu0
        %v893 = vadd.f32 %v309, %v892
        %894 = vmatmul.bf16.gmra.mxu0 %v665
        %v895 = vpop.f32.mrf.mxu0
        %v896 = vadd.f32 %v309, %v895
        %v897 = vpop.f32.mrf.mxu0
        %v898 = vadd.f32 %v309, %v897
        %899 = vmatmul.bf16.gmra.mxu0 %v668
        %v900 = vpop.f32.mrf.mxu0
        %v901 = vadd.f32 %v309, %v900
        %v902 = vpop.f32.mrf.mxu0
        %v903 = vadd.f32 %v309, %v902
        %904 = vmatmul.bf16.gmra.mxu0 %v671
        %v905 = vpop.f32.mrf.mxu0
        %v906 = vadd.f32 %v309, %v905
        %v907 = vpop.f32.mrf.mxu0
        %v908 = vadd.f32 %v309, %v907
        %909 = vmatmul.bf16.gmra.mxu0 %v674
        %v910 = vpop.f32.mrf.mxu0
        %v911 = vadd.f32 %v309, %v910
        %v912 = vpop.f32.mrf.mxu0
        %v913 = vadd.f32 %v309, %v912
        %914 = vmatmul.bf16.gmra.mxu0 %v677
        %v915 = vpop.f32.mrf.mxu0
        %v916 = vadd.f32 %v309, %v915
        %v917 = vpop.f32.mrf.mxu0
        %v918 = vadd.f32 %v309, %v917
        %919 = vmatmul.bf16.gmra.mxu0 %v680
        %v920 = vpop.f32.mrf.mxu0
        %v921 = vadd.f32 %v309, %v920
        %v922 = vpop.f32.mrf.mxu0
        %v923 = vadd.f32 %v309, %v922
        %924 = vmatmul.bf16.gmra.mxu0 %v683
        %v925 = vpop.f32.mrf.mxu0
        %v926 = vadd.f32 %v309, %v925
        %v927 = vpop.f32.mrf.mxu0
        %v928 = vadd.f32 %v309, %v927
        %929 = vmatmul.bf16.gmra.mxu0 %v686
        %v930 = vpop.f32.mrf.mxu0
        %v931 = vadd.f32 %v309, %v930
        %v932 = vpop.f32.mrf.mxu0
        %v933 = vadd.f32 %v309, %v932
        %934 = vmatmul.bf16.gmra.mxu0 %v689
        %v935 = vpop.f32.mrf.mxu0
        %v936 = vadd.f32 %v309, %v935
        %v937 = vpop.f32.mrf.mxu0
        %v938 = vadd.f32 %v309, %v937
        %939 = vmatmul.bf16.gmra.mxu0 %v692
        %v940 = vpop.f32.mrf.mxu0
        %v941 = vadd.f32 %v309, %v940
        %v942 = vpop.f32.mrf.mxu0
        %v943 = vadd.f32 %v309, %v942
        %944 = vmatmul.bf16.gmra.mxu0 %v695
        %v945 = vpop.f32.mrf.mxu0
        %v946 = vadd.f32 %v309, %v945
        %v947 = vpop.f32.mrf.mxu0
        %v948 = vadd.f32 %v309, %v947
        %949 = vmatmul.bf16.gmra.mxu0 %v698
        %v950 = vpop.f32.mrf.mxu0
        %v951 = vadd.f32 %v309, %v950
        %v952 = vpop.f32.mrf.mxu0
        %v953 = vadd.f32 %v309, %v952
        %954 = vmatmul.bf16.gmra.mxu0 %v701
        %v955 = vpop.f32.mrf.mxu0
        %v956 = vadd.f32 %v309, %v955
        %v957 = vpop.f32.mrf.mxu0
        %v958 = vadd.f32 %v309, %v957
        %959 = vmatmul.bf16.gmra.mxu0 %v704
        %v960 = vpop.f32.mrf.mxu0
        %v961 = vadd.f32 %v309, %v960
        %v962 = vpop.f32.mrf.mxu0
        %v963 = vadd.f32 %v309, %v962
        %964 = vmatmul.bf16.gmra.mxu0 %v707
        %v965 = vpop.f32.mrf.mxu0
        %v966 = vadd.f32 %v309, %v965
        %v967 = vpop.f32.mrf.mxu0
        %v968 = vadd.f32 %v309, %v967
        %969 = vdwg.mxu0
        %v970 = vmax.f32 %v726, 0.0
        %v971 = vmax.f32 %v728, 0.0
        %v972 = vmax.f32 %v731, 0.0
        %v973 = vmax.f32 %v733, 0.0
        %v974 = vmax.f32 %v736, 0.0
        %v975 = vmax.f32 %v738, 0.0
        %v976 = vmax.f32 %v741, 0.0
        %v977 = vmax.f32 %v743, 0.0
        %v978 = vmax.f32 %v746, 0.0
        %v979 = vmax.f32 %v748, 0.0
        %v980 = vmax.f32 %v751, 0.0
        %v981 = vmax.f32 %v753, 0.0
        %v982 = vmax.f32 %v756, 0.0
        %v983 = vmax.f32 %v758, 0.0
        %v984 = vmax.f32 %v761, 0.0
        %v985 = vmax.f32 %v763, 0.0
        %v986 = vmax.f32 %v766, 0.0
        %v987 = vmax.f32 %v768, 0.0
        %v988 = vmax.f32 %v771, 0.0
        %v989 = vmax.f32 %v773, 0.0
        %v990 = vmax.f32 %v776, 0.0
        %v991 = vmax.f32 %v778, 0.0
        %v992 = vmax.f32 %v781, 0.0
        %v993 = vmax.f32 %v783, 0.0
        %v994 = vmax.f32 %v786, 0.0
        %v995 = vmax.f32 %v788, 0.0
        %v996 = vmax.f32 %v791, 0.0
        %v997 = vmax.f32 %v793, 0.0
        %v998 = vmax.f32 %v796, 0.0
        %v999 = vmax.f32 %v798, 0.0
        %v1000 = vmax.f32 %v801, 0.0
        %v1001 = vmax.f32 %v803, 0.0
        %v1002 = vmax.f32 %v806, 0.0
        %v1003 = vmax.f32 %v808, 0.0
        %v1004 = vmax.f32 %v811, 0.0
        %v1005 = vmax.f32 %v813, 0.0
        %v1006 = vmax.f32 %v816, 0.0
        %v1007 = vmax.f32 %v818, 0.0
        %v1008 = vmax.f32 %v821, 0.0
        %v1009 = vmax.f32 %v823, 0.0
        %v1010 = vmax.f32 %v826, 0.0
        %v1011 = vmax.f32 %v828, 0.0
        %v1012 = vmax.f32 %v831, 0.0
        %v1013 = vmax.f32 %v833, 0.0
        %v1014 = vmax.f32 %v836, 0.0
        %v1015 = vmax.f32 %v838, 0.0
        %v1016 = vmax.f32 %v841, 0.0
        %v1017 = vmax.f32 %v843, 0.0
        %v1018 = vmax.f32 %v846, 0.0
        %v1019 = vmax.f32 %v848, 0.0
        %v1020 = vmax.f32 %v851, 0.0
        %v1021 = vmax.f32 %v853, 0.0
        %v1022 = vmax.f32 %v856, 0.0
        %v1023 = vmax.f32 %v858, 0.0
        %v1024 = vmax.f32 %v861, 0.0
        %v1025 = vmax.f32 %v863, 0.0
        %v1026 = vmax.f32 %v866, 0.0
        %v1027 = vmax.f32 %v868, 0.0
        %v1028 = vmax.f32 %v871, 0.0
        %v1029 = vmax.f32 %v873, 0.0
        %v1030 = vmax.f32 %v876, 0.0
        %v1031 = vmax.f32 %v878, 0.0
        %v1032 = vmax.f32 %v881, 0.0
        %v1033 = vmax.f32 %v883, 0.0
        %v1034 = vmax.f32 %v886, 0.0
        %v1035 = vmax.f32 %v888, 0.0
        %v1036 = vmax.f32 %v891, 0.0
        %v1037 = vmax.f32 %v893, 0.0
        %v1038 = vmax.f32 %v896, 0.0
        %v1039 = vmax.f32 %v898, 0.0
        %v1040 = vmax.f32 %v901, 0.0
        %v1041 = vmax.f32 %v903, 0.0
        %v1042 = vmax.f32 %v906, 0.0
        %v1043 = vmax.f32 %v908, 0.0
        %v1044 = vmax.f32 %v911, 0.0
        %v1045 = vmax.f32 %v913, 0.0
        %v1046 = vmax.f32 %v916, 0.0
        %v1047 = vmax.f32 %v918, 0.0
        %v1048 = vmax.f32 %v921, 0.0
        %v1049 = vmax.f32 %v923, 0.0
        %v1050 = vmax.f32 %v926, 0.0
        %v1051 = vmax.f32 %v928, 0.0
        %v1052 = vmax.f32 %v931, 0.0
        %v1053 = vmax.f32 %v933, 0.0
        %v1054 = vmax.f32 %v936, 0.0
        %v1055 = vmax.f32 %v938, 0.0
        %v1056 = vmax.f32 %v941, 0.0
        %v1057 = vmax.f32 %v943, 0.0
        %v1058 = vmax.f32 %v946, 0.0
        %v1059 = vmax.f32 %v948, 0.0
        %v1060 = vmax.f32 %v951, 0.0
        %v1061 = vmax.f32 %v953, 0.0
        %v1062 = vmax.f32 %v956, 0.0
        %v1063 = vmax.f32 %v958, 0.0
        %v1064 = vmax.f32 %v961, 0.0
        %v1065 = vmax.f32 %v963, 0.0
        %v1066 = vmax.f32 %v966, 0.0
        %v1067 = vmax.f32 %v968, 0.0
        %v1068 = vpack.c.bf16 %v970, %v970
        %v1069 = vpack.c.bf16 %v971, %v971
        %v1070 = vpack.c.bf16 %v972, %v972
        %v1071 = vpack.c.bf16 %v973, %v973
        %v1072 = vpack.c.bf16 %v974, %v974
        %v1073 = vpack.c.bf16 %v975, %v975
        %v1074 = vpack.c.bf16 %v976, %v976
        %v1075 = vpack.c.bf16 %v977, %v977
        %v1076 = vpack.c.bf16 %v978, %v978
        %v1077 = vpack.c.bf16 %v979, %v979
        %v1078 = vpack.c.bf16 %v980, %v980
        %v1079 = vpack.c.bf16 %v981, %v981
        %v1080 = vpack.c.bf16 %v982, %v982
        %v1081 = vpack.c.bf16 %v983, %v983
        %v1082 = vpack.c.bf16 %v984, %v984
        %v1083 = vpack.c.bf16 %v985, %v985
        %v1084 = vpack.c.bf16 %v986, %v986
        %v1085 = vpack.c.bf16 %v987, %v987
        %v1086 = vpack.c.bf16 %v988, %v988
        %v1087 = vpack.c.bf16 %v989, %v989
        %v1088 = vpack.c.bf16 %v990, %v990
        %v1089 = vpack.c.bf16 %v991, %v991
        %v1090 = vpack.c.bf16 %v992, %v992
        %v1091 = vpack.c.bf16 %v993, %v993
        %v1092 = vpack.c.bf16 %v994, %v994
        %v1093 = vpack.c.bf16 %v995, %v995
        %v1094 = vpack.c.bf16 %v996, %v996
        %v1095 = vpack.c.bf16 %v997, %v997
        %v1096 = vpack.c.bf16 %v998, %v998
        %v1097 = vpack.c.bf16 %v999, %v999
        %v1098 = vpack.c.bf16 %v1000, %v1000
        %v1099 = vpack.c.bf16 %v1001, %v1001
        %v1100 = vpack.c.bf16 %v1002, %v1002
        %v1101 = vpack.c.bf16 %v1003, %v1003
        %v1102 = vpack.c.bf16 %v1004, %v1004
        %v1103 = vpack.c.bf16 %v1005, %v1005
        %v1104 = vpack.c.bf16 %v1006, %v1006
        %v1105 = vpack.c.bf16 %v1007, %v1007
        %v1106 = vpack.c.bf16 %v1008, %v1008
        %v1107 = vpack.c.bf16 %v1009, %v1009
        %v1108 = vpack.c.bf16 %v1010, %v1010
        %v1109 = vpack.c.bf16 %v1011, %v1011
        %v1110 = vpack.c.bf16 %v1012, %v1012
        %v1111 = vpack.c.bf16 %v1013, %v1013
        %v1112 = vpack.c.bf16 %v1014, %v1014
        %v1113 = vpack.c.bf16 %v1015, %v1015
        %v1114 = vpack.c.bf16 %v1016, %v1016
        %v1115 = vpack.c.bf16 %v1017, %v1017
        %v1116 = vpack.c.bf16 %v1018, %v1018
        %v1117 = vpack.c.bf16 %v1019, %v1019
        %v1118 = vpack.c.bf16 %v1020, %v1020
        %v1119 = vpack.c.bf16 %v1021, %v1021
        %v1120 = vpack.c.bf16 %v1022, %v1022
        %v1121 = vpack.c.bf16 %v1023, %v1023
        %v1122 = vpack.c.bf16 %v1024, %v1024
        %v1123 = vpack.c.bf16 %v1025, %v1025
        %v1124 = vpack.c.bf16 %v1026, %v1026
        %v1125 = vpack.c.bf16 %v1027, %v1027
        %v1126 = vpack.c.bf16 %v1028, %v1028
        %v1127 = vpack.c.bf16 %v1029, %v1029
        %v1128 = vpack.c.bf16 %v1030, %v1030
        %v1129 = vpack.c.bf16 %v1031, %v1031
        %v1130 = vpack.c.bf16 %v1032, %v1032
        %v1131 = vpack.c.bf16 %v1033, %v1033
        %v1132 = vpack.c.bf16 %v1034, %v1034
        %v1133 = vpack.c.bf16 %v1035, %v1035
        %v1134 = vpack.c.bf16 %v1036, %v1036
        %v1135 = vpack.c.bf16 %v1037, %v1037
        %v1136 = vpack.c.bf16 %v1038, %v1038
        %v1137 = vpack.c.bf16 %v1039, %v1039
        %v1138 = vpack.c.bf16 %v1040, %v1040
        %v1139 = vpack.c.bf16 %v1041, %v1041
        %v1140 = vpack.c.bf16 %v1042, %v1042
        %v1141 = vpack.c.bf16 %v1043, %v1043
        %v1142 = vpack.c.bf16 %v1044, %v1044
        %v1143 = vpack.c.bf16 %v1045, %v1045
        %v1144 = vpack.c.bf16 %v1046, %v1046
        %v1145 = vpack.c.bf16 %v1047, %v1047
        %v1146 = vpack.c.bf16 %v1048, %v1048
        %v1147 = vpack.c.bf16 %v1049, %v1049
        %v1148 = vpack.c.bf16 %v1050, %v1050
        %v1149 = vpack.c.bf16 %v1051, %v1051
        %v1150 = vpack.c.bf16 %v1052, %v1052
        %v1151 = vpack.c.bf16 %v1053, %v1053
        %v1152 = vpack.c.bf16 %v1054, %v1054
        %v1153 = vpack.c.bf16 %v1055, %v1055
        %v1154 = vpack.c.bf16 %v1056, %v1056
        %v1155 = vpack.c.bf16 %v1057, %v1057
        %v1156 = vpack.c.bf16 %v1058, %v1058
        %v1157 = vpack.c.bf16 %v1059, %v1059
        %v1158 = vpack.c.bf16 %v1060, %v1060
        %v1159 = vpack.c.bf16 %v1061, %v1061
        %v1160 = vpack.c.bf16 %v1062, %v1062
        %v1161 = vpack.c.bf16 %v1063, %v1063
        %v1162 = vpack.c.bf16 %v1064, %v1064
        %v1163 = vpack.c.bf16 %v1065, %v1065
        %v1164 = vpack.c.bf16 %v1066, %v1066
        %v1165 = vpack.c.bf16 %v1067, %v1067
        %vm1166 = vcmask 125952
        %1167 = vst.msk [vmem:[%s204] sm:$0xf] %vm1166, %v1068
        %1168 = vst.msk [vmem:[%s204 + $0x4] sm:$0xf] %vm1166, %v1069
        %1169 = vst.msk [vmem:[%s204 + $0x8] sm:$0xf] %vm1166, %v1070
        %1170 = vst.msk [vmem:[%s204 + $0xc] sm:$0xf] %vm1166, %v1071
        %1171 = vst.msk [vmem:[%s204 + $0x10] sm:$0xf] %vm1166, %v1072
        %1172 = vst.msk [vmem:[%s204 + $0x14] sm:$0xf] %vm1166, %v1073
        %1173 = vst.msk [vmem:[%s204 + $0x18] sm:$0xf] %vm1166, %v1074
        %1174 = vst.msk [vmem:[%s204 + $0x1c] sm:$0xf] %vm1166, %v1075
        %1175 = vst.msk [vmem:[%s204 + $0x20] sm:$0xf] %vm1166, %v1076
        %1176 = vst.msk [vmem:[%s204 + $0x24] sm:$0xf] %vm1166, %v1077
        %1177 = vst.msk [vmem:[%s204 + $0x28] sm:$0xf] %vm1166, %v1078
        %1178 = vst.msk [vmem:[%s204 + $0x2c] sm:$0xf] %vm1166, %v1079
        %1179 = vst.msk [vmem:[%s204 + $0x30] sm:$0xf] %vm1166, %v1080
        %1180 = vst.msk [vmem:[%s204 + $0x34] sm:$0xf] %vm1166, %v1081
        %1181 = vst.msk [vmem:[%s204 + $0x38] sm:$0xf] %vm1166, %v1082
        %1182 = vst.msk [vmem:[%s204 + $0x3c] sm:$0xf] %vm1166, %v1083
        %1183 = vst.msk [vmem:[%s204 + $0x40] sm:$0xf] %vm1166, %v1084
        %1184 = vst.msk [vmem:[%s204 + $0x44] sm:$0xf] %vm1166, %v1085
        %1185 = vst.msk [vmem:[%s204 + $0x48] sm:$0xf] %vm1166, %v1086
        %1186 = vst.msk [vmem:[%s204 + $0x4c] sm:$0xf] %vm1166, %v1087
        %1187 = vst.msk [vmem:[%s204 + $0x50] sm:$0xf] %vm1166, %v1088
        %1188 = vst.msk [vmem:[%s204 + $0x54] sm:$0xf] %vm1166, %v1089
        %1189 = vst.msk [vmem:[%s204 + $0x58] sm:$0xf] %vm1166, %v1090
        %1190 = vst.msk [vmem:[%s204 + $0x5c] sm:$0xf] %vm1166, %v1091
        %1191 = vst.msk [vmem:[%s204 + $0x60] sm:$0xf] %vm1166, %v1092
        %1192 = vst.msk [vmem:[%s204 + $0x64] sm:$0xf] %vm1166, %v1093
        %1193 = vst.msk [vmem:[%s204 + $0x68] sm:$0xf] %vm1166, %v1094
        %1194 = vst.msk [vmem:[%s204 + $0x6c] sm:$0xf] %vm1166, %v1095
        %1195 = vst.msk [vmem:[%s204 + $0x70] sm:$0xf] %vm1166, %v1096
        %1196 = vst.msk [vmem:[%s204 + $0x74] sm:$0xf] %vm1166, %v1097
        %1197 = vst.msk [vmem:[%s204 + $0x78] sm:$0xf] %vm1166, %v1098
        %1198 = vst.msk [vmem:[%s204 + $0x7c] sm:$0xf] %vm1166, %v1099
        %1199 = vst.msk [vmem:[%s204 + $0x80] sm:$0xf] %vm1166, %v1100
        %1200 = vst.msk [vmem:[%s204 + $0x84] sm:$0xf] %vm1166, %v1101
        %1201 = vst.msk [vmem:[%s204 + $0x88] sm:$0xf] %vm1166, %v1102
        %1202 = vst.msk [vmem:[%s204 + $0x8c] sm:$0xf] %vm1166, %v1103
        %1203 = vst.msk [vmem:[%s204 + $0x90] sm:$0xf] %vm1166, %v1104
        %1204 = vst.msk [vmem:[%s204 + $0x94] sm:$0xf] %vm1166, %v1105
        %1205 = vst.msk [vmem:[%s204 + $0x98] sm:$0xf] %vm1166, %v1106
        %1206 = vst.msk [vmem:[%s204 + $0x9c] sm:$0xf] %vm1166, %v1107
        %1207 = vst.msk [vmem:[%s204 + $0xa0] sm:$0xf] %vm1166, %v1108
        %1208 = vst.msk [vmem:[%s204 + $0xa4] sm:$0xf] %vm1166, %v1109
        %1209 = vst.msk [vmem:[%s204 + $0xa8] sm:$0xf] %vm1166, %v1110
        %1210 = vst.msk [vmem:[%s204 + $0xac] sm:$0xf] %vm1166, %v1111
        %1211 = vst.msk [vmem:[%s204 + $0xb0] sm:$0xf] %vm1166, %v1112
        %1212 = vst.msk [vmem:[%s204 + $0xb4] sm:$0xf] %vm1166, %v1113
        %1213 = vst.msk [vmem:[%s204 + $0xb8] sm:$0xf] %vm1166, %v1114
        %1214 = vst.msk [vmem:[%s204 + $0xbc] sm:$0xf] %vm1166, %v1115
        %1215 = vst.msk [vmem:[%s204 + $0xc0] sm:$0xf] %vm1166, %v1116
        %1216 = vst.msk [vmem:[%s204 + $0xc4] sm:$0xf] %vm1166, %v1117
        %1217 = vst.msk [vmem:[%s204 + $0xc8] sm:$0xf] %vm1166, %v1118
        %1218 = vst.msk [vmem:[%s204 + $0xcc] sm:$0xf] %vm1166, %v1119
        %1219 = vst.msk [vmem:[%s204 + $0xd0] sm:$0xf] %vm1166, %v1120
        %1220 = vst.msk [vmem:[%s204 + $0xd4] sm:$0xf] %vm1166, %v1121
        %1221 = vst.msk [vmem:[%s204 + $0xd8] sm:$0xf] %vm1166, %v1122
        %1222 = vst.msk [vmem:[%s204 + $0xdc] sm:$0xf] %vm1166, %v1123
        %1223 = vst.msk [vmem:[%s204 + $0xe0] sm:$0xf] %vm1166, %v1124
        %1224 = vst.msk [vmem:[%s204 + $0xe4] sm:$0xf] %vm1166, %v1125
        %1225 = vst.msk [vmem:[%s204 + $0xe8] sm:$0xf] %vm1166, %v1126
        %1226 = vst.msk [vmem:[%s204 + $0xec] sm:$0xf] %vm1166, %v1127
        %1227 = vst.msk [vmem:[%s204 + $0xf0] sm:$0xf] %vm1166, %v1128
        %1228 = vst.msk [vmem:[%s204 + $0xf4] sm:$0xf] %vm1166, %v1129
        %1229 = vst.msk [vmem:[%s204 + $0xf8] sm:$0xf] %vm1166, %v1130
        %1230 = vst.msk [vmem:[%s204 + $0xfc] sm:$0xf] %vm1166, %v1131
        %1231 = vst.msk [vmem:[%s204 + $0x100] sm:$0xf] %vm1166, %v1132
        %1232 = vst.msk [vmem:[%s204 + $0x104] sm:$0xf] %vm1166, %v1133
        %1233 = vst.msk [vmem:[%s204 + $0x108] sm:$0xf] %vm1166, %v1134
        %1234 = vst.msk [vmem:[%s204 + $0x10c] sm:$0xf] %vm1166, %v1135
        %1235 = vst.msk [vmem:[%s204 + $0x110] sm:$0xf] %vm1166, %v1136
        %1236 = vst.msk [vmem:[%s204 + $0x114] sm:$0xf] %vm1166, %v1137
        %1237 = vst.msk [vmem:[%s204 + $0x118] sm:$0xf] %vm1166, %v1138
        %1238 = vst.msk [vmem:[%s204 + $0x11c] sm:$0xf] %vm1166, %v1139
        %1239 = vst.msk [vmem:[%s204 + $0x120] sm:$0xf] %vm1166, %v1140
        %1240 = vst.msk [vmem:[%s204 + $0x124] sm:$0xf] %vm1166, %v1141
        %1241 = vst.msk [vmem:[%s204 + $0x128] sm:$0xf] %vm1166, %v1142
        %1242 = vst.msk [vmem:[%s204 + $0x12c] sm:$0xf] %vm1166, %v1143
        %1243 = vst.msk [vmem:[%s204 + $0x130] sm:$0xf] %vm1166, %v1144
        %1244 = vst.msk [vmem:[%s204 + $0x134] sm:$0xf] %vm1166, %v1145
        %1245 = vst.msk [vmem:[%s204 + $0x138] sm:$0xf] %vm1166, %v1146
        %1246 = vst.msk [vmem:[%s204 + $0x13c] sm:$0xf] %vm1166, %v1147
        %1247 = vst.msk [vmem:[%s204 + $0x140] sm:$0xf] %vm1166, %v1148
        %1248 = vst.msk [vmem:[%s204 + $0x144] sm:$0xf] %vm1166, %v1149
        %1249 = vst.msk [vmem:[%s204 + $0x148] sm:$0xf] %vm1166, %v1150
        %1250 = vst.msk [vmem:[%s204 + $0x14c] sm:$0xf] %vm1166, %v1151
        %1251 = vst.msk [vmem:[%s204 + $0x150] sm:$0xf] %vm1166, %v1152
        %1252 = vst.msk [vmem:[%s204 + $0x154] sm:$0xf] %vm1166, %v1153
        %1253 = vst.msk [vmem:[%s204 + $0x158] sm:$0xf] %vm1166, %v1154
        %1254 = vst.msk [vmem:[%s204 + $0x15c] sm:$0xf] %vm1166, %v1155
        %1255 = vst.msk [vmem:[%s204 + $0x160] sm:$0xf] %vm1166, %v1156
        %1256 = vst.msk [vmem:[%s204 + $0x164] sm:$0xf] %vm1166, %v1157
        %1257 = vst.msk [vmem:[%s204 + $0x168] sm:$0xf] %vm1166, %v1158
        %1258 = vst.msk [vmem:[%s204 + $0x16c] sm:$0xf] %vm1166, %v1159
        %1259 = vst.msk [vmem:[%s204 + $0x170] sm:$0xf] %vm1166, %v1160
        %1260 = vst.msk [vmem:[%s204 + $0x174] sm:$0xf] %vm1166, %v1161
        %1261 = vst.msk [vmem:[%s204 + $0x178] sm:$0xf] %vm1166, %v1162
        %1262 = vst.msk [vmem:[%s204 + $0x17c] sm:$0xf] %vm1166, %v1163
        %1263 = vst.msk [vmem:[%s204 + $0x180] sm:$0xf] %vm1166, %v1164
        %1264 = vst.msk [vmem:[%s204 + $0x184] sm:$0xf] %vm1166, %v1165
        %s1265 = smul.u32 98, %s16
        %p1266 = scmp.lt.s32.totalorder %s1265, 195
        %s1267 = scalar_select %p1266, %s1265, 195
        %s1268 = smul.addr %s1267, 4
        %s1269 = scalar_lea.vmem %s3, %s1268
        // Predicated region
        $region41: #{resnet10_emnist_forward.16} parent=31 // pred_check
          %p1270 = pneg %p102
        $region42: #{resnet10_emnist_forward.16} parent=31 // pred_check_branch
          %1272 = sbr.rel (%p1270) target = $region44
        $region43: #{resnet10_emnist_forward.16} parent=31 // pred_region
          %s1273 = smul.u32 98, %s16
        $region44: #{resnet10_emnist_forward.16} parent=31 // pred_fallthru
          _
      $region32: #{resnet10_emnist_forward.16} parent=5 // pred_fallthru
        _
      %p1274 = scmp.le.s32.totalorder 2, %s11
      // Predicated region
      $region45: #{resnet10_emnist_forward.16} parent=5 // pred_check
        %p1275 = pneg %p1274
      $region46: #{resnet10_emnist_forward.16} parent=5 // pred_check_branch
        %1277 = sbr.rel (%p1275) target = $region48
      $region47: #{resnet10_emnist_forward.16} parent=5 // pred_region
        %s1278 = ssub.s32 %s11, 2
        // Predicated region
        $region49: #{resnet10_emnist_forward.16} parent=47 // pred_check
          %p1279 = pneg %p108
        $region50: #{resnet10_emnist_forward.16} parent=47 // pred_check_branch
          %1281 = sbr.rel (%p1279) target = $region52
        $region51: #{resnet10_emnist_forward.16} parent=47 // pred_region
          %s1282 = smul.u32 98, %s17
          %p1283 = scmp.lt.s32.totalorder %s1282, 195
          %s1284 = scalar_select %p1283, %s1282, 195
          %s1285 = smul.addr %s1284, 4
          %s1286 = scalar_lea.vmem %s3, %s1285
        $region52: #{resnet10_emnist_forward.16} parent=47 // pred_fallthru
          _
      $region48: #{resnet10_emnist_forward.16} parent=5 // pred_fallthru
        _
    $region6: #{resnet10_emnist_forward.16} parent=1 // loop_footer
      %s15 = sadd.s32 1, %s11
    $region7: #{resnet10_emnist_forward.16} parent=1 // loop_footer_branch
      %10 = sbr.rel target = $region3
    $region8: #{resnet10_emnist_forward.16} parent=1 // loop_exit
      _
    %1287 = vsyncpa [#allocation3], 1
    %s1288 = scalar_lea.sflag [#allocation3], 1
    %1289 = vsyncpa %s1288, 1
    %1290 = vsyncpa [#allocation5], 1

// kernel: resnet10_emnist_forward.17
$region0: #{resnet10_emnist_forward.17}
  #allocation0 [shape = 'u32[]', space=smem, size = 0x4, offset = 0x4, fixed_abs, tag = 'smem constant byte address 0x4 - core index']
  #allocation1 [shape = 'u32[72,128]{1,0:T(1,128)}', space=vmem, size = 0x9000, scoped, tag = 'internal scratch']
  %s0 = inlined_call_operand.vmem [shape: bf16[1568,144], index: 0, kind: input, shape index: {}]
  %s1 = inlined_call_operand.vmem [shape: bf16[144,16], index: 1, kind: input, shape index: {}]
  %s2 = inlined_call_operand.vmem [shape: f32[1,16], index: 2, kind: input, shape index: {}]
  %s3 = inlined_call_operand.vmem [shape: bf16[1568,16], index: 3, kind: output, shape index: {}]
  %s4 = sld [smem:[#allocation0]]
  $region45: #{resnet10_emnist_forward.17} parent=0
    _
  %s6 = ssub.s32 1, %s4
  %s7 = scalar_select 0, %s6, %s4
  loop: start=0, step=1, limit=4
  $region2: #{resnet10_emnist_forward.17} parent=0 // loop_pre_header
    _
  $region3: #{resnet10_emnist_forward.17} parent=0 // loop_header
    %s9 = sphi 0, %s13
    %p10 = scmp.ge.s32.totalorder %s9, 4
    %s19 = sphi 0, %s21
    %s22 = sphi 0, %s19
    %s23 = sphi 0, %s22
    %s39 = sphi 0, %s23
    %s43 = sphi 0, %s43
    %s45 = sphi 0, %s43
    %s46 = sphi 0, %s45
    %s60 = sphi 0, %s46
    %s64 = sphi 0, %s64
    %s66 = sphi 0, %s64
    %s67 = sphi 0, %s66
    %s81 = sphi 0, %s67
    %s87 = sphi 0, %s89
    %s90 = sphi 0, %s87
    %s91 = sphi 0, %s90
    %s107 = sphi 0, %s91
  $region4: #{resnet10_emnist_forward.17} parent=0 // loop_header_branch
    %12 = sbr.rel (%p10) target = $region8
  $region5: #{resnet10_emnist_forward.17} parent=0 // loop_body
    %s14 = ssub.s32 %s9, 1
    %s15 = ssub.s32 %s9, 2
    %s16 = sadd.s32 %s9, 1
    %s17 = ssub.s32 %s9, %s16
    %p18 = scmp.eq.s32.totalorder %s17, 0
    %s20 = sadd.s32 %s19, 1
    %s21 = scalar_select %p18, %s19, %s20
    %p24 = pneg %p18
    %p25 = scmp.eq.s32.totalorder %s9, 1
    %p26 = por %p24, %p25
    %p27 = scmp.ne.s32.totalorder %s19, %s22
    %p28 = scmp.eq.s32.totalorder %s9, 0
    %p29 = por %p27, %p28
    %p30 = scmp.ne.s32.totalorder %s19, %s22
    %p31 = scmp.eq.s32.totalorder %s14, 1
    %p32 = por %p30, %p31
    %p33 = scmp.ne.s32.totalorder %s22, %s23
    %p34 = scmp.eq.s32.totalorder %s14, 0
    %p35 = por %p33, %p34
    %p36 = scmp.ne.s32.totalorder %s22, %s23
    %p37 = scmp.eq.s32.totalorder %s15, 1
    %p38 = por %p36, %p37
    %p40 = scmp.ne.s32.totalorder %s23, %s39
    %p41 = scmp.eq.s32.totalorder %s15, 0
    %p42 = por %p40, %p41
    %s44 = sadd.s32 %s43, 1
    %p47 = scmp.eq.s32.totalorder %s9, 1
    %p48 = scmp.ne.s32.totalorder %s43, %s45
    %p49 = scmp.eq.s32.totalorder %s9, 0
    %p50 = por %p48, %p49
    %p51 = scmp.ne.s32.totalorder %s43, %s45
    %p52 = scmp.eq.s32.totalorder %s14, 1
    %p53 = por %p51, %p52
    %p54 = scmp.ne.s32.totalorder %s45, %s46
    %p55 = scmp.eq.s32.totalorder %s14, 0
    %p56 = por %p54, %p55
    %p57 = scmp.ne.s32.totalorder %s45, %s46
    %p58 = scmp.eq.s32.totalorder %s15, 1
    %p59 = por %p57, %p58
    %p61 = scmp.ne.s32.totalorder %s46, %s60
    %p62 = scmp.eq.s32.totalorder %s15, 0
    %p63 = por %p61, %p62
    %s65 = sadd.s32 %s64, 1
    %p68 = scmp.eq.s32.totalorder %s9, 1
    %p69 = scmp.ne.s32.totalorder %s64, %s66
    %p70 = scmp.eq.s32.totalorder %s9, 0
    %p71 = por %p69, %p70
    %p72 = scmp.ne.s32.totalorder %s64, %s66
    %p73 = scmp.eq.s32.totalorder %s14, 1
    %p74 = por %p72, %p73
    %p75 = scmp.ne.s32.totalorder %s66, %s67
    %p76 = scmp.eq.s32.totalorder %s14, 0
    %p77 = por %p75, %p76
    %p78 = scmp.ne.s32.totalorder %s66, %s67
    %p79 = scmp.eq.s32.totalorder %s15, 1
    %p80 = por %p78, %p79
    %p82 = scmp.ne.s32.totalorder %s67, %s81
    %p83 = scmp.eq.s32.totalorder %s15, 0
    %p84 = por %p82, %p83
    %s85 = ssub.s32 %s9, %s16
    %p86 = scmp.eq.s32.totalorder %s85, 0
    %s88 = sadd.s32 %s87, 1
    %s89 = scalar_select %p86, %s87, %s88
    %p92 = pneg %p86
    %p93 = scmp.eq.s32.totalorder %s9, 1
    %p94 = por %p92, %p93
    %p95 = scmp.ne.s32.totalorder %s87, %s90
    %p96 = scmp.eq.s32.totalorder %s9, 0
    %p97 = por %p95, %p96
    %p98 = scmp.ne.s32.totalorder %s87, %s90
    %p99 = scmp.eq.s32.totalorder %s14, 1
    %p100 = por %p98, %p99
    %p101 = scmp.ne.s32.totalorder %s90, %s91
    %p102 = scmp.eq.s32.totalorder %s14, 0
    %p103 = por %p101, %p102
    %p104 = scmp.ne.s32.totalorder %s90, %s91
    %p105 = scmp.eq.s32.totalorder %s15, 1
    %p106 = por %p104, %p105
    %p108 = scmp.ne.s32.totalorder %s91, %s107
    %p109 = scmp.eq.s32.totalorder %s15, 0
    %p110 = por %p108, %p109
    %p111 = scmp.le.s32.totalorder 1, %s9
    %p112 = scmp.lt.s32.totalorder %s9, 3
    %p113 = pnand %p111, %p112
    %p114 = pneg %p113
    // Predicated region
    $region9: #{resnet10_emnist_forward.17} parent=5 // pred_check
      _
    $region10: #{resnet10_emnist_forward.17} parent=5 // pred_check_branch
      %116 = sbr.rel (%p113) target = $region12
    $region11: #{resnet10_emnist_forward.17} parent=5 // pred_region
      %s117 = ssub.s32 %s9, 1
      // Predicated region
      $region13: #{resnet10_emnist_forward.17} parent=11 // pred_check
        %p118 = pneg %p56
      $region14: #{resnet10_emnist_forward.17} parent=11 // pred_check_branch
        %120 = sbr.rel (%p118) target = $region16
      $region15: #{resnet10_emnist_forward.17} parent=11 // pred_region
        _
      $region16: #{resnet10_emnist_forward.17} parent=11 // pred_fallthru
        _
      // Predicated region
      $region17: #{resnet10_emnist_forward.17} parent=11 // pred_check
        %p121 = pneg %p77
      $region18: #{resnet10_emnist_forward.17} parent=11 // pred_check_branch
        %123 = sbr.rel (%p121) target = $region20
      $region19: #{resnet10_emnist_forward.17} parent=11 // pred_region
        _
      $region20: #{resnet10_emnist_forward.17} parent=11 // pred_fallthru
        _
    $region12: #{resnet10_emnist_forward.17} parent=5 // pred_fallthru
      _
    %p124 = scmp.lt.s32.totalorder %s9, 2
    // Predicated region
    $region21: #{resnet10_emnist_forward.17} parent=5 // pred_check
      %p125 = pneg %p124
    $region22: #{resnet10_emnist_forward.17} parent=5 // pred_check_branch
      %127 = sbr.rel (%p125) target = $region24
    $region23: #{resnet10_emnist_forward.17} parent=5 // pred_region
      // Predicated region
      $region25: #{resnet10_emnist_forward.17} parent=23 // pred_check
        %p128 = pneg %p29
      $region26: #{resnet10_emnist_forward.17} parent=23 // pred_check_branch
        %130 = sbr.rel (%p128) target = $region28
      $region27: #{resnet10_emnist_forward.17} parent=23 // pred_region
        %s131 = smul.u32 98, %s9
        %p132 = scmp.lt.s32.totalorder %s131, 195
        %s133 = scalar_select %p132, %s131, 195
        %s134 = smul.addr %s133, 2
        %s135 = smul.addr %s134, 4
        %s136 = scalar_lea.vmem %s0, %s135
        %s137 = smul.u32 98, %s9
      $region28: #{resnet10_emnist_forward.17} parent=23 // pred_fallthru
        _
    $region24: #{resnet10_emnist_forward.17} parent=5 // pred_fallthru
      _
    %p138 = scmp.le.s32.totalorder 1, %s9
    %p139 = scmp.lt.s32.totalorder %s9, 3
    %p140 = pnand %p138, %p139
    %p141 = pneg %p140
    // Predicated region
    $region29: #{resnet10_emnist_forward.17} parent=5 // pred_check
      _
    $region30: #{resnet10_emnist_forward.17} parent=5 // pred_check_branch
      %143 = sbr.rel (%p140) target = $region32
    $region31: #{resnet10_emnist_forward.17} parent=5 // pred_region
      %s144 = ssub.s32 %s9, 1
      %s145 = smul.u32 98, %s14
      %p146 = scmp.lt.s32.totalorder %s145, 195
      %s147 = scalar_select %p146, %s145, 195
      %s148 = smul.addr %s147, 2
      %s149 = smul.addr %s148, 4
      %s150 = scalar_lea.vmem %s0, %s149
      %p151 = pneg %p35
      %p152 = pneg %p32
      %p153 = pneg %p56
      %p154 = pneg %p53
      %p155 = pneg %p77
      %p156 = pneg %p74
      %p157 = pneg %p103
      %p158 = pneg %p100
      %s159 = smul.u32 98, %s14
      %p160 = scmp.lt.s32.totalorder %s159, 195
      %s161 = scalar_select %p160, %s159, 195
      %s162 = smul.addr %s161, 4
      %s163 = scalar_lea.vmem %s3, %s162
      %s164 = smul.u32 98, %s14
      %p165 = scmp.lt.s32.totalorder %s164, 195
      %s166 = scalar_select %p165, %s164, 195
      %s167 = smul.addr %s166, 2
      %s168 = smul.addr %s167, 4
      %s169 = scalar_lea.vmem %s0, %s168
      %s170 = smul.u32 98, %s14
      %s171 = smul.u32 98, %s14
      %p172 = scmp.lt.s32.totalorder %s171, 195
      %s173 = scalar_select %p172, %s171, 195
      %s174 = smul.addr %s173, 4
      %s175 = scalar_lea.vmem %s3, %s174
      %s176 = smul.u32 98, %s14
      %v178 = vld [vmem:[%s169] sm:$0xff]
      %v179 = vld [vmem:[%s169 + $0x8] sm:$0xff]
      %v180 = vld [vmem:[%s169 + $0x10] sm:$0xff]
      %v181 = vld [vmem:[%s169 + $0x18] sm:$0xff]
      %v182 = vld [vmem:[%s169 + $0x20] sm:$0xff]
      %v183 = vld [vmem:[%s169 + $0x28] sm:$0xff]
      %v184 = vld [vmem:[%s169 + $0x30] sm:$0xff]
      %v185 = vld [vmem:[%s169 + $0x38] sm:$0xff]
      %v186 = vld [vmem:[%s169 + $0x40] sm:$0xff]
      %v187 = vld [vmem:[%s169 + $0x48] sm:$0xff]
      %v188 = vld [vmem:[%s169 + $0x50] sm:$0xff]
      %v189 = vld [vmem:[%s169 + $0x58] sm:$0xff]
      %v190 = vld [vmem:[%s169 + $0x60] sm:$0xff]
      %v191 = vld [vmem:[%s169 + $0x68] sm:$0xff]
      %v192 = vld [vmem:[%s169 + $0x70] sm:$0xff]
      %v193 = vld [vmem:[%s169 + $0x78] sm:$0xff]
      %v194 = vld [vmem:[%s169 + $0x80] sm:$0xff]
      %v195 = vld [vmem:[%s169 + $0x88] sm:$0xff]
      %v196 = vld [vmem:[%s169 + $0x90] sm:$0xff]
      %v197 = vld [vmem:[%s169 + $0x98] sm:$0xff]
      %v198 = vld [vmem:[%s169 + $0xa0] sm:$0xff]
      %v199 = vld [vmem:[%s169 + $0xa8] sm:$0xff]
      %v200 = vld [vmem:[%s169 + $0xb0] sm:$0xff]
      %v201 = vld [vmem:[%s169 + $0xb8] sm:$0xff]
      %v202 = vld [vmem:[%s169 + $0xc0] sm:$0xff]
      %v203 = vld [vmem:[%s169 + $0xc8] sm:$0xff]
      %v204 = vld [vmem:[%s169 + $0xd0] sm:$0xff]
      %v205 = vld [vmem:[%s169 + $0xd8] sm:$0xff]
      %v206 = vld [vmem:[%s169 + $0xe0] sm:$0xff]
      %v207 = vld [vmem:[%s169 + $0xe8] sm:$0xff]
      %v208 = vld [vmem:[%s169 + $0xf0] sm:$0xff]
      %v209 = vld [vmem:[%s169 + $0xf8] sm:$0xff]
      %v210 = vld [vmem:[%s169 + $0x100] sm:$0xff]
      %v211 = vld [vmem:[%s169 + $0x108] sm:$0xff]
      %v212 = vld [vmem:[%s169 + $0x110] sm:$0xff]
      %v213 = vld [vmem:[%s169 + $0x118] sm:$0xff]
      %v214 = vld [vmem:[%s169 + $0x120] sm:$0xff]
      %v215 = vld [vmem:[%s169 + $0x128] sm:$0xff]
      %v216 = vld [vmem:[%s169 + $0x130] sm:$0xff]
      %v217 = vld [vmem:[%s169 + $0x138] sm:$0xff]
      %v218 = vld [vmem:[%s169 + $0x140] sm:$0xff]
      %v219 = vld [vmem:[%s169 + $0x148] sm:$0xff]
      %v220 = vld [vmem:[%s169 + $0x150] sm:$0xff]
      %v221 = vld [vmem:[%s169 + $0x158] sm:$0xff]
      %v222 = vld [vmem:[%s169 + $0x160] sm:$0xff]
      %v223 = vld [vmem:[%s169 + $0x168] sm:$0xff]
      %v224 = vld [vmem:[%s169 + $0x170] sm:$0xff]
      %v225 = vld [vmem:[%s169 + $0x178] sm:$0xff]
      %v226 = vld [vmem:[%s169 + $0x180] sm:$0xff]
      %v227 = vld [vmem:[%s169 + $0x188] sm:$0xff]
      %v228 = vld [vmem:[%s169 + $0x190] sm:$0xff]
      %v229 = vld [vmem:[%s169 + $0x198] sm:$0xff]
      %v230 = vld [vmem:[%s169 + $0x1a0] sm:$0xff]
      %v231 = vld [vmem:[%s169 + $0x1a8] sm:$0xff]
      %v232 = vld [vmem:[%s169 + $0x1b0] sm:$0xff]
      %v233 = vld [vmem:[%s169 + $0x1b8] sm:$0xff]
      %v234 = vld [vmem:[%s169 + $0x1c0] sm:$0xff]
      %v235 = vld [vmem:[%s169 + $0x1c8] sm:$0xff]
      %v236 = vld [vmem:[%s169 + $0x1d0] sm:$0xff]
      %v237 = vld [vmem:[%s169 + $0x1d8] sm:$0xff]
      %v238 = vld [vmem:[%s169 + $0x1e0] sm:$0xff]
      %v239 = vld [vmem:[%s169 + $0x1e8] sm:$0xff]
      %v240 = vld [vmem:[%s169 + $0x1f0] sm:$0xff]
      %v241 = vld [vmem:[%s169 + $0x1f8] sm:$0xff]
      %v242 = vld [vmem:[%s169 + $0x200] sm:$0xff]
      %v243 = vld [vmem:[%s169 + $0x208] sm:$0xff]
      %v244 = vld [vmem:[%s169 + $0x210] sm:$0xff]
      %v245 = vld [vmem:[%s169 + $0x218] sm:$0xff]
      %v246 = vld [vmem:[%s169 + $0x220] sm:$0xff]
      %v247 = vld [vmem:[%s169 + $0x228] sm:$0xff]
      %v248 = vld [vmem:[%s169 + $0x230] sm:$0xff]
      %v249 = vld [vmem:[%s169 + $0x238] sm:$0xff]
      %v250 = vld [vmem:[%s169 + $0x240] sm:$0xff]
      %v251 = vld [vmem:[%s169 + $0x248] sm:$0xff]
      %v252 = vld [vmem:[%s169 + $0x250] sm:$0xff]
      %v253 = vld [vmem:[%s169 + $0x258] sm:$0xff]
      %v254 = vld [vmem:[%s169 + $0x260] sm:$0xff]
      %v255 = vld [vmem:[%s169 + $0x268] sm:$0xff]
      %v256 = vld [vmem:[%s169 + $0x270] sm:$0xff]
      %v257 = vld [vmem:[%s169 + $0x278] sm:$0xff]
      %v258 = vld [vmem:[%s169 + $0x280] sm:$0xff]
      %v259 = vld [vmem:[%s169 + $0x288] sm:$0xff]
      %v260 = vld [vmem:[%s169 + $0x290] sm:$0xff]
      %v261 = vld [vmem:[%s169 + $0x298] sm:$0xff]
      %v262 = vld [vmem:[%s169 + $0x2a0] sm:$0xff]
      %v263 = vld [vmem:[%s169 + $0x2a8] sm:$0xff]
      %v264 = vld [vmem:[%s169 + $0x2b0] sm:$0xff]
      %v265 = vld [vmem:[%s169 + $0x2b8] sm:$0xff]
      %v266 = vld [vmem:[%s169 + $0x2c0] sm:$0xff]
      %v267 = vld [vmem:[%s169 + $0x2c8] sm:$0xff]
      %v268 = vld [vmem:[%s169 + $0x2d0] sm:$0xff]
      %v269 = vld [vmem:[%s169 + $0x2d8] sm:$0xff]
      %v270 = vld [vmem:[%s169 + $0x2e0] sm:$0xff]
      %v271 = vld [vmem:[%s169 + $0x2e8] sm:$0xff]
      %v272 = vld [vmem:[%s169 + $0x2f0] sm:$0xff]
      %v273 = vld [vmem:[%s169 + $0x2f8] sm:$0xff]
      %v274 = vld [vmem:[%s169 + $0x300] sm:$0xff]
      %v275 = vld [vmem:[%s169 + $0x308] sm:$0xff]
      %v276 = vld [vmem:[%s1] sm:$0xf]
      %v277 = vld [vmem:[%s1 + $0x4] sm:$0xf]
      %v278 = vld [vmem:[%s1 + $0x8] sm:$0xf]
      %v279 = vld [vmem:[%s1 + $0xc] sm:$0xf]
      %v280 = vld [vmem:[%s1 + $0x10] sm:$0xf]
      %v281 = vld [vmem:[%s1 + $0x14] sm:$0xf]
      %v282 = vld [vmem:[%s1 + $0x18] sm:$0xf]
      %v283 = vld [vmem:[%s1 + $0x1c] sm:$0xf]
      %v284 = vld [vmem:[%s1 + $0x20] sm:$0xf]
      %v285 = vld [vmem:[%s1 + $0x24] sm:$0xf]
      %v286 = vld [vmem:[%s1 + $0x28] sm:$0xf]
      %v287 = vld [vmem:[%s1 + $0x2c] sm:$0xf]
      %v288 = vld [vmem:[%s1 + $0x30] sm:$0xf]
      %v289 = vld [vmem:[%s1 + $0x34] sm:$0xf]
      %v290 = vld [vmem:[%s1 + $0x38] sm:$0xf]
      %v291 = vld [vmem:[%s1 + $0x3c] sm:$0xf]
      %v292 = vld [vmem:[%s1 + $0x40] sm:$0xf]
      %v293 = vld [vmem:[%s1 + $0x44] sm:$0xf]
      %v294 = vld [vmem:[%s2] sm:$0x1]
      %v296 = vperm.slane %v294, 0
      %v396 = vunpack.c.l.b16 %v178
      %v397 = vunpack.c.h.b16 %v178
      %v398 = vunpack.c.l.b16 %v179
      %v399 = vunpack.c.h.b16 %v179
      %v400 = vunpack.c.l.b16 %v180
      %v401 = vunpack.c.h.b16 %v180
      %v402 = vunpack.c.l.b16 %v181
      %v403 = vunpack.c.h.b16 %v181
      %v404 = vunpack.c.l.b16 %v182
      %v405 = vunpack.c.h.b16 %v182
      %v406 = vunpack.c.l.b16 %v183
      %v407 = vunpack.c.h.b16 %v183
      %v408 = vunpack.c.l.b16 %v184
      %v409 = vunpack.c.h.b16 %v184
      %v410 = vunpack.c.l.b16 %v185
      %v411 = vunpack.c.h.b16 %v185
      %v412 = vunpack.c.l.b16 %v186
      %v413 = vunpack.c.h.b16 %v186
      %v414 = vunpack.c.l.b16 %v187
      %v415 = vunpack.c.h.b16 %v187
      %v416 = vunpack.c.l.b16 %v188
      %v417 = vunpack.c.h.b16 %v188
      %v418 = vunpack.c.l.b16 %v189
      %v419 = vunpack.c.h.b16 %v189
      %v420 = vunpack.c.l.b16 %v190
      %v421 = vunpack.c.h.b16 %v190
      %v422 = vunpack.c.l.b16 %v191
      %v423 = vunpack.c.h.b16 %v191
      %v424 = vunpack.c.l.b16 %v192
      %v425 = vunpack.c.h.b16 %v192
      %v426 = vunpack.c.l.b16 %v193
      %v427 = vunpack.c.h.b16 %v193
      %v428 = vunpack.c.l.b16 %v194
      %v429 = vunpack.c.h.b16 %v194
      %v430 = vunpack.c.l.b16 %v195
      %v431 = vunpack.c.h.b16 %v195
      %v432 = vunpack.c.l.b16 %v196
      %v433 = vunpack.c.h.b16 %v196
      %v434 = vunpack.c.l.b16 %v197
      %v435 = vunpack.c.h.b16 %v197
      %v436 = vunpack.c.l.b16 %v198
      %v437 = vunpack.c.h.b16 %v198
      %v438 = vunpack.c.l.b16 %v199
      %v439 = vunpack.c.h.b16 %v199
      %v440 = vunpack.c.l.b16 %v200
      %v441 = vunpack.c.h.b16 %v200
      %v442 = vunpack.c.l.b16 %v201
      %v443 = vunpack.c.h.b16 %v201
      %v444 = vunpack.c.l.b16 %v202
      %v445 = vunpack.c.h.b16 %v202
      %v446 = vunpack.c.l.b16 %v203
      %v447 = vunpack.c.h.b16 %v203
      %v448 = vunpack.c.l.b16 %v204
      %v449 = vunpack.c.h.b16 %v204
      %v450 = vunpack.c.l.b16 %v205
      %v451 = vunpack.c.h.b16 %v205
      %v452 = vunpack.c.l.b16 %v206
      %v453 = vunpack.c.h.b16 %v206
      %v454 = vunpack.c.l.b16 %v207
      %v455 = vunpack.c.h.b16 %v207
      %v456 = vunpack.c.l.b16 %v208
      %v457 = vunpack.c.h.b16 %v208
      %v458 = vunpack.c.l.b16 %v209
      %v459 = vunpack.c.h.b16 %v209
      %v460 = vunpack.c.l.b16 %v210
      %v461 = vunpack.c.h.b16 %v210
      %v462 = vunpack.c.l.b16 %v211
      %v463 = vunpack.c.h.b16 %v211
      %v464 = vunpack.c.l.b16 %v212
      %v465 = vunpack.c.h.b16 %v212
      %v466 = vunpack.c.l.b16 %v213
      %v467 = vunpack.c.h.b16 %v213
      %v468 = vunpack.c.l.b16 %v214
      %v469 = vunpack.c.h.b16 %v214
      %v470 = vunpack.c.l.b16 %v215
      %v471 = vunpack.c.h.b16 %v215
      %v472 = vunpack.c.l.b16 %v216
      %v473 = vunpack.c.h.b16 %v216
      %v474 = vunpack.c.l.b16 %v217
      %v475 = vunpack.c.h.b16 %v217
      %v476 = vunpack.c.l.b16 %v218
      %v477 = vunpack.c.h.b16 %v218
      %v478 = vunpack.c.l.b16 %v219
      %v479 = vunpack.c.h.b16 %v219
      %v480 = vunpack.c.l.b16 %v220
      %v481 = vunpack.c.h.b16 %v220
      %v482 = vunpack.c.l.b16 %v221
      %v483 = vunpack.c.h.b16 %v221
      %v484 = vunpack.c.l.b16 %v222
      %v485 = vunpack.c.h.b16 %v222
      %v486 = vunpack.c.l.b16 %v223
      %v487 = vunpack.c.h.b16 %v223
      %v488 = vunpack.c.l.b16 %v224
      %v489 = vunpack.c.h.b16 %v224
      %v490 = vunpack.c.l.b16 %v225
      %v491 = vunpack.c.h.b16 %v225
      %v492 = vunpack.c.l.b16 %v226
      %v493 = vunpack.c.h.b16 %v226
      %v494 = vunpack.c.l.b16 %v227
      %v495 = vunpack.c.h.b16 %v227
      %v496 = vunpack.c.l.b16 %v228
      %v497 = vunpack.c.h.b16 %v228
      %v498 = vunpack.c.l.b16 %v229
      %v499 = vunpack.c.h.b16 %v229
      %v500 = vunpack.c.l.b16 %v230
      %v501 = vunpack.c.h.b16 %v230
      %v502 = vunpack.c.l.b16 %v231
      %v503 = vunpack.c.h.b16 %v231
      %v504 = vunpack.c.l.b16 %v232
      %v505 = vunpack.c.h.b16 %v232
      %v506 = vunpack.c.l.b16 %v233
      %v507 = vunpack.c.h.b16 %v233
      %v508 = vunpack.c.l.b16 %v234
      %v509 = vunpack.c.h.b16 %v234
      %v510 = vunpack.c.l.b16 %v235
      %v511 = vunpack.c.h.b16 %v235
      %v512 = vunpack.c.l.b16 %v236
      %v513 = vunpack.c.h.b16 %v236
      %v514 = vunpack.c.l.b16 %v237
      %v515 = vunpack.c.h.b16 %v237
      %v516 = vunpack.c.l.b16 %v238
      %v517 = vunpack.c.h.b16 %v238
      %v518 = vunpack.c.l.b16 %v239
      %v519 = vunpack.c.h.b16 %v239
      %v520 = vunpack.c.l.b16 %v240
      %v521 = vunpack.c.h.b16 %v240
      %v522 = vunpack.c.l.b16 %v241
      %v523 = vunpack.c.h.b16 %v241
      %v524 = vunpack.c.l.b16 %v242
      %v525 = vunpack.c.h.b16 %v242
      %v526 = vunpack.c.l.b16 %v243
      %v527 = vunpack.c.h.b16 %v243
      %v528 = vunpack.c.l.b16 %v244
      %v529 = vunpack.c.h.b16 %v244
      %v530 = vunpack.c.l.b16 %v245
      %v531 = vunpack.c.h.b16 %v245
      %v532 = vunpack.c.l.b16 %v246
      %v533 = vunpack.c.h.b16 %v246
      %v534 = vunpack.c.l.b16 %v247
      %v535 = vunpack.c.h.b16 %v247
      %v536 = vunpack.c.l.b16 %v248
      %v537 = vunpack.c.h.b16 %v248
      %v538 = vunpack.c.l.b16 %v249
      %v539 = vunpack.c.h.b16 %v249
      %v540 = vunpack.c.l.b16 %v250
      %v541 = vunpack.c.h.b16 %v250
      %v542 = vunpack.c.l.b16 %v251
      %v543 = vunpack.c.h.b16 %v251
      %v544 = vunpack.c.l.b16 %v252
      %v545 = vunpack.c.h.b16 %v252
      %v546 = vunpack.c.l.b16 %v253
      %v547 = vunpack.c.h.b16 %v253
      %v548 = vunpack.c.l.b16 %v254
      %v549 = vunpack.c.h.b16 %v254
      %v550 = vunpack.c.l.b16 %v255
      %v551 = vunpack.c.h.b16 %v255
      %v552 = vunpack.c.l.b16 %v256
      %v553 = vunpack.c.h.b16 %v256
      %v554 = vunpack.c.l.b16 %v257
      %v555 = vunpack.c.h.b16 %v257
      %v556 = vunpack.c.l.b16 %v258
      %v557 = vunpack.c.h.b16 %v258
      %v558 = vunpack.c.l.b16 %v259
      %v559 = vunpack.c.h.b16 %v259
      %v560 = vunpack.c.l.b16 %v260
      %v561 = vunpack.c.h.b16 %v260
      %v562 = vunpack.c.l.b16 %v261
      %v563 = vunpack.c.h.b16 %v261
      %v564 = vunpack.c.l.b16 %v262
      %v565 = vunpack.c.h.b16 %v262
      %v566 = vunpack.c.l.b16 %v263
      %v567 = vunpack.c.h.b16 %v263
      %v568 = vunpack.c.l.b16 %v264
      %v569 = vunpack.c.h.b16 %v264
      %v570 = vunpack.c.l.b16 %v265
      %v571 = vunpack.c.h.b16 %v265
      %v572 = vunpack.c.l.b16 %v266
      %v573 = vunpack.c.h.b16 %v266
      %v574 = vunpack.c.l.b16 %v267
      %v575 = vunpack.c.h.b16 %v267
      %v576 = vunpack.c.l.b16 %v268
      %v577 = vunpack.c.h.b16 %v268
      %v578 = vunpack.c.l.b16 %v269
      %v579 = vunpack.c.h.b16 %v269
      %v580 = vunpack.c.l.b16 %v270
      %v581 = vunpack.c.h.b16 %v270
      %v582 = vunpack.c.l.b16 %v271
      %v583 = vunpack.c.h.b16 %v271
      %v584 = vunpack.c.l.b16 %v272
      %v585 = vunpack.c.h.b16 %v272
      %v586 = vunpack.c.l.b16 %v273
      %v587 = vunpack.c.h.b16 %v273
      %v588 = vunpack.c.l.b16 %v274
      %v589 = vunpack.c.h.b16 %v274
      %v590 = vunpack.c.l.b16 %v275
      %v591 = vunpack.c.h.b16 %v275
      %v592 = vpack.c.b16 %v398, %v396
      %v593 = vpack.c.b16 %v399, %v397
      %v594 = vpack.c.b16 %v402, %v400
      %v595 = vpack.c.b16 %v403, %v401
      %v596 = vpack.c.b16 %v406, %v404
      %v597 = vpack.c.b16 %v407, %v405
      %v598 = vpack.c.b16 %v410, %v408
      %v599 = vpack.c.b16 %v411, %v409
      %v600 = vpack.c.b16 %v414, %v412
      %v601 = vpack.c.b16 %v415, %v413
      %v602 = vpack.c.b16 %v418, %v416
      %v603 = vpack.c.b16 %v419, %v417
      %v604 = vpack.c.b16 %v422, %v420
      %v605 = vpack.c.b16 %v423, %v421
      %v606 = vpack.c.b16 %v426, %v424
      %v607 = vpack.c.b16 %v427, %v425
      %v608 = vpack.c.b16 %v430, %v428
      %v609 = vpack.c.b16 %v431, %v429
      %v610 = vpack.c.b16 %v434, %v432
      %v611 = vpack.c.b16 %v435, %v433
      %v612 = vpack.c.b16 %v438, %v436
      %v613 = vpack.c.b16 %v439, %v437
      %v614 = vpack.c.b16 %v442, %v440
      %v615 = vpack.c.b16 %v443, %v441
      %v616 = vpack.c.b16 %v446, %v444
      %v617 = vpack.c.b16 %v447, %v445
      %v618 = vpack.c.b16 %v450, %v448
      %v619 = vpack.c.b16 %v451, %v449
      %v620 = vpack.c.b16 %v454, %v452
      %v621 = vpack.c.b16 %v455, %v453
      %v622 = vpack.c.b16 %v458, %v456
      %v623 = vpack.c.b16 %v459, %v457
      %v624 = vpack.c.b16 %v462, %v460
      %v625 = vpack.c.b16 %v463, %v461
      %v626 = vpack.c.b16 %v466, %v464
      %v627 = vpack.c.b16 %v467, %v465
      %v628 = vpack.c.b16 %v470, %v468
      %v629 = vpack.c.b16 %v471, %v469
      %v630 = vpack.c.b16 %v474, %v472
      %v631 = vpack.c.b16 %v475, %v473
      %v632 = vpack.c.b16 %v478, %v476
      %v633 = vpack.c.b16 %v479, %v477
      %v634 = vpack.c.b16 %v482, %v480
      %v635 = vpack.c.b16 %v483, %v481
      %v636 = vpack.c.b16 %v486, %v484
      %v637 = vpack.c.b16 %v487, %v485
      %v638 = vpack.c.b16 %v490, %v488
      %v639 = vpack.c.b16 %v491, %v489
      %v640 = vpack.c.b16 %v494, %v492
      %v641 = vpack.c.b16 %v495, %v493
      %v642 = vpack.c.b16 %v498, %v496
      %v643 = vpack.c.b16 %v499, %v497
      %v644 = vpack.c.b16 %v502, %v500
      %v645 = vpack.c.b16 %v503, %v501
      %v646 = vpack.c.b16 %v506, %v504
      %v647 = vpack.c.b16 %v507, %v505
      %v648 = vpack.c.b16 %v510, %v508
      %v649 = vpack.c.b16 %v511, %v509
      %v650 = vpack.c.b16 %v514, %v512
      %v651 = vpack.c.b16 %v515, %v513
      %v652 = vpack.c.b16 %v518, %v516
      %v653 = vpack.c.b16 %v519, %v517
      %v654 = vpack.c.b16 %v522, %v520
      %v655 = vpack.c.b16 %v523, %v521
      %v656 = vpack.c.b16 %v526, %v524
      %v657 = vpack.c.b16 %v527, %v525
      %v658 = vpack.c.b16 %v530, %v528
      %v659 = vpack.c.b16 %v531, %v529
      %v660 = vpack.c.b16 %v534, %v532
      %v661 = vpack.c.b16 %v535, %v533
      %v662 = vpack.c.b16 %v538, %v536
      %v663 = vpack.c.b16 %v539, %v537
      %v664 = vpack.c.b16 %v542, %v540
      %v665 = vpack.c.b16 %v543, %v541
      %v666 = vpack.c.b16 %v546, %v544
      %v667 = vpack.c.b16 %v547, %v545
      %v668 = vpack.c.b16 %v550, %v548
      %v669 = vpack.c.b16 %v551, %v549
      %v670 = vpack.c.b16 %v554, %v552
      %v671 = vpack.c.b16 %v555, %v553
      %v672 = vpack.c.b16 %v558, %v556
      %v673 = vpack.c.b16 %v559, %v557
      %v674 = vpack.c.b16 %v562, %v560
      %v675 = vpack.c.b16 %v563, %v561
      %v676 = vpack.c.b16 %v566, %v564
      %v677 = vpack.c.b16 %v567, %v565
      %v678 = vpack.c.b16 %v570, %v568
      %v679 = vpack.c.b16 %v571, %v569
      %v680 = vpack.c.b16 %v574, %v572
      %v681 = vpack.c.b16 %v575, %v573
      %v682 = vpack.c.b16 %v578, %v576
      %v683 = vpack.c.b16 %v579, %v577
      %v684 = vpack.c.b16 %v582, %v580
      %v685 = vpack.c.b16 %v583, %v581
      %v686 = vpack.c.b16 %v586, %v584
      %v687 = vpack.c.b16 %v587, %v585
      %v688 = vpack.c.b16 %v590, %v588
      %v689 = vpack.c.b16 %v591, %v589
      %v757 = vunpack.c.l.b16 %v276
      %v758 = vunpack.c.l.b16 %v277
      %v759 = vunpack.c.l.b16 %v278
      %v760 = vunpack.c.l.b16 %v279
      %v761 = vunpack.c.l.b16 %v280
      %v762 = vunpack.c.l.b16 %v281
      %v763 = vunpack.c.l.b16 %v282
      %v764 = vunpack.c.l.b16 %v283
      %v765 = vunpack.c.l.b16 %v284
      %v766 = vunpack.c.l.b16 %v285
      %v767 = vunpack.c.l.b16 %v286
      %v768 = vunpack.c.l.b16 %v287
      %v769 = vunpack.c.l.b16 %v288
      %v770 = vunpack.c.l.b16 %v289
      %v771 = vunpack.c.l.b16 %v290
      %v772 = vunpack.c.l.b16 %v291
      %v773 = vunpack.c.l.b16 %v292
      %v774 = vunpack.c.l.b16 %v293
      %v775 = vpack.c.b16 %v758, %v757
      %v776 = vpack.c.b16 %v760, %v759
      %v777 = vpack.c.b16 %v762, %v761
      %v778 = vpack.c.b16 %v764, %v763
      %v779 = vpack.c.b16 %v766, %v765
      %v780 = vpack.c.b16 %v768, %v767
      %v781 = vpack.c.b16 %v770, %v769
      %v782 = vpack.c.b16 %v772, %v771
      %v783 = vpack.c.b16 %v774, %v773
      %vm793 = vcmask 130048
      %v795 = vsel %vm793, %v593, 0
      %v798 = vsel %vm793, %v595, 0
      %v801 = vsel %vm793, %v597, 0
      %v804 = vsel %vm793, %v599, 0
      %v807 = vsel %vm793, %v601, 0
      %v810 = vsel %vm793, %v603, 0
      %v813 = vsel %vm793, %v605, 0
      %v816 = vsel %vm793, %v607, 0
      %v819 = vsel %vm793, %v609, 0
      %v822 = vsel %vm793, %v611, 0
      %v825 = vsel %vm793, %v613, 0
      %v828 = vsel %vm793, %v615, 0
      %v831 = vsel %vm793, %v617, 0
      %v834 = vsel %vm793, %v619, 0
      %v837 = vsel %vm793, %v621, 0
      %v840 = vsel %vm793, %v623, 0
      %v843 = vsel %vm793, %v625, 0
      %v846 = vsel %vm793, %v627, 0
      %v849 = vsel %vm793, %v629, 0
      %v852 = vsel %vm793, %v631, 0
      %v855 = vsel %vm793, %v633, 0
      %v858 = vsel %vm793, %v635, 0
      %v861 = vsel %vm793, %v637, 0
      %v864 = vsel %vm793, %v639, 0
      %v867 = vsel %vm793, %v641, 0
      %v870 = vsel %vm793, %v643, 0
      %v873 = vsel %vm793, %v645, 0
      %v876 = vsel %vm793, %v647, 0
      %v879 = vsel %vm793, %v649, 0
      %v882 = vsel %vm793, %v651, 0
      %v885 = vsel %vm793, %v653, 0
      %v888 = vsel %vm793, %v655, 0
      %v891 = vsel %vm793, %v657, 0
      %v894 = vsel %vm793, %v659, 0
      %v897 = vsel %vm793, %v661, 0
      %v900 = vsel %vm793, %v663, 0
      %v903 = vsel %vm793, %v665, 0
      %v906 = vsel %vm793, %v667, 0
      %v909 = vsel %vm793, %v669, 0
      %v912 = vsel %vm793, %v671, 0
      %v915 = vsel %vm793, %v673, 0
      %v918 = vsel %vm793, %v675, 0
      %v921 = vsel %vm793, %v677, 0
      %v924 = vsel %vm793, %v679, 0
      %v927 = vsel %vm793, %v681, 0
      %v930 = vsel %vm793, %v683, 0
      %v933 = vsel %vm793, %v685, 0
      %v936 = vsel %vm793, %v687, 0
      %v939 = vsel %vm793, %v689, 0
      %941 = vmatpush.bf16.msra.mxu0 %v782
      %942 = vmatpush.bf16.msra.mxu0 %v781
      %943 = vmatpush.bf16.msra.mxu0 %v780
      %944 = vmatpush.bf16.msra.mxu0 %v779
      %945 = vmatpush.bf16.msra.mxu0 %v778
      %946 = vmatpush.bf16.msra.mxu0 %v777
      %947 = vmatpush.bf16.msra.mxu0 %v776
      %948 = vmatpush.bf16.msra.mxu0 %v775
      %949 = vmatmul.bf16.gmra.mxu0 %v592
      %v950 = vpop.f32.mrf.mxu0
      %v951 = vadd.f32 %v296, %v950
      %v952 = vpop.f32.mrf.mxu0
      %v953 = vadd.f32 %v296, %v952
      %954 = vmatmul.bf16.gmra.mxu0 %v594
      %v955 = vpop.f32.mrf.mxu0
      %v956 = vadd.f32 %v296, %v955
      %v957 = vpop.f32.mrf.mxu0
      %v958 = vadd.f32 %v296, %v957
      %959 = vmatmul.bf16.gmra.mxu0 %v596
      %v960 = vpop.f32.mrf.mxu0
      %v961 = vadd.f32 %v296, %v960
      %v962 = vpop.f32.mrf.mxu0
      %v963 = vadd.f32 %v296, %v962
      %964 = vmatmul.bf16.gmra.mxu0 %v598
      %v965 = vpop.f32.mrf.mxu0
      %v966 = vadd.f32 %v296, %v965
      %v967 = vpop.f32.mrf.mxu0
      %v968 = vadd.f32 %v296, %v967
      %969 = vmatmul.bf16.gmra.mxu0 %v600
      %v970 = vpop.f32.mrf.mxu0
      %v971 = vadd.f32 %v296, %v970
      %v972 = vpop.f32.mrf.mxu0
      %v973 = vadd.f32 %v296, %v972
      %974 = vmatmul.bf16.gmra.mxu0 %v602
      %v975 = vpop.f32.mrf.mxu0
      %v976 = vadd.f32 %v296, %v975
      %v977 = vpop.f32.mrf.mxu0
      %v978 = vadd.f32 %v296, %v977
      %979 = vmatmul.bf16.gmra.mxu0 %v604
      %v980 = vpop.f32.mrf.mxu0
      %v981 = vadd.f32 %v296, %v980
      %v982 = vpop.f32.mrf.mxu0
      %v983 = vadd.f32 %v296, %v982
      %984 = vmatmul.bf16.gmra.mxu0 %v606
      %v985 = vpop.f32.mrf.mxu0
      %v986 = vadd.f32 %v296, %v985
      %v987 = vpop.f32.mrf.mxu0
      %v988 = vadd.f32 %v296, %v987
      %989 = vmatmul.bf16.gmra.mxu0 %v608
      %v990 = vpop.f32.mrf.mxu0
      %v991 = vadd.f32 %v296, %v990
      %v992 = vpop.f32.mrf.mxu0
      %v993 = vadd.f32 %v296, %v992
      %994 = vmatmul.bf16.gmra.mxu0 %v610
      %v995 = vpop.f32.mrf.mxu0
      %v996 = vadd.f32 %v296, %v995
      %v997 = vpop.f32.mrf.mxu0
      %v998 = vadd.f32 %v296, %v997
      %999 = vmatmul.bf16.gmra.mxu0 %v612
      %v1000 = vpop.f32.mrf.mxu0
      %v1001 = vadd.f32 %v296, %v1000
      %v1002 = vpop.f32.mrf.mxu0
      %v1003 = vadd.f32 %v296, %v1002
      %1004 = vmatmul.bf16.gmra.mxu0 %v614
      %v1005 = vpop.f32.mrf.mxu0
      %v1006 = vadd.f32 %v296, %v1005
      %v1007 = vpop.f32.mrf.mxu0
      %v1008 = vadd.f32 %v296, %v1007
      %1009 = vmatmul.bf16.gmra.mxu0 %v616
      %v1010 = vpop.f32.mrf.mxu0
      %v1011 = vadd.f32 %v296, %v1010
      %v1012 = vpop.f32.mrf.mxu0
      %v1013 = vadd.f32 %v296, %v1012
      %1014 = vmatmul.bf16.gmra.mxu0 %v618
      %v1015 = vpop.f32.mrf.mxu0
      %v1016 = vadd.f32 %v296, %v1015
      %v1017 = vpop.f32.mrf.mxu0
      %v1018 = vadd.f32 %v296, %v1017
      %1019 = vmatmul.bf16.gmra.mxu0 %v620
      %v1020 = vpop.f32.mrf.mxu0
      %v1021 = vadd.f32 %v296, %v1020
      %v1022 = vpop.f32.mrf.mxu0
      %v1023 = vadd.f32 %v296, %v1022
      %1024 = vmatmul.bf16.gmra.mxu0 %v622
      %v1025 = vpop.f32.mrf.mxu0
      %v1026 = vadd.f32 %v296, %v1025
      %v1027 = vpop.f32.mrf.mxu0
      %v1028 = vadd.f32 %v296, %v1027
      %1029 = vmatmul.bf16.gmra.mxu0 %v624
      %v1030 = vpop.f32.mrf.mxu0
      %v1031 = vadd.f32 %v296, %v1030
      %v1032 = vpop.f32.mrf.mxu0
      %v1033 = vadd.f32 %v296, %v1032
      %1034 = vmatmul.bf16.gmra.mxu0 %v626
      %v1035 = vpop.f32.mrf.mxu0
      %v1036 = vadd.f32 %v296, %v1035
      %v1037 = vpop.f32.mrf.mxu0
      %v1038 = vadd.f32 %v296, %v1037
      %1039 = vmatmul.bf16.gmra.mxu0 %v628
      %v1040 = vpop.f32.mrf.mxu0
      %v1041 = vadd.f32 %v296, %v1040
      %v1042 = vpop.f32.mrf.mxu0
      %v1043 = vadd.f32 %v296, %v1042
      %1044 = vmatmul.bf16.gmra.mxu0 %v630
      %v1045 = vpop.f32.mrf.mxu0
      %v1046 = vadd.f32 %v296, %v1045
      %v1047 = vpop.f32.mrf.mxu0
      %v1048 = vadd.f32 %v296, %v1047
      %1049 = vmatmul.bf16.gmra.mxu0 %v632
      %v1050 = vpop.f32.mrf.mxu0
      %v1051 = vadd.f32 %v296, %v1050
      %v1052 = vpop.f32.mrf.mxu0
      %v1053 = vadd.f32 %v296, %v1052
      %1054 = vmatmul.bf16.gmra.mxu0 %v634
      %v1055 = vpop.f32.mrf.mxu0
      %v1056 = vadd.f32 %v296, %v1055
      %v1057 = vpop.f32.mrf.mxu0
      %v1058 = vadd.f32 %v296, %v1057
      %1059 = vmatmul.bf16.gmra.mxu0 %v636
      %v1060 = vpop.f32.mrf.mxu0
      %v1061 = vadd.f32 %v296, %v1060
      %v1062 = vpop.f32.mrf.mxu0
      %v1063 = vadd.f32 %v296, %v1062
      %1064 = vmatmul.bf16.gmra.mxu0 %v638
      %v1065 = vpop.f32.mrf.mxu0
      %v1066 = vadd.f32 %v296, %v1065
      %v1067 = vpop.f32.mrf.mxu0
      %v1068 = vadd.f32 %v296, %v1067
      %1069 = vmatmul.bf16.gmra.mxu0 %v640
      %v1070 = vpop.f32.mrf.mxu0
      %v1071 = vadd.f32 %v296, %v1070
      %v1072 = vpop.f32.mrf.mxu0
      %v1073 = vadd.f32 %v296, %v1072
      %1074 = vmatmul.bf16.gmra.mxu0 %v642
      %v1075 = vpop.f32.mrf.mxu0
      %v1076 = vadd.f32 %v296, %v1075
      %v1077 = vpop.f32.mrf.mxu0
      %v1078 = vadd.f32 %v296, %v1077
      %1079 = vmatmul.bf16.gmra.mxu0 %v644
      %v1080 = vpop.f32.mrf.mxu0
      %v1081 = vadd.f32 %v296, %v1080
      %v1082 = vpop.f32.mrf.mxu0
      %v1083 = vadd.f32 %v296, %v1082
      %1084 = vmatmul.bf16.gmra.mxu0 %v646
      %v1085 = vpop.f32.mrf.mxu0
      %v1086 = vadd.f32 %v296, %v1085
      %v1087 = vpop.f32.mrf.mxu0
      %v1088 = vadd.f32 %v296, %v1087
      %1089 = vmatmul.bf16.gmra.mxu0 %v648
      %v1090 = vpop.f32.mrf.mxu0
      %v1091 = vadd.f32 %v296, %v1090
      %v1092 = vpop.f32.mrf.mxu0
      %v1093 = vadd.f32 %v296, %v1092
      %1094 = vmatmul.bf16.gmra.mxu0 %v650
      %v1095 = vpop.f32.mrf.mxu0
      %v1096 = vadd.f32 %v296, %v1095
      %v1097 = vpop.f32.mrf.mxu0
      %v1098 = vadd.f32 %v296, %v1097
      %1099 = vmatmul.bf16.gmra.mxu0 %v652
      %v1100 = vpop.f32.mrf.mxu0
      %v1101 = vadd.f32 %v296, %v1100
      %v1102 = vpop.f32.mrf.mxu0
      %v1103 = vadd.f32 %v296, %v1102
      %1104 = vmatmul.bf16.gmra.mxu0 %v654
      %v1105 = vpop.f32.mrf.mxu0
      %v1106 = vadd.f32 %v296, %v1105
      %v1107 = vpop.f32.mrf.mxu0
      %v1108 = vadd.f32 %v296, %v1107
      %1109 = vmatmul.bf16.gmra.mxu0 %v656
      %v1110 = vpop.f32.mrf.mxu0
      %v1111 = vadd.f32 %v296, %v1110
      %v1112 = vpop.f32.mrf.mxu0
      %v1113 = vadd.f32 %v296, %v1112
      %1114 = vmatmul.bf16.gmra.mxu0 %v658
      %v1115 = vpop.f32.mrf.mxu0
      %v1116 = vadd.f32 %v296, %v1115
      %v1117 = vpop.f32.mrf.mxu0
      %v1118 = vadd.f32 %v296, %v1117
      %1119 = vmatmul.bf16.gmra.mxu0 %v660
      %v1120 = vpop.f32.mrf.mxu0
      %v1121 = vadd.f32 %v296, %v1120
      %v1122 = vpop.f32.mrf.mxu0
      %v1123 = vadd.f32 %v296, %v1122
      %1124 = vmatmul.bf16.gmra.mxu0 %v662
      %v1125 = vpop.f32.mrf.mxu0
      %v1126 = vadd.f32 %v296, %v1125
      %v1127 = vpop.f32.mrf.mxu0
      %v1128 = vadd.f32 %v296, %v1127
      %1129 = vmatmul.bf16.gmra.mxu0 %v664
      %v1130 = vpop.f32.mrf.mxu0
      %v1131 = vadd.f32 %v296, %v1130
      %v1132 = vpop.f32.mrf.mxu0
      %v1133 = vadd.f32 %v296, %v1132
      %1134 = vmatmul.bf16.gmra.mxu0 %v666
      %v1135 = vpop.f32.mrf.mxu0
      %v1136 = vadd.f32 %v296, %v1135
      %v1137 = vpop.f32.mrf.mxu0
      %v1138 = vadd.f32 %v296, %v1137
      %1139 = vmatmul.bf16.gmra.mxu0 %v668
      %v1140 = vpop.f32.mrf.mxu0
      %v1141 = vadd.f32 %v296, %v1140
      %v1142 = vpop.f32.mrf.mxu0
      %v1143 = vadd.f32 %v296, %v1142
      %1144 = vmatmul.bf16.gmra.mxu0 %v670
      %v1145 = vpop.f32.mrf.mxu0
      %v1146 = vadd.f32 %v296, %v1145
      %v1147 = vpop.f32.mrf.mxu0
      %v1148 = vadd.f32 %v296, %v1147
      %1149 = vmatmul.bf16.gmra.mxu0 %v672
      %v1150 = vpop.f32.mrf.mxu0
      %v1151 = vadd.f32 %v296, %v1150
      %v1152 = vpop.f32.mrf.mxu0
      %v1153 = vadd.f32 %v296, %v1152
      %1154 = vmatmul.bf16.gmra.mxu0 %v674
      %v1155 = vpop.f32.mrf.mxu0
      %v1156 = vadd.f32 %v296, %v1155
      %v1157 = vpop.f32.mrf.mxu0
      %v1158 = vadd.f32 %v296, %v1157
      %1159 = vmatmul.bf16.gmra.mxu0 %v676
      %v1160 = vpop.f32.mrf.mxu0
      %v1161 = vadd.f32 %v296, %v1160
      %v1162 = vpop.f32.mrf.mxu0
      %v1163 = vadd.f32 %v296, %v1162
      %1164 = vmatmul.bf16.gmra.mxu0 %v678
      %v1165 = vpop.f32.mrf.mxu0
      %v1166 = vadd.f32 %v296, %v1165
      %v1167 = vpop.f32.mrf.mxu0
      %v1168 = vadd.f32 %v296, %v1167
      %1169 = vmatmul.bf16.gmra.mxu0 %v680
      %v1170 = vpop.f32.mrf.mxu0
      %v1171 = vadd.f32 %v296, %v1170
      %v1172 = vpop.f32.mrf.mxu0
      %v1173 = vadd.f32 %v296, %v1172
      %1174 = vmatmul.bf16.gmra.mxu0 %v682
      %v1175 = vpop.f32.mrf.mxu0
      %v1176 = vadd.f32 %v296, %v1175
      %v1177 = vpop.f32.mrf.mxu0
      %v1178 = vadd.f32 %v296, %v1177
      %1179 = vmatmul.bf16.gmra.mxu0 %v684
      %v1180 = vpop.f32.mrf.mxu0
      %v1181 = vadd.f32 %v296, %v1180
      %v1182 = vpop.f32.mrf.mxu0
      %v1183 = vadd.f32 %v296, %v1182
      %1184 = vmatmul.bf16.gmra.mxu0 %v686
      %v1185 = vpop.f32.mrf.mxu0
      %v1186 = vadd.f32 %v296, %v1185
      %v1187 = vpop.f32.mrf.mxu0
      %v1188 = vadd.f32 %v296, %v1187
      %1189 = vmatmul.bf16.gmra.mxu0 %v688
      %v1190 = vpop.f32.mrf.mxu0
      %v1191 = vadd.f32 %v296, %v1190
      %v1192 = vpop.f32.mrf.mxu0
      %v1193 = vadd.f32 %v296, %v1192
      %1194 = vdwg.mxu0
      %1195 = vmatpush.bf16.msra.mxu0 0
      %1196 = vmatpush.bf16.msra.mxu0 0
      %1197 = vmatpush.bf16.msra.mxu0 0
      %1198 = vmatpush.bf16.msra.mxu0 0
      %1199 = vmatpush.bf16.msra.mxu0 0
      %1200 = vmatpush.bf16.msra.mxu0 0
      %1201 = vmatpush.bf16.msra.mxu0 0
      %1202 = vmatpush.bf16.msra.mxu0 %v783
      %1203 = vmatmul.bf16.gmra.mxu0 %v795
      %v1204 = vpop.f32.mrf.mxu0
      %v1205 = vadd.f32 %v951, %v1204
      %v1206 = vpop.f32.mrf.mxu0
      %v1207 = vadd.f32 %v953, %v1206
      %1208 = vmatmul.bf16.gmra.mxu0 %v798
      %v1209 = vpop.f32.mrf.mxu0
      %v1210 = vadd.f32 %v956, %v1209
      %v1211 = vpop.f32.mrf.mxu0
      %v1212 = vadd.f32 %v958, %v1211
      %1213 = vmatmul.bf16.gmra.mxu0 %v801
      %v1214 = vpop.f32.mrf.mxu0
      %v1215 = vadd.f32 %v961, %v1214
      %v1216 = vpop.f32.mrf.mxu0
      %v1217 = vadd.f32 %v963, %v1216
      %1218 = vmatmul.bf16.gmra.mxu0 %v804
      %v1219 = vpop.f32.mrf.mxu0
      %v1220 = vadd.f32 %v966, %v1219
      %v1221 = vpop.f32.mrf.mxu0
      %v1222 = vadd.f32 %v968, %v1221
      %1223 = vmatmul.bf16.gmra.mxu0 %v807
      %v1224 = vpop.f32.mrf.mxu0
      %v1225 = vadd.f32 %v971, %v1224
      %v1226 = vpop.f32.mrf.mxu0
      %v1227 = vadd.f32 %v973, %v1226
      %1228 = vmatmul.bf16.gmra.mxu0 %v810
      %v1229 = vpop.f32.mrf.mxu0
      %v1230 = vadd.f32 %v976, %v1229
      %v1231 = vpop.f32.mrf.mxu0
      %v1232 = vadd.f32 %v978, %v1231
      %1233 = vmatmul.bf16.gmra.mxu0 %v813
      %v1234 = vpop.f32.mrf.mxu0
      %v1235 = vadd.f32 %v981, %v1234
      %v1236 = vpop.f32.mrf.mxu0
      %v1237 = vadd.f32 %v983, %v1236
      %1238 = vmatmul.bf16.gmra.mxu0 %v816
      %v1239 = vpop.f32.mrf.mxu0
      %v1240 = vadd.f32 %v986, %v1239
      %v1241 = vpop.f32.mrf.mxu0
      %v1242 = vadd.f32 %v988, %v1241
      %1243 = vmatmul.bf16.gmra.mxu0 %v819
      %v1244 = vpop.f32.mrf.mxu0
      %v1245 = vadd.f32 %v991, %v1244
      %v1246 = vpop.f32.mrf.mxu0
      %v1247 = vadd.f32 %v993, %v1246
      %1248 = vmatmul.bf16.gmra.mxu0 %v822
      %v1249 = vpop.f32.mrf.mxu0
      %v1250 = vadd.f32 %v996, %v1249
      %v1251 = vpop.f32.mrf.mxu0
      %v1252 = vadd.f32 %v998, %v1251
      %1253 = vmatmul.bf16.gmra.mxu0 %v825
      %v1254 = vpop.f32.mrf.mxu0
      %v1255 = vadd.f32 %v1001, %v1254
      %v1256 = vpop.f32.mrf.mxu0
      %v1257 = vadd.f32 %v1003, %v1256
      %1258 = vmatmul.bf16.gmra.mxu0 %v828
      %v1259 = vpop.f32.mrf.mxu0
      %v1260 = vadd.f32 %v1006, %v1259
      %v1261 = vpop.f32.mrf.mxu0
      %v1262 = vadd.f32 %v1008, %v1261
      %1263 = vmatmul.bf16.gmra.mxu0 %v831
      %v1264 = vpop.f32.mrf.mxu0
      %v1265 = vadd.f32 %v1011, %v1264
      %v1266 = vpop.f32.mrf.mxu0
      %v1267 = vadd.f32 %v1013, %v1266
      %1268 = vmatmul.bf16.gmra.mxu0 %v834
      %v1269 = vpop.f32.mrf.mxu0
      %v1270 = vadd.f32 %v1016, %v1269
      %v1271 = vpop.f32.mrf.mxu0
      %v1272 = vadd.f32 %v1018, %v1271
      %1273 = vmatmul.bf16.gmra.mxu0 %v837
      %v1274 = vpop.f32.mrf.mxu0
      %v1275 = vadd.f32 %v1021, %v1274
      %v1276 = vpop.f32.mrf.mxu0
      %v1277 = vadd.f32 %v1023, %v1276
      %1278 = vmatmul.bf16.gmra.mxu0 %v840
      %v1279 = vpop.f32.mrf.mxu0
      %v1280 = vadd.f32 %v1026, %v1279
      %v1281 = vpop.f32.mrf.mxu0
      %v1282 = vadd.f32 %v1028, %v1281
      %1283 = vmatmul.bf16.gmra.mxu0 %v843
      %v1284 = vpop.f32.mrf.mxu0
      %v1285 = vadd.f32 %v1031, %v1284
      %v1286 = vpop.f32.mrf.mxu0
      %v1287 = vadd.f32 %v1033, %v1286
      %1288 = vmatmul.bf16.gmra.mxu0 %v846
      %v1289 = vpop.f32.mrf.mxu0
      %v1290 = vadd.f32 %v1036, %v1289
      %v1291 = vpop.f32.mrf.mxu0
      %v1292 = vadd.f32 %v1038, %v1291
      %1293 = vmatmul.bf16.gmra.mxu0 %v849
      %v1294 = vpop.f32.mrf.mxu0
      %v1295 = vadd.f32 %v1041, %v1294
      %v1296 = vpop.f32.mrf.mxu0
      %v1297 = vadd.f32 %v1043, %v1296
      %1298 = vmatmul.bf16.gmra.mxu0 %v852
      %v1299 = vpop.f32.mrf.mxu0
      %v1300 = vadd.f32 %v1046, %v1299
      %v1301 = vpop.f32.mrf.mxu0
      %v1302 = vadd.f32 %v1048, %v1301
      %1303 = vmatmul.bf16.gmra.mxu0 %v855
      %v1304 = vpop.f32.mrf.mxu0
      %v1305 = vadd.f32 %v1051, %v1304
      %v1306 = vpop.f32.mrf.mxu0
      %v1307 = vadd.f32 %v1053, %v1306
      %1308 = vmatmul.bf16.gmra.mxu0 %v858
      %v1309 = vpop.f32.mrf.mxu0
      %v1310 = vadd.f32 %v1056, %v1309
      %v1311 = vpop.f32.mrf.mxu0
      %v1312 = vadd.f32 %v1058, %v1311
      %1313 = vmatmul.bf16.gmra.mxu0 %v861
      %v1314 = vpop.f32.mrf.mxu0
      %v1315 = vadd.f32 %v1061, %v1314
      %v1316 = vpop.f32.mrf.mxu0
      %v1317 = vadd.f32 %v1063, %v1316
      %1318 = vmatmul.bf16.gmra.mxu0 %v864
      %v1319 = vpop.f32.mrf.mxu0
      %v1320 = vadd.f32 %v1066, %v1319
      %v1321 = vpop.f32.mrf.mxu0
      %v1322 = vadd.f32 %v1068, %v1321
      %1323 = vmatmul.bf16.gmra.mxu0 %v867
      %v1324 = vpop.f32.mrf.mxu0
      %v1325 = vadd.f32 %v1071, %v1324
      %v1326 = vpop.f32.mrf.mxu0
      %v1327 = vadd.f32 %v1073, %v1326
      %1328 = vmatmul.bf16.gmra.mxu0 %v870
      %v1329 = vpop.f32.mrf.mxu0
      %v1330 = vadd.f32 %v1076, %v1329
      %v1331 = vpop.f32.mrf.mxu0
      %v1332 = vadd.f32 %v1078, %v1331
      %1333 = vmatmul.bf16.gmra.mxu0 %v873
      %v1334 = vpop.f32.mrf.mxu0
      %v1335 = vadd.f32 %v1081, %v1334
      %v1336 = vpop.f32.mrf.mxu0
      %v1337 = vadd.f32 %v1083, %v1336
      %1338 = vmatmul.bf16.gmra.mxu0 %v876
      %v1339 = vpop.f32.mrf.mxu0
      %v1340 = vadd.f32 %v1086, %v1339
      %v1341 = vpop.f32.mrf.mxu0
      %v1342 = vadd.f32 %v1088, %v1341
      %1343 = vmatmul.bf16.gmra.mxu0 %v879
      %v1344 = vpop.f32.mrf.mxu0
      %v1345 = vadd.f32 %v1091, %v1344
      %v1346 = vpop.f32.mrf.mxu0
      %v1347 = vadd.f32 %v1093, %v1346
      %1348 = vmatmul.bf16.gmra.mxu0 %v882
      %v1349 = vpop.f32.mrf.mxu0
      %v1350 = vadd.f32 %v1096, %v1349
      %v1351 = vpop.f32.mrf.mxu0
      %v1352 = vadd.f32 %v1098, %v1351
      %1353 = vmatmul.bf16.gmra.mxu0 %v885
      %v1354 = vpop.f32.mrf.mxu0
      %v1355 = vadd.f32 %v1101, %v1354
      %v1356 = vpop.f32.mrf.mxu0
      %v1357 = vadd.f32 %v1103, %v1356
      %1358 = vmatmul.bf16.gmra.mxu0 %v888
      %v1359 = vpop.f32.mrf.mxu0
      %v1360 = vadd.f32 %v1106, %v1359
      %v1361 = vpop.f32.mrf.mxu0
      %v1362 = vadd.f32 %v1108, %v1361
      %1363 = vmatmul.bf16.gmra.mxu0 %v891
      %v1364 = vpop.f32.mrf.mxu0
      %v1365 = vadd.f32 %v1111, %v1364
      %v1366 = vpop.f32.mrf.mxu0
      %v1367 = vadd.f32 %v1113, %v1366
      %1368 = vmatmul.bf16.gmra.mxu0 %v894
      %v1369 = vpop.f32.mrf.mxu0
      %v1370 = vadd.f32 %v1116, %v1369
      %v1371 = vpop.f32.mrf.mxu0
      %v1372 = vadd.f32 %v1118, %v1371
      %1373 = vmatmul.bf16.gmra.mxu0 %v897
      %v1374 = vpop.f32.mrf.mxu0
      %v1375 = vadd.f32 %v1121, %v1374
      %v1376 = vpop.f32.mrf.mxu0
      %v1377 = vadd.f32 %v1123, %v1376
      %1378 = vmatmul.bf16.gmra.mxu0 %v900
      %v1379 = vpop.f32.mrf.mxu0
      %v1380 = vadd.f32 %v1126, %v1379
      %v1381 = vpop.f32.mrf.mxu0
      %v1382 = vadd.f32 %v1128, %v1381
      %1383 = vmatmul.bf16.gmra.mxu0 %v903
      %v1384 = vpop.f32.mrf.mxu0
      %v1385 = vadd.f32 %v1131, %v1384
      %v1386 = vpop.f32.mrf.mxu0
      %v1387 = vadd.f32 %v1133, %v1386
      %1388 = vmatmul.bf16.gmra.mxu0 %v906
      %v1389 = vpop.f32.mrf.mxu0
      %v1390 = vadd.f32 %v1136, %v1389
      %v1391 = vpop.f32.mrf.mxu0
      %v1392 = vadd.f32 %v1138, %v1391
      %1393 = vmatmul.bf16.gmra.mxu0 %v909
      %v1394 = vpop.f32.mrf.mxu0
      %v1395 = vadd.f32 %v1141, %v1394
      %v1396 = vpop.f32.mrf.mxu0
      %v1397 = vadd.f32 %v1143, %v1396
      %1398 = vmatmul.bf16.gmra.mxu0 %v912
      %v1399 = vpop.f32.mrf.mxu0
      %v1400 = vadd.f32 %v1146, %v1399
      %v1401 = vpop.f32.mrf.mxu0
      %v1402 = vadd.f32 %v1148, %v1401
      %1403 = vmatmul.bf16.gmra.mxu0 %v915
      %v1404 = vpop.f32.mrf.mxu0
      %v1405 = vadd.f32 %v1151, %v1404
      %v1406 = vpop.f32.mrf.mxu0
      %v1407 = vadd.f32 %v1153, %v1406
      %1408 = vmatmul.bf16.gmra.mxu0 %v918
      %v1409 = vpop.f32.mrf.mxu0
      %v1410 = vadd.f32 %v1156, %v1409
      %v1411 = vpop.f32.mrf.mxu0
      %v1412 = vadd.f32 %v1158, %v1411
      %1413 = vmatmul.bf16.gmra.mxu0 %v921
      %v1414 = vpop.f32.mrf.mxu0
      %v1415 = vadd.f32 %v1161, %v1414
      %v1416 = vpop.f32.mrf.mxu0
      %v1417 = vadd.f32 %v1163, %v1416
      %1418 = vmatmul.bf16.gmra.mxu0 %v924
      %v1419 = vpop.f32.mrf.mxu0
      %v1420 = vadd.f32 %v1166, %v1419
      %v1421 = vpop.f32.mrf.mxu0
      %v1422 = vadd.f32 %v1168, %v1421
      %1423 = vmatmul.bf16.gmra.mxu0 %v927
      %v1424 = vpop.f32.mrf.mxu0
      %v1425 = vadd.f32 %v1171, %v1424
      %v1426 = vpop.f32.mrf.mxu0
      %v1427 = vadd.f32 %v1173, %v1426
      %1428 = vmatmul.bf16.gmra.mxu0 %v930
      %v1429 = vpop.f32.mrf.mxu0
      %v1430 = vadd.f32 %v1176, %v1429
      %v1431 = vpop.f32.mrf.mxu0
      %v1432 = vadd.f32 %v1178, %v1431
      %1433 = vmatmul.bf16.gmra.mxu0 %v933
      %v1434 = vpop.f32.mrf.mxu0
      %v1435 = vadd.f32 %v1181, %v1434
      %v1436 = vpop.f32.mrf.mxu0
      %v1437 = vadd.f32 %v1183, %v1436
      %1438 = vmatmul.bf16.gmra.mxu0 %v936
      %v1439 = vpop.f32.mrf.mxu0
      %v1440 = vadd.f32 %v1186, %v1439
      %v1441 = vpop.f32.mrf.mxu0
      %v1442 = vadd.f32 %v1188, %v1441
      %1443 = vmatmul.bf16.gmra.mxu0 %v939
      %v1444 = vpop.f32.mrf.mxu0
      %v1445 = vadd.f32 %v1191, %v1444
      %v1446 = vpop.f32.mrf.mxu0
      %v1447 = vadd.f32 %v1193, %v1446
      %1448 = vdwg.mxu0
      %v1449 = vmax.f32 %v1205, 0.0
      %v1450 = vmax.f32 %v1207, 0.0
      %v1451 = vmax.f32 %v1210, 0.0
      %v1452 = vmax.f32 %v1212, 0.0
      %v1453 = vmax.f32 %v1215, 0.0
      %v1454 = vmax.f32 %v1217, 0.0
      %v1455 = vmax.f32 %v1220, 0.0
      %v1456 = vmax.f32 %v1222, 0.0
      %v1457 = vmax.f32 %v1225, 0.0
      %v1458 = vmax.f32 %v1227, 0.0
      %v1459 = vmax.f32 %v1230, 0.0
      %v1460 = vmax.f32 %v1232, 0.0
      %v1461 = vmax.f32 %v1235, 0.0
      %v1462 = vmax.f32 %v1237, 0.0
      %v1463 = vmax.f32 %v1240, 0.0
      %v1464 = vmax.f32 %v1242, 0.0
      %v1465 = vmax.f32 %v1245, 0.0
      %v1466 = vmax.f32 %v1247, 0.0
      %v1467 = vmax.f32 %v1250, 0.0
      %v1468 = vmax.f32 %v1252, 0.0
      %v1469 = vmax.f32 %v1255, 0.0
      %v1470 = vmax.f32 %v1257, 0.0
      %v1471 = vmax.f32 %v1260, 0.0
      %v1472 = vmax.f32 %v1262, 0.0
      %v1473 = vmax.f32 %v1265, 0.0
      %v1474 = vmax.f32 %v1267, 0.0
      %v1475 = vmax.f32 %v1270, 0.0
      %v1476 = vmax.f32 %v1272, 0.0
      %v1477 = vmax.f32 %v1275, 0.0
      %v1478 = vmax.f32 %v1277, 0.0
      %v1479 = vmax.f32 %v1280, 0.0
      %v1480 = vmax.f32 %v1282, 0.0
      %v1481 = vmax.f32 %v1285, 0.0
      %v1482 = vmax.f32 %v1287, 0.0
      %v1483 = vmax.f32 %v1290, 0.0
      %v1484 = vmax.f32 %v1292, 0.0
      %v1485 = vmax.f32 %v1295, 0.0
      %v1486 = vmax.f32 %v1297, 0.0
      %v1487 = vmax.f32 %v1300, 0.0
      %v1488 = vmax.f32 %v1302, 0.0
      %v1489 = vmax.f32 %v1305, 0.0
      %v1490 = vmax.f32 %v1307, 0.0
      %v1491 = vmax.f32 %v1310, 0.0
      %v1492 = vmax.f32 %v1312, 0.0
      %v1493 = vmax.f32 %v1315, 0.0
      %v1494 = vmax.f32 %v1317, 0.0
      %v1495 = vmax.f32 %v1320, 0.0
      %v1496 = vmax.f32 %v1322, 0.0
      %v1497 = vmax.f32 %v1325, 0.0
      %v1498 = vmax.f32 %v1327, 0.0
      %v1499 = vmax.f32 %v1330, 0.0
      %v1500 = vmax.f32 %v1332, 0.0
      %v1501 = vmax.f32 %v1335, 0.0
      %v1502 = vmax.f32 %v1337, 0.0
      %v1503 = vmax.f32 %v1340, 0.0
      %v1504 = vmax.f32 %v1342, 0.0
      %v1505 = vmax.f32 %v1345, 0.0
      %v1506 = vmax.f32 %v1347, 0.0
      %v1507 = vmax.f32 %v1350, 0.0
      %v1508 = vmax.f32 %v1352, 0.0
      %v1509 = vmax.f32 %v1355, 0.0
      %v1510 = vmax.f32 %v1357, 0.0
      %v1511 = vmax.f32 %v1360, 0.0
      %v1512 = vmax.f32 %v1362, 0.0
      %v1513 = vmax.f32 %v1365, 0.0
      %v1514 = vmax.f32 %v1367, 0.0
      %v1515 = vmax.f32 %v1370, 0.0
      %v1516 = vmax.f32 %v1372, 0.0
      %v1517 = vmax.f32 %v1375, 0.0
      %v1518 = vmax.f32 %v1377, 0.0
      %v1519 = vmax.f32 %v1380, 0.0
      %v1520 = vmax.f32 %v1382, 0.0
      %v1521 = vmax.f32 %v1385, 0.0
      %v1522 = vmax.f32 %v1387, 0.0
      %v1523 = vmax.f32 %v1390, 0.0
      %v1524 = vmax.f32 %v1392, 0.0
      %v1525 = vmax.f32 %v1395, 0.0
      %v1526 = vmax.f32 %v1397, 0.0
      %v1527 = vmax.f32 %v1400, 0.0
      %v1528 = vmax.f32 %v1402, 0.0
      %v1529 = vmax.f32 %v1405, 0.0
      %v1530 = vmax.f32 %v1407, 0.0
      %v1531 = vmax.f32 %v1410, 0.0
      %v1532 = vmax.f32 %v1412, 0.0
      %v1533 = vmax.f32 %v1415, 0.0
      %v1534 = vmax.f32 %v1417, 0.0
      %v1535 = vmax.f32 %v1420, 0.0
      %v1536 = vmax.f32 %v1422, 0.0
      %v1537 = vmax.f32 %v1425, 0.0
      %v1538 = vmax.f32 %v1427, 0.0
      %v1539 = vmax.f32 %v1430, 0.0
      %v1540 = vmax.f32 %v1432, 0.0
      %v1541 = vmax.f32 %v1435, 0.0
      %v1542 = vmax.f32 %v1437, 0.0
      %v1543 = vmax.f32 %v1440, 0.0
      %v1544 = vmax.f32 %v1442, 0.0
      %v1545 = vmax.f32 %v1445, 0.0
      %v1546 = vmax.f32 %v1447, 0.0
      %v1547 = vpack.c.bf16 %v1449, %v1449
      %v1548 = vpack.c.bf16 %v1450, %v1450
      %v1549 = vpack.c.bf16 %v1451, %v1451
      %v1550 = vpack.c.bf16 %v1452, %v1452
      %v1551 = vpack.c.bf16 %v1453, %v1453
      %v1552 = vpack.c.bf16 %v1454, %v1454
      %v1553 = vpack.c.bf16 %v1455, %v1455
      %v1554 = vpack.c.bf16 %v1456, %v1456
      %v1555 = vpack.c.bf16 %v1457, %v1457
      %v1556 = vpack.c.bf16 %v1458, %v1458
      %v1557 = vpack.c.bf16 %v1459, %v1459
      %v1558 = vpack.c.bf16 %v1460, %v1460
      %v1559 = vpack.c.bf16 %v1461, %v1461
      %v1560 = vpack.c.bf16 %v1462, %v1462
      %v1561 = vpack.c.bf16 %v1463, %v1463
      %v1562 = vpack.c.bf16 %v1464, %v1464
      %v1563 = vpack.c.bf16 %v1465, %v1465
      %v1564 = vpack.c.bf16 %v1466, %v1466
      %v1565 = vpack.c.bf16 %v1467, %v1467
      %v1566 = vpack.c.bf16 %v1468, %v1468
      %v1567 = vpack.c.bf16 %v1469, %v1469
      %v1568 = vpack.c.bf16 %v1470, %v1470
      %v1569 = vpack.c.bf16 %v1471, %v1471
      %v1570 = vpack.c.bf16 %v1472, %v1472
      %v1571 = vpack.c.bf16 %v1473, %v1473
      %v1572 = vpack.c.bf16 %v1474, %v1474
      %v1573 = vpack.c.bf16 %v1475, %v1475
      %v1574 = vpack.c.bf16 %v1476, %v1476
      %v1575 = vpack.c.bf16 %v1477, %v1477
      %v1576 = vpack.c.bf16 %v1478, %v1478
      %v1577 = vpack.c.bf16 %v1479, %v1479
      %v1578 = vpack.c.bf16 %v1480, %v1480
      %v1579 = vpack.c.bf16 %v1481, %v1481
      %v1580 = vpack.c.bf16 %v1482, %v1482
      %v1581 = vpack.c.bf16 %v1483, %v1483
      %v1582 = vpack.c.bf16 %v1484, %v1484
      %v1583 = vpack.c.bf16 %v1485, %v1485
      %v1584 = vpack.c.bf16 %v1486, %v1486
      %v1585 = vpack.c.bf16 %v1487, %v1487
      %v1586 = vpack.c.bf16 %v1488, %v1488
      %v1587 = vpack.c.bf16 %v1489, %v1489
      %v1588 = vpack.c.bf16 %v1490, %v1490
      %v1589 = vpack.c.bf16 %v1491, %v1491
      %v1590 = vpack.c.bf16 %v1492, %v1492
      %v1591 = vpack.c.bf16 %v1493, %v1493
      %v1592 = vpack.c.bf16 %v1494, %v1494
      %v1593 = vpack.c.bf16 %v1495, %v1495
      %v1594 = vpack.c.bf16 %v1496, %v1496
      %v1595 = vpack.c.bf16 %v1497, %v1497
      %v1596 = vpack.c.bf16 %v1498, %v1498
      %v1597 = vpack.c.bf16 %v1499, %v1499
      %v1598 = vpack.c.bf16 %v1500, %v1500
      %v1599 = vpack.c.bf16 %v1501, %v1501
      %v1600 = vpack.c.bf16 %v1502, %v1502
      %v1601 = vpack.c.bf16 %v1503, %v1503
      %v1602 = vpack.c.bf16 %v1504, %v1504
      %v1603 = vpack.c.bf16 %v1505, %v1505
      %v1604 = vpack.c.bf16 %v1506, %v1506
      %v1605 = vpack.c.bf16 %v1507, %v1507
      %v1606 = vpack.c.bf16 %v1508, %v1508
      %v1607 = vpack.c.bf16 %v1509, %v1509
      %v1608 = vpack.c.bf16 %v1510, %v1510
      %v1609 = vpack.c.bf16 %v1511, %v1511
      %v1610 = vpack.c.bf16 %v1512, %v1512
      %v1611 = vpack.c.bf16 %v1513, %v1513
      %v1612 = vpack.c.bf16 %v1514, %v1514
      %v1613 = vpack.c.bf16 %v1515, %v1515
      %v1614 = vpack.c.bf16 %v1516, %v1516
      %v1615 = vpack.c.bf16 %v1517, %v1517
      %v1616 = vpack.c.bf16 %v1518, %v1518
      %v1617 = vpack.c.bf16 %v1519, %v1519
      %v1618 = vpack.c.bf16 %v1520, %v1520
      %v1619 = vpack.c.bf16 %v1521, %v1521
      %v1620 = vpack.c.bf16 %v1522, %v1522
      %v1621 = vpack.c.bf16 %v1523, %v1523
      %v1622 = vpack.c.bf16 %v1524, %v1524
      %v1623 = vpack.c.bf16 %v1525, %v1525
      %v1624 = vpack.c.bf16 %v1526, %v1526
      %v1625 = vpack.c.bf16 %v1527, %v1527
      %v1626 = vpack.c.bf16 %v1528, %v1528
      %v1627 = vpack.c.bf16 %v1529, %v1529
      %v1628 = vpack.c.bf16 %v1530, %v1530
      %v1629 = vpack.c.bf16 %v1531, %v1531
      %v1630 = vpack.c.bf16 %v1532, %v1532
      %v1631 = vpack.c.bf16 %v1533, %v1533
      %v1632 = vpack.c.bf16 %v1534, %v1534
      %v1633 = vpack.c.bf16 %v1535, %v1535
      %v1634 = vpack.c.bf16 %v1536, %v1536
      %v1635 = vpack.c.bf16 %v1537, %v1537
      %v1636 = vpack.c.bf16 %v1538, %v1538
      %v1637 = vpack.c.bf16 %v1539, %v1539
      %v1638 = vpack.c.bf16 %v1540, %v1540
      %v1639 = vpack.c.bf16 %v1541, %v1541
      %v1640 = vpack.c.bf16 %v1542, %v1542
      %v1641 = vpack.c.bf16 %v1543, %v1543
      %v1642 = vpack.c.bf16 %v1544, %v1544
      %v1643 = vpack.c.bf16 %v1545, %v1545
      %v1644 = vpack.c.bf16 %v1546, %v1546
      %vm1645 = vcmask 125952
      %1646 = vst.msk [vmem:[%s175] sm:$0xf] %vm1645, %v1547
      %1647 = vst.msk [vmem:[%s175 + $0x4] sm:$0xf] %vm1645, %v1548
      %1648 = vst.msk [vmem:[%s175 + $0x8] sm:$0xf] %vm1645, %v1549
      %1649 = vst.msk [vmem:[%s175 + $0xc] sm:$0xf] %vm1645, %v1550
      %1650 = vst.msk [vmem:[%s175 + $0x10] sm:$0xf] %vm1645, %v1551
      %1651 = vst.msk [vmem:[%s175 + $0x14] sm:$0xf] %vm1645, %v1552
      %1652 = vst.msk [vmem:[%s175 + $0x18] sm:$0xf] %vm1645, %v1553
      %1653 = vst.msk [vmem:[%s175 + $0x1c] sm:$0xf] %vm1645, %v1554
      %1654 = vst.msk [vmem:[%s175 + $0x20] sm:$0xf] %vm1645, %v1555
      %1655 = vst.msk [vmem:[%s175 + $0x24] sm:$0xf] %vm1645, %v1556
      %1656 = vst.msk [vmem:[%s175 + $0x28] sm:$0xf] %vm1645, %v1557
      %1657 = vst.msk [vmem:[%s175 + $0x2c] sm:$0xf] %vm1645, %v1558
      %1658 = vst.msk [vmem:[%s175 + $0x30] sm:$0xf] %vm1645, %v1559
      %1659 = vst.msk [vmem:[%s175 + $0x34] sm:$0xf] %vm1645, %v1560
      %1660 = vst.msk [vmem:[%s175 + $0x38] sm:$0xf] %vm1645, %v1561
      %1661 = vst.msk [vmem:[%s175 + $0x3c] sm:$0xf] %vm1645, %v1562
      %1662 = vst.msk [vmem:[%s175 + $0x40] sm:$0xf] %vm1645, %v1563
      %1663 = vst.msk [vmem:[%s175 + $0x44] sm:$0xf] %vm1645, %v1564
      %1664 = vst.msk [vmem:[%s175 + $0x48] sm:$0xf] %vm1645, %v1565
      %1665 = vst.msk [vmem:[%s175 + $0x4c] sm:$0xf] %vm1645, %v1566
      %1666 = vst.msk [vmem:[%s175 + $0x50] sm:$0xf] %vm1645, %v1567
      %1667 = vst.msk [vmem:[%s175 + $0x54] sm:$0xf] %vm1645, %v1568
      %1668 = vst.msk [vmem:[%s175 + $0x58] sm:$0xf] %vm1645, %v1569
      %1669 = vst.msk [vmem:[%s175 + $0x5c] sm:$0xf] %vm1645, %v1570
      %1670 = vst.msk [vmem:[%s175 + $0x60] sm:$0xf] %vm1645, %v1571
      %1671 = vst.msk [vmem:[%s175 + $0x64] sm:$0xf] %vm1645, %v1572
      %1672 = vst.msk [vmem:[%s175 + $0x68] sm:$0xf] %vm1645, %v1573
      %1673 = vst.msk [vmem:[%s175 + $0x6c] sm:$0xf] %vm1645, %v1574
      %1674 = vst.msk [vmem:[%s175 + $0x70] sm:$0xf] %vm1645, %v1575
      %1675 = vst.msk [vmem:[%s175 + $0x74] sm:$0xf] %vm1645, %v1576
      %1676 = vst.msk [vmem:[%s175 + $0x78] sm:$0xf] %vm1645, %v1577
      %1677 = vst.msk [vmem:[%s175 + $0x7c] sm:$0xf] %vm1645, %v1578
      %1678 = vst.msk [vmem:[%s175 + $0x80] sm:$0xf] %vm1645, %v1579
      %1679 = vst.msk [vmem:[%s175 + $0x84] sm:$0xf] %vm1645, %v1580
      %1680 = vst.msk [vmem:[%s175 + $0x88] sm:$0xf] %vm1645, %v1581
      %1681 = vst.msk [vmem:[%s175 + $0x8c] sm:$0xf] %vm1645, %v1582
      %1682 = vst.msk [vmem:[%s175 + $0x90] sm:$0xf] %vm1645, %v1583
      %1683 = vst.msk [vmem:[%s175 + $0x94] sm:$0xf] %vm1645, %v1584
      %1684 = vst.msk [vmem:[%s175 + $0x98] sm:$0xf] %vm1645, %v1585
      %1685 = vst.msk [vmem:[%s175 + $0x9c] sm:$0xf] %vm1645, %v1586
      %1686 = vst.msk [vmem:[%s175 + $0xa0] sm:$0xf] %vm1645, %v1587
      %1687 = vst.msk [vmem:[%s175 + $0xa4] sm:$0xf] %vm1645, %v1588
      %1688 = vst.msk [vmem:[%s175 + $0xa8] sm:$0xf] %vm1645, %v1589
      %1689 = vst.msk [vmem:[%s175 + $0xac] sm:$0xf] %vm1645, %v1590
      %1690 = vst.msk [vmem:[%s175 + $0xb0] sm:$0xf] %vm1645, %v1591
      %1691 = vst.msk [vmem:[%s175 + $0xb4] sm:$0xf] %vm1645, %v1592
      %1692 = vst.msk [vmem:[%s175 + $0xb8] sm:$0xf] %vm1645, %v1593
      %1693 = vst.msk [vmem:[%s175 + $0xbc] sm:$0xf] %vm1645, %v1594
      %1694 = vst.msk [vmem:[%s175 + $0xc0] sm:$0xf] %vm1645, %v1595
      %1695 = vst.msk [vmem:[%s175 + $0xc4] sm:$0xf] %vm1645, %v1596
      %1696 = vst.msk [vmem:[%s175 + $0xc8] sm:$0xf] %vm1645, %v1597
      %1697 = vst.msk [vmem:[%s175 + $0xcc] sm:$0xf] %vm1645, %v1598
      %1698 = vst.msk [vmem:[%s175 + $0xd0] sm:$0xf] %vm1645, %v1599
      %1699 = vst.msk [vmem:[%s175 + $0xd4] sm:$0xf] %vm1645, %v1600
      %1700 = vst.msk [vmem:[%s175 + $0xd8] sm:$0xf] %vm1645, %v1601
      %1701 = vst.msk [vmem:[%s175 + $0xdc] sm:$0xf] %vm1645, %v1602
      %1702 = vst.msk [vmem:[%s175 + $0xe0] sm:$0xf] %vm1645, %v1603
      %1703 = vst.msk [vmem:[%s175 + $0xe4] sm:$0xf] %vm1645, %v1604
      %1704 = vst.msk [vmem:[%s175 + $0xe8] sm:$0xf] %vm1645, %v1605
      %1705 = vst.msk [vmem:[%s175 + $0xec] sm:$0xf] %vm1645, %v1606
      %1706 = vst.msk [vmem:[%s175 + $0xf0] sm:$0xf] %vm1645, %v1607
      %1707 = vst.msk [vmem:[%s175 + $0xf4] sm:$0xf] %vm1645, %v1608
      %1708 = vst.msk [vmem:[%s175 + $0xf8] sm:$0xf] %vm1645, %v1609
      %1709 = vst.msk [vmem:[%s175 + $0xfc] sm:$0xf] %vm1645, %v1610
      %1710 = vst.msk [vmem:[%s175 + $0x100] sm:$0xf] %vm1645, %v1611
      %1711 = vst.msk [vmem:[%s175 + $0x104] sm:$0xf] %vm1645, %v1612
      %1712 = vst.msk [vmem:[%s175 + $0x108] sm:$0xf] %vm1645, %v1613
      %1713 = vst.msk [vmem:[%s175 + $0x10c] sm:$0xf] %vm1645, %v1614
      %1714 = vst.msk [vmem:[%s175 + $0x110] sm:$0xf] %vm1645, %v1615
      %1715 = vst.msk [vmem:[%s175 + $0x114] sm:$0xf] %vm1645, %v1616
      %1716 = vst.msk [vmem:[%s175 + $0x118] sm:$0xf] %vm1645, %v1617
      %1717 = vst.msk [vmem:[%s175 + $0x11c] sm:$0xf] %vm1645, %v1618
      %1718 = vst.msk [vmem:[%s175 + $0x120] sm:$0xf] %vm1645, %v1619
      %1719 = vst.msk [vmem:[%s175 + $0x124] sm:$0xf] %vm1645, %v1620
      %1720 = vst.msk [vmem:[%s175 + $0x128] sm:$0xf] %vm1645, %v1621
      %1721 = vst.msk [vmem:[%s175 + $0x12c] sm:$0xf] %vm1645, %v1622
      %1722 = vst.msk [vmem:[%s175 + $0x130] sm:$0xf] %vm1645, %v1623
      %1723 = vst.msk [vmem:[%s175 + $0x134] sm:$0xf] %vm1645, %v1624
      %1724 = vst.msk [vmem:[%s175 + $0x138] sm:$0xf] %vm1645, %v1625
      %1725 = vst.msk [vmem:[%s175 + $0x13c] sm:$0xf] %vm1645, %v1626
      %1726 = vst.msk [vmem:[%s175 + $0x140] sm:$0xf] %vm1645, %v1627
      %1727 = vst.msk [vmem:[%s175 + $0x144] sm:$0xf] %vm1645, %v1628
      %1728 = vst.msk [vmem:[%s175 + $0x148] sm:$0xf] %vm1645, %v1629
      %1729 = vst.msk [vmem:[%s175 + $0x14c] sm:$0xf] %vm1645, %v1630
      %1730 = vst.msk [vmem:[%s175 + $0x150] sm:$0xf] %vm1645, %v1631
      %1731 = vst.msk [vmem:[%s175 + $0x154] sm:$0xf] %vm1645, %v1632
      %1732 = vst.msk [vmem:[%s175 + $0x158] sm:$0xf] %vm1645, %v1633
      %1733 = vst.msk [vmem:[%s175 + $0x15c] sm:$0xf] %vm1645, %v1634
      %1734 = vst.msk [vmem:[%s175 + $0x160] sm:$0xf] %vm1645, %v1635
      %1735 = vst.msk [vmem:[%s175 + $0x164] sm:$0xf] %vm1645, %v1636
      %1736 = vst.msk [vmem:[%s175 + $0x168] sm:$0xf] %vm1645, %v1637
      %1737 = vst.msk [vmem:[%s175 + $0x16c] sm:$0xf] %vm1645, %v1638
      %1738 = vst.msk [vmem:[%s175 + $0x170] sm:$0xf] %vm1645, %v1639
      %1739 = vst.msk [vmem:[%s175 + $0x174] sm:$0xf] %vm1645, %v1640
      %1740 = vst.msk [vmem:[%s175 + $0x178] sm:$0xf] %vm1645, %v1641
      %1741 = vst.msk [vmem:[%s175 + $0x17c] sm:$0xf] %vm1645, %v1642
      %1742 = vst.msk [vmem:[%s175 + $0x180] sm:$0xf] %vm1645, %v1643
      %1743 = vst.msk [vmem:[%s175 + $0x184] sm:$0xf] %vm1645, %v1644
      %s1744 = smul.u32 98, %s14
      %p1745 = scmp.lt.s32.totalorder %s1744, 195
      %s1746 = scalar_select %p1745, %s1744, 195
      %s1747 = smul.addr %s1746, 4
      %s1748 = scalar_lea.vmem %s3, %s1747
      // Predicated region
      $region33: #{resnet10_emnist_forward.17} parent=31 // pred_check
        %p1749 = pneg %p100
      $region34: #{resnet10_emnist_forward.17} parent=31 // pred_check_branch
        %1751 = sbr.rel (%p1749) target = $region36
      $region35: #{resnet10_emnist_forward.17} parent=31 // pred_region
        %s1752 = smul.u32 98, %s14
      $region36: #{resnet10_emnist_forward.17} parent=31 // pred_fallthru
        _
    $region32: #{resnet10_emnist_forward.17} parent=5 // pred_fallthru
      _
    %p1753 = scmp.le.s32.totalorder 2, %s9
    // Predicated region
    $region37: #{resnet10_emnist_forward.17} parent=5 // pred_check
      %p1754 = pneg %p1753
    $region38: #{resnet10_emnist_forward.17} parent=5 // pred_check_branch
      %1756 = sbr.rel (%p1754) target = $region40
    $region39: #{resnet10_emnist_forward.17} parent=5 // pred_region
      %s1757 = ssub.s32 %s9, 2
      // Predicated region
      $region41: #{resnet10_emnist_forward.17} parent=39 // pred_check
        %p1758 = pneg %p106
      $region42: #{resnet10_emnist_forward.17} parent=39 // pred_check_branch
        %1760 = sbr.rel (%p1758) target = $region44
      $region43: #{resnet10_emnist_forward.17} parent=39 // pred_region
        %s1761 = smul.u32 98, %s15
        %p1762 = scmp.lt.s32.totalorder %s1761, 195
        %s1763 = scalar_select %p1762, %s1761, 195
        %s1764 = smul.addr %s1763, 4
        %s1765 = scalar_lea.vmem %s3, %s1764
      $region44: #{resnet10_emnist_forward.17} parent=39 // pred_fallthru
        _
    $region40: #{resnet10_emnist_forward.17} parent=5 // pred_fallthru
      _
  $region6: #{resnet10_emnist_forward.17} parent=0 // loop_footer
    %s13 = sadd.s32 1, %s9
  $region7: #{resnet10_emnist_forward.17} parent=0 // loop_footer_branch
    %8 = sbr.rel target = $region3
  $region8: #{resnet10_emnist_forward.17} parent=0 // loop_exit
    _

// kernel: resnet10_emnist_forward.18
$region0: #{resnet10_emnist_forward.18}
  #allocation0 [shape = 'u32[]', space=smem, size = 0x4, offset = 0x4, fixed_abs, tag = 'smem constant byte address 0x4 - core index']
  #allocation1 [shape = 'u32[72,128]{1,0:T(1,128)}', space=vmem, size = 0x9000, scoped, tag = 'internal scratch']
  %s0 = inlined_call_operand.vmem [shape: bf16[1568,144], index: 0, kind: input, shape index: {}]
  %s1 = inlined_call_operand.vmem [shape: bf16[144,16], index: 1, kind: input, shape index: {}]
  %s2 = inlined_call_operand.vmem [shape: f32[1,16], index: 2, kind: input, shape index: {}]
  %s3 = inlined_call_operand.vmem [shape: bf16[1568,16], index: 3, kind: input, shape index: {}]
  %s4 = inlined_call_operand.vmem [shape: bf16[1568,16], index: 4, kind: output, shape index: {}]
  %s5 = sld [smem:[#allocation0]]
  $region49: #{resnet10_emnist_forward.18} parent=0
    _
  %s7 = ssub.s32 1, %s5
  %s8 = scalar_select 0, %s7, %s5
  loop: start=0, step=1, limit=4
  $region2: #{resnet10_emnist_forward.18} parent=0 // loop_pre_header
    _
  $region3: #{resnet10_emnist_forward.18} parent=0 // loop_header
    %s10 = sphi 0, %s14
    %p11 = scmp.ge.s32.totalorder %s10, 4
    %s20 = sphi 0, %s22
    %s23 = sphi 0, %s20
    %s24 = sphi 0, %s23
    %s40 = sphi 0, %s24
    %s44 = sphi 0, %s44
    %s46 = sphi 0, %s44
    %s47 = sphi 0, %s46
    %s61 = sphi 0, %s47
    %s65 = sphi 0, %s65
    %s67 = sphi 0, %s65
    %s68 = sphi 0, %s67
    %s82 = sphi 0, %s68
    %s88 = sphi 0, %s90
    %s91 = sphi 0, %s88
    %s92 = sphi 0, %s91
    %s108 = sphi 0, %s92
    %s114 = sphi 0, %s116
    %s117 = sphi 0, %s114
    %s118 = sphi 0, %s117
    %s134 = sphi 0, %s118
  $region4: #{resnet10_emnist_forward.18} parent=0 // loop_header_branch
    %13 = sbr.rel (%p11) target = $region8
  $region5: #{resnet10_emnist_forward.18} parent=0 // loop_body
    %s15 = ssub.s32 %s10, 1
    %s16 = ssub.s32 %s10, 2
    %s17 = sadd.s32 %s10, 1
    %s18 = ssub.s32 %s10, %s17
    %p19 = scmp.eq.s32.totalorder %s18, 0
    %s21 = sadd.s32 %s20, 1
    %s22 = scalar_select %p19, %s20, %s21
    %p25 = pneg %p19
    %p26 = scmp.eq.s32.totalorder %s10, 1
    %p27 = por %p25, %p26
    %p28 = scmp.ne.s32.totalorder %s20, %s23
    %p29 = scmp.eq.s32.totalorder %s10, 0
    %p30 = por %p28, %p29
    %p31 = scmp.ne.s32.totalorder %s20, %s23
    %p32 = scmp.eq.s32.totalorder %s15, 1
    %p33 = por %p31, %p32
    %p34 = scmp.ne.s32.totalorder %s23, %s24
    %p35 = scmp.eq.s32.totalorder %s15, 0
    %p36 = por %p34, %p35
    %p37 = scmp.ne.s32.totalorder %s23, %s24
    %p38 = scmp.eq.s32.totalorder %s16, 1
    %p39 = por %p37, %p38
    %p41 = scmp.ne.s32.totalorder %s24, %s40
    %p42 = scmp.eq.s32.totalorder %s16, 0
    %p43 = por %p41, %p42
    %s45 = sadd.s32 %s44, 1
    %p48 = scmp.eq.s32.totalorder %s10, 1
    %p49 = scmp.ne.s32.totalorder %s44, %s46
    %p50 = scmp.eq.s32.totalorder %s10, 0
    %p51 = por %p49, %p50
    %p52 = scmp.ne.s32.totalorder %s44, %s46
    %p53 = scmp.eq.s32.totalorder %s15, 1
    %p54 = por %p52, %p53
    %p55 = scmp.ne.s32.totalorder %s46, %s47
    %p56 = scmp.eq.s32.totalorder %s15, 0
    %p57 = por %p55, %p56
    %p58 = scmp.ne.s32.totalorder %s46, %s47
    %p59 = scmp.eq.s32.totalorder %s16, 1
    %p60 = por %p58, %p59
    %p62 = scmp.ne.s32.totalorder %s47, %s61
    %p63 = scmp.eq.s32.totalorder %s16, 0
    %p64 = por %p62, %p63
    %s66 = sadd.s32 %s65, 1
    %p69 = scmp.eq.s32.totalorder %s10, 1
    %p70 = scmp.ne.s32.totalorder %s65, %s67
    %p71 = scmp.eq.s32.totalorder %s10, 0
    %p72 = por %p70, %p71
    %p73 = scmp.ne.s32.totalorder %s65, %s67
    %p74 = scmp.eq.s32.totalorder %s15, 1
    %p75 = por %p73, %p74
    %p76 = scmp.ne.s32.totalorder %s67, %s68
    %p77 = scmp.eq.s32.totalorder %s15, 0
    %p78 = por %p76, %p77
    %p79 = scmp.ne.s32.totalorder %s67, %s68
    %p80 = scmp.eq.s32.totalorder %s16, 1
    %p81 = por %p79, %p80
    %p83 = scmp.ne.s32.totalorder %s68, %s82
    %p84 = scmp.eq.s32.totalorder %s16, 0
    %p85 = por %p83, %p84
    %s86 = ssub.s32 %s10, %s17
    %p87 = scmp.eq.s32.totalorder %s86, 0
    %s89 = sadd.s32 %s88, 1
    %s90 = scalar_select %p87, %s88, %s89
    %p93 = pneg %p87
    %p94 = scmp.eq.s32.totalorder %s10, 1
    %p95 = por %p93, %p94
    %p96 = scmp.ne.s32.totalorder %s88, %s91
    %p97 = scmp.eq.s32.totalorder %s10, 0
    %p98 = por %p96, %p97
    %p99 = scmp.ne.s32.totalorder %s88, %s91
    %p100 = scmp.eq.s32.totalorder %s15, 1
    %p101 = por %p99, %p100
    %p102 = scmp.ne.s32.totalorder %s91, %s92
    %p103 = scmp.eq.s32.totalorder %s15, 0
    %p104 = por %p102, %p103
    %p105 = scmp.ne.s32.totalorder %s91, %s92
    %p106 = scmp.eq.s32.totalorder %s16, 1
    %p107 = por %p105, %p106
    %p109 = scmp.ne.s32.totalorder %s92, %s108
    %p110 = scmp.eq.s32.totalorder %s16, 0
    %p111 = por %p109, %p110
    %s112 = ssub.s32 %s10, %s17
    %p113 = scmp.eq.s32.totalorder %s112, 0
    %s115 = sadd.s32 %s114, 1
    %s116 = scalar_select %p113, %s114, %s115
    %p119 = pneg %p113
    %p120 = scmp.eq.s32.totalorder %s10, 1
    %p121 = por %p119, %p120
    %p122 = scmp.ne.s32.totalorder %s114, %s117
    %p123 = scmp.eq.s32.totalorder %s10, 0
    %p124 = por %p122, %p123
    %p125 = scmp.ne.s32.totalorder %s114, %s117
    %p126 = scmp.eq.s32.totalorder %s15, 1
    %p127 = por %p125, %p126
    %p128 = scmp.ne.s32.totalorder %s117, %s118
    %p129 = scmp.eq.s32.totalorder %s15, 0
    %p130 = por %p128, %p129
    %p131 = scmp.ne.s32.totalorder %s117, %s118
    %p132 = scmp.eq.s32.totalorder %s16, 1
    %p133 = por %p131, %p132
    %p135 = scmp.ne.s32.totalorder %s118, %s134
    %p136 = scmp.eq.s32.totalorder %s16, 0
    %p137 = por %p135, %p136
    %p138 = scmp.le.s32.totalorder 1, %s10
    %p139 = scmp.lt.s32.totalorder %s10, 3
    %p140 = pnand %p138, %p139
    %p141 = pneg %p140
    // Predicated region
    $region9: #{resnet10_emnist_forward.18} parent=5 // pred_check
      _
    $region10: #{resnet10_emnist_forward.18} parent=5 // pred_check_branch
      %143 = sbr.rel (%p140) target = $region12
    $region11: #{resnet10_emnist_forward.18} parent=5 // pred_region
      %s144 = ssub.s32 %s10, 1
      // Predicated region
      $region13: #{resnet10_emnist_forward.18} parent=11 // pred_check
        %p145 = pneg %p57
      $region14: #{resnet10_emnist_forward.18} parent=11 // pred_check_branch
        %147 = sbr.rel (%p145) target = $region16
      $region15: #{resnet10_emnist_forward.18} parent=11 // pred_region
        _
      $region16: #{resnet10_emnist_forward.18} parent=11 // pred_fallthru
        _
      // Predicated region
      $region17: #{resnet10_emnist_forward.18} parent=11 // pred_check
        %p148 = pneg %p78
      $region18: #{resnet10_emnist_forward.18} parent=11 // pred_check_branch
        %150 = sbr.rel (%p148) target = $region20
      $region19: #{resnet10_emnist_forward.18} parent=11 // pred_region
        _
      $region20: #{resnet10_emnist_forward.18} parent=11 // pred_fallthru
        _
    $region12: #{resnet10_emnist_forward.18} parent=5 // pred_fallthru
      _
    %p151 = scmp.lt.s32.totalorder %s10, 2
    // Predicated region
    $region21: #{resnet10_emnist_forward.18} parent=5 // pred_check
      %p152 = pneg %p151
    $region22: #{resnet10_emnist_forward.18} parent=5 // pred_check_branch
      %154 = sbr.rel (%p152) target = $region24
    $region23: #{resnet10_emnist_forward.18} parent=5 // pred_region
      // Predicated region
      $region25: #{resnet10_emnist_forward.18} parent=23 // pred_check
        %p155 = pneg %p30
      $region26: #{resnet10_emnist_forward.18} parent=23 // pred_check_branch
        %157 = sbr.rel (%p155) target = $region28
      $region27: #{resnet10_emnist_forward.18} parent=23 // pred_region
        %s158 = smul.u32 98, %s10
        %p159 = scmp.lt.s32.totalorder %s158, 195
        %s160 = scalar_select %p159, %s158, 195
        %s161 = smul.addr %s160, 2
        %s162 = smul.addr %s161, 4
        %s163 = scalar_lea.vmem %s0, %s162
        %s164 = smul.u32 98, %s10
      $region28: #{resnet10_emnist_forward.18} parent=23 // pred_fallthru
        _
      // Predicated region
      $region29: #{resnet10_emnist_forward.18} parent=23 // pred_check
        %p165 = pneg %p98
      $region30: #{resnet10_emnist_forward.18} parent=23 // pred_check_branch
        %167 = sbr.rel (%p165) target = $region32
      $region31: #{resnet10_emnist_forward.18} parent=23 // pred_region
        %s168 = smul.u32 98, %s10
        %p169 = scmp.lt.s32.totalorder %s168, 195
        %s170 = scalar_select %p169, %s168, 195
        %s171 = smul.addr %s170, 4
        %s172 = scalar_lea.vmem %s3, %s171
        %s173 = smul.u32 98, %s10
      $region32: #{resnet10_emnist_forward.18} parent=23 // pred_fallthru
        _
    $region24: #{resnet10_emnist_forward.18} parent=5 // pred_fallthru
      _
    %p174 = scmp.le.s32.totalorder 1, %s10
    %p175 = scmp.lt.s32.totalorder %s10, 3
    %p176 = pnand %p174, %p175
    %p177 = pneg %p176
    // Predicated region
    $region33: #{resnet10_emnist_forward.18} parent=5 // pred_check
      _
    $region34: #{resnet10_emnist_forward.18} parent=5 // pred_check_branch
      %179 = sbr.rel (%p176) target = $region36
    $region35: #{resnet10_emnist_forward.18} parent=5 // pred_region
      %s180 = ssub.s32 %s10, 1
      %s181 = smul.u32 98, %s15
      %p182 = scmp.lt.s32.totalorder %s181, 195
      %s183 = scalar_select %p182, %s181, 195
      %s184 = smul.addr %s183, 2
      %s185 = smul.addr %s184, 4
      %s186 = scalar_lea.vmem %s0, %s185
      %p187 = pneg %p36
      %p188 = pneg %p33
      %p189 = pneg %p57
      %p190 = pneg %p54
      %p191 = pneg %p78
      %p192 = pneg %p75
      %s193 = smul.u32 98, %s15
      %p194 = scmp.lt.s32.totalorder %s193, 195
      %s195 = scalar_select %p194, %s193, 195
      %s196 = smul.addr %s195, 4
      %s197 = scalar_lea.vmem %s3, %s196
      %p198 = pneg %p104
      %p199 = pneg %p101
      %p200 = pneg %p130
      %p201 = pneg %p127
      %s202 = smul.u32 98, %s15
      %p203 = scmp.lt.s32.totalorder %s202, 195
      %s204 = scalar_select %p203, %s202, 195
      %s205 = smul.addr %s204, 4
      %s206 = scalar_lea.vmem %s4, %s205
      %s207 = smul.u32 98, %s15
      %p208 = scmp.lt.s32.totalorder %s207, 195
      %s209 = scalar_select %p208, %s207, 195
      %s210 = smul.addr %s209, 2
      %s211 = smul.addr %s210, 4
      %s212 = scalar_lea.vmem %s0, %s211
      %s213 = smul.u32 98, %s15
      %s214 = smul.u32 98, %s15
      %p215 = scmp.lt.s32.totalorder %s214, 195
      %s216 = scalar_select %p215, %s214, 195
      %s217 = smul.addr %s216, 4
      %s218 = scalar_lea.vmem %s3, %s217
      %s219 = smul.u32 98, %s15
      %s220 = smul.u32 98, %s15
      %p221 = scmp.lt.s32.totalorder %s220, 195
      %s222 = scalar_select %p221, %s220, 195
      %s223 = smul.addr %s222, 4
      %s224 = scalar_lea.vmem %s4, %s223
      %s225 = smul.u32 98, %s15
      %v227 = vld [vmem:[%s212] sm:$0xff]
      %v228 = vld [vmem:[%s212 + $0x8] sm:$0xff]
      %v229 = vld [vmem:[%s212 + $0x10] sm:$0xff]
      %v230 = vld [vmem:[%s212 + $0x18] sm:$0xff]
      %v231 = vld [vmem:[%s212 + $0x20] sm:$0xff]
      %v232 = vld [vmem:[%s212 + $0x28] sm:$0xff]
      %v233 = vld [vmem:[%s212 + $0x30] sm:$0xff]
      %v234 = vld [vmem:[%s212 + $0x38] sm:$0xff]
      %v235 = vld [vmem:[%s212 + $0x40] sm:$0xff]
      %v236 = vld [vmem:[%s212 + $0x48] sm:$0xff]
      %v237 = vld [vmem:[%s212 + $0x50] sm:$0xff]
      %v238 = vld [vmem:[%s212 + $0x58] sm:$0xff]
      %v239 = vld [vmem:[%s212 + $0x60] sm:$0xff]
      %v240 = vld [vmem:[%s212 + $0x68] sm:$0xff]
      %v241 = vld [vmem:[%s212 + $0x70] sm:$0xff]
      %v242 = vld [vmem:[%s212 + $0x78] sm:$0xff]
      %v243 = vld [vmem:[%s212 + $0x80] sm:$0xff]
      %v244 = vld [vmem:[%s212 + $0x88] sm:$0xff]
      %v245 = vld [vmem:[%s212 + $0x90] sm:$0xff]
      %v246 = vld [vmem:[%s212 + $0x98] sm:$0xff]
      %v247 = vld [vmem:[%s212 + $0xa0] sm:$0xff]
      %v248 = vld [vmem:[%s212 + $0xa8] sm:$0xff]
      %v249 = vld [vmem:[%s212 + $0xb0] sm:$0xff]
      %v250 = vld [vmem:[%s212 + $0xb8] sm:$0xff]
      %v251 = vld [vmem:[%s212 + $0xc0] sm:$0xff]
      %v252 = vld [vmem:[%s212 + $0xc8] sm:$0xff]
      %v253 = vld [vmem:[%s212 + $0xd0] sm:$0xff]
      %v254 = vld [vmem:[%s212 + $0xd8] sm:$0xff]
      %v255 = vld [vmem:[%s212 + $0xe0] sm:$0xff]
      %v256 = vld [vmem:[%s212 + $0xe8] sm:$0xff]
      %v257 = vld [vmem:[%s212 + $0xf0] sm:$0xff]
      %v258 = vld [vmem:[%s212 + $0xf8] sm:$0xff]
      %v259 = vld [vmem:[%s212 + $0x100] sm:$0xff]
      %v260 = vld [vmem:[%s212 + $0x108] sm:$0xff]
      %v261 = vld [vmem:[%s212 + $0x110] sm:$0xff]
      %v262 = vld [vmem:[%s212 + $0x118] sm:$0xff]
      %v263 = vld [vmem:[%s212 + $0x120] sm:$0xff]
      %v264 = vld [vmem:[%s212 + $0x128] sm:$0xff]
      %v265 = vld [vmem:[%s212 + $0x130] sm:$0xff]
      %v266 = vld [vmem:[%s212 + $0x138] sm:$0xff]
      %v267 = vld [vmem:[%s212 + $0x140] sm:$0xff]
      %v268 = vld [vmem:[%s212 + $0x148] sm:$0xff]
      %v269 = vld [vmem:[%s212 + $0x150] sm:$0xff]
      %v270 = vld [vmem:[%s212 + $0x158] sm:$0xff]
      %v271 = vld [vmem:[%s212 + $0x160] sm:$0xff]
      %v272 = vld [vmem:[%s212 + $0x168] sm:$0xff]
      %v273 = vld [vmem:[%s212 + $0x170] sm:$0xff]
      %v274 = vld [vmem:[%s212 + $0x178] sm:$0xff]
      %v275 = vld [vmem:[%s212 + $0x180] sm:$0xff]
      %v276 = vld [vmem:[%s212 + $0x188] sm:$0xff]
      %v277 = vld [vmem:[%s212 + $0x190] sm:$0xff]
      %v278 = vld [vmem:[%s212 + $0x198] sm:$0xff]
      %v279 = vld [vmem:[%s212 + $0x1a0] sm:$0xff]
      %v280 = vld [vmem:[%s212 + $0x1a8] sm:$0xff]
      %v281 = vld [vmem:[%s212 + $0x1b0] sm:$0xff]
      %v282 = vld [vmem:[%s212 + $0x1b8] sm:$0xff]
      %v283 = vld [vmem:[%s212 + $0x1c0] sm:$0xff]
      %v284 = vld [vmem:[%s212 + $0x1c8] sm:$0xff]
      %v285 = vld [vmem:[%s212 + $0x1d0] sm:$0xff]
      %v286 = vld [vmem:[%s212 + $0x1d8] sm:$0xff]
      %v287 = vld [vmem:[%s212 + $0x1e0] sm:$0xff]
      %v288 = vld [vmem:[%s212 + $0x1e8] sm:$0xff]
      %v289 = vld [vmem:[%s212 + $0x1f0] sm:$0xff]
      %v290 = vld [vmem:[%s212 + $0x1f8] sm:$0xff]
      %v291 = vld [vmem:[%s212 + $0x200] sm:$0xff]
      %v292 = vld [vmem:[%s212 + $0x208] sm:$0xff]
      %v293 = vld [vmem:[%s212 + $0x210] sm:$0xff]
      %v294 = vld [vmem:[%s212 + $0x218] sm:$0xff]
      %v295 = vld [vmem:[%s212 + $0x220] sm:$0xff]
      %v296 = vld [vmem:[%s212 + $0x228] sm:$0xff]
      %v297 = vld [vmem:[%s212 + $0x230] sm:$0xff]
      %v298 = vld [vmem:[%s212 + $0x238] sm:$0xff]
      %v299 = vld [vmem:[%s212 + $0x240] sm:$0xff]
      %v300 = vld [vmem:[%s212 + $0x248] sm:$0xff]
      %v301 = vld [vmem:[%s212 + $0x250] sm:$0xff]
      %v302 = vld [vmem:[%s212 + $0x258] sm:$0xff]
      %v303 = vld [vmem:[%s212 + $0x260] sm:$0xff]
      %v304 = vld [vmem:[%s212 + $0x268] sm:$0xff]
      %v305 = vld [vmem:[%s212 + $0x270] sm:$0xff]
      %v306 = vld [vmem:[%s212 + $0x278] sm:$0xff]
      %v307 = vld [vmem:[%s212 + $0x280] sm:$0xff]
      %v308 = vld [vmem:[%s212 + $0x288] sm:$0xff]
      %v309 = vld [vmem:[%s212 + $0x290] sm:$0xff]
      %v310 = vld [vmem:[%s212 + $0x298] sm:$0xff]
      %v311 = vld [vmem:[%s212 + $0x2a0] sm:$0xff]
      %v312 = vld [vmem:[%s212 + $0x2a8] sm:$0xff]
      %v313 = vld [vmem:[%s212 + $0x2b0] sm:$0xff]
      %v314 = vld [vmem:[%s212 + $0x2b8] sm:$0xff]
      %v315 = vld [vmem:[%s212 + $0x2c0] sm:$0xff]
      %v316 = vld [vmem:[%s212 + $0x2c8] sm:$0xff]
      %v317 = vld [vmem:[%s212 + $0x2d0] sm:$0xff]
      %v318 = vld [vmem:[%s212 + $0x2d8] sm:$0xff]
      %v319 = vld [vmem:[%s212 + $0x2e0] sm:$0xff]
      %v320 = vld [vmem:[%s212 + $0x2e8] sm:$0xff]
      %v321 = vld [vmem:[%s212 + $0x2f0] sm:$0xff]
      %v322 = vld [vmem:[%s212 + $0x2f8] sm:$0xff]
      %v323 = vld [vmem:[%s212 + $0x300] sm:$0xff]
      %v324 = vld [vmem:[%s212 + $0x308] sm:$0xff]
      %v325 = vld [vmem:[%s1] sm:$0xf]
      %v326 = vld [vmem:[%s1 + $0x4] sm:$0xf]
      %v327 = vld [vmem:[%s1 + $0x8] sm:$0xf]
      %v328 = vld [vmem:[%s1 + $0xc] sm:$0xf]
      %v329 = vld [vmem:[%s1 + $0x10] sm:$0xf]
      %v330 = vld [vmem:[%s1 + $0x14] sm:$0xf]
      %v331 = vld [vmem:[%s1 + $0x18] sm:$0xf]
      %v332 = vld [vmem:[%s1 + $0x1c] sm:$0xf]
      %v333 = vld [vmem:[%s1 + $0x20] sm:$0xf]
      %v334 = vld [vmem:[%s1 + $0x24] sm:$0xf]
      %v335 = vld [vmem:[%s1 + $0x28] sm:$0xf]
      %v336 = vld [vmem:[%s1 + $0x2c] sm:$0xf]
      %v337 = vld [vmem:[%s1 + $0x30] sm:$0xf]
      %v338 = vld [vmem:[%s1 + $0x34] sm:$0xf]
      %v339 = vld [vmem:[%s1 + $0x38] sm:$0xf]
      %v340 = vld [vmem:[%s1 + $0x3c] sm:$0xf]
      %v341 = vld [vmem:[%s1 + $0x40] sm:$0xf]
      %v342 = vld [vmem:[%s1 + $0x44] sm:$0xf]
      %v343 = vld [vmem:[%s2] sm:$0x1]
      %v345 = vperm.slane %v343, 0
      %v445 = vunpack.c.l.b16 %v227
      %v446 = vunpack.c.h.b16 %v227
      %v447 = vunpack.c.l.b16 %v228
      %v448 = vunpack.c.h.b16 %v228
      %v449 = vunpack.c.l.b16 %v229
      %v450 = vunpack.c.h.b16 %v229
      %v451 = vunpack.c.l.b16 %v230
      %v452 = vunpack.c.h.b16 %v230
      %v453 = vunpack.c.l.b16 %v231
      %v454 = vunpack.c.h.b16 %v231
      %v455 = vunpack.c.l.b16 %v232
      %v456 = vunpack.c.h.b16 %v232
      %v457 = vunpack.c.l.b16 %v233
      %v458 = vunpack.c.h.b16 %v233
      %v459 = vunpack.c.l.b16 %v234
      %v460 = vunpack.c.h.b16 %v234
      %v461 = vunpack.c.l.b16 %v235
      %v462 = vunpack.c.h.b16 %v235
      %v463 = vunpack.c.l.b16 %v236
      %v464 = vunpack.c.h.b16 %v236
      %v465 = vunpack.c.l.b16 %v237
      %v466 = vunpack.c.h.b16 %v237
      %v467 = vunpack.c.l.b16 %v238
      %v468 = vunpack.c.h.b16 %v238
      %v469 = vunpack.c.l.b16 %v239
      %v470 = vunpack.c.h.b16 %v239
      %v471 = vunpack.c.l.b16 %v240
      %v472 = vunpack.c.h.b16 %v240
      %v473 = vunpack.c.l.b16 %v241
      %v474 = vunpack.c.h.b16 %v241
      %v475 = vunpack.c.l.b16 %v242
      %v476 = vunpack.c.h.b16 %v242
      %v477 = vunpack.c.l.b16 %v243
      %v478 = vunpack.c.h.b16 %v243
      %v479 = vunpack.c.l.b16 %v244
      %v480 = vunpack.c.h.b16 %v244
      %v481 = vunpack.c.l.b16 %v245
      %v482 = vunpack.c.h.b16 %v245
      %v483 = vunpack.c.l.b16 %v246
      %v484 = vunpack.c.h.b16 %v246
      %v485 = vunpack.c.l.b16 %v247
      %v486 = vunpack.c.h.b16 %v247
      %v487 = vunpack.c.l.b16 %v248
      %v488 = vunpack.c.h.b16 %v248
      %v489 = vunpack.c.l.b16 %v249
      %v490 = vunpack.c.h.b16 %v249
      %v491 = vunpack.c.l.b16 %v250
      %v492 = vunpack.c.h.b16 %v250
      %v493 = vunpack.c.l.b16 %v251
      %v494 = vunpack.c.h.b16 %v251
      %v495 = vunpack.c.l.b16 %v252
      %v496 = vunpack.c.h.b16 %v252
      %v497 = vunpack.c.l.b16 %v253
      %v498 = vunpack.c.h.b16 %v253
      %v499 = vunpack.c.l.b16 %v254
      %v500 = vunpack.c.h.b16 %v254
      %v501 = vunpack.c.l.b16 %v255
      %v502 = vunpack.c.h.b16 %v255
      %v503 = vunpack.c.l.b16 %v256
      %v504 = vunpack.c.h.b16 %v256
      %v505 = vunpack.c.l.b16 %v257
      %v506 = vunpack.c.h.b16 %v257
      %v507 = vunpack.c.l.b16 %v258
      %v508 = vunpack.c.h.b16 %v258
      %v509 = vunpack.c.l.b16 %v259
      %v510 = vunpack.c.h.b16 %v259
      %v511 = vunpack.c.l.b16 %v260
      %v512 = vunpack.c.h.b16 %v260
      %v513 = vunpack.c.l.b16 %v261
      %v514 = vunpack.c.h.b16 %v261
      %v515 = vunpack.c.l.b16 %v262
      %v516 = vunpack.c.h.b16 %v262
      %v517 = vunpack.c.l.b16 %v263
      %v518 = vunpack.c.h.b16 %v263
      %v519 = vunpack.c.l.b16 %v264
      %v520 = vunpack.c.h.b16 %v264
      %v521 = vunpack.c.l.b16 %v265
      %v522 = vunpack.c.h.b16 %v265
      %v523 = vunpack.c.l.b16 %v266
      %v524 = vunpack.c.h.b16 %v266
      %v525 = vunpack.c.l.b16 %v267
      %v526 = vunpack.c.h.b16 %v267
      %v527 = vunpack.c.l.b16 %v268
      %v528 = vunpack.c.h.b16 %v268
      %v529 = vunpack.c.l.b16 %v269
      %v530 = vunpack.c.h.b16 %v269
      %v531 = vunpack.c.l.b16 %v270
      %v532 = vunpack.c.h.b16 %v270
      %v533 = vunpack.c.l.b16 %v271
      %v534 = vunpack.c.h.b16 %v271
      %v535 = vunpack.c.l.b16 %v272
      %v536 = vunpack.c.h.b16 %v272
      %v537 = vunpack.c.l.b16 %v273
      %v538 = vunpack.c.h.b16 %v273
      %v539 = vunpack.c.l.b16 %v274
      %v540 = vunpack.c.h.b16 %v274
      %v541 = vunpack.c.l.b16 %v275
      %v542 = vunpack.c.h.b16 %v275
      %v543 = vunpack.c.l.b16 %v276
      %v544 = vunpack.c.h.b16 %v276
      %v545 = vunpack.c.l.b16 %v277
      %v546 = vunpack.c.h.b16 %v277
      %v547 = vunpack.c.l.b16 %v278
      %v548 = vunpack.c.h.b16 %v278
      %v549 = vunpack.c.l.b16 %v279
      %v550 = vunpack.c.h.b16 %v279
      %v551 = vunpack.c.l.b16 %v280
      %v552 = vunpack.c.h.b16 %v280
      %v553 = vunpack.c.l.b16 %v281
      %v554 = vunpack.c.h.b16 %v281
      %v555 = vunpack.c.l.b16 %v282
      %v556 = vunpack.c.h.b16 %v282
      %v557 = vunpack.c.l.b16 %v283
      %v558 = vunpack.c.h.b16 %v283
      %v559 = vunpack.c.l.b16 %v284
      %v560 = vunpack.c.h.b16 %v284
      %v561 = vunpack.c.l.b16 %v285
      %v562 = vunpack.c.h.b16 %v285
      %v563 = vunpack.c.l.b16 %v286
      %v564 = vunpack.c.h.b16 %v286
      %v565 = vunpack.c.l.b16 %v287
      %v566 = vunpack.c.h.b16 %v287
      %v567 = vunpack.c.l.b16 %v288
      %v568 = vunpack.c.h.b16 %v288
      %v569 = vunpack.c.l.b16 %v289
      %v570 = vunpack.c.h.b16 %v289
      %v571 = vunpack.c.l.b16 %v290
      %v572 = vunpack.c.h.b16 %v290
      %v573 = vunpack.c.l.b16 %v291
      %v574 = vunpack.c.h.b16 %v291
      %v575 = vunpack.c.l.b16 %v292
      %v576 = vunpack.c.h.b16 %v292
      %v577 = vunpack.c.l.b16 %v293
      %v578 = vunpack.c.h.b16 %v293
      %v579 = vunpack.c.l.b16 %v294
      %v580 = vunpack.c.h.b16 %v294
      %v581 = vunpack.c.l.b16 %v295
      %v582 = vunpack.c.h.b16 %v295
      %v583 = vunpack.c.l.b16 %v296
      %v584 = vunpack.c.h.b16 %v296
      %v585 = vunpack.c.l.b16 %v297
      %v586 = vunpack.c.h.b16 %v297
      %v587 = vunpack.c.l.b16 %v298
      %v588 = vunpack.c.h.b16 %v298
      %v589 = vunpack.c.l.b16 %v299
      %v590 = vunpack.c.h.b16 %v299
      %v591 = vunpack.c.l.b16 %v300
      %v592 = vunpack.c.h.b16 %v300
      %v593 = vunpack.c.l.b16 %v301
      %v594 = vunpack.c.h.b16 %v301
      %v595 = vunpack.c.l.b16 %v302
      %v596 = vunpack.c.h.b16 %v302
      %v597 = vunpack.c.l.b16 %v303
      %v598 = vunpack.c.h.b16 %v303
      %v599 = vunpack.c.l.b16 %v304
      %v600 = vunpack.c.h.b16 %v304
      %v601 = vunpack.c.l.b16 %v305
      %v602 = vunpack.c.h.b16 %v305
      %v603 = vunpack.c.l.b16 %v306
      %v604 = vunpack.c.h.b16 %v306
      %v605 = vunpack.c.l.b16 %v307
      %v606 = vunpack.c.h.b16 %v307
      %v607 = vunpack.c.l.b16 %v308
      %v608 = vunpack.c.h.b16 %v308
      %v609 = vunpack.c.l.b16 %v309
      %v610 = vunpack.c.h.b16 %v309
      %v611 = vunpack.c.l.b16 %v310
      %v612 = vunpack.c.h.b16 %v310
      %v613 = vunpack.c.l.b16 %v311
      %v614 = vunpack.c.h.b16 %v311
      %v615 = vunpack.c.l.b16 %v312
      %v616 = vunpack.c.h.b16 %v312
      %v617 = vunpack.c.l.b16 %v313
      %v618 = vunpack.c.h.b16 %v313
      %v619 = vunpack.c.l.b16 %v314
      %v620 = vunpack.c.h.b16 %v314
      %v621 = vunpack.c.l.b16 %v315
      %v622 = vunpack.c.h.b16 %v315
      %v623 = vunpack.c.l.b16 %v316
      %v624 = vunpack.c.h.b16 %v316
      %v625 = vunpack.c.l.b16 %v317
      %v626 = vunpack.c.h.b16 %v317
      %v627 = vunpack.c.l.b16 %v318
      %v628 = vunpack.c.h.b16 %v318
      %v629 = vunpack.c.l.b16 %v319
      %v630 = vunpack.c.h.b16 %v319
      %v631 = vunpack.c.l.b16 %v320
      %v632 = vunpack.c.h.b16 %v320
      %v633 = vunpack.c.l.b16 %v321
      %v634 = vunpack.c.h.b16 %v321
      %v635 = vunpack.c.l.b16 %v322
      %v636 = vunpack.c.h.b16 %v322
      %v637 = vunpack.c.l.b16 %v323
      %v638 = vunpack.c.h.b16 %v323
      %v639 = vunpack.c.l.b16 %v324
      %v640 = vunpack.c.h.b16 %v324
      %v641 = vpack.c.b16 %v447, %v445
      %v642 = vpack.c.b16 %v448, %v446
      %v643 = vpack.c.b16 %v451, %v449
      %v644 = vpack.c.b16 %v452, %v450
      %v645 = vpack.c.b16 %v455, %v453
      %v646 = vpack.c.b16 %v456, %v454
      %v647 = vpack.c.b16 %v459, %v457
      %v648 = vpack.c.b16 %v460, %v458
      %v649 = vpack.c.b16 %v463, %v461
      %v650 = vpack.c.b16 %v464, %v462
      %v651 = vpack.c.b16 %v467, %v465
      %v652 = vpack.c.b16 %v468, %v466
      %v653 = vpack.c.b16 %v471, %v469
      %v654 = vpack.c.b16 %v472, %v470
      %v655 = vpack.c.b16 %v475, %v473
      %v656 = vpack.c.b16 %v476, %v474
      %v657 = vpack.c.b16 %v479, %v477
      %v658 = vpack.c.b16 %v480, %v478
      %v659 = vpack.c.b16 %v483, %v481
      %v660 = vpack.c.b16 %v484, %v482
      %v661 = vpack.c.b16 %v487, %v485
      %v662 = vpack.c.b16 %v488, %v486
      %v663 = vpack.c.b16 %v491, %v489
      %v664 = vpack.c.b16 %v492, %v490
      %v665 = vpack.c.b16 %v495, %v493
      %v666 = vpack.c.b16 %v496, %v494
      %v667 = vpack.c.b16 %v499, %v497
      %v668 = vpack.c.b16 %v500, %v498
      %v669 = vpack.c.b16 %v503, %v501
      %v670 = vpack.c.b16 %v504, %v502
      %v671 = vpack.c.b16 %v507, %v505
      %v672 = vpack.c.b16 %v508, %v506
      %v673 = vpack.c.b16 %v511, %v509
      %v674 = vpack.c.b16 %v512, %v510
      %v675 = vpack.c.b16 %v515, %v513
      %v676 = vpack.c.b16 %v516, %v514
      %v677 = vpack.c.b16 %v519, %v517
      %v678 = vpack.c.b16 %v520, %v518
      %v679 = vpack.c.b16 %v523, %v521
      %v680 = vpack.c.b16 %v524, %v522
      %v681 = vpack.c.b16 %v527, %v525
      %v682 = vpack.c.b16 %v528, %v526
      %v683 = vpack.c.b16 %v531, %v529
      %v684 = vpack.c.b16 %v532, %v530
      %v685 = vpack.c.b16 %v535, %v533
      %v686 = vpack.c.b16 %v536, %v534
      %v687 = vpack.c.b16 %v539, %v537
      %v688 = vpack.c.b16 %v540, %v538
      %v689 = vpack.c.b16 %v543, %v541
      %v690 = vpack.c.b16 %v544, %v542
      %v691 = vpack.c.b16 %v547, %v545
      %v692 = vpack.c.b16 %v548, %v546
      %v693 = vpack.c.b16 %v551, %v549
      %v694 = vpack.c.b16 %v552, %v550
      %v695 = vpack.c.b16 %v555, %v553
      %v696 = vpack.c.b16 %v556, %v554
      %v697 = vpack.c.b16 %v559, %v557
      %v698 = vpack.c.b16 %v560, %v558
      %v699 = vpack.c.b16 %v563, %v561
      %v700 = vpack.c.b16 %v564, %v562
      %v701 = vpack.c.b16 %v567, %v565
      %v702 = vpack.c.b16 %v568, %v566
      %v703 = vpack.c.b16 %v571, %v569
      %v704 = vpack.c.b16 %v572, %v570
      %v705 = vpack.c.b16 %v575, %v573
      %v706 = vpack.c.b16 %v576, %v574
      %v707 = vpack.c.b16 %v579, %v577
      %v708 = vpack.c.b16 %v580, %v578
      %v709 = vpack.c.b16 %v583, %v581
      %v710 = vpack.c.b16 %v584, %v582
      %v711 = vpack.c.b16 %v587, %v585
      %v712 = vpack.c.b16 %v588, %v586
      %v713 = vpack.c.b16 %v591, %v589
      %v714 = vpack.c.b16 %v592, %v590
      %v715 = vpack.c.b16 %v595, %v593
      %v716 = vpack.c.b16 %v596, %v594
      %v717 = vpack.c.b16 %v599, %v597
      %v718 = vpack.c.b16 %v600, %v598
      %v719 = vpack.c.b16 %v603, %v601
      %v720 = vpack.c.b16 %v604, %v602
      %v721 = vpack.c.b16 %v607, %v605
      %v722 = vpack.c.b16 %v608, %v606
      %v723 = vpack.c.b16 %v611, %v609
      %v724 = vpack.c.b16 %v612, %v610
      %v725 = vpack.c.b16 %v615, %v613
      %v726 = vpack.c.b16 %v616, %v614
      %v727 = vpack.c.b16 %v619, %v617
      %v728 = vpack.c.b16 %v620, %v618
      %v729 = vpack.c.b16 %v623, %v621
      %v730 = vpack.c.b16 %v624, %v622
      %v731 = vpack.c.b16 %v627, %v625
      %v732 = vpack.c.b16 %v628, %v626
      %v733 = vpack.c.b16 %v631, %v629
      %v734 = vpack.c.b16 %v632, %v630
      %v735 = vpack.c.b16 %v635, %v633
      %v736 = vpack.c.b16 %v636, %v634
      %v737 = vpack.c.b16 %v639, %v637
      %v738 = vpack.c.b16 %v640, %v638
      %v806 = vunpack.c.l.b16 %v325
      %v807 = vunpack.c.l.b16 %v326
      %v808 = vunpack.c.l.b16 %v327
      %v809 = vunpack.c.l.b16 %v328
      %v810 = vunpack.c.l.b16 %v329
      %v811 = vunpack.c.l.b16 %v330
      %v812 = vunpack.c.l.b16 %v331
      %v813 = vunpack.c.l.b16 %v332
      %v814 = vunpack.c.l.b16 %v333
      %v815 = vunpack.c.l.b16 %v334
      %v816 = vunpack.c.l.b16 %v335
      %v817 = vunpack.c.l.b16 %v336
      %v818 = vunpack.c.l.b16 %v337
      %v819 = vunpack.c.l.b16 %v338
      %v820 = vunpack.c.l.b16 %v339
      %v821 = vunpack.c.l.b16 %v340
      %v822 = vunpack.c.l.b16 %v341
      %v823 = vunpack.c.l.b16 %v342
      %v824 = vpack.c.b16 %v807, %v806
      %v825 = vpack.c.b16 %v809, %v808
      %v826 = vpack.c.b16 %v811, %v810
      %v827 = vpack.c.b16 %v813, %v812
      %v828 = vpack.c.b16 %v815, %v814
      %v829 = vpack.c.b16 %v817, %v816
      %v830 = vpack.c.b16 %v819, %v818
      %v831 = vpack.c.b16 %v821, %v820
      %v832 = vpack.c.b16 %v823, %v822
      %vm842 = vcmask 130048
      %v844 = vsel %vm842, %v642, 0
      %v847 = vsel %vm842, %v644, 0
      %v850 = vsel %vm842, %v646, 0
      %v853 = vsel %vm842, %v648, 0
      %v856 = vsel %vm842, %v650, 0
      %v859 = vsel %vm842, %v652, 0
      %v862 = vsel %vm842, %v654, 0
      %v865 = vsel %vm842, %v656, 0
      %v868 = vsel %vm842, %v658, 0
      %v871 = vsel %vm842, %v660, 0
      %v874 = vsel %vm842, %v662, 0
      %v877 = vsel %vm842, %v664, 0
      %v880 = vsel %vm842, %v666, 0
      %v883 = vsel %vm842, %v668, 0
      %v886 = vsel %vm842, %v670, 0
      %v889 = vsel %vm842, %v672, 0
      %v892 = vsel %vm842, %v674, 0
      %v895 = vsel %vm842, %v676, 0
      %v898 = vsel %vm842, %v678, 0
      %v901 = vsel %vm842, %v680, 0
      %v904 = vsel %vm842, %v682, 0
      %v907 = vsel %vm842, %v684, 0
      %v910 = vsel %vm842, %v686, 0
      %v913 = vsel %vm842, %v688, 0
      %v916 = vsel %vm842, %v690, 0
      %v919 = vsel %vm842, %v692, 0
      %v922 = vsel %vm842, %v694, 0
      %v925 = vsel %vm842, %v696, 0
      %v928 = vsel %vm842, %v698, 0
      %v931 = vsel %vm842, %v700, 0
      %v934 = vsel %vm842, %v702, 0
      %v937 = vsel %vm842, %v704, 0
      %v940 = vsel %vm842, %v706, 0
      %v943 = vsel %vm842, %v708, 0
      %v946 = vsel %vm842, %v710, 0
      %v949 = vsel %vm842, %v712, 0
      %v952 = vsel %vm842, %v714, 0
      %v955 = vsel %vm842, %v716, 0
      %v958 = vsel %vm842, %v718, 0
      %v961 = vsel %vm842, %v720, 0
      %v964 = vsel %vm842, %v722, 0
      %v967 = vsel %vm842, %v724, 0
      %v970 = vsel %vm842, %v726, 0
      %v973 = vsel %vm842, %v728, 0
      %v976 = vsel %vm842, %v730, 0
      %v979 = vsel %vm842, %v732, 0
      %v982 = vsel %vm842, %v734, 0
      %v985 = vsel %vm842, %v736, 0
      %v988 = vsel %vm842, %v738, 0
      %990 = vmatpush.bf16.msra.mxu0 %v831
      %991 = vmatpush.bf16.msra.mxu0 %v830
      %992 = vmatpush.bf16.msra.mxu0 %v829
      %993 = vmatpush.bf16.msra.mxu0 %v828
      %994 = vmatpush.bf16.msra.mxu0 %v827
      %995 = vmatpush.bf16.msra.mxu0 %v826
      %996 = vmatpush.bf16.msra.mxu0 %v825
      %997 = vmatpush.bf16.msra.mxu0 %v824
      %998 = vmatmul.bf16.gmra.mxu0 %v641
      %v999 = vpop.f32.mrf.mxu0
      %v1000 = vadd.f32 %v345, %v999
      %v1001 = vpop.f32.mrf.mxu0
      %v1002 = vadd.f32 %v345, %v1001
      %1003 = vmatmul.bf16.gmra.mxu0 %v643
      %v1004 = vpop.f32.mrf.mxu0
      %v1005 = vadd.f32 %v345, %v1004
      %v1006 = vpop.f32.mrf.mxu0
      %v1007 = vadd.f32 %v345, %v1006
      %1008 = vmatmul.bf16.gmra.mxu0 %v645
      %v1009 = vpop.f32.mrf.mxu0
      %v1010 = vadd.f32 %v345, %v1009
      %v1011 = vpop.f32.mrf.mxu0
      %v1012 = vadd.f32 %v345, %v1011
      %1013 = vmatmul.bf16.gmra.mxu0 %v647
      %v1014 = vpop.f32.mrf.mxu0
      %v1015 = vadd.f32 %v345, %v1014
      %v1016 = vpop.f32.mrf.mxu0
      %v1017 = vadd.f32 %v345, %v1016
      %1018 = vmatmul.bf16.gmra.mxu0 %v649
      %v1019 = vpop.f32.mrf.mxu0
      %v1020 = vadd.f32 %v345, %v1019
      %v1021 = vpop.f32.mrf.mxu0
      %v1022 = vadd.f32 %v345, %v1021
      %1023 = vmatmul.bf16.gmra.mxu0 %v651
      %v1024 = vpop.f32.mrf.mxu0
      %v1025 = vadd.f32 %v345, %v1024
      %v1026 = vpop.f32.mrf.mxu0
      %v1027 = vadd.f32 %v345, %v1026
      %1028 = vmatmul.bf16.gmra.mxu0 %v653
      %v1029 = vpop.f32.mrf.mxu0
      %v1030 = vadd.f32 %v345, %v1029
      %v1031 = vpop.f32.mrf.mxu0
      %v1032 = vadd.f32 %v345, %v1031
      %1033 = vmatmul.bf16.gmra.mxu0 %v655
      %v1034 = vpop.f32.mrf.mxu0
      %v1035 = vadd.f32 %v345, %v1034
      %v1036 = vpop.f32.mrf.mxu0
      %v1037 = vadd.f32 %v345, %v1036
      %1038 = vmatmul.bf16.gmra.mxu0 %v657
      %v1039 = vpop.f32.mrf.mxu0
      %v1040 = vadd.f32 %v345, %v1039
      %v1041 = vpop.f32.mrf.mxu0
      %v1042 = vadd.f32 %v345, %v1041
      %1043 = vmatmul.bf16.gmra.mxu0 %v659
      %v1044 = vpop.f32.mrf.mxu0
      %v1045 = vadd.f32 %v345, %v1044
      %v1046 = vpop.f32.mrf.mxu0
      %v1047 = vadd.f32 %v345, %v1046
      %1048 = vmatmul.bf16.gmra.mxu0 %v661
      %v1049 = vpop.f32.mrf.mxu0
      %v1050 = vadd.f32 %v345, %v1049
      %v1051 = vpop.f32.mrf.mxu0
      %v1052 = vadd.f32 %v345, %v1051
      %1053 = vmatmul.bf16.gmra.mxu0 %v663
      %v1054 = vpop.f32.mrf.mxu0
      %v1055 = vadd.f32 %v345, %v1054
      %v1056 = vpop.f32.mrf.mxu0
      %v1057 = vadd.f32 %v345, %v1056
      %1058 = vmatmul.bf16.gmra.mxu0 %v665
      %v1059 = vpop.f32.mrf.mxu0
      %v1060 = vadd.f32 %v345, %v1059
      %v1061 = vpop.f32.mrf.mxu0
      %v1062 = vadd.f32 %v345, %v1061
      %1063 = vmatmul.bf16.gmra.mxu0 %v667
      %v1064 = vpop.f32.mrf.mxu0
      %v1065 = vadd.f32 %v345, %v1064
      %v1066 = vpop.f32.mrf.mxu0
      %v1067 = vadd.f32 %v345, %v1066
      %1068 = vmatmul.bf16.gmra.mxu0 %v669
      %v1069 = vpop.f32.mrf.mxu0
      %v1070 = vadd.f32 %v345, %v1069
      %v1071 = vpop.f32.mrf.mxu0
      %v1072 = vadd.f32 %v345, %v1071
      %1073 = vmatmul.bf16.gmra.mxu0 %v671
      %v1074 = vpop.f32.mrf.mxu0
      %v1075 = vadd.f32 %v345, %v1074
      %v1076 = vpop.f32.mrf.mxu0
      %v1077 = vadd.f32 %v345, %v1076
      %1078 = vmatmul.bf16.gmra.mxu0 %v673
      %v1079 = vpop.f32.mrf.mxu0
      %v1080 = vadd.f32 %v345, %v1079
      %v1081 = vpop.f32.mrf.mxu0
      %v1082 = vadd.f32 %v345, %v1081
      %1083 = vmatmul.bf16.gmra.mxu0 %v675
      %v1084 = vpop.f32.mrf.mxu0
      %v1085 = vadd.f32 %v345, %v1084
      %v1086 = vpop.f32.mrf.mxu0
      %v1087 = vadd.f32 %v345, %v1086
      %1088 = vmatmul.bf16.gmra.mxu0 %v677
      %v1089 = vpop.f32.mrf.mxu0
      %v1090 = vadd.f32 %v345, %v1089
      %v1091 = vpop.f32.mrf.mxu0
      %v1092 = vadd.f32 %v345, %v1091
      %1093 = vmatmul.bf16.gmra.mxu0 %v679
      %v1094 = vpop.f32.mrf.mxu0
      %v1095 = vadd.f32 %v345, %v1094
      %v1096 = vpop.f32.mrf.mxu0
      %v1097 = vadd.f32 %v345, %v1096
      %1098 = vmatmul.bf16.gmra.mxu0 %v681
      %v1099 = vpop.f32.mrf.mxu0
      %v1100 = vadd.f32 %v345, %v1099
      %v1101 = vpop.f32.mrf.mxu0
      %v1102 = vadd.f32 %v345, %v1101
      %1103 = vmatmul.bf16.gmra.mxu0 %v683
      %v1104 = vpop.f32.mrf.mxu0
      %v1105 = vadd.f32 %v345, %v1104
      %v1106 = vpop.f32.mrf.mxu0
      %v1107 = vadd.f32 %v345, %v1106
      %1108 = vmatmul.bf16.gmra.mxu0 %v685
      %v1109 = vpop.f32.mrf.mxu0
      %v1110 = vadd.f32 %v345, %v1109
      %v1111 = vpop.f32.mrf.mxu0
      %v1112 = vadd.f32 %v345, %v1111
      %1113 = vmatmul.bf16.gmra.mxu0 %v687
      %v1114 = vpop.f32.mrf.mxu0
      %v1115 = vadd.f32 %v345, %v1114
      %v1116 = vpop.f32.mrf.mxu0
      %v1117 = vadd.f32 %v345, %v1116
      %1118 = vmatmul.bf16.gmra.mxu0 %v689
      %v1119 = vpop.f32.mrf.mxu0
      %v1120 = vadd.f32 %v345, %v1119
      %v1121 = vpop.f32.mrf.mxu0
      %v1122 = vadd.f32 %v345, %v1121
      %1123 = vmatmul.bf16.gmra.mxu0 %v691
      %v1124 = vpop.f32.mrf.mxu0
      %v1125 = vadd.f32 %v345, %v1124
      %v1126 = vpop.f32.mrf.mxu0
      %v1127 = vadd.f32 %v345, %v1126
      %1128 = vmatmul.bf16.gmra.mxu0 %v693
      %v1129 = vpop.f32.mrf.mxu0
      %v1130 = vadd.f32 %v345, %v1129
      %v1131 = vpop.f32.mrf.mxu0
      %v1132 = vadd.f32 %v345, %v1131
      %1133 = vmatmul.bf16.gmra.mxu0 %v695
      %v1134 = vpop.f32.mrf.mxu0
      %v1135 = vadd.f32 %v345, %v1134
      %v1136 = vpop.f32.mrf.mxu0
      %v1137 = vadd.f32 %v345, %v1136
      %1138 = vmatmul.bf16.gmra.mxu0 %v697
      %v1139 = vpop.f32.mrf.mxu0
      %v1140 = vadd.f32 %v345, %v1139
      %v1141 = vpop.f32.mrf.mxu0
      %v1142 = vadd.f32 %v345, %v1141
      %1143 = vmatmul.bf16.gmra.mxu0 %v699
      %v1144 = vpop.f32.mrf.mxu0
      %v1145 = vadd.f32 %v345, %v1144
      %v1146 = vpop.f32.mrf.mxu0
      %v1147 = vadd.f32 %v345, %v1146
      %1148 = vmatmul.bf16.gmra.mxu0 %v701
      %v1149 = vpop.f32.mrf.mxu0
      %v1150 = vadd.f32 %v345, %v1149
      %v1151 = vpop.f32.mrf.mxu0
      %v1152 = vadd.f32 %v345, %v1151
      %1153 = vmatmul.bf16.gmra.mxu0 %v703
      %v1154 = vpop.f32.mrf.mxu0
      %v1155 = vadd.f32 %v345, %v1154
      %v1156 = vpop.f32.mrf.mxu0
      %v1157 = vadd.f32 %v345, %v1156
      %1158 = vmatmul.bf16.gmra.mxu0 %v705
      %v1159 = vpop.f32.mrf.mxu0
      %v1160 = vadd.f32 %v345, %v1159
      %v1161 = vpop.f32.mrf.mxu0
      %v1162 = vadd.f32 %v345, %v1161
      %1163 = vmatmul.bf16.gmra.mxu0 %v707
      %v1164 = vpop.f32.mrf.mxu0
      %v1165 = vadd.f32 %v345, %v1164
      %v1166 = vpop.f32.mrf.mxu0
      %v1167 = vadd.f32 %v345, %v1166
      %1168 = vmatmul.bf16.gmra.mxu0 %v709
      %v1169 = vpop.f32.mrf.mxu0
      %v1170 = vadd.f32 %v345, %v1169
      %v1171 = vpop.f32.mrf.mxu0
      %v1172 = vadd.f32 %v345, %v1171
      %1173 = vmatmul.bf16.gmra.mxu0 %v711
      %v1174 = vpop.f32.mrf.mxu0
      %v1175 = vadd.f32 %v345, %v1174
      %v1176 = vpop.f32.mrf.mxu0
      %v1177 = vadd.f32 %v345, %v1176
      %1178 = vmatmul.bf16.gmra.mxu0 %v713
      %v1179 = vpop.f32.mrf.mxu0
      %v1180 = vadd.f32 %v345, %v1179
      %v1181 = vpop.f32.mrf.mxu0
      %v1182 = vadd.f32 %v345, %v1181
      %1183 = vmatmul.bf16.gmra.mxu0 %v715
      %v1184 = vpop.f32.mrf.mxu0
      %v1185 = vadd.f32 %v345, %v1184
      %v1186 = vpop.f32.mrf.mxu0
      %v1187 = vadd.f32 %v345, %v1186
      %1188 = vmatmul.bf16.gmra.mxu0 %v717
      %v1189 = vpop.f32.mrf.mxu0
      %v1190 = vadd.f32 %v345, %v1189
      %v1191 = vpop.f32.mrf.mxu0
      %v1192 = vadd.f32 %v345, %v1191
      %1193 = vmatmul.bf16.gmra.mxu0 %v719
      %v1194 = vpop.f32.mrf.mxu0
      %v1195 = vadd.f32 %v345, %v1194
      %v1196 = vpop.f32.mrf.mxu0
      %v1197 = vadd.f32 %v345, %v1196
      %1198 = vmatmul.bf16.gmra.mxu0 %v721
      %v1199 = vpop.f32.mrf.mxu0
      %v1200 = vadd.f32 %v345, %v1199
      %v1201 = vpop.f32.mrf.mxu0
      %v1202 = vadd.f32 %v345, %v1201
      %1203 = vmatmul.bf16.gmra.mxu0 %v723
      %v1204 = vpop.f32.mrf.mxu0
      %v1205 = vadd.f32 %v345, %v1204
      %v1206 = vpop.f32.mrf.mxu0
      %v1207 = vadd.f32 %v345, %v1206
      %1208 = vmatmul.bf16.gmra.mxu0 %v725
      %v1209 = vpop.f32.mrf.mxu0
      %v1210 = vadd.f32 %v345, %v1209
      %v1211 = vpop.f32.mrf.mxu0
      %v1212 = vadd.f32 %v345, %v1211
      %1213 = vmatmul.bf16.gmra.mxu0 %v727
      %v1214 = vpop.f32.mrf.mxu0
      %v1215 = vadd.f32 %v345, %v1214
      %v1216 = vpop.f32.mrf.mxu0
      %v1217 = vadd.f32 %v345, %v1216
      %1218 = vmatmul.bf16.gmra.mxu0 %v729
      %v1219 = vpop.f32.mrf.mxu0
      %v1220 = vadd.f32 %v345, %v1219
      %v1221 = vpop.f32.mrf.mxu0
      %v1222 = vadd.f32 %v345, %v1221
      %1223 = vmatmul.bf16.gmra.mxu0 %v731
      %v1224 = vpop.f32.mrf.mxu0
      %v1225 = vadd.f32 %v345, %v1224
      %v1226 = vpop.f32.mrf.mxu0
      %v1227 = vadd.f32 %v345, %v1226
      %1228 = vmatmul.bf16.gmra.mxu0 %v733
      %v1229 = vpop.f32.mrf.mxu0
      %v1230 = vadd.f32 %v345, %v1229
      %v1231 = vpop.f32.mrf.mxu0
      %v1232 = vadd.f32 %v345, %v1231
      %1233 = vmatmul.bf16.gmra.mxu0 %v735
      %v1234 = vpop.f32.mrf.mxu0
      %v1235 = vadd.f32 %v345, %v1234
      %v1236 = vpop.f32.mrf.mxu0
      %v1237 = vadd.f32 %v345, %v1236
      %1238 = vmatmul.bf16.gmra.mxu0 %v737
      %v1239 = vpop.f32.mrf.mxu0
      %v1240 = vadd.f32 %v345, %v1239
      %v1241 = vpop.f32.mrf.mxu0
      %v1242 = vadd.f32 %v345, %v1241
      %1243 = vdwg.mxu0
      %1244 = vmatpush.bf16.msra.mxu0 0
      %1245 = vmatpush.bf16.msra.mxu0 0
      %1246 = vmatpush.bf16.msra.mxu0 0
      %1247 = vmatpush.bf16.msra.mxu0 0
      %1248 = vmatpush.bf16.msra.mxu0 0
      %1249 = vmatpush.bf16.msra.mxu0 0
      %1250 = vmatpush.bf16.msra.mxu0 0
      %1251 = vmatpush.bf16.msra.mxu0 %v832
      %1252 = vmatmul.bf16.gmra.mxu0 %v844
      %v1253 = vpop.f32.mrf.mxu0
      %v1254 = vadd.f32 %v1000, %v1253
      %v1255 = vpop.f32.mrf.mxu0
      %v1256 = vadd.f32 %v1002, %v1255
      %1257 = vmatmul.bf16.gmra.mxu0 %v847
      %v1258 = vpop.f32.mrf.mxu0
      %v1259 = vadd.f32 %v1005, %v1258
      %v1260 = vpop.f32.mrf.mxu0
      %v1261 = vadd.f32 %v1007, %v1260
      %1262 = vmatmul.bf16.gmra.mxu0 %v850
      %v1263 = vpop.f32.mrf.mxu0
      %v1264 = vadd.f32 %v1010, %v1263
      %v1265 = vpop.f32.mrf.mxu0
      %v1266 = vadd.f32 %v1012, %v1265
      %1267 = vmatmul.bf16.gmra.mxu0 %v853
      %v1268 = vpop.f32.mrf.mxu0
      %v1269 = vadd.f32 %v1015, %v1268
      %v1270 = vpop.f32.mrf.mxu0
      %v1271 = vadd.f32 %v1017, %v1270
      %1272 = vmatmul.bf16.gmra.mxu0 %v856
      %v1273 = vpop.f32.mrf.mxu0
      %v1274 = vadd.f32 %v1020, %v1273
      %v1275 = vpop.f32.mrf.mxu0
      %v1276 = vadd.f32 %v1022, %v1275
      %1277 = vmatmul.bf16.gmra.mxu0 %v859
      %v1278 = vpop.f32.mrf.mxu0
      %v1279 = vadd.f32 %v1025, %v1278
      %v1280 = vpop.f32.mrf.mxu0
      %v1281 = vadd.f32 %v1027, %v1280
      %1282 = vmatmul.bf16.gmra.mxu0 %v862
      %v1283 = vpop.f32.mrf.mxu0
      %v1284 = vadd.f32 %v1030, %v1283
      %v1285 = vpop.f32.mrf.mxu0
      %v1286 = vadd.f32 %v1032, %v1285
      %1287 = vmatmul.bf16.gmra.mxu0 %v865
      %v1288 = vpop.f32.mrf.mxu0
      %v1289 = vadd.f32 %v1035, %v1288
      %v1290 = vpop.f32.mrf.mxu0
      %v1291 = vadd.f32 %v1037, %v1290
      %1292 = vmatmul.bf16.gmra.mxu0 %v868
      %v1293 = vpop.f32.mrf.mxu0
      %v1294 = vadd.f32 %v1040, %v1293
      %v1295 = vpop.f32.mrf.mxu0
      %v1296 = vadd.f32 %v1042, %v1295
      %1297 = vmatmul.bf16.gmra.mxu0 %v871
      %v1298 = vpop.f32.mrf.mxu0
      %v1299 = vadd.f32 %v1045, %v1298
      %v1300 = vpop.f32.mrf.mxu0
      %v1301 = vadd.f32 %v1047, %v1300
      %1302 = vmatmul.bf16.gmra.mxu0 %v874
      %v1303 = vpop.f32.mrf.mxu0
      %v1304 = vadd.f32 %v1050, %v1303
      %v1305 = vpop.f32.mrf.mxu0
      %v1306 = vadd.f32 %v1052, %v1305
      %1307 = vmatmul.bf16.gmra.mxu0 %v877
      %v1308 = vpop.f32.mrf.mxu0
      %v1309 = vadd.f32 %v1055, %v1308
      %v1310 = vpop.f32.mrf.mxu0
      %v1311 = vadd.f32 %v1057, %v1310
      %1312 = vmatmul.bf16.gmra.mxu0 %v880
      %v1313 = vpop.f32.mrf.mxu0
      %v1314 = vadd.f32 %v1060, %v1313
      %v1315 = vpop.f32.mrf.mxu0
      %v1316 = vadd.f32 %v1062, %v1315
      %1317 = vmatmul.bf16.gmra.mxu0 %v883
      %v1318 = vpop.f32.mrf.mxu0
      %v1319 = vadd.f32 %v1065, %v1318
      %v1320 = vpop.f32.mrf.mxu0
      %v1321 = vadd.f32 %v1067, %v1320
      %1322 = vmatmul.bf16.gmra.mxu0 %v886
      %v1323 = vpop.f32.mrf.mxu0
      %v1324 = vadd.f32 %v1070, %v1323
      %v1325 = vpop.f32.mrf.mxu0
      %v1326 = vadd.f32 %v1072, %v1325
      %1327 = vmatmul.bf16.gmra.mxu0 %v889
      %v1328 = vpop.f32.mrf.mxu0
      %v1329 = vadd.f32 %v1075, %v1328
      %v1330 = vpop.f32.mrf.mxu0
      %v1331 = vadd.f32 %v1077, %v1330
      %1332 = vmatmul.bf16.gmra.mxu0 %v892
      %v1333 = vpop.f32.mrf.mxu0
      %v1334 = vadd.f32 %v1080, %v1333
      %v1335 = vpop.f32.mrf.mxu0
      %v1336 = vadd.f32 %v1082, %v1335
      %1337 = vmatmul.bf16.gmra.mxu0 %v895
      %v1338 = vpop.f32.mrf.mxu0
      %v1339 = vadd.f32 %v1085, %v1338
      %v1340 = vpop.f32.mrf.mxu0
      %v1341 = vadd.f32 %v1087, %v1340
      %1342 = vmatmul.bf16.gmra.mxu0 %v898
      %v1343 = vpop.f32.mrf.mxu0
      %v1344 = vadd.f32 %v1090, %v1343
      %v1345 = vpop.f32.mrf.mxu0
      %v1346 = vadd.f32 %v1092, %v1345
      %1347 = vmatmul.bf16.gmra.mxu0 %v901
      %v1348 = vpop.f32.mrf.mxu0
      %v1349 = vadd.f32 %v1095, %v1348
      %v1350 = vpop.f32.mrf.mxu0
      %v1351 = vadd.f32 %v1097, %v1350
      %1352 = vmatmul.bf16.gmra.mxu0 %v904
      %v1353 = vpop.f32.mrf.mxu0
      %v1354 = vadd.f32 %v1100, %v1353
      %v1355 = vpop.f32.mrf.mxu0
      %v1356 = vadd.f32 %v1102, %v1355
      %1357 = vmatmul.bf16.gmra.mxu0 %v907
      %v1358 = vpop.f32.mrf.mxu0
      %v1359 = vadd.f32 %v1105, %v1358
      %v1360 = vpop.f32.mrf.mxu0
      %v1361 = vadd.f32 %v1107, %v1360
      %1362 = vmatmul.bf16.gmra.mxu0 %v910
      %v1363 = vpop.f32.mrf.mxu0
      %v1364 = vadd.f32 %v1110, %v1363
      %v1365 = vpop.f32.mrf.mxu0
      %v1366 = vadd.f32 %v1112, %v1365
      %1367 = vmatmul.bf16.gmra.mxu0 %v913
      %v1368 = vpop.f32.mrf.mxu0
      %v1369 = vadd.f32 %v1115, %v1368
      %v1370 = vpop.f32.mrf.mxu0
      %v1371 = vadd.f32 %v1117, %v1370
      %1372 = vmatmul.bf16.gmra.mxu0 %v916
      %v1373 = vpop.f32.mrf.mxu0
      %v1374 = vadd.f32 %v1120, %v1373
      %v1375 = vpop.f32.mrf.mxu0
      %v1376 = vadd.f32 %v1122, %v1375
      %1377 = vmatmul.bf16.gmra.mxu0 %v919
      %v1378 = vpop.f32.mrf.mxu0
      %v1379 = vadd.f32 %v1125, %v1378
      %v1380 = vpop.f32.mrf.mxu0
      %v1381 = vadd.f32 %v1127, %v1380
      %1382 = vmatmul.bf16.gmra.mxu0 %v922
      %v1383 = vpop.f32.mrf.mxu0
      %v1384 = vadd.f32 %v1130, %v1383
      %v1385 = vpop.f32.mrf.mxu0
      %v1386 = vadd.f32 %v1132, %v1385
      %1387 = vmatmul.bf16.gmra.mxu0 %v925
      %v1388 = vpop.f32.mrf.mxu0
      %v1389 = vadd.f32 %v1135, %v1388
      %v1390 = vpop.f32.mrf.mxu0
      %v1391 = vadd.f32 %v1137, %v1390
      %1392 = vmatmul.bf16.gmra.mxu0 %v928
      %v1393 = vpop.f32.mrf.mxu0
      %v1394 = vadd.f32 %v1140, %v1393
      %v1395 = vpop.f32.mrf.mxu0
      %v1396 = vadd.f32 %v1142, %v1395
      %1397 = vmatmul.bf16.gmra.mxu0 %v931
      %v1398 = vpop.f32.mrf.mxu0
      %v1399 = vadd.f32 %v1145, %v1398
      %v1400 = vpop.f32.mrf.mxu0
      %v1401 = vadd.f32 %v1147, %v1400
      %1402 = vmatmul.bf16.gmra.mxu0 %v934
      %v1403 = vpop.f32.mrf.mxu0
      %v1404 = vadd.f32 %v1150, %v1403
      %v1405 = vpop.f32.mrf.mxu0
      %v1406 = vadd.f32 %v1152, %v1405
      %1407 = vmatmul.bf16.gmra.mxu0 %v937
      %v1408 = vpop.f32.mrf.mxu0
      %v1409 = vadd.f32 %v1155, %v1408
      %v1410 = vpop.f32.mrf.mxu0
      %v1411 = vadd.f32 %v1157, %v1410
      %1412 = vmatmul.bf16.gmra.mxu0 %v940
      %v1413 = vpop.f32.mrf.mxu0
      %v1414 = vadd.f32 %v1160, %v1413
      %v1415 = vpop.f32.mrf.mxu0
      %v1416 = vadd.f32 %v1162, %v1415
      %1417 = vmatmul.bf16.gmra.mxu0 %v943
      %v1418 = vpop.f32.mrf.mxu0
      %v1419 = vadd.f32 %v1165, %v1418
      %v1420 = vpop.f32.mrf.mxu0
      %v1421 = vadd.f32 %v1167, %v1420
      %1422 = vmatmul.bf16.gmra.mxu0 %v946
      %v1423 = vpop.f32.mrf.mxu0
      %v1424 = vadd.f32 %v1170, %v1423
      %v1425 = vpop.f32.mrf.mxu0
      %v1426 = vadd.f32 %v1172, %v1425
      %1427 = vmatmul.bf16.gmra.mxu0 %v949
      %v1428 = vpop.f32.mrf.mxu0
      %v1429 = vadd.f32 %v1175, %v1428
      %v1430 = vpop.f32.mrf.mxu0
      %v1431 = vadd.f32 %v1177, %v1430
      %1432 = vmatmul.bf16.gmra.mxu0 %v952
      %v1433 = vpop.f32.mrf.mxu0
      %v1434 = vadd.f32 %v1180, %v1433
      %v1435 = vpop.f32.mrf.mxu0
      %v1436 = vadd.f32 %v1182, %v1435
      %1437 = vmatmul.bf16.gmra.mxu0 %v955
      %v1438 = vpop.f32.mrf.mxu0
      %v1439 = vadd.f32 %v1185, %v1438
      %v1440 = vpop.f32.mrf.mxu0
      %v1441 = vadd.f32 %v1187, %v1440
      %1442 = vmatmul.bf16.gmra.mxu0 %v958
      %v1443 = vpop.f32.mrf.mxu0
      %v1444 = vadd.f32 %v1190, %v1443
      %v1445 = vpop.f32.mrf.mxu0
      %v1446 = vadd.f32 %v1192, %v1445
      %1447 = vmatmul.bf16.gmra.mxu0 %v961
      %v1448 = vpop.f32.mrf.mxu0
      %v1449 = vadd.f32 %v1195, %v1448
      %v1450 = vpop.f32.mrf.mxu0
      %v1451 = vadd.f32 %v1197, %v1450
      %1452 = vmatmul.bf16.gmra.mxu0 %v964
      %v1453 = vpop.f32.mrf.mxu0
      %v1454 = vadd.f32 %v1200, %v1453
      %v1455 = vpop.f32.mrf.mxu0
      %v1456 = vadd.f32 %v1202, %v1455
      %1457 = vmatmul.bf16.gmra.mxu0 %v967
      %v1458 = vpop.f32.mrf.mxu0
      %v1459 = vadd.f32 %v1205, %v1458
      %v1460 = vpop.f32.mrf.mxu0
      %v1461 = vadd.f32 %v1207, %v1460
      %1462 = vmatmul.bf16.gmra.mxu0 %v970
      %v1463 = vpop.f32.mrf.mxu0
      %v1464 = vadd.f32 %v1210, %v1463
      %v1465 = vpop.f32.mrf.mxu0
      %v1466 = vadd.f32 %v1212, %v1465
      %1467 = vmatmul.bf16.gmra.mxu0 %v973
      %v1468 = vpop.f32.mrf.mxu0
      %v1469 = vadd.f32 %v1215, %v1468
      %v1470 = vpop.f32.mrf.mxu0
      %v1471 = vadd.f32 %v1217, %v1470
      %1472 = vmatmul.bf16.gmra.mxu0 %v976
      %v1473 = vpop.f32.mrf.mxu0
      %v1474 = vadd.f32 %v1220, %v1473
      %v1475 = vpop.f32.mrf.mxu0
      %v1476 = vadd.f32 %v1222, %v1475
      %1477 = vmatmul.bf16.gmra.mxu0 %v979
      %v1478 = vpop.f32.mrf.mxu0
      %v1479 = vadd.f32 %v1225, %v1478
      %v1480 = vpop.f32.mrf.mxu0
      %v1481 = vadd.f32 %v1227, %v1480
      %1482 = vmatmul.bf16.gmra.mxu0 %v982
      %v1483 = vpop.f32.mrf.mxu0
      %v1484 = vadd.f32 %v1230, %v1483
      %v1485 = vpop.f32.mrf.mxu0
      %v1486 = vadd.f32 %v1232, %v1485
      %1487 = vmatmul.bf16.gmra.mxu0 %v985
      %v1488 = vpop.f32.mrf.mxu0
      %v1489 = vadd.f32 %v1235, %v1488
      %v1490 = vpop.f32.mrf.mxu0
      %v1491 = vadd.f32 %v1237, %v1490
      %1492 = vmatmul.bf16.gmra.mxu0 %v988
      %v1493 = vpop.f32.mrf.mxu0
      %v1494 = vadd.f32 %v1240, %v1493
      %v1495 = vpop.f32.mrf.mxu0
      %v1496 = vadd.f32 %v1242, %v1495
      %1497 = vdwg.mxu0
      %v1498 = vld [vmem:[%s218] sm:$0xf]
      %v1499 = vld [vmem:[%s218 + $0x4] sm:$0xf]
      %v1500 = vld [vmem:[%s218 + $0x8] sm:$0xf]
      %v1501 = vld [vmem:[%s218 + $0xc] sm:$0xf]
      %v1502 = vld [vmem:[%s218 + $0x10] sm:$0xf]
      %v1503 = vld [vmem:[%s218 + $0x14] sm:$0xf]
      %v1504 = vld [vmem:[%s218 + $0x18] sm:$0xf]
      %v1505 = vld [vmem:[%s218 + $0x1c] sm:$0xf]
      %v1506 = vld [vmem:[%s218 + $0x20] sm:$0xf]
      %v1507 = vld [vmem:[%s218 + $0x24] sm:$0xf]
      %v1508 = vld [vmem:[%s218 + $0x28] sm:$0xf]
      %v1509 = vld [vmem:[%s218 + $0x2c] sm:$0xf]
      %v1510 = vld [vmem:[%s218 + $0x30] sm:$0xf]
      %v1511 = vld [vmem:[%s218 + $0x34] sm:$0xf]
      %v1512 = vld [vmem:[%s218 + $0x38] sm:$0xf]
      %v1513 = vld [vmem:[%s218 + $0x3c] sm:$0xf]
      %v1514 = vld [vmem:[%s218 + $0x40] sm:$0xf]
      %v1515 = vld [vmem:[%s218 + $0x44] sm:$0xf]
      %v1516 = vld [vmem:[%s218 + $0x48] sm:$0xf]
      %v1517 = vld [vmem:[%s218 + $0x4c] sm:$0xf]
      %v1518 = vld [vmem:[%s218 + $0x50] sm:$0xf]
      %v1519 = vld [vmem:[%s218 + $0x54] sm:$0xf]
      %v1520 = vld [vmem:[%s218 + $0x58] sm:$0xf]
      %v1521 = vld [vmem:[%s218 + $0x5c] sm:$0xf]
      %v1522 = vld [vmem:[%s218 + $0x60] sm:$0xf]
      %v1523 = vld [vmem:[%s218 + $0x64] sm:$0xf]
      %v1524 = vld [vmem:[%s218 + $0x68] sm:$0xf]
      %v1525 = vld [vmem:[%s218 + $0x6c] sm:$0xf]
      %v1526 = vld [vmem:[%s218 + $0x70] sm:$0xf]
      %v1527 = vld [vmem:[%s218 + $0x74] sm:$0xf]
      %v1528 = vld [vmem:[%s218 + $0x78] sm:$0xf]
      %v1529 = vld [vmem:[%s218 + $0x7c] sm:$0xf]
      %v1530 = vld [vmem:[%s218 + $0x80] sm:$0xf]
      %v1531 = vld [vmem:[%s218 + $0x84] sm:$0xf]
      %v1532 = vld [vmem:[%s218 + $0x88] sm:$0xf]
      %v1533 = vld [vmem:[%s218 + $0x8c] sm:$0xf]
      %v1534 = vld [vmem:[%s218 + $0x90] sm:$0xf]
      %v1535 = vld [vmem:[%s218 + $0x94] sm:$0xf]
      %v1536 = vld [vmem:[%s218 + $0x98] sm:$0xf]
      %v1537 = vld [vmem:[%s218 + $0x9c] sm:$0xf]
      %v1538 = vld [vmem:[%s218 + $0xa0] sm:$0xf]
      %v1539 = vld [vmem:[%s218 + $0xa4] sm:$0xf]
      %v1540 = vld [vmem:[%s218 + $0xa8] sm:$0xf]
      %v1541 = vld [vmem:[%s218 + $0xac] sm:$0xf]
      %v1542 = vld [vmem:[%s218 + $0xb0] sm:$0xf]
      %v1543 = vld [vmem:[%s218 + $0xb4] sm:$0xf]
      %v1544 = vld [vmem:[%s218 + $0xb8] sm:$0xf]
      %v1545 = vld [vmem:[%s218 + $0xbc] sm:$0xf]
      %v1546 = vld [vmem:[%s218 + $0xc0] sm:$0xf]
      %v1547 = vld [vmem:[%s218 + $0xc4] sm:$0xf]
      %v1548 = vld [vmem:[%s218 + $0xc8] sm:$0xf]
      %v1549 = vld [vmem:[%s218 + $0xcc] sm:$0xf]
      %v1550 = vld [vmem:[%s218 + $0xd0] sm:$0xf]
      %v1551 = vld [vmem:[%s218 + $0xd4] sm:$0xf]
      %v1552 = vld [vmem:[%s218 + $0xd8] sm:$0xf]
      %v1553 = vld [vmem:[%s218 + $0xdc] sm:$0xf]
      %v1554 = vld [vmem:[%s218 + $0xe0] sm:$0xf]
      %v1555 = vld [vmem:[%s218 + $0xe4] sm:$0xf]
      %v1556 = vld [vmem:[%s218 + $0xe8] sm:$0xf]
      %v1557 = vld [vmem:[%s218 + $0xec] sm:$0xf]
      %v1558 = vld [vmem:[%s218 + $0xf0] sm:$0xf]
      %v1559 = vld [vmem:[%s218 + $0xf4] sm:$0xf]
      %v1560 = vld [vmem:[%s218 + $0xf8] sm:$0xf]
      %v1561 = vld [vmem:[%s218 + $0xfc] sm:$0xf]
      %v1562 = vld [vmem:[%s218 + $0x100] sm:$0xf]
      %v1563 = vld [vmem:[%s218 + $0x104] sm:$0xf]
      %v1564 = vld [vmem:[%s218 + $0x108] sm:$0xf]
      %v1565 = vld [vmem:[%s218 + $0x10c] sm:$0xf]
      %v1566 = vld [vmem:[%s218 + $0x110] sm:$0xf]
      %v1567 = vld [vmem:[%s218 + $0x114] sm:$0xf]
      %v1568 = vld [vmem:[%s218 + $0x118] sm:$0xf]
      %v1569 = vld [vmem:[%s218 + $0x11c] sm:$0xf]
      %v1570 = vld [vmem:[%s218 + $0x120] sm:$0xf]
      %v1571 = vld [vmem:[%s218 + $0x124] sm:$0xf]
      %v1572 = vld [vmem:[%s218 + $0x128] sm:$0xf]
      %v1573 = vld [vmem:[%s218 + $0x12c] sm:$0xf]
      %v1574 = vld [vmem:[%s218 + $0x130] sm:$0xf]
      %v1575 = vld [vmem:[%s218 + $0x134] sm:$0xf]
      %v1576 = vld [vmem:[%s218 + $0x138] sm:$0xf]
      %v1577 = vld [vmem:[%s218 + $0x13c] sm:$0xf]
      %v1578 = vld [vmem:[%s218 + $0x140] sm:$0xf]
      %v1579 = vld [vmem:[%s218 + $0x144] sm:$0xf]
      %v1580 = vld [vmem:[%s218 + $0x148] sm:$0xf]
      %v1581 = vld [vmem:[%s218 + $0x14c] sm:$0xf]
      %v1582 = vld [vmem:[%s218 + $0x150] sm:$0xf]
      %v1583 = vld [vmem:[%s218 + $0x154] sm:$0xf]
      %v1584 = vld [vmem:[%s218 + $0x158] sm:$0xf]
      %v1585 = vld [vmem:[%s218 + $0x15c] sm:$0xf]
      %v1586 = vld [vmem:[%s218 + $0x160] sm:$0xf]
      %v1587 = vld [vmem:[%s218 + $0x164] sm:$0xf]
      %v1588 = vld [vmem:[%s218 + $0x168] sm:$0xf]
      %v1589 = vld [vmem:[%s218 + $0x16c] sm:$0xf]
      %v1590 = vld [vmem:[%s218 + $0x170] sm:$0xf]
      %v1591 = vld [vmem:[%s218 + $0x174] sm:$0xf]
      %v1592 = vld [vmem:[%s218 + $0x178] sm:$0xf]
      %v1593 = vld [vmem:[%s218 + $0x17c] sm:$0xf]
      %v1594 = vld [vmem:[%s218 + $0x180] sm:$0xf]
      %v1595 = vld [vmem:[%s218 + $0x184] sm:$0xf]
      %v1596 = vunpack.c.l.bf16 %v1498
      %v1597 = vunpack.c.l.bf16 %v1499
      %v1598 = vunpack.c.l.bf16 %v1500
      %v1599 = vunpack.c.l.bf16 %v1501
      %v1600 = vunpack.c.l.bf16 %v1502
      %v1601 = vunpack.c.l.bf16 %v1503
      %v1602 = vunpack.c.l.bf16 %v1504
      %v1603 = vunpack.c.l.bf16 %v1505
      %v1604 = vunpack.c.l.bf16 %v1506
      %v1605 = vunpack.c.l.bf16 %v1507
      %v1606 = vunpack.c.l.bf16 %v1508
      %v1607 = vunpack.c.l.bf16 %v1509
      %v1608 = vunpack.c.l.bf16 %v1510
      %v1609 = vunpack.c.l.bf16 %v1511
      %v1610 = vunpack.c.l.bf16 %v1512
      %v1611 = vunpack.c.l.bf16 %v1513
      %v1612 = vunpack.c.l.bf16 %v1514
      %v1613 = vunpack.c.l.bf16 %v1515
      %v1614 = vunpack.c.l.bf16 %v1516
      %v1615 = vunpack.c.l.bf16 %v1517
      %v1616 = vunpack.c.l.bf16 %v1518
      %v1617 = vunpack.c.l.bf16 %v1519
      %v1618 = vunpack.c.l.bf16 %v1520
      %v1619 = vunpack.c.l.bf16 %v1521
      %v1620 = vunpack.c.l.bf16 %v1522
      %v1621 = vunpack.c.l.bf16 %v1523
      %v1622 = vunpack.c.l.bf16 %v1524
      %v1623 = vunpack.c.l.bf16 %v1525
      %v1624 = vunpack.c.l.bf16 %v1526
      %v1625 = vunpack.c.l.bf16 %v1527
      %v1626 = vunpack.c.l.bf16 %v1528
      %v1627 = vunpack.c.l.bf16 %v1529
      %v1628 = vunpack.c.l.bf16 %v1530
      %v1629 = vunpack.c.l.bf16 %v1531
      %v1630 = vunpack.c.l.bf16 %v1532
      %v1631 = vunpack.c.l.bf16 %v1533
      %v1632 = vunpack.c.l.bf16 %v1534
      %v1633 = vunpack.c.l.bf16 %v1535
      %v1634 = vunpack.c.l.bf16 %v1536
      %v1635 = vunpack.c.l.bf16 %v1537
      %v1636 = vunpack.c.l.bf16 %v1538
      %v1637 = vunpack.c.l.bf16 %v1539
      %v1638 = vunpack.c.l.bf16 %v1540
      %v1639 = vunpack.c.l.bf16 %v1541
      %v1640 = vunpack.c.l.bf16 %v1542
      %v1641 = vunpack.c.l.bf16 %v1543
      %v1642 = vunpack.c.l.bf16 %v1544
      %v1643 = vunpack.c.l.bf16 %v1545
      %v1644 = vunpack.c.l.bf16 %v1546
      %v1645 = vunpack.c.l.bf16 %v1547
      %v1646 = vunpack.c.l.bf16 %v1548
      %v1647 = vunpack.c.l.bf16 %v1549
      %v1648 = vunpack.c.l.bf16 %v1550
      %v1649 = vunpack.c.l.bf16 %v1551
      %v1650 = vunpack.c.l.bf16 %v1552
      %v1651 = vunpack.c.l.bf16 %v1553
      %v1652 = vunpack.c.l.bf16 %v1554
      %v1653 = vunpack.c.l.bf16 %v1555
      %v1654 = vunpack.c.l.bf16 %v1556
      %v1655 = vunpack.c.l.bf16 %v1557
      %v1656 = vunpack.c.l.bf16 %v1558
      %v1657 = vunpack.c.l.bf16 %v1559
      %v1658 = vunpack.c.l.bf16 %v1560
      %v1659 = vunpack.c.l.bf16 %v1561
      %v1660 = vunpack.c.l.bf16 %v1562
      %v1661 = vunpack.c.l.bf16 %v1563
      %v1662 = vunpack.c.l.bf16 %v1564
      %v1663 = vunpack.c.l.bf16 %v1565
      %v1664 = vunpack.c.l.bf16 %v1566
      %v1665 = vunpack.c.l.bf16 %v1567
      %v1666 = vunpack.c.l.bf16 %v1568
      %v1667 = vunpack.c.l.bf16 %v1569
      %v1668 = vunpack.c.l.bf16 %v1570
      %v1669 = vunpack.c.l.bf16 %v1571
      %v1670 = vunpack.c.l.bf16 %v1572
      %v1671 = vunpack.c.l.bf16 %v1573
      %v1672 = vunpack.c.l.bf16 %v1574
      %v1673 = vunpack.c.l.bf16 %v1575
      %v1674 = vunpack.c.l.bf16 %v1576
      %v1675 = vunpack.c.l.bf16 %v1577
      %v1676 = vunpack.c.l.bf16 %v1578
      %v1677 = vunpack.c.l.bf16 %v1579
      %v1678 = vunpack.c.l.bf16 %v1580
      %v1679 = vunpack.c.l.bf16 %v1581
      %v1680 = vunpack.c.l.bf16 %v1582
      %v1681 = vunpack.c.l.bf16 %v1583
      %v1682 = vunpack.c.l.bf16 %v1584
      %v1683 = vunpack.c.l.bf16 %v1585
      %v1684 = vunpack.c.l.bf16 %v1586
      %v1685 = vunpack.c.l.bf16 %v1587
      %v1686 = vunpack.c.l.bf16 %v1588
      %v1687 = vunpack.c.l.bf16 %v1589
      %v1688 = vunpack.c.l.bf16 %v1590
      %v1689 = vunpack.c.l.bf16 %v1591
      %v1690 = vunpack.c.l.bf16 %v1592
      %v1691 = vunpack.c.l.bf16 %v1593
      %v1692 = vunpack.c.l.bf16 %v1594
      %v1693 = vunpack.c.l.bf16 %v1595
      %v1694 = vadd.f32 %v1254, %v1596
      %v1695 = vadd.f32 %v1256, %v1597
      %v1696 = vadd.f32 %v1259, %v1598
      %v1697 = vadd.f32 %v1261, %v1599
      %v1698 = vadd.f32 %v1264, %v1600
      %v1699 = vadd.f32 %v1266, %v1601
      %v1700 = vadd.f32 %v1269, %v1602
      %v1701 = vadd.f32 %v1271, %v1603
      %v1702 = vadd.f32 %v1274, %v1604
      %v1703 = vadd.f32 %v1276, %v1605
      %v1704 = vadd.f32 %v1279, %v1606
      %v1705 = vadd.f32 %v1281, %v1607
      %v1706 = vadd.f32 %v1284, %v1608
      %v1707 = vadd.f32 %v1286, %v1609
      %v1708 = vadd.f32 %v1289, %v1610
      %v1709 = vadd.f32 %v1291, %v1611
      %v1710 = vadd.f32 %v1294, %v1612
      %v1711 = vadd.f32 %v1296, %v1613
      %v1712 = vadd.f32 %v1299, %v1614
      %v1713 = vadd.f32 %v1301, %v1615
      %v1714 = vadd.f32 %v1304, %v1616
      %v1715 = vadd.f32 %v1306, %v1617
      %v1716 = vadd.f32 %v1309, %v1618
      %v1717 = vadd.f32 %v1311, %v1619
      %v1718 = vadd.f32 %v1314, %v1620
      %v1719 = vadd.f32 %v1316, %v1621
      %v1720 = vadd.f32 %v1319, %v1622
      %v1721 = vadd.f32 %v1321, %v1623
      %v1722 = vadd.f32 %v1324, %v1624
      %v1723 = vadd.f32 %v1326, %v1625
      %v1724 = vadd.f32 %v1329, %v1626
      %v1725 = vadd.f32 %v1331, %v1627
      %v1726 = vadd.f32 %v1334, %v1628
      %v1727 = vadd.f32 %v1336, %v1629
      %v1728 = vadd.f32 %v1339, %v1630
      %v1729 = vadd.f32 %v1341, %v1631
      %v1730 = vadd.f32 %v1344, %v1632
      %v1731 = vadd.f32 %v1346, %v1633
      %v1732 = vadd.f32 %v1349, %v1634
      %v1733 = vadd.f32 %v1351, %v1635
      %v1734 = vadd.f32 %v1354, %v1636
      %v1735 = vadd.f32 %v1356, %v1637
      %v1736 = vadd.f32 %v1359, %v1638
      %v1737 = vadd.f32 %v1361, %v1639
      %v1738 = vadd.f32 %v1364, %v1640
      %v1739 = vadd.f32 %v1366, %v1641
      %v1740 = vadd.f32 %v1369, %v1642
      %v1741 = vadd.f32 %v1371, %v1643
      %v1742 = vadd.f32 %v1374, %v1644
      %v1743 = vadd.f32 %v1376, %v1645
      %v1744 = vadd.f32 %v1379, %v1646
      %v1745 = vadd.f32 %v1381, %v1647
      %v1746 = vadd.f32 %v1384, %v1648
      %v1747 = vadd.f32 %v1386, %v1649
      %v1748 = vadd.f32 %v1389, %v1650
      %v1749 = vadd.f32 %v1391, %v1651
      %v1750 = vadd.f32 %v1394, %v1652
      %v1751 = vadd.f32 %v1396, %v1653
      %v1752 = vadd.f32 %v1399, %v1654
      %v1753 = vadd.f32 %v1401, %v1655
      %v1754 = vadd.f32 %v1404, %v1656
      %v1755 = vadd.f32 %v1406, %v1657
      %v1756 = vadd.f32 %v1409, %v1658
      %v1757 = vadd.f32 %v1411, %v1659
      %v1758 = vadd.f32 %v1414, %v1660
      %v1759 = vadd.f32 %v1416, %v1661
      %v1760 = vadd.f32 %v1419, %v1662
      %v1761 = vadd.f32 %v1421, %v1663
      %v1762 = vadd.f32 %v1424, %v1664
      %v1763 = vadd.f32 %v1426, %v1665
      %v1764 = vadd.f32 %v1429, %v1666
      %v1765 = vadd.f32 %v1431, %v1667
      %v1766 = vadd.f32 %v1434, %v1668
      %v1767 = vadd.f32 %v1436, %v1669
      %v1768 = vadd.f32 %v1439, %v1670
      %v1769 = vadd.f32 %v1441, %v1671
      %v1770 = vadd.f32 %v1444, %v1672
      %v1771 = vadd.f32 %v1446, %v1673
      %v1772 = vadd.f32 %v1449, %v1674
      %v1773 = vadd.f32 %v1451, %v1675
      %v1774 = vadd.f32 %v1454, %v1676
      %v1775 = vadd.f32 %v1456, %v1677
      %v1776 = vadd.f32 %v1459, %v1678
      %v1777 = vadd.f32 %v1461, %v1679
      %v1778 = vadd.f32 %v1464, %v1680
      %v1779 = vadd.f32 %v1466, %v1681
      %v1780 = vadd.f32 %v1469, %v1682
      %v1781 = vadd.f32 %v1471, %v1683
      %v1782 = vadd.f32 %v1474, %v1684
      %v1783 = vadd.f32 %v1476, %v1685
      %v1784 = vadd.f32 %v1479, %v1686
      %v1785 = vadd.f32 %v1481, %v1687
      %v1786 = vadd.f32 %v1484, %v1688
      %v1787 = vadd.f32 %v1486, %v1689
      %v1788 = vadd.f32 %v1489, %v1690
      %v1789 = vadd.f32 %v1491, %v1691
      %v1790 = vadd.f32 %v1494, %v1692
      %v1791 = vadd.f32 %v1496, %v1693
      %v1792 = vmax.f32 %v1694, 0.0
      %v1793 = vmax.f32 %v1695, 0.0
      %v1794 = vmax.f32 %v1696, 0.0
      %v1795 = vmax.f32 %v1697, 0.0
      %v1796 = vmax.f32 %v1698, 0.0
      %v1797 = vmax.f32 %v1699, 0.0
      %v1798 = vmax.f32 %v1700, 0.0
      %v1799 = vmax.f32 %v1701, 0.0
      %v1800 = vmax.f32 %v1702, 0.0
      %v1801 = vmax.f32 %v1703, 0.0
      %v1802 = vmax.f32 %v1704, 0.0
      %v1803 = vmax.f32 %v1705, 0.0
      %v1804 = vmax.f32 %v1706, 0.0
      %v1805 = vmax.f32 %v1707, 0.0
      %v1806 = vmax.f32 %v1708, 0.0
      %v1807 = vmax.f32 %v1709, 0.0
      %v1808 = vmax.f32 %v1710, 0.0
      %v1809 = vmax.f32 %v1711, 0.0
      %v1810 = vmax.f32 %v1712, 0.0
      %v1811 = vmax.f32 %v1713, 0.0
      %v1812 = vmax.f32 %v1714, 0.0
      %v1813 = vmax.f32 %v1715, 0.0
      %v1814 = vmax.f32 %v1716, 0.0
      %v1815 = vmax.f32 %v1717, 0.0
      %v1816 = vmax.f32 %v1718, 0.0
      %v1817 = vmax.f32 %v1719, 0.0
      %v1818 = vmax.f32 %v1720, 0.0
      %v1819 = vmax.f32 %v1721, 0.0
      %v1820 = vmax.f32 %v1722, 0.0
      %v1821 = vmax.f32 %v1723, 0.0
      %v1822 = vmax.f32 %v1724, 0.0
      %v1823 = vmax.f32 %v1725, 0.0
      %v1824 = vmax.f32 %v1726, 0.0
      %v1825 = vmax.f32 %v1727, 0.0
      %v1826 = vmax.f32 %v1728, 0.0
      %v1827 = vmax.f32 %v1729, 0.0
      %v1828 = vmax.f32 %v1730, 0.0
      %v1829 = vmax.f32 %v1731, 0.0
      %v1830 = vmax.f32 %v1732, 0.0
      %v1831 = vmax.f32 %v1733, 0.0
      %v1832 = vmax.f32 %v1734, 0.0
      %v1833 = vmax.f32 %v1735, 0.0
      %v1834 = vmax.f32 %v1736, 0.0
      %v1835 = vmax.f32 %v1737, 0.0
      %v1836 = vmax.f32 %v1738, 0.0
      %v1837 = vmax.f32 %v1739, 0.0
      %v1838 = vmax.f32 %v1740, 0.0
      %v1839 = vmax.f32 %v1741, 0.0
      %v1840 = vmax.f32 %v1742, 0.0
      %v1841 = vmax.f32 %v1743, 0.0
      %v1842 = vmax.f32 %v1744, 0.0
      %v1843 = vmax.f32 %v1745, 0.0
      %v1844 = vmax.f32 %v1746, 0.0
      %v1845 = vmax.f32 %v1747, 0.0
      %v1846 = vmax.f32 %v1748, 0.0
      %v1847 = vmax.f32 %v1749, 0.0
      %v1848 = vmax.f32 %v1750, 0.0
      %v1849 = vmax.f32 %v1751, 0.0
      %v1850 = vmax.f32 %v1752, 0.0
      %v1851 = vmax.f32 %v1753, 0.0
      %v1852 = vmax.f32 %v1754, 0.0
      %v1853 = vmax.f32 %v1755, 0.0
      %v1854 = vmax.f32 %v1756, 0.0
      %v1855 = vmax.f32 %v1757, 0.0
      %v1856 = vmax.f32 %v1758, 0.0
      %v1857 = vmax.f32 %v1759, 0.0
      %v1858 = vmax.f32 %v1760, 0.0
      %v1859 = vmax.f32 %v1761, 0.0
      %v1860 = vmax.f32 %v1762, 0.0
      %v1861 = vmax.f32 %v1763, 0.0
      %v1862 = vmax.f32 %v1764, 0.0
      %v1863 = vmax.f32 %v1765, 0.0
      %v1864 = vmax.f32 %v1766, 0.0
      %v1865 = vmax.f32 %v1767, 0.0
      %v1866 = vmax.f32 %v1768, 0.0
      %v1867 = vmax.f32 %v1769, 0.0
      %v1868 = vmax.f32 %v1770, 0.0
      %v1869 = vmax.f32 %v1771, 0.0
      %v1870 = vmax.f32 %v1772, 0.0
      %v1871 = vmax.f32 %v1773, 0.0
      %v1872 = vmax.f32 %v1774, 0.0
      %v1873 = vmax.f32 %v1775, 0.0
      %v1874 = vmax.f32 %v1776, 0.0
      %v1875 = vmax.f32 %v1777, 0.0
      %v1876 = vmax.f32 %v1778, 0.0
      %v1877 = vmax.f32 %v1779, 0.0
      %v1878 = vmax.f32 %v1780, 0.0
      %v1879 = vmax.f32 %v1781, 0.0
      %v1880 = vmax.f32 %v1782, 0.0
      %v1881 = vmax.f32 %v1783, 0.0
      %v1882 = vmax.f32 %v1784, 0.0
      %v1883 = vmax.f32 %v1785, 0.0
      %v1884 = vmax.f32 %v1786, 0.0
      %v1885 = vmax.f32 %v1787, 0.0
      %v1886 = vmax.f32 %v1788, 0.0
      %v1887 = vmax.f32 %v1789, 0.0
      %v1888 = vmax.f32 %v1790, 0.0
      %v1889 = vmax.f32 %v1791, 0.0
      %v1890 = vpack.c.bf16 %v1792, %v1792
      %v1891 = vpack.c.bf16 %v1793, %v1793
      %v1892 = vpack.c.bf16 %v1794, %v1794
      %v1893 = vpack.c.bf16 %v1795, %v1795
      %v1894 = vpack.c.bf16 %v1796, %v1796
      %v1895 = vpack.c.bf16 %v1797, %v1797
      %v1896 = vpack.c.bf16 %v1798, %v1798
      %v1897 = vpack.c.bf16 %v1799, %v1799
      %v1898 = vpack.c.bf16 %v1800, %v1800
      %v1899 = vpack.c.bf16 %v1801, %v1801
      %v1900 = vpack.c.bf16 %v1802, %v1802
      %v1901 = vpack.c.bf16 %v1803, %v1803
      %v1902 = vpack.c.bf16 %v1804, %v1804
      %v1903 = vpack.c.bf16 %v1805, %v1805
      %v1904 = vpack.c.bf16 %v1806, %v1806
      %v1905 = vpack.c.bf16 %v1807, %v1807
      %v1906 = vpack.c.bf16 %v1808, %v1808
      %v1907 = vpack.c.bf16 %v1809, %v1809
      %v1908 = vpack.c.bf16 %v1810, %v1810
      %v1909 = vpack.c.bf16 %v1811, %v1811
      %v1910 = vpack.c.bf16 %v1812, %v1812
      %v1911 = vpack.c.bf16 %v1813, %v1813
      %v1912 = vpack.c.bf16 %v1814, %v1814
      %v1913 = vpack.c.bf16 %v1815, %v1815
      %v1914 = vpack.c.bf16 %v1816, %v1816
      %v1915 = vpack.c.bf16 %v1817, %v1817
      %v1916 = vpack.c.bf16 %v1818, %v1818
      %v1917 = vpack.c.bf16 %v1819, %v1819
      %v1918 = vpack.c.bf16 %v1820, %v1820
      %v1919 = vpack.c.bf16 %v1821, %v1821
      %v1920 = vpack.c.bf16 %v1822, %v1822
      %v1921 = vpack.c.bf16 %v1823, %v1823
      %v1922 = vpack.c.bf16 %v1824, %v1824
      %v1923 = vpack.c.bf16 %v1825, %v1825
      %v1924 = vpack.c.bf16 %v1826, %v1826
      %v1925 = vpack.c.bf16 %v1827, %v1827
      %v1926 = vpack.c.bf16 %v1828, %v1828
      %v1927 = vpack.c.bf16 %v1829, %v1829
      %v1928 = vpack.c.bf16 %v1830, %v1830
      %v1929 = vpack.c.bf16 %v1831, %v1831
      %v1930 = vpack.c.bf16 %v1832, %v1832
      %v1931 = vpack.c.bf16 %v1833, %v1833
      %v1932 = vpack.c.bf16 %v1834, %v1834
      %v1933 = vpack.c.bf16 %v1835, %v1835
      %v1934 = vpack.c.bf16 %v1836, %v1836
      %v1935 = vpack.c.bf16 %v1837, %v1837
      %v1936 = vpack.c.bf16 %v1838, %v1838
      %v1937 = vpack.c.bf16 %v1839, %v1839
      %v1938 = vpack.c.bf16 %v1840, %v1840
      %v1939 = vpack.c.bf16 %v1841, %v1841
      %v1940 = vpack.c.bf16 %v1842, %v1842
      %v1941 = vpack.c.bf16 %v1843, %v1843
      %v1942 = vpack.c.bf16 %v1844, %v1844
      %v1943 = vpack.c.bf16 %v1845, %v1845
      %v1944 = vpack.c.bf16 %v1846, %v1846
      %v1945 = vpack.c.bf16 %v1847, %v1847
      %v1946 = vpack.c.bf16 %v1848, %v1848
      %v1947 = vpack.c.bf16 %v1849, %v1849
      %v1948 = vpack.c.bf16 %v1850, %v1850
      %v1949 = vpack.c.bf16 %v1851, %v1851
      %v1950 = vpack.c.bf16 %v1852, %v1852
      %v1951 = vpack.c.bf16 %v1853, %v1853
      %v1952 = vpack.c.bf16 %v1854, %v1854
      %v1953 = vpack.c.bf16 %v1855, %v1855
      %v1954 = vpack.c.bf16 %v1856, %v1856
      %v1955 = vpack.c.bf16 %v1857, %v1857
      %v1956 = vpack.c.bf16 %v1858, %v1858
      %v1957 = vpack.c.bf16 %v1859, %v1859
      %v1958 = vpack.c.bf16 %v1860, %v1860
      %v1959 = vpack.c.bf16 %v1861, %v1861
      %v1960 = vpack.c.bf16 %v1862, %v1862
      %v1961 = vpack.c.bf16 %v1863, %v1863
      %v1962 = vpack.c.bf16 %v1864, %v1864
      %v1963 = vpack.c.bf16 %v1865, %v1865
      %v1964 = vpack.c.bf16 %v1866, %v1866
      %v1965 = vpack.c.bf16 %v1867, %v1867
      %v1966 = vpack.c.bf16 %v1868, %v1868
      %v1967 = vpack.c.bf16 %v1869, %v1869
      %v1968 = vpack.c.bf16 %v1870, %v1870
      %v1969 = vpack.c.bf16 %v1871, %v1871
      %v1970 = vpack.c.bf16 %v1872, %v1872
      %v1971 = vpack.c.bf16 %v1873, %v1873
      %v1972 = vpack.c.bf16 %v1874, %v1874
      %v1973 = vpack.c.bf16 %v1875, %v1875
      %v1974 = vpack.c.bf16 %v1876, %v1876
      %v1975 = vpack.c.bf16 %v1877, %v1877
      %v1976 = vpack.c.bf16 %v1878, %v1878
      %v1977 = vpack.c.bf16 %v1879, %v1879
      %v1978 = vpack.c.bf16 %v1880, %v1880
      %v1979 = vpack.c.bf16 %v1881, %v1881
      %v1980 = vpack.c.bf16 %v1882, %v1882
      %v1981 = vpack.c.bf16 %v1883, %v1883
      %v1982 = vpack.c.bf16 %v1884, %v1884
      %v1983 = vpack.c.bf16 %v1885, %v1885
      %v1984 = vpack.c.bf16 %v1886, %v1886
      %v1985 = vpack.c.bf16 %v1887, %v1887
      %v1986 = vpack.c.bf16 %v1888, %v1888
      %v1987 = vpack.c.bf16 %v1889, %v1889
      %vm1988 = vcmask 125952
      %1989 = vst.msk [vmem:[%s224] sm:$0xf] %vm1988, %v1890
      %1990 = vst.msk [vmem:[%s224 + $0x4] sm:$0xf] %vm1988, %v1891
      %1991 = vst.msk [vmem:[%s224 + $0x8] sm:$0xf] %vm1988, %v1892
      %1992 = vst.msk [vmem:[%s224 + $0xc] sm:$0xf] %vm1988, %v1893
      %1993 = vst.msk [vmem:[%s224 + $0x10] sm:$0xf] %vm1988, %v1894
      %1994 = vst.msk [vmem:[%s224 + $0x14] sm:$0xf] %vm1988, %v1895
      %1995 = vst.msk [vmem:[%s224 + $0x18] sm:$0xf] %vm1988, %v1896
      %1996 = vst.msk [vmem:[%s224 + $0x1c] sm:$0xf] %vm1988, %v1897
      %1997 = vst.msk [vmem:[%s224 + $0x20] sm:$0xf] %vm1988, %v1898
      %1998 = vst.msk [vmem:[%s224 + $0x24] sm:$0xf] %vm1988, %v1899
      %1999 = vst.msk [vmem:[%s224 + $0x28] sm:$0xf] %vm1988, %v1900
      %2000 = vst.msk [vmem:[%s224 + $0x2c] sm:$0xf] %vm1988, %v1901
      %2001 = vst.msk [vmem:[%s224 + $0x30] sm:$0xf] %vm1988, %v1902
      %2002 = vst.msk [vmem:[%s224 + $0x34] sm:$0xf] %vm1988, %v1903
      %2003 = vst.msk [vmem:[%s224 + $0x38] sm:$0xf] %vm1988, %v1904
      %2004 = vst.msk [vmem:[%s224 + $0x3c] sm:$0xf] %vm1988, %v1905
      %2005 = vst.msk [vmem:[%s224 + $0x40] sm:$0xf] %vm1988, %v1906
      %2006 = vst.msk [vmem:[%s224 + $0x44] sm:$0xf] %vm1988, %v1907
      %2007 = vst.msk [vmem:[%s224 + $0x48] sm:$0xf] %vm1988, %v1908
      %2008 = vst.msk [vmem:[%s224 + $0x4c] sm:$0xf] %vm1988, %v1909
      %2009 = vst.msk [vmem:[%s224 + $0x50] sm:$0xf] %vm1988, %v1910
      %2010 = vst.msk [vmem:[%s224 + $0x54] sm:$0xf] %vm1988, %v1911
      %2011 = vst.msk [vmem:[%s224 + $0x58] sm:$0xf] %vm1988, %v1912
      %2012 = vst.msk [vmem:[%s224 + $0x5c] sm:$0xf] %vm1988, %v1913
      %2013 = vst.msk [vmem:[%s224 + $0x60] sm:$0xf] %vm1988, %v1914
      %2014 = vst.msk [vmem:[%s224 + $0x64] sm:$0xf] %vm1988, %v1915
      %2015 = vst.msk [vmem:[%s224 + $0x68] sm:$0xf] %vm1988, %v1916
      %2016 = vst.msk [vmem:[%s224 + $0x6c] sm:$0xf] %vm1988, %v1917
      %2017 = vst.msk [vmem:[%s224 + $0x70] sm:$0xf] %vm1988, %v1918
      %2018 = vst.msk [vmem:[%s224 + $0x74] sm:$0xf] %vm1988, %v1919
      %2019 = vst.msk [vmem:[%s224 + $0x78] sm:$0xf] %vm1988, %v1920
      %2020 = vst.msk [vmem:[%s224 + $0x7c] sm:$0xf] %vm1988, %v1921
      %2021 = vst.msk [vmem:[%s224 + $0x80] sm:$0xf] %vm1988, %v1922
      %2022 = vst.msk [vmem:[%s224 + $0x84] sm:$0xf] %vm1988, %v1923
      %2023 = vst.msk [vmem:[%s224 + $0x88] sm:$0xf] %vm1988, %v1924
      %2024 = vst.msk [vmem:[%s224 + $0x8c] sm:$0xf] %vm1988, %v1925
      %2025 = vst.msk [vmem:[%s224 + $0x90] sm:$0xf] %vm1988, %v1926
      %2026 = vst.msk [vmem:[%s224 + $0x94] sm:$0xf] %vm1988, %v1927
      %2027 = vst.msk [vmem:[%s224 + $0x98] sm:$0xf] %vm1988, %v1928
      %2028 = vst.msk [vmem:[%s224 + $0x9c] sm:$0xf] %vm1988, %v1929
      %2029 = vst.msk [vmem:[%s224 + $0xa0] sm:$0xf] %vm1988, %v1930
      %2030 = vst.msk [vmem:[%s224 + $0xa4] sm:$0xf] %vm1988, %v1931
      %2031 = vst.msk [vmem:[%s224 + $0xa8] sm:$0xf] %vm1988, %v1932
      %2032 = vst.msk [vmem:[%s224 + $0xac] sm:$0xf] %vm1988, %v1933
      %2033 = vst.msk [vmem:[%s224 + $0xb0] sm:$0xf] %vm1988, %v1934
      %2034 = vst.msk [vmem:[%s224 + $0xb4] sm:$0xf] %vm1988, %v1935
      %2035 = vst.msk [vmem:[%s224 + $0xb8] sm:$0xf] %vm1988, %v1936
      %2036 = vst.msk [vmem:[%s224 + $0xbc] sm:$0xf] %vm1988, %v1937
      %2037 = vst.msk [vmem:[%s224 + $0xc0] sm:$0xf] %vm1988, %v1938
      %2038 = vst.msk [vmem:[%s224 + $0xc4] sm:$0xf] %vm1988, %v1939
      %2039 = vst.msk [vmem:[%s224 + $0xc8] sm:$0xf] %vm1988, %v1940
      %2040 = vst.msk [vmem:[%s224 + $0xcc] sm:$0xf] %vm1988, %v1941
      %2041 = vst.msk [vmem:[%s224 + $0xd0] sm:$0xf] %vm1988, %v1942
      %2042 = vst.msk [vmem:[%s224 + $0xd4] sm:$0xf] %vm1988, %v1943
      %2043 = vst.msk [vmem:[%s224 + $0xd8] sm:$0xf] %vm1988, %v1944
      %2044 = vst.msk [vmem:[%s224 + $0xdc] sm:$0xf] %vm1988, %v1945
      %2045 = vst.msk [vmem:[%s224 + $0xe0] sm:$0xf] %vm1988, %v1946
      %2046 = vst.msk [vmem:[%s224 + $0xe4] sm:$0xf] %vm1988, %v1947
      %2047 = vst.msk [vmem:[%s224 + $0xe8] sm:$0xf] %vm1988, %v1948
      %2048 = vst.msk [vmem:[%s224 + $0xec] sm:$0xf] %vm1988, %v1949
      %2049 = vst.msk [vmem:[%s224 + $0xf0] sm:$0xf] %vm1988, %v1950
      %2050 = vst.msk [vmem:[%s224 + $0xf4] sm:$0xf] %vm1988, %v1951
      %2051 = vst.msk [vmem:[%s224 + $0xf8] sm:$0xf] %vm1988, %v1952
      %2052 = vst.msk [vmem:[%s224 + $0xfc] sm:$0xf] %vm1988, %v1953
      %2053 = vst.msk [vmem:[%s224 + $0x100] sm:$0xf] %vm1988, %v1954
      %2054 = vst.msk [vmem:[%s224 + $0x104] sm:$0xf] %vm1988, %v1955
      %2055 = vst.msk [vmem:[%s224 + $0x108] sm:$0xf] %vm1988, %v1956
      %2056 = vst.msk [vmem:[%s224 + $0x10c] sm:$0xf] %vm1988, %v1957
      %2057 = vst.msk [vmem:[%s224 + $0x110] sm:$0xf] %vm1988, %v1958
      %2058 = vst.msk [vmem:[%s224 + $0x114] sm:$0xf] %vm1988, %v1959
      %2059 = vst.msk [vmem:[%s224 + $0x118] sm:$0xf] %vm1988, %v1960
      %2060 = vst.msk [vmem:[%s224 + $0x11c] sm:$0xf] %vm1988, %v1961
      %2061 = vst.msk [vmem:[%s224 + $0x120] sm:$0xf] %vm1988, %v1962
      %2062 = vst.msk [vmem:[%s224 + $0x124] sm:$0xf] %vm1988, %v1963
      %2063 = vst.msk [vmem:[%s224 + $0x128] sm:$0xf] %vm1988, %v1964
      %2064 = vst.msk [vmem:[%s224 + $0x12c] sm:$0xf] %vm1988, %v1965
      %2065 = vst.msk [vmem:[%s224 + $0x130] sm:$0xf] %vm1988, %v1966
      %2066 = vst.msk [vmem:[%s224 + $0x134] sm:$0xf] %vm1988, %v1967
      %2067 = vst.msk [vmem:[%s224 + $0x138] sm:$0xf] %vm1988, %v1968
      %2068 = vst.msk [vmem:[%s224 + $0x13c] sm:$0xf] %vm1988, %v1969
      %2069 = vst.msk [vmem:[%s224 + $0x140] sm:$0xf] %vm1988, %v1970
      %2070 = vst.msk [vmem:[%s224 + $0x144] sm:$0xf] %vm1988, %v1971
      %2071 = vst.msk [vmem:[%s224 + $0x148] sm:$0xf] %vm1988, %v1972
      %2072 = vst.msk [vmem:[%s224 + $0x14c] sm:$0xf] %vm1988, %v1973
      %2073 = vst.msk [vmem:[%s224 + $0x150] sm:$0xf] %vm1988, %v1974
      %2074 = vst.msk [vmem:[%s224 + $0x154] sm:$0xf] %vm1988, %v1975
      %2075 = vst.msk [vmem:[%s224 + $0x158] sm:$0xf] %vm1988, %v1976
      %2076 = vst.msk [vmem:[%s224 + $0x15c] sm:$0xf] %vm1988, %v1977
      %2077 = vst.msk [vmem:[%s224 + $0x160] sm:$0xf] %vm1988, %v1978
      %2078 = vst.msk [vmem:[%s224 + $0x164] sm:$0xf] %vm1988, %v1979
      %2079 = vst.msk [vmem:[%s224 + $0x168] sm:$0xf] %vm1988, %v1980
      %2080 = vst.msk [vmem:[%s224 + $0x16c] sm:$0xf] %vm1988, %v1981
      %2081 = vst.msk [vmem:[%s224 + $0x170] sm:$0xf] %vm1988, %v1982
      %2082 = vst.msk [vmem:[%s224 + $0x174] sm:$0xf] %vm1988, %v1983
      %2083 = vst.msk [vmem:[%s224 + $0x178] sm:$0xf] %vm1988, %v1984
      %2084 = vst.msk [vmem:[%s224 + $0x17c] sm:$0xf] %vm1988, %v1985
      %2085 = vst.msk [vmem:[%s224 + $0x180] sm:$0xf] %vm1988, %v1986
      %2086 = vst.msk [vmem:[%s224 + $0x184] sm:$0xf] %vm1988, %v1987
      %s2087 = smul.u32 98, %s15
      %p2088 = scmp.lt.s32.totalorder %s2087, 195
      %s2089 = scalar_select %p2088, %s2087, 195
      %s2090 = smul.addr %s2089, 4
      %s2091 = scalar_lea.vmem %s4, %s2090
      // Predicated region
      $region37: #{resnet10_emnist_forward.18} parent=35 // pred_check
        %p2092 = pneg %p127
      $region38: #{resnet10_emnist_forward.18} parent=35 // pred_check_branch
        %2094 = sbr.rel (%p2092) target = $region40
      $region39: #{resnet10_emnist_forward.18} parent=35 // pred_region
        %s2095 = smul.u32 98, %s15
      $region40: #{resnet10_emnist_forward.18} parent=35 // pred_fallthru
        _
    $region36: #{resnet10_emnist_forward.18} parent=5 // pred_fallthru
      _
    %p2096 = scmp.le.s32.totalorder 2, %s10
    // Predicated region
    $region41: #{resnet10_emnist_forward.18} parent=5 // pred_check
      %p2097 = pneg %p2096
    $region42: #{resnet10_emnist_forward.18} parent=5 // pred_check_branch
      %2099 = sbr.rel (%p2097) target = $region44
    $region43: #{resnet10_emnist_forward.18} parent=5 // pred_region
      %s2100 = ssub.s32 %s10, 2
      // Predicated region
      $region45: #{resnet10_emnist_forward.18} parent=43 // pred_check
        %p2101 = pneg %p133
      $region46: #{resnet10_emnist_forward.18} parent=43 // pred_check_branch
        %2103 = sbr.rel (%p2101) target = $region48
      $region47: #{resnet10_emnist_forward.18} parent=43 // pred_region
        %s2104 = smul.u32 98, %s16
        %p2105 = scmp.lt.s32.totalorder %s2104, 195
        %s2106 = scalar_select %p2105, %s2104, 195
        %s2107 = smul.addr %s2106, 4
        %s2108 = scalar_lea.vmem %s4, %s2107
      $region48: #{resnet10_emnist_forward.18} parent=43 // pred_fallthru
        _
    $region44: #{resnet10_emnist_forward.18} parent=5 // pred_fallthru
      _
  $region6: #{resnet10_emnist_forward.18} parent=0 // loop_footer
    %s14 = sadd.s32 1, %s10
  $region7: #{resnet10_emnist_forward.18} parent=0 // loop_footer_branch
    %9 = sbr.rel target = $region3
  $region8: #{resnet10_emnist_forward.18} parent=0 // loop_exit
    _

// kernel: resnet10_emnist_forward.21
$region0: #{resnet10_emnist_forward.21}
  #allocation0 [shape = 'u32[]', space=smem, size = 0x4, offset = 0x4, fixed_abs, tag = 'smem constant byte address 0x4 - core index']
  #allocation1 [shape = 'u32[72,128]{1,0:T(1,128)}', space=vmem, size = 0x9000, scoped, tag = 'internal scratch']
  %s0 = inlined_call_operand.vmem [shape: bf16[392,144], index: 0, kind: input, shape index: {}]
  %s1 = inlined_call_operand.vmem [shape: bf16[144,32], index: 1, kind: input, shape index: {}]
  %s2 = inlined_call_operand.vmem [shape: f32[1,32], index: 2, kind: input, shape index: {}]
  %s3 = inlined_call_operand.vmem [shape: bf16[392,32], index: 3, kind: output, shape index: {}]
  %s4 = sld [smem:[#allocation0]]
  $region22: #{resnet10_emnist_forward.21} parent=0
    _
  %s6 = ssub.s32 1, %s4
  %s7 = scalar_select 0, %s6, %s4
  // Predicated region
  $region2: #{resnet10_emnist_forward.21} parent=0 // pred_check
    _
  $region3: #{resnet10_emnist_forward.21} parent=0 // pred_check_branch
    %9 = sbr.rel (0) target = $region5
  $region4: #{resnet10_emnist_forward.21} parent=0 // pred_region
    _
  $region5: #{resnet10_emnist_forward.21} parent=0 // pred_fallthru
    _
  // Predicated region
  $region6: #{resnet10_emnist_forward.21} parent=0 // pred_check
    _
  $region7: #{resnet10_emnist_forward.21} parent=0 // pred_check_branch
    %11 = sbr.rel (0) target = $region9
  $region8: #{resnet10_emnist_forward.21} parent=0 // pred_region
    _
  $region9: #{resnet10_emnist_forward.21} parent=0 // pred_fallthru
    _
  // Predicated region
  $region10: #{resnet10_emnist_forward.21} parent=0 // pred_check
    _
  $region11: #{resnet10_emnist_forward.21} parent=0 // pred_check_branch
    %13 = sbr.rel (0) target = $region13
  $region12: #{resnet10_emnist_forward.21} parent=0 // pred_region
    _
  $region13: #{resnet10_emnist_forward.21} parent=0 // pred_fallthru
    _
  %v15 = vld [vmem:[%s0] sm:$0xff]
  %v16 = vld [vmem:[%s0 + $0x8] sm:$0xff]
  %v17 = vld [vmem:[%s0 + $0x10] sm:$0xff]
  %v18 = vld [vmem:[%s0 + $0x18] sm:$0xff]
  %v19 = vld [vmem:[%s0 + $0x20] sm:$0xff]
  %v20 = vld [vmem:[%s0 + $0x28] sm:$0xff]
  %v21 = vld [vmem:[%s0 + $0x30] sm:$0xff]
  %v22 = vld [vmem:[%s0 + $0x38] sm:$0xff]
  %v23 = vld [vmem:[%s0 + $0x40] sm:$0xff]
  %v24 = vld [vmem:[%s0 + $0x48] sm:$0xff]
  %v25 = vld [vmem:[%s0 + $0x50] sm:$0xff]
  %v26 = vld [vmem:[%s0 + $0x58] sm:$0xff]
  %v27 = vld [vmem:[%s0 + $0x60] sm:$0xff]
  %v28 = vld [vmem:[%s0 + $0x68] sm:$0xff]
  %v29 = vld [vmem:[%s0 + $0x70] sm:$0xff]
  %v30 = vld [vmem:[%s0 + $0x78] sm:$0xff]
  %v31 = vld [vmem:[%s0 + $0x80] sm:$0xff]
  %v32 = vld [vmem:[%s0 + $0x88] sm:$0xff]
  %v33 = vld [vmem:[%s0 + $0x90] sm:$0xff]
  %v34 = vld [vmem:[%s0 + $0x98] sm:$0xff]
  %v35 = vld [vmem:[%s0 + $0xa0] sm:$0xff]
  %v36 = vld [vmem:[%s0 + $0xa8] sm:$0xff]
  %v37 = vld [vmem:[%s0 + $0xb0] sm:$0xff]
  %v38 = vld [vmem:[%s0 + $0xb8] sm:$0xff]
  %v39 = vld [vmem:[%s0 + $0xc0] sm:$0xff]
  %v40 = vld [vmem:[%s0 + $0xc8] sm:$0xff]
  %v41 = vld [vmem:[%s0 + $0xd0] sm:$0xff]
  %v42 = vld [vmem:[%s0 + $0xd8] sm:$0xff]
  %v43 = vld [vmem:[%s0 + $0xe0] sm:$0xff]
  %v44 = vld [vmem:[%s0 + $0xe8] sm:$0xff]
  %v45 = vld [vmem:[%s0 + $0xf0] sm:$0xff]
  %v46 = vld [vmem:[%s0 + $0xf8] sm:$0xff]
  %v47 = vld [vmem:[%s0 + $0x100] sm:$0xff]
  %v48 = vld [vmem:[%s0 + $0x108] sm:$0xff]
  %v49 = vld [vmem:[%s0 + $0x110] sm:$0xff]
  %v50 = vld [vmem:[%s0 + $0x118] sm:$0xff]
  %v51 = vld [vmem:[%s0 + $0x120] sm:$0xff]
  %v52 = vld [vmem:[%s0 + $0x128] sm:$0xff]
  %v53 = vld [vmem:[%s0 + $0x130] sm:$0xff]
  %v54 = vld [vmem:[%s0 + $0x138] sm:$0xff]
  %v55 = vld [vmem:[%s0 + $0x140] sm:$0xff]
  %v56 = vld [vmem:[%s0 + $0x148] sm:$0xff]
  %v57 = vld [vmem:[%s0 + $0x150] sm:$0xff]
  %v58 = vld [vmem:[%s0 + $0x158] sm:$0xff]
  %v59 = vld [vmem:[%s0 + $0x160] sm:$0xff]
  %v60 = vld [vmem:[%s0 + $0x168] sm:$0xff]
  %v61 = vld [vmem:[%s0 + $0x170] sm:$0xff]
  %v62 = vld [vmem:[%s0 + $0x178] sm:$0xff]
  %v63 = vld [vmem:[%s0 + $0x180] sm:$0xff]
  %v64 = vld [vmem:[%s1] sm:$0xf]
  %v65 = vld [vmem:[%s1 + $0x4] sm:$0xf]
  %v66 = vld [vmem:[%s1 + $0x8] sm:$0xf]
  %v67 = vld [vmem:[%s1 + $0xc] sm:$0xf]
  %v68 = vld [vmem:[%s1 + $0x10] sm:$0xf]
  %v69 = vld [vmem:[%s1 + $0x14] sm:$0xf]
  %v70 = vld [vmem:[%s1 + $0x18] sm:$0xf]
  %v71 = vld [vmem:[%s1 + $0x1c] sm:$0xf]
  %v72 = vld [vmem:[%s1 + $0x20] sm:$0xf]
  %v73 = vld [vmem:[%s1 + $0x24] sm:$0xf]
  %v74 = vld [vmem:[%s1 + $0x28] sm:$0xf]
  %v75 = vld [vmem:[%s1 + $0x2c] sm:$0xf]
  %v76 = vld [vmem:[%s1 + $0x30] sm:$0xf]
  %v77 = vld [vmem:[%s1 + $0x34] sm:$0xf]
  %v78 = vld [vmem:[%s1 + $0x38] sm:$0xf]
  %v79 = vld [vmem:[%s1 + $0x3c] sm:$0xf]
  %v80 = vld [vmem:[%s1 + $0x40] sm:$0xf]
  %v81 = vld [vmem:[%s1 + $0x44] sm:$0xf]
  %v82 = vld [vmem:[%s2] sm:$0x1]
  %v84 = vperm.slane %v82, 0
  %v135 = vunpack.c.l.b16 %v15
  %v136 = vunpack.c.h.b16 %v15
  %v137 = vunpack.c.l.b16 %v16
  %v138 = vunpack.c.h.b16 %v16
  %v139 = vunpack.c.l.b16 %v17
  %v140 = vunpack.c.h.b16 %v17
  %v141 = vunpack.c.l.b16 %v18
  %v142 = vunpack.c.h.b16 %v18
  %v143 = vunpack.c.l.b16 %v19
  %v144 = vunpack.c.h.b16 %v19
  %v145 = vunpack.c.l.b16 %v20
  %v146 = vunpack.c.h.b16 %v20
  %v147 = vunpack.c.l.b16 %v21
  %v148 = vunpack.c.h.b16 %v21
  %v149 = vunpack.c.l.b16 %v22
  %v150 = vunpack.c.h.b16 %v22
  %v151 = vunpack.c.l.b16 %v23
  %v152 = vunpack.c.h.b16 %v23
  %v153 = vunpack.c.l.b16 %v24
  %v154 = vunpack.c.h.b16 %v24
  %v155 = vunpack.c.l.b16 %v25
  %v156 = vunpack.c.h.b16 %v25
  %v157 = vunpack.c.l.b16 %v26
  %v158 = vunpack.c.h.b16 %v26
  %v159 = vunpack.c.l.b16 %v27
  %v160 = vunpack.c.h.b16 %v27
  %v161 = vunpack.c.l.b16 %v28
  %v162 = vunpack.c.h.b16 %v28
  %v163 = vunpack.c.l.b16 %v29
  %v164 = vunpack.c.h.b16 %v29
  %v165 = vunpack.c.l.b16 %v30
  %v166 = vunpack.c.h.b16 %v30
  %v167 = vunpack.c.l.b16 %v31
  %v168 = vunpack.c.h.b16 %v31
  %v169 = vunpack.c.l.b16 %v32
  %v170 = vunpack.c.h.b16 %v32
  %v171 = vunpack.c.l.b16 %v33
  %v172 = vunpack.c.h.b16 %v33
  %v173 = vunpack.c.l.b16 %v34
  %v174 = vunpack.c.h.b16 %v34
  %v175 = vunpack.c.l.b16 %v35
  %v176 = vunpack.c.h.b16 %v35
  %v177 = vunpack.c.l.b16 %v36
  %v178 = vunpack.c.h.b16 %v36
  %v179 = vunpack.c.l.b16 %v37
  %v180 = vunpack.c.h.b16 %v37
  %v181 = vunpack.c.l.b16 %v38
  %v182 = vunpack.c.h.b16 %v38
  %v183 = vunpack.c.l.b16 %v39
  %v184 = vunpack.c.h.b16 %v39
  %v185 = vunpack.c.l.b16 %v40
  %v186 = vunpack.c.h.b16 %v40
  %v187 = vunpack.c.l.b16 %v41
  %v188 = vunpack.c.h.b16 %v41
  %v189 = vunpack.c.l.b16 %v42
  %v190 = vunpack.c.h.b16 %v42
  %v191 = vunpack.c.l.b16 %v43
  %v192 = vunpack.c.h.b16 %v43
  %v193 = vunpack.c.l.b16 %v44
  %v194 = vunpack.c.h.b16 %v44
  %v195 = vunpack.c.l.b16 %v45
  %v196 = vunpack.c.h.b16 %v45
  %v197 = vunpack.c.l.b16 %v46
  %v198 = vunpack.c.h.b16 %v46
  %v199 = vunpack.c.l.b16 %v47
  %v200 = vunpack.c.h.b16 %v47
  %v201 = vunpack.c.l.b16 %v48
  %v202 = vunpack.c.h.b16 %v48
  %v203 = vunpack.c.l.b16 %v49
  %v204 = vunpack.c.h.b16 %v49
  %v205 = vunpack.c.l.b16 %v50
  %v206 = vunpack.c.h.b16 %v50
  %v207 = vunpack.c.l.b16 %v51
  %v208 = vunpack.c.h.b16 %v51
  %v209 = vunpack.c.l.b16 %v52
  %v210 = vunpack.c.h.b16 %v52
  %v211 = vunpack.c.l.b16 %v53
  %v212 = vunpack.c.h.b16 %v53
  %v213 = vunpack.c.l.b16 %v54
  %v214 = vunpack.c.h.b16 %v54
  %v215 = vunpack.c.l.b16 %v55
  %v216 = vunpack.c.h.b16 %v55
  %v217 = vunpack.c.l.b16 %v56
  %v218 = vunpack.c.h.b16 %v56
  %v219 = vunpack.c.l.b16 %v57
  %v220 = vunpack.c.h.b16 %v57
  %v221 = vunpack.c.l.b16 %v58
  %v222 = vunpack.c.h.b16 %v58
  %v223 = vunpack.c.l.b16 %v59
  %v224 = vunpack.c.h.b16 %v59
  %v225 = vunpack.c.l.b16 %v60
  %v226 = vunpack.c.h.b16 %v60
  %v227 = vunpack.c.l.b16 %v61
  %v228 = vunpack.c.h.b16 %v61
  %v229 = vunpack.c.l.b16 %v62
  %v230 = vunpack.c.h.b16 %v62
  %v231 = vunpack.c.l.b16 %v63
  %v232 = vunpack.c.h.b16 %v63
  %v233 = vpack.c.b16 %v137, %v135
  %v234 = vpack.c.b16 %v138, %v136
  %v235 = vpack.c.b16 %v141, %v139
  %v236 = vpack.c.b16 %v142, %v140
  %v237 = vpack.c.b16 %v145, %v143
  %v238 = vpack.c.b16 %v146, %v144
  %v239 = vpack.c.b16 %v149, %v147
  %v240 = vpack.c.b16 %v150, %v148
  %v241 = vpack.c.b16 %v153, %v151
  %v242 = vpack.c.b16 %v154, %v152
  %v243 = vpack.c.b16 %v157, %v155
  %v244 = vpack.c.b16 %v158, %v156
  %v245 = vpack.c.b16 %v161, %v159
  %v246 = vpack.c.b16 %v162, %v160
  %v247 = vpack.c.b16 %v165, %v163
  %v248 = vpack.c.b16 %v166, %v164
  %v249 = vpack.c.b16 %v169, %v167
  %v250 = vpack.c.b16 %v170, %v168
  %v251 = vpack.c.b16 %v173, %v171
  %v252 = vpack.c.b16 %v174, %v172
  %v253 = vpack.c.b16 %v177, %v175
  %v254 = vpack.c.b16 %v178, %v176
  %v255 = vpack.c.b16 %v181, %v179
  %v256 = vpack.c.b16 %v182, %v180
  %v257 = vpack.c.b16 %v185, %v183
  %v258 = vpack.c.b16 %v186, %v184
  %v259 = vpack.c.b16 %v189, %v187
  %v260 = vpack.c.b16 %v190, %v188
  %v261 = vpack.c.b16 %v193, %v191
  %v262 = vpack.c.b16 %v194, %v192
  %v263 = vpack.c.b16 %v197, %v195
  %v264 = vpack.c.b16 %v198, %v196
  %v265 = vpack.c.b16 %v201, %v199
  %v266 = vpack.c.b16 %v202, %v200
  %v267 = vpack.c.b16 %v205, %v203
  %v268 = vpack.c.b16 %v206, %v204
  %v269 = vpack.c.b16 %v209, %v207
  %v270 = vpack.c.b16 %v210, %v208
  %v271 = vpack.c.b16 %v213, %v211
  %v272 = vpack.c.b16 %v214, %v212
  %v273 = vpack.c.b16 %v217, %v215
  %v274 = vpack.c.b16 %v218, %v216
  %v275 = vpack.c.b16 %v221, %v219
  %v276 = vpack.c.b16 %v222, %v220
  %v277 = vpack.c.b16 %v225, %v223
  %v278 = vpack.c.b16 %v226, %v224
  %v279 = vpack.c.b16 %v229, %v227
  %v280 = vpack.c.b16 %v230, %v228
  %v281 = vpack.c.b16 %v231, %v231
  %v282 = vpack.c.b16 %v232, %v232
  %v326 = vunpack.c.l.b16 %v64
  %v327 = vunpack.c.l.b16 %v65
  %v328 = vunpack.c.l.b16 %v66
  %v329 = vunpack.c.l.b16 %v67
  %v330 = vunpack.c.l.b16 %v68
  %v331 = vunpack.c.l.b16 %v69
  %v332 = vunpack.c.l.b16 %v70
  %v333 = vunpack.c.l.b16 %v71
  %v334 = vunpack.c.l.b16 %v72
  %v335 = vunpack.c.l.b16 %v73
  %v336 = vunpack.c.l.b16 %v74
  %v337 = vunpack.c.l.b16 %v75
  %v338 = vunpack.c.l.b16 %v76
  %v339 = vunpack.c.l.b16 %v77
  %v340 = vunpack.c.l.b16 %v78
  %v341 = vunpack.c.l.b16 %v79
  %v342 = vunpack.c.l.b16 %v80
  %v343 = vunpack.c.l.b16 %v81
  %v344 = vpack.c.b16 %v327, %v326
  %v345 = vpack.c.b16 %v329, %v328
  %v346 = vpack.c.b16 %v331, %v330
  %v347 = vpack.c.b16 %v333, %v332
  %v348 = vpack.c.b16 %v335, %v334
  %v349 = vpack.c.b16 %v337, %v336
  %v350 = vpack.c.b16 %v339, %v338
  %v351 = vpack.c.b16 %v341, %v340
  %v352 = vpack.c.b16 %v343, %v342
  %vm362 = vcmask 130048
  %v364 = vsel %vm362, %v234, 0
  %v367 = vsel %vm362, %v236, 0
  %v370 = vsel %vm362, %v238, 0
  %v373 = vsel %vm362, %v240, 0
  %v376 = vsel %vm362, %v242, 0
  %v379 = vsel %vm362, %v244, 0
  %v382 = vsel %vm362, %v246, 0
  %v385 = vsel %vm362, %v248, 0
  %v388 = vsel %vm362, %v250, 0
  %v391 = vsel %vm362, %v252, 0
  %v394 = vsel %vm362, %v254, 0
  %v397 = vsel %vm362, %v256, 0
  %v400 = vsel %vm362, %v258, 0
  %v403 = vsel %vm362, %v260, 0
  %v406 = vsel %vm362, %v262, 0
  %v409 = vsel %vm362, %v264, 0
  %v412 = vsel %vm362, %v266, 0
  %v415 = vsel %vm362, %v268, 0
  %v418 = vsel %vm362, %v270, 0
  %v421 = vsel %vm362, %v272, 0
  %v424 = vsel %vm362, %v274, 0
  %v427 = vsel %vm362, %v276, 0
  %v430 = vsel %vm362, %v278, 0
  %v433 = vsel %vm362, %v280, 0
  %v436 = vsel %vm362, %v282, 0
  %438 = vmatpush.bf16.msra.mxu0 %v351
  %439 = vmatpush.bf16.msra.mxu0 %v350
  %440 = vmatpush.bf16.msra.mxu0 %v349
  %441 = vmatpush.bf16.msra.mxu0 %v348
  %442 = vmatpush.bf16.msra.mxu0 %v347
  %443 = vmatpush.bf16.msra.mxu0 %v346
  %444 = vmatpush.bf16.msra.mxu0 %v345
  %445 = vmatpush.bf16.msra.mxu0 %v344
  %446 = vmatmul.bf16.gmra.mxu0 %v233
  %v447 = vpop.f32.mrf.mxu0
  %v448 = vadd.f32 %v84, %v447
  %v449 = vpop.f32.mrf.mxu0
  %v450 = vadd.f32 %v84, %v449
  %451 = vmatmul.bf16.gmra.mxu0 %v235
  %v452 = vpop.f32.mrf.mxu0
  %v453 = vadd.f32 %v84, %v452
  %v454 = vpop.f32.mrf.mxu0
  %v455 = vadd.f32 %v84, %v454
  %456 = vmatmul.bf16.gmra.mxu0 %v237
  %v457 = vpop.f32.mrf.mxu0
  %v458 = vadd.f32 %v84, %v457
  %v459 = vpop.f32.mrf.mxu0
  %v460 = vadd.f32 %v84, %v459
  %461 = vmatmul.bf16.gmra.mxu0 %v239
  %v462 = vpop.f32.mrf.mxu0
  %v463 = vadd.f32 %v84, %v462
  %v464 = vpop.f32.mrf.mxu0
  %v465 = vadd.f32 %v84, %v464
  %466 = vmatmul.bf16.gmra.mxu0 %v241
  %v467 = vpop.f32.mrf.mxu0
  %v468 = vadd.f32 %v84, %v467
  %v469 = vpop.f32.mrf.mxu0
  %v470 = vadd.f32 %v84, %v469
  %471 = vmatmul.bf16.gmra.mxu0 %v243
  %v472 = vpop.f32.mrf.mxu0
  %v473 = vadd.f32 %v84, %v472
  %v474 = vpop.f32.mrf.mxu0
  %v475 = vadd.f32 %v84, %v474
  %476 = vmatmul.bf16.gmra.mxu0 %v245
  %v477 = vpop.f32.mrf.mxu0
  %v478 = vadd.f32 %v84, %v477
  %v479 = vpop.f32.mrf.mxu0
  %v480 = vadd.f32 %v84, %v479
  %481 = vmatmul.bf16.gmra.mxu0 %v247
  %v482 = vpop.f32.mrf.mxu0
  %v483 = vadd.f32 %v84, %v482
  %v484 = vpop.f32.mrf.mxu0
  %v485 = vadd.f32 %v84, %v484
  %486 = vmatmul.bf16.gmra.mxu0 %v249
  %v487 = vpop.f32.mrf.mxu0
  %v488 = vadd.f32 %v84, %v487
  %v489 = vpop.f32.mrf.mxu0
  %v490 = vadd.f32 %v84, %v489
  %491 = vmatmul.bf16.gmra.mxu0 %v251
  %v492 = vpop.f32.mrf.mxu0
  %v493 = vadd.f32 %v84, %v492
  %v494 = vpop.f32.mrf.mxu0
  %v495 = vadd.f32 %v84, %v494
  %496 = vmatmul.bf16.gmra.mxu0 %v253
  %v497 = vpop.f32.mrf.mxu0
  %v498 = vadd.f32 %v84, %v497
  %v499 = vpop.f32.mrf.mxu0
  %v500 = vadd.f32 %v84, %v499
  %501 = vmatmul.bf16.gmra.mxu0 %v255
  %v502 = vpop.f32.mrf.mxu0
  %v503 = vadd.f32 %v84, %v502
  %v504 = vpop.f32.mrf.mxu0
  %v505 = vadd.f32 %v84, %v504
  %506 = vmatmul.bf16.gmra.mxu0 %v257
  %v507 = vpop.f32.mrf.mxu0
  %v508 = vadd.f32 %v84, %v507
  %v509 = vpop.f32.mrf.mxu0
  %v510 = vadd.f32 %v84, %v509
  %511 = vmatmul.bf16.gmra.mxu0 %v259
  %v512 = vpop.f32.mrf.mxu0
  %v513 = vadd.f32 %v84, %v512
  %v514 = vpop.f32.mrf.mxu0
  %v515 = vadd.f32 %v84, %v514
  %516 = vmatmul.bf16.gmra.mxu0 %v261
  %v517 = vpop.f32.mrf.mxu0
  %v518 = vadd.f32 %v84, %v517
  %v519 = vpop.f32.mrf.mxu0
  %v520 = vadd.f32 %v84, %v519
  %521 = vmatmul.bf16.gmra.mxu0 %v263
  %v522 = vpop.f32.mrf.mxu0
  %v523 = vadd.f32 %v84, %v522
  %v524 = vpop.f32.mrf.mxu0
  %v525 = vadd.f32 %v84, %v524
  %526 = vmatmul.bf16.gmra.mxu0 %v265
  %v527 = vpop.f32.mrf.mxu0
  %v528 = vadd.f32 %v84, %v527
  %v529 = vpop.f32.mrf.mxu0
  %v530 = vadd.f32 %v84, %v529
  %531 = vmatmul.bf16.gmra.mxu0 %v267
  %v532 = vpop.f32.mrf.mxu0
  %v533 = vadd.f32 %v84, %v532
  %v534 = vpop.f32.mrf.mxu0
  %v535 = vadd.f32 %v84, %v534
  %536 = vmatmul.bf16.gmra.mxu0 %v269
  %v537 = vpop.f32.mrf.mxu0
  %v538 = vadd.f32 %v84, %v537
  %v539 = vpop.f32.mrf.mxu0
  %v540 = vadd.f32 %v84, %v539
  %541 = vmatmul.bf16.gmra.mxu0 %v271
  %v542 = vpop.f32.mrf.mxu0
  %v543 = vadd.f32 %v84, %v542
  %v544 = vpop.f32.mrf.mxu0
  %v545 = vadd.f32 %v84, %v544
  %546 = vmatmul.bf16.gmra.mxu0 %v273
  %v547 = vpop.f32.mrf.mxu0
  %v548 = vadd.f32 %v84, %v547
  %v549 = vpop.f32.mrf.mxu0
  %v550 = vadd.f32 %v84, %v549
  %551 = vmatmul.bf16.gmra.mxu0 %v275
  %v552 = vpop.f32.mrf.mxu0
  %v553 = vadd.f32 %v84, %v552
  %v554 = vpop.f32.mrf.mxu0
  %v555 = vadd.f32 %v84, %v554
  %556 = vmatmul.bf16.gmra.mxu0 %v277
  %v557 = vpop.f32.mrf.mxu0
  %v558 = vadd.f32 %v84, %v557
  %v559 = vpop.f32.mrf.mxu0
  %v560 = vadd.f32 %v84, %v559
  %561 = vmatmul.bf16.gmra.mxu0 %v279
  %v562 = vpop.f32.mrf.mxu0
  %v563 = vadd.f32 %v84, %v562
  %v564 = vpop.f32.mrf.mxu0
  %v565 = vadd.f32 %v84, %v564
  %566 = vmatmul.bf16.gmra.mxu0 %v281
  %v567 = vpop.f32.mrf.mxu0
  %v568 = vadd.f32 %v84, %v567
  %v569 = vpop.f32.mrf.mxu0
  %570 = vdwg.mxu0
  %571 = vmatpush.bf16.msra.mxu0 0
  %572 = vmatpush.bf16.msra.mxu0 0
  %573 = vmatpush.bf16.msra.mxu0 0
  %574 = vmatpush.bf16.msra.mxu0 0
  %575 = vmatpush.bf16.msra.mxu0 0
  %576 = vmatpush.bf16.msra.mxu0 0
  %577 = vmatpush.bf16.msra.mxu0 0
  %578 = vmatpush.bf16.msra.mxu0 %v352
  %579 = vmatmul.bf16.gmra.mxu0 %v364
  %v580 = vpop.f32.mrf.mxu0
  %v581 = vadd.f32 %v448, %v580
  %v582 = vpop.f32.mrf.mxu0
  %v583 = vadd.f32 %v450, %v582
  %584 = vmatmul.bf16.gmra.mxu0 %v367
  %v585 = vpop.f32.mrf.mxu0
  %v586 = vadd.f32 %v453, %v585
  %v587 = vpop.f32.mrf.mxu0
  %v588 = vadd.f32 %v455, %v587
  %589 = vmatmul.bf16.gmra.mxu0 %v370
  %v590 = vpop.f32.mrf.mxu0
  %v591 = vadd.f32 %v458, %v590
  %v592 = vpop.f32.mrf.mxu0
  %v593 = vadd.f32 %v460, %v592
  %594 = vmatmul.bf16.gmra.mxu0 %v373
  %v595 = vpop.f32.mrf.mxu0
  %v596 = vadd.f32 %v463, %v595
  %v597 = vpop.f32.mrf.mxu0
  %v598 = vadd.f32 %v465, %v597
  %599 = vmatmul.bf16.gmra.mxu0 %v376
  %v600 = vpop.f32.mrf.mxu0
  %v601 = vadd.f32 %v468, %v600
  %v602 = vpop.f32.mrf.mxu0
  %v603 = vadd.f32 %v470, %v602
  %604 = vmatmul.bf16.gmra.mxu0 %v379
  %v605 = vpop.f32.mrf.mxu0
  %v606 = vadd.f32 %v473, %v605
  %v607 = vpop.f32.mrf.mxu0
  %v608 = vadd.f32 %v475, %v607
  %609 = vmatmul.bf16.gmra.mxu0 %v382
  %v610 = vpop.f32.mrf.mxu0
  %v611 = vadd.f32 %v478, %v610
  %v612 = vpop.f32.mrf.mxu0
  %v613 = vadd.f32 %v480, %v612
  %614 = vmatmul.bf16.gmra.mxu0 %v385
  %v615 = vpop.f32.mrf.mxu0
  %v616 = vadd.f32 %v483, %v615
  %v617 = vpop.f32.mrf.mxu0
  %v618 = vadd.f32 %v485, %v617
  %619 = vmatmul.bf16.gmra.mxu0 %v388
  %v620 = vpop.f32.mrf.mxu0
  %v621 = vadd.f32 %v488, %v620
  %v622 = vpop.f32.mrf.mxu0
  %v623 = vadd.f32 %v490, %v622
  %624 = vmatmul.bf16.gmra.mxu0 %v391
  %v625 = vpop.f32.mrf.mxu0
  %v626 = vadd.f32 %v493, %v625
  %v627 = vpop.f32.mrf.mxu0
  %v628 = vadd.f32 %v495, %v627
  %629 = vmatmul.bf16.gmra.mxu0 %v394
  %v630 = vpop.f32.mrf.mxu0
  %v631 = vadd.f32 %v498, %v630
  %v632 = vpop.f32.mrf.mxu0
  %v633 = vadd.f32 %v500, %v632
  %634 = vmatmul.bf16.gmra.mxu0 %v397
  %v635 = vpop.f32.mrf.mxu0
  %v636 = vadd.f32 %v503, %v635
  %v637 = vpop.f32.mrf.mxu0
  %v638 = vadd.f32 %v505, %v637
  %639 = vmatmul.bf16.gmra.mxu0 %v400
  %v640 = vpop.f32.mrf.mxu0
  %v641 = vadd.f32 %v508, %v640
  %v642 = vpop.f32.mrf.mxu0
  %v643 = vadd.f32 %v510, %v642
  %644 = vmatmul.bf16.gmra.mxu0 %v403
  %v645 = vpop.f32.mrf.mxu0
  %v646 = vadd.f32 %v513, %v645
  %v647 = vpop.f32.mrf.mxu0
  %v648 = vadd.f32 %v515, %v647
  %649 = vmatmul.bf16.gmra.mxu0 %v406
  %v650 = vpop.f32.mrf.mxu0
  %v651 = vadd.f32 %v518, %v650
  %v652 = vpop.f32.mrf.mxu0
  %v653 = vadd.f32 %v520, %v652
  %654 = vmatmul.bf16.gmra.mxu0 %v409
  %v655 = vpop.f32.mrf.mxu0
  %v656 = vadd.f32 %v523, %v655
  %v657 = vpop.f32.mrf.mxu0
  %v658 = vadd.f32 %v525, %v657
  %659 = vmatmul.bf16.gmra.mxu0 %v412
  %v660 = vpop.f32.mrf.mxu0
  %v661 = vadd.f32 %v528, %v660
  %v662 = vpop.f32.mrf.mxu0
  %v663 = vadd.f32 %v530, %v662
  %664 = vmatmul.bf16.gmra.mxu0 %v415
  %v665 = vpop.f32.mrf.mxu0
  %v666 = vadd.f32 %v533, %v665
  %v667 = vpop.f32.mrf.mxu0
  %v668 = vadd.f32 %v535, %v667
  %669 = vmatmul.bf16.gmra.mxu0 %v418
  %v670 = vpop.f32.mrf.mxu0
  %v671 = vadd.f32 %v538, %v670
  %v672 = vpop.f32.mrf.mxu0
  %v673 = vadd.f32 %v540, %v672
  %674 = vmatmul.bf16.gmra.mxu0 %v421
  %v675 = vpop.f32.mrf.mxu0
  %v676 = vadd.f32 %v543, %v675
  %v677 = vpop.f32.mrf.mxu0
  %v678 = vadd.f32 %v545, %v677
  %679 = vmatmul.bf16.gmra.mxu0 %v424
  %v680 = vpop.f32.mrf.mxu0
  %v681 = vadd.f32 %v548, %v680
  %v682 = vpop.f32.mrf.mxu0
  %v683 = vadd.f32 %v550, %v682
  %684 = vmatmul.bf16.gmra.mxu0 %v427
  %v685 = vpop.f32.mrf.mxu0
  %v686 = vadd.f32 %v553, %v685
  %v687 = vpop.f32.mrf.mxu0
  %v688 = vadd.f32 %v555, %v687
  %689 = vmatmul.bf16.gmra.mxu0 %v430
  %v690 = vpop.f32.mrf.mxu0
  %v691 = vadd.f32 %v558, %v690
  %v692 = vpop.f32.mrf.mxu0
  %v693 = vadd.f32 %v560, %v692
  %694 = vmatmul.bf16.gmra.mxu0 %v433
  %v695 = vpop.f32.mrf.mxu0
  %v696 = vadd.f32 %v563, %v695
  %v697 = vpop.f32.mrf.mxu0
  %v698 = vadd.f32 %v565, %v697
  %699 = vmatmul.bf16.gmra.mxu0 %v436
  %v700 = vpop.f32.mrf.mxu0
  %v701 = vadd.f32 %v568, %v700
  %v702 = vpop.f32.mrf.mxu0
  %703 = vdwg.mxu0
  %v704 = vmax.f32 %v581, 0.0
  %v705 = vmax.f32 %v583, 0.0
  %v706 = vmax.f32 %v586, 0.0
  %v707 = vmax.f32 %v588, 0.0
  %v708 = vmax.f32 %v591, 0.0
  %v709 = vmax.f32 %v593, 0.0
  %v710 = vmax.f32 %v596, 0.0
  %v711 = vmax.f32 %v598, 0.0
  %v712 = vmax.f32 %v601, 0.0
  %v713 = vmax.f32 %v603, 0.0
  %v714 = vmax.f32 %v606, 0.0
  %v715 = vmax.f32 %v608, 0.0
  %v716 = vmax.f32 %v611, 0.0
  %v717 = vmax.f32 %v613, 0.0
  %v718 = vmax.f32 %v616, 0.0
  %v719 = vmax.f32 %v618, 0.0
  %v720 = vmax.f32 %v621, 0.0
  %v721 = vmax.f32 %v623, 0.0
  %v722 = vmax.f32 %v626, 0.0
  %v723 = vmax.f32 %v628, 0.0
  %v724 = vmax.f32 %v631, 0.0
  %v725 = vmax.f32 %v633, 0.0
  %v726 = vmax.f32 %v636, 0.0
  %v727 = vmax.f32 %v638, 0.0
  %v728 = vmax.f32 %v641, 0.0
  %v729 = vmax.f32 %v643, 0.0
  %v730 = vmax.f32 %v646, 0.0
  %v731 = vmax.f32 %v648, 0.0
  %v732 = vmax.f32 %v651, 0.0
  %v733 = vmax.f32 %v653, 0.0
  %v734 = vmax.f32 %v656, 0.0
  %v735 = vmax.f32 %v658, 0.0
  %v736 = vmax.f32 %v661, 0.0
  %v737 = vmax.f32 %v663, 0.0
  %v738 = vmax.f32 %v666, 0.0
  %v739 = vmax.f32 %v668, 0.0
  %v740 = vmax.f32 %v671, 0.0
  %v741 = vmax.f32 %v673, 0.0
  %v742 = vmax.f32 %v676, 0.0
  %v743 = vmax.f32 %v678, 0.0
  %v744 = vmax.f32 %v681, 0.0
  %v745 = vmax.f32 %v683, 0.0
  %v746 = vmax.f32 %v686, 0.0
  %v747 = vmax.f32 %v688, 0.0
  %v748 = vmax.f32 %v691, 0.0
  %v749 = vmax.f32 %v693, 0.0
  %v750 = vmax.f32 %v696, 0.0
  %v751 = vmax.f32 %v698, 0.0
  %v752 = vmax.f32 %v701, 0.0
  %v753 = vpack.c.bf16 %v704, %v704
  %v754 = vpack.c.bf16 %v705, %v705
  %v755 = vpack.c.bf16 %v706, %v706
  %v756 = vpack.c.bf16 %v707, %v707
  %v757 = vpack.c.bf16 %v708, %v708
  %v758 = vpack.c.bf16 %v709, %v709
  %v759 = vpack.c.bf16 %v710, %v710
  %v760 = vpack.c.bf16 %v711, %v711
  %v761 = vpack.c.bf16 %v712, %v712
  %v762 = vpack.c.bf16 %v713, %v713
  %v763 = vpack.c.bf16 %v714, %v714
  %v764 = vpack.c.bf16 %v715, %v715
  %v765 = vpack.c.bf16 %v716, %v716
  %v766 = vpack.c.bf16 %v717, %v717
  %v767 = vpack.c.bf16 %v718, %v718
  %v768 = vpack.c.bf16 %v719, %v719
  %v769 = vpack.c.bf16 %v720, %v720
  %v770 = vpack.c.bf16 %v721, %v721
  %v771 = vpack.c.bf16 %v722, %v722
  %v772 = vpack.c.bf16 %v723, %v723
  %v773 = vpack.c.bf16 %v724, %v724
  %v774 = vpack.c.bf16 %v725, %v725
  %v775 = vpack.c.bf16 %v726, %v726
  %v776 = vpack.c.bf16 %v727, %v727
  %v777 = vpack.c.bf16 %v728, %v728
  %v778 = vpack.c.bf16 %v729, %v729
  %v779 = vpack.c.bf16 %v730, %v730
  %v780 = vpack.c.bf16 %v731, %v731
  %v781 = vpack.c.bf16 %v732, %v732
  %v782 = vpack.c.bf16 %v733, %v733
  %v783 = vpack.c.bf16 %v734, %v734
  %v784 = vpack.c.bf16 %v735, %v735
  %v785 = vpack.c.bf16 %v736, %v736
  %v786 = vpack.c.bf16 %v737, %v737
  %v787 = vpack.c.bf16 %v738, %v738
  %v788 = vpack.c.bf16 %v739, %v739
  %v789 = vpack.c.bf16 %v740, %v740
  %v790 = vpack.c.bf16 %v741, %v741
  %v791 = vpack.c.bf16 %v742, %v742
  %v792 = vpack.c.bf16 %v743, %v743
  %v793 = vpack.c.bf16 %v744, %v744
  %v794 = vpack.c.bf16 %v745, %v745
  %v795 = vpack.c.bf16 %v746, %v746
  %v796 = vpack.c.bf16 %v747, %v747
  %v797 = vpack.c.bf16 %v748, %v748
  %v798 = vpack.c.bf16 %v749, %v749
  %v799 = vpack.c.bf16 %v750, %v750
  %v800 = vpack.c.bf16 %v751, %v751
  %v801 = vpack.c.bf16 %v752, %v752
  %vm802 = vcmask 257024
  %803 = vst.msk [vmem:[%s3] sm:$0xf] %vm802, %v753
  %804 = vst.msk [vmem:[%s3 + $0x4] sm:$0xf] %vm802, %v754
  %805 = vst.msk [vmem:[%s3 + $0x8] sm:$0xf] %vm802, %v755
  %806 = vst.msk [vmem:[%s3 + $0xc] sm:$0xf] %vm802, %v756
  %807 = vst.msk [vmem:[%s3 + $0x10] sm:$0xf] %vm802, %v757
  %808 = vst.msk [vmem:[%s3 + $0x14] sm:$0xf] %vm802, %v758
  %809 = vst.msk [vmem:[%s3 + $0x18] sm:$0xf] %vm802, %v759
  %810 = vst.msk [vmem:[%s3 + $0x1c] sm:$0xf] %vm802, %v760
  %811 = vst.msk [vmem:[%s3 + $0x20] sm:$0xf] %vm802, %v761
  %812 = vst.msk [vmem:[%s3 + $0x24] sm:$0xf] %vm802, %v762
  %813 = vst.msk [vmem:[%s3 + $0x28] sm:$0xf] %vm802, %v763
  %814 = vst.msk [vmem:[%s3 + $0x2c] sm:$0xf] %vm802, %v764
  %815 = vst.msk [vmem:[%s3 + $0x30] sm:$0xf] %vm802, %v765
  %816 = vst.msk [vmem:[%s3 + $0x34] sm:$0xf] %vm802, %v766
  %817 = vst.msk [vmem:[%s3 + $0x38] sm:$0xf] %vm802, %v767
  %818 = vst.msk [vmem:[%s3 + $0x3c] sm:$0xf] %vm802, %v768
  %819 = vst.msk [vmem:[%s3 + $0x40] sm:$0xf] %vm802, %v769
  %820 = vst.msk [vmem:[%s3 + $0x44] sm:$0xf] %vm802, %v770
  %821 = vst.msk [vmem:[%s3 + $0x48] sm:$0xf] %vm802, %v771
  %822 = vst.msk [vmem:[%s3 + $0x4c] sm:$0xf] %vm802, %v772
  %823 = vst.msk [vmem:[%s3 + $0x50] sm:$0xf] %vm802, %v773
  %824 = vst.msk [vmem:[%s3 + $0x54] sm:$0xf] %vm802, %v774
  %825 = vst.msk [vmem:[%s3 + $0x58] sm:$0xf] %vm802, %v775
  %826 = vst.msk [vmem:[%s3 + $0x5c] sm:$0xf] %vm802, %v776
  %827 = vst.msk [vmem:[%s3 + $0x60] sm:$0xf] %vm802, %v777
  %828 = vst.msk [vmem:[%s3 + $0x64] sm:$0xf] %vm802, %v778
  %829 = vst.msk [vmem:[%s3 + $0x68] sm:$0xf] %vm802, %v779
  %830 = vst.msk [vmem:[%s3 + $0x6c] sm:$0xf] %vm802, %v780
  %831 = vst.msk [vmem:[%s3 + $0x70] sm:$0xf] %vm802, %v781
  %832 = vst.msk [vmem:[%s3 + $0x74] sm:$0xf] %vm802, %v782
  %833 = vst.msk [vmem:[%s3 + $0x78] sm:$0xf] %vm802, %v783
  %834 = vst.msk [vmem:[%s3 + $0x7c] sm:$0xf] %vm802, %v784
  %835 = vst.msk [vmem:[%s3 + $0x80] sm:$0xf] %vm802, %v785
  %836 = vst.msk [vmem:[%s3 + $0x84] sm:$0xf] %vm802, %v786
  %837 = vst.msk [vmem:[%s3 + $0x88] sm:$0xf] %vm802, %v787
  %838 = vst.msk [vmem:[%s3 + $0x8c] sm:$0xf] %vm802, %v788
  %839 = vst.msk [vmem:[%s3 + $0x90] sm:$0xf] %vm802, %v789
  %840 = vst.msk [vmem:[%s3 + $0x94] sm:$0xf] %vm802, %v790
  %841 = vst.msk [vmem:[%s3 + $0x98] sm:$0xf] %vm802, %v791
  %842 = vst.msk [vmem:[%s3 + $0x9c] sm:$0xf] %vm802, %v792
  %843 = vst.msk [vmem:[%s3 + $0xa0] sm:$0xf] %vm802, %v793
  %844 = vst.msk [vmem:[%s3 + $0xa4] sm:$0xf] %vm802, %v794
  %845 = vst.msk [vmem:[%s3 + $0xa8] sm:$0xf] %vm802, %v795
  %846 = vst.msk [vmem:[%s3 + $0xac] sm:$0xf] %vm802, %v796
  %847 = vst.msk [vmem:[%s3 + $0xb0] sm:$0xf] %vm802, %v797
  %848 = vst.msk [vmem:[%s3 + $0xb4] sm:$0xf] %vm802, %v798
  %849 = vst.msk [vmem:[%s3 + $0xb8] sm:$0xf] %vm802, %v799
  %850 = vst.msk [vmem:[%s3 + $0xbc] sm:$0xf] %vm802, %v800
  %851 = vst.msk [vmem:[%s3 + $0xc0] sm:$0xf] %vm802, %v801
  // Predicated region
  $region14: #{resnet10_emnist_forward.21} parent=0 // pred_check
    _
  $region15: #{resnet10_emnist_forward.21} parent=0 // pred_check_branch
    %853 = sbr.rel (0) target = $region17
  $region16: #{resnet10_emnist_forward.21} parent=0 // pred_region
    _
  $region17: #{resnet10_emnist_forward.21} parent=0 // pred_fallthru
    _
  // Predicated region
  $region18: #{resnet10_emnist_forward.21} parent=0 // pred_check
    _
  $region19: #{resnet10_emnist_forward.21} parent=0 // pred_check_branch
    %855 = sbr.rel (0) target = $region21
  $region20: #{resnet10_emnist_forward.21} parent=0 // pred_region
    _
  $region21: #{resnet10_emnist_forward.21} parent=0 // pred_fallthru
    _

// kernel: resnet10_emnist_forward.22
$region0: #{resnet10_emnist_forward.22}
  #allocation0 [shape = 'u32[]', space=smem, size = 0x4, offset = 0x4, fixed_abs, tag = 'smem constant byte address 0x4 - core index']
  #allocation1 [shape = 'u32[72,128]{1,0:T(1,128)}', space=vmem, size = 0x9000, scoped, tag = 'internal scratch']
  %s0 = inlined_call_operand.vmem [shape: bf16[392,16], index: 0, kind: input, shape index: {}]
  %s1 = inlined_call_operand.vmem [shape: bf16[16,32], index: 1, kind: input, shape index: {}]
  %s2 = inlined_call_operand.vmem [shape: f32[1,32], index: 2, kind: input, shape index: {}]
  %s3 = inlined_call_operand.vmem [shape: bf16[392,32], index: 3, kind: output, shape index: {}]
  %s4 = sld [smem:[#allocation0]]
  $region22: #{resnet10_emnist_forward.22} parent=0
    _
  %s6 = ssub.s32 1, %s4
  %s7 = scalar_select 0, %s6, %s4
  // Predicated region
  $region2: #{resnet10_emnist_forward.22} parent=0 // pred_check
    _
  $region3: #{resnet10_emnist_forward.22} parent=0 // pred_check_branch
    %9 = sbr.rel (0) target = $region5
  $region4: #{resnet10_emnist_forward.22} parent=0 // pred_region
    _
  $region5: #{resnet10_emnist_forward.22} parent=0 // pred_fallthru
    _
  // Predicated region
  $region6: #{resnet10_emnist_forward.22} parent=0 // pred_check
    _
  $region7: #{resnet10_emnist_forward.22} parent=0 // pred_check_branch
    %11 = sbr.rel (0) target = $region9
  $region8: #{resnet10_emnist_forward.22} parent=0 // pred_region
    _
  $region9: #{resnet10_emnist_forward.22} parent=0 // pred_fallthru
    _
  // Predicated region
  $region10: #{resnet10_emnist_forward.22} parent=0 // pred_check
    _
  $region11: #{resnet10_emnist_forward.22} parent=0 // pred_check_branch
    %13 = sbr.rel (0) target = $region13
  $region12: #{resnet10_emnist_forward.22} parent=0 // pred_region
    _
  $region13: #{resnet10_emnist_forward.22} parent=0 // pred_fallthru
    _
  %v15 = vld [vmem:[%s0] sm:$0xf]
  %v16 = vld [vmem:[%s0 + $0x4] sm:$0xf]
  %v17 = vld [vmem:[%s0 + $0x8] sm:$0xf]
  %v18 = vld [vmem:[%s0 + $0xc] sm:$0xf]
  %v19 = vld [vmem:[%s0 + $0x10] sm:$0xf]
  %v20 = vld [vmem:[%s0 + $0x14] sm:$0xf]
  %v21 = vld [vmem:[%s0 + $0x18] sm:$0xf]
  %v22 = vld [vmem:[%s0 + $0x1c] sm:$0xf]
  %v23 = vld [vmem:[%s0 + $0x20] sm:$0xf]
  %v24 = vld [vmem:[%s0 + $0x24] sm:$0xf]
  %v25 = vld [vmem:[%s0 + $0x28] sm:$0xf]
  %v26 = vld [vmem:[%s0 + $0x2c] sm:$0xf]
  %v27 = vld [vmem:[%s0 + $0x30] sm:$0xf]
  %v28 = vld [vmem:[%s0 + $0x34] sm:$0xf]
  %v29 = vld [vmem:[%s0 + $0x38] sm:$0xf]
  %v30 = vld [vmem:[%s0 + $0x3c] sm:$0xf]
  %v31 = vld [vmem:[%s0 + $0x40] sm:$0xf]
  %v32 = vld [vmem:[%s0 + $0x44] sm:$0xf]
  %v33 = vld [vmem:[%s0 + $0x48] sm:$0xf]
  %v34 = vld [vmem:[%s0 + $0x4c] sm:$0xf]
  %v35 = vld [vmem:[%s0 + $0x50] sm:$0xf]
  %v36 = vld [vmem:[%s0 + $0x54] sm:$0xf]
  %v37 = vld [vmem:[%s0 + $0x58] sm:$0xf]
  %v38 = vld [vmem:[%s0 + $0x5c] sm:$0xf]
  %v39 = vld [vmem:[%s0 + $0x60] sm:$0xf]
  %v40 = vld [vmem:[%s0 + $0x64] sm:$0xf]
  %v41 = vld [vmem:[%s0 + $0x68] sm:$0xf]
  %v42 = vld [vmem:[%s0 + $0x6c] sm:$0xf]
  %v43 = vld [vmem:[%s0 + $0x70] sm:$0xf]
  %v44 = vld [vmem:[%s0 + $0x74] sm:$0xf]
  %v45 = vld [vmem:[%s0 + $0x78] sm:$0xf]
  %v46 = vld [vmem:[%s0 + $0x7c] sm:$0xf]
  %v47 = vld [vmem:[%s0 + $0x80] sm:$0xf]
  %v48 = vld [vmem:[%s0 + $0x84] sm:$0xf]
  %v49 = vld [vmem:[%s0 + $0x88] sm:$0xf]
  %v50 = vld [vmem:[%s0 + $0x8c] sm:$0xf]
  %v51 = vld [vmem:[%s0 + $0x90] sm:$0xf]
  %v52 = vld [vmem:[%s0 + $0x94] sm:$0xf]
  %v53 = vld [vmem:[%s0 + $0x98] sm:$0xf]
  %v54 = vld [vmem:[%s0 + $0x9c] sm:$0xf]
  %v55 = vld [vmem:[%s0 + $0xa0] sm:$0xf]
  %v56 = vld [vmem:[%s0 + $0xa4] sm:$0xf]
  %v57 = vld [vmem:[%s0 + $0xa8] sm:$0xf]
  %v58 = vld [vmem:[%s0 + $0xac] sm:$0xf]
  %v59 = vld [vmem:[%s0 + $0xb0] sm:$0xf]
  %v60 = vld [vmem:[%s0 + $0xb4] sm:$0xf]
  %v61 = vld [vmem:[%s0 + $0xb8] sm:$0xf]
  %v62 = vld [vmem:[%s0 + $0xbc] sm:$0xf]
  %v63 = vld [vmem:[%s0 + $0xc0] sm:$0xf]
  %v64 = vld [vmem:[%s1] sm:$0xf]
  %v65 = vld [vmem:[%s1 + $0x4] sm:$0xf]
  %v66 = vld [vmem:[%s2] sm:$0x1]
  %v68 = vperm.slane %v66, 0
  %v119 = vunpack.c.l.b16 %v15
  %v120 = vunpack.c.l.b16 %v16
  %v121 = vunpack.c.l.b16 %v17
  %v122 = vunpack.c.l.b16 %v18
  %v123 = vunpack.c.l.b16 %v19
  %v124 = vunpack.c.l.b16 %v20
  %v125 = vunpack.c.l.b16 %v21
  %v126 = vunpack.c.l.b16 %v22
  %v127 = vunpack.c.l.b16 %v23
  %v128 = vunpack.c.l.b16 %v24
  %v129 = vunpack.c.l.b16 %v25
  %v130 = vunpack.c.l.b16 %v26
  %v131 = vunpack.c.l.b16 %v27
  %v132 = vunpack.c.l.b16 %v28
  %v133 = vunpack.c.l.b16 %v29
  %v134 = vunpack.c.l.b16 %v30
  %v135 = vunpack.c.l.b16 %v31
  %v136 = vunpack.c.l.b16 %v32
  %v137 = vunpack.c.l.b16 %v33
  %v138 = vunpack.c.l.b16 %v34
  %v139 = vunpack.c.l.b16 %v35
  %v140 = vunpack.c.l.b16 %v36
  %v141 = vunpack.c.l.b16 %v37
  %v142 = vunpack.c.l.b16 %v38
  %v143 = vunpack.c.l.b16 %v39
  %v144 = vunpack.c.l.b16 %v40
  %v145 = vunpack.c.l.b16 %v41
  %v146 = vunpack.c.l.b16 %v42
  %v147 = vunpack.c.l.b16 %v43
  %v148 = vunpack.c.l.b16 %v44
  %v149 = vunpack.c.l.b16 %v45
  %v150 = vunpack.c.l.b16 %v46
  %v151 = vunpack.c.l.b16 %v47
  %v152 = vunpack.c.l.b16 %v48
  %v153 = vunpack.c.l.b16 %v49
  %v154 = vunpack.c.l.b16 %v50
  %v155 = vunpack.c.l.b16 %v51
  %v156 = vunpack.c.l.b16 %v52
  %v157 = vunpack.c.l.b16 %v53
  %v158 = vunpack.c.l.b16 %v54
  %v159 = vunpack.c.l.b16 %v55
  %v160 = vunpack.c.l.b16 %v56
  %v161 = vunpack.c.l.b16 %v57
  %v162 = vunpack.c.l.b16 %v58
  %v163 = vunpack.c.l.b16 %v59
  %v164 = vunpack.c.l.b16 %v60
  %v165 = vunpack.c.l.b16 %v61
  %v166 = vunpack.c.l.b16 %v62
  %v167 = vunpack.c.l.b16 %v63
  %v168 = vpack.c.b16 %v120, %v119
  %v169 = vpack.c.b16 %v122, %v121
  %v170 = vpack.c.b16 %v124, %v123
  %v171 = vpack.c.b16 %v126, %v125
  %v172 = vpack.c.b16 %v128, %v127
  %v173 = vpack.c.b16 %v130, %v129
  %v174 = vpack.c.b16 %v132, %v131
  %v175 = vpack.c.b16 %v134, %v133
  %v176 = vpack.c.b16 %v136, %v135
  %v177 = vpack.c.b16 %v138, %v137
  %v178 = vpack.c.b16 %v140, %v139
  %v179 = vpack.c.b16 %v142, %v141
  %v180 = vpack.c.b16 %v144, %v143
  %v181 = vpack.c.b16 %v146, %v145
  %v182 = vpack.c.b16 %v148, %v147
  %v183 = vpack.c.b16 %v150, %v149
  %v184 = vpack.c.b16 %v152, %v151
  %v185 = vpack.c.b16 %v154, %v153
  %v186 = vpack.c.b16 %v156, %v155
  %v187 = vpack.c.b16 %v158, %v157
  %v188 = vpack.c.b16 %v160, %v159
  %v189 = vpack.c.b16 %v162, %v161
  %v190 = vpack.c.b16 %v164, %v163
  %v191 = vpack.c.b16 %v166, %v165
  %v192 = vpack.c.b16 %v167, %v167
  %v195 = vunpack.c.l.b16 %v64
  %v196 = vunpack.c.l.b16 %v65
  %v197 = vpack.c.b16 %v196, %v195
  %vm199 = vcmask 130048
  %v201 = vsel %vm199, %v168, 0
  %v204 = vsel %vm199, %v169, 0
  %v207 = vsel %vm199, %v170, 0
  %v210 = vsel %vm199, %v171, 0
  %v213 = vsel %vm199, %v172, 0
  %v216 = vsel %vm199, %v173, 0
  %v219 = vsel %vm199, %v174, 0
  %v222 = vsel %vm199, %v175, 0
  %v225 = vsel %vm199, %v176, 0
  %v228 = vsel %vm199, %v177, 0
  %v231 = vsel %vm199, %v178, 0
  %v234 = vsel %vm199, %v179, 0
  %v237 = vsel %vm199, %v180, 0
  %v240 = vsel %vm199, %v181, 0
  %v243 = vsel %vm199, %v182, 0
  %v246 = vsel %vm199, %v183, 0
  %v249 = vsel %vm199, %v184, 0
  %v252 = vsel %vm199, %v185, 0
  %v255 = vsel %vm199, %v186, 0
  %v258 = vsel %vm199, %v187, 0
  %v261 = vsel %vm199, %v188, 0
  %v264 = vsel %vm199, %v189, 0
  %v267 = vsel %vm199, %v190, 0
  %v270 = vsel %vm199, %v191, 0
  %v273 = vsel %vm199, %v192, 0
  %275 = vmatpush.bf16.msra.mxu0 0
  %276 = vmatpush.bf16.msra.mxu0 0
  %277 = vmatpush.bf16.msra.mxu0 0
  %278 = vmatpush.bf16.msra.mxu0 0
  %279 = vmatpush.bf16.msra.mxu0 0
  %280 = vmatpush.bf16.msra.mxu0 0
  %281 = vmatpush.bf16.msra.mxu0 0
  %282 = vmatpush.bf16.msra.mxu0 %v197
  %283 = vmatmul.bf16.gmra.mxu0 %v201
  %v284 = vpop.f32.mrf.mxu0
  %v285 = vadd.f32 %v68, %v284
  %v286 = vpop.f32.mrf.mxu0
  %v287 = vadd.f32 %v68, %v286
  %288 = vmatmul.bf16.gmra.mxu0 %v204
  %v289 = vpop.f32.mrf.mxu0
  %v290 = vadd.f32 %v68, %v289
  %v291 = vpop.f32.mrf.mxu0
  %v292 = vadd.f32 %v68, %v291
  %293 = vmatmul.bf16.gmra.mxu0 %v207
  %v294 = vpop.f32.mrf.mxu0
  %v295 = vadd.f32 %v68, %v294
  %v296 = vpop.f32.mrf.mxu0
  %v297 = vadd.f32 %v68, %v296
  %298 = vmatmul.bf16.gmra.mxu0 %v210
  %v299 = vpop.f32.mrf.mxu0
  %v300 = vadd.f32 %v68, %v299
  %v301 = vpop.f32.mrf.mxu0
  %v302 = vadd.f32 %v68, %v301
  %303 = vmatmul.bf16.gmra.mxu0 %v213
  %v304 = vpop.f32.mrf.mxu0
  %v305 = vadd.f32 %v68, %v304
  %v306 = vpop.f32.mrf.mxu0
  %v307 = vadd.f32 %v68, %v306
  %308 = vmatmul.bf16.gmra.mxu0 %v216
  %v309 = vpop.f32.mrf.mxu0
  %v310 = vadd.f32 %v68, %v309
  %v311 = vpop.f32.mrf.mxu0
  %v312 = vadd.f32 %v68, %v311
  %313 = vmatmul.bf16.gmra.mxu0 %v219
  %v314 = vpop.f32.mrf.mxu0
  %v315 = vadd.f32 %v68, %v314
  %v316 = vpop.f32.mrf.mxu0
  %v317 = vadd.f32 %v68, %v316
  %318 = vmatmul.bf16.gmra.mxu0 %v222
  %v319 = vpop.f32.mrf.mxu0
  %v320 = vadd.f32 %v68, %v319
  %v321 = vpop.f32.mrf.mxu0
  %v322 = vadd.f32 %v68, %v321
  %323 = vmatmul.bf16.gmra.mxu0 %v225
  %v324 = vpop.f32.mrf.mxu0
  %v325 = vadd.f32 %v68, %v324
  %v326 = vpop.f32.mrf.mxu0
  %v327 = vadd.f32 %v68, %v326
  %328 = vmatmul.bf16.gmra.mxu0 %v228
  %v329 = vpop.f32.mrf.mxu0
  %v330 = vadd.f32 %v68, %v329
  %v331 = vpop.f32.mrf.mxu0
  %v332 = vadd.f32 %v68, %v331
  %333 = vmatmul.bf16.gmra.mxu0 %v231
  %v334 = vpop.f32.mrf.mxu0
  %v335 = vadd.f32 %v68, %v334
  %v336 = vpop.f32.mrf.mxu0
  %v337 = vadd.f32 %v68, %v336
  %338 = vmatmul.bf16.gmra.mxu0 %v234
  %v339 = vpop.f32.mrf.mxu0
  %v340 = vadd.f32 %v68, %v339
  %v341 = vpop.f32.mrf.mxu0
  %v342 = vadd.f32 %v68, %v341
  %343 = vmatmul.bf16.gmra.mxu0 %v237
  %v344 = vpop.f32.mrf.mxu0
  %v345 = vadd.f32 %v68, %v344
  %v346 = vpop.f32.mrf.mxu0
  %v347 = vadd.f32 %v68, %v346
  %348 = vmatmul.bf16.gmra.mxu0 %v240
  %v349 = vpop.f32.mrf.mxu0
  %v350 = vadd.f32 %v68, %v349
  %v351 = vpop.f32.mrf.mxu0
  %v352 = vadd.f32 %v68, %v351
  %353 = vmatmul.bf16.gmra.mxu0 %v243
  %v354 = vpop.f32.mrf.mxu0
  %v355 = vadd.f32 %v68, %v354
  %v356 = vpop.f32.mrf.mxu0
  %v357 = vadd.f32 %v68, %v356
  %358 = vmatmul.bf16.gmra.mxu0 %v246
  %v359 = vpop.f32.mrf.mxu0
  %v360 = vadd.f32 %v68, %v359
  %v361 = vpop.f32.mrf.mxu0
  %v362 = vadd.f32 %v68, %v361
  %363 = vmatmul.bf16.gmra.mxu0 %v249
  %v364 = vpop.f32.mrf.mxu0
  %v365 = vadd.f32 %v68, %v364
  %v366 = vpop.f32.mrf.mxu0
  %v367 = vadd.f32 %v68, %v366
  %368 = vmatmul.bf16.gmra.mxu0 %v252
  %v369 = vpop.f32.mrf.mxu0
  %v370 = vadd.f32 %v68, %v369
  %v371 = vpop.f32.mrf.mxu0
  %v372 = vadd.f32 %v68, %v371
  %373 = vmatmul.bf16.gmra.mxu0 %v255
  %v374 = vpop.f32.mrf.mxu0
  %v375 = vadd.f32 %v68, %v374
  %v376 = vpop.f32.mrf.mxu0
  %v377 = vadd.f32 %v68, %v376
  %378 = vmatmul.bf16.gmra.mxu0 %v258
  %v379 = vpop.f32.mrf.mxu0
  %v380 = vadd.f32 %v68, %v379
  %v381 = vpop.f32.mrf.mxu0
  %v382 = vadd.f32 %v68, %v381
  %383 = vmatmul.bf16.gmra.mxu0 %v261
  %v384 = vpop.f32.mrf.mxu0
  %v385 = vadd.f32 %v68, %v384
  %v386 = vpop.f32.mrf.mxu0
  %v387 = vadd.f32 %v68, %v386
  %388 = vmatmul.bf16.gmra.mxu0 %v264
  %v389 = vpop.f32.mrf.mxu0
  %v390 = vadd.f32 %v68, %v389
  %v391 = vpop.f32.mrf.mxu0
  %v392 = vadd.f32 %v68, %v391
  %393 = vmatmul.bf16.gmra.mxu0 %v267
  %v394 = vpop.f32.mrf.mxu0
  %v395 = vadd.f32 %v68, %v394
  %v396 = vpop.f32.mrf.mxu0
  %v397 = vadd.f32 %v68, %v396
  %398 = vmatmul.bf16.gmra.mxu0 %v270
  %v399 = vpop.f32.mrf.mxu0
  %v400 = vadd.f32 %v68, %v399
  %v401 = vpop.f32.mrf.mxu0
  %v402 = vadd.f32 %v68, %v401
  %403 = vmatmul.bf16.gmra.mxu0 %v273
  %v404 = vpop.f32.mrf.mxu0
  %v405 = vadd.f32 %v68, %v404
  %v406 = vpop.f32.mrf.mxu0
  %407 = vdwg.mxu0
  %v408 = vpack.c.bf16 %v285, %v285
  %v409 = vpack.c.bf16 %v287, %v287
  %v410 = vpack.c.bf16 %v290, %v290
  %v411 = vpack.c.bf16 %v292, %v292
  %v412 = vpack.c.bf16 %v295, %v295
  %v413 = vpack.c.bf16 %v297, %v297
  %v414 = vpack.c.bf16 %v300, %v300
  %v415 = vpack.c.bf16 %v302, %v302
  %v416 = vpack.c.bf16 %v305, %v305
  %v417 = vpack.c.bf16 %v307, %v307
  %v418 = vpack.c.bf16 %v310, %v310
  %v419 = vpack.c.bf16 %v312, %v312
  %v420 = vpack.c.bf16 %v315, %v315
  %v421 = vpack.c.bf16 %v317, %v317
  %v422 = vpack.c.bf16 %v320, %v320
  %v423 = vpack.c.bf16 %v322, %v322
  %v424 = vpack.c.bf16 %v325, %v325
  %v425 = vpack.c.bf16 %v327, %v327
  %v426 = vpack.c.bf16 %v330, %v330
  %v427 = vpack.c.bf16 %v332, %v332
  %v428 = vpack.c.bf16 %v335, %v335
  %v429 = vpack.c.bf16 %v337, %v337
  %v430 = vpack.c.bf16 %v340, %v340
  %v431 = vpack.c.bf16 %v342, %v342
  %v432 = vpack.c.bf16 %v345, %v345
  %v433 = vpack.c.bf16 %v347, %v347
  %v434 = vpack.c.bf16 %v350, %v350
  %v435 = vpack.c.bf16 %v352, %v352
  %v436 = vpack.c.bf16 %v355, %v355
  %v437 = vpack.c.bf16 %v357, %v357
  %v438 = vpack.c.bf16 %v360, %v360
  %v439 = vpack.c.bf16 %v362, %v362
  %v440 = vpack.c.bf16 %v365, %v365
  %v441 = vpack.c.bf16 %v367, %v367
  %v442 = vpack.c.bf16 %v370, %v370
  %v443 = vpack.c.bf16 %v372, %v372
  %v444 = vpack.c.bf16 %v375, %v375
  %v445 = vpack.c.bf16 %v377, %v377
  %v446 = vpack.c.bf16 %v380, %v380
  %v447 = vpack.c.bf16 %v382, %v382
  %v448 = vpack.c.bf16 %v385, %v385
  %v449 = vpack.c.bf16 %v387, %v387
  %v450 = vpack.c.bf16 %v390, %v390
  %v451 = vpack.c.bf16 %v392, %v392
  %v452 = vpack.c.bf16 %v395, %v395
  %v453 = vpack.c.bf16 %v397, %v397
  %v454 = vpack.c.bf16 %v400, %v400
  %v455 = vpack.c.bf16 %v402, %v402
  %v456 = vpack.c.bf16 %v405, %v405
  %vm457 = vcmask 257024
  %458 = vst.msk [vmem:[%s3] sm:$0xf] %vm457, %v408
  %459 = vst.msk [vmem:[%s3 + $0x4] sm:$0xf] %vm457, %v409
  %460 = vst.msk [vmem:[%s3 + $0x8] sm:$0xf] %vm457, %v410
  %461 = vst.msk [vmem:[%s3 + $0xc] sm:$0xf] %vm457, %v411
  %462 = vst.msk [vmem:[%s3 + $0x10] sm:$0xf] %vm457, %v412
  %463 = vst.msk [vmem:[%s3 + $0x14] sm:$0xf] %vm457, %v413
  %464 = vst.msk [vmem:[%s3 + $0x18] sm:$0xf] %vm457, %v414
  %465 = vst.msk [vmem:[%s3 + $0x1c] sm:$0xf] %vm457, %v415
  %466 = vst.msk [vmem:[%s3 + $0x20] sm:$0xf] %vm457, %v416
  %467 = vst.msk [vmem:[%s3 + $0x24] sm:$0xf] %vm457, %v417
  %468 = vst.msk [vmem:[%s3 + $0x28] sm:$0xf] %vm457, %v418
  %469 = vst.msk [vmem:[%s3 + $0x2c] sm:$0xf] %vm457, %v419
  %470 = vst.msk [vmem:[%s3 + $0x30] sm:$0xf] %vm457, %v420
  %471 = vst.msk [vmem:[%s3 + $0x34] sm:$0xf] %vm457, %v421
  %472 = vst.msk [vmem:[%s3 + $0x38] sm:$0xf] %vm457, %v422
  %473 = vst.msk [vmem:[%s3 + $0x3c] sm:$0xf] %vm457, %v423
  %474 = vst.msk [vmem:[%s3 + $0x40] sm:$0xf] %vm457, %v424
  %475 = vst.msk [vmem:[%s3 + $0x44] sm:$0xf] %vm457, %v425
  %476 = vst.msk [vmem:[%s3 + $0x48] sm:$0xf] %vm457, %v426
  %477 = vst.msk [vmem:[%s3 + $0x4c] sm:$0xf] %vm457, %v427
  %478 = vst.msk [vmem:[%s3 + $0x50] sm:$0xf] %vm457, %v428
  %479 = vst.msk [vmem:[%s3 + $0x54] sm:$0xf] %vm457, %v429
  %480 = vst.msk [vmem:[%s3 + $0x58] sm:$0xf] %vm457, %v430
  %481 = vst.msk [vmem:[%s3 + $0x5c] sm:$0xf] %vm457, %v431
  %482 = vst.msk [vmem:[%s3 + $0x60] sm:$0xf] %vm457, %v432
  %483 = vst.msk [vmem:[%s3 + $0x64] sm:$0xf] %vm457, %v433
  %484 = vst.msk [vmem:[%s3 + $0x68] sm:$0xf] %vm457, %v434
  %485 = vst.msk [vmem:[%s3 + $0x6c] sm:$0xf] %vm457, %v435
  %486 = vst.msk [vmem:[%s3 + $0x70] sm:$0xf] %vm457, %v436
  %487 = vst.msk [vmem:[%s3 + $0x74] sm:$0xf] %vm457, %v437
  %488 = vst.msk [vmem:[%s3 + $0x78] sm:$0xf] %vm457, %v438
  %489 = vst.msk [vmem:[%s3 + $0x7c] sm:$0xf] %vm457, %v439
  %490 = vst.msk [vmem:[%s3 + $0x80] sm:$0xf] %vm457, %v440
  %491 = vst.msk [vmem:[%s3 + $0x84] sm:$0xf] %vm457, %v441
  %492 = vst.msk [vmem:[%s3 + $0x88] sm:$0xf] %vm457, %v442
  %493 = vst.msk [vmem:[%s3 + $0x8c] sm:$0xf] %vm457, %v443
  %494 = vst.msk [vmem:[%s3 + $0x90] sm:$0xf] %vm457, %v444
  %495 = vst.msk [vmem:[%s3 + $0x94] sm:$0xf] %vm457, %v445
  %496 = vst.msk [vmem:[%s3 + $0x98] sm:$0xf] %vm457, %v446
  %497 = vst.msk [vmem:[%s3 + $0x9c] sm:$0xf] %vm457, %v447
  %498 = vst.msk [vmem:[%s3 + $0xa0] sm:$0xf] %vm457, %v448
  %499 = vst.msk [vmem:[%s3 + $0xa4] sm:$0xf] %vm457, %v449
  %500 = vst.msk [vmem:[%s3 + $0xa8] sm:$0xf] %vm457, %v450
  %501 = vst.msk [vmem:[%s3 + $0xac] sm:$0xf] %vm457, %v451
  %502 = vst.msk [vmem:[%s3 + $0xb0] sm:$0xf] %vm457, %v452
  %503 = vst.msk [vmem:[%s3 + $0xb4] sm:$0xf] %vm457, %v453
  %504 = vst.msk [vmem:[%s3 + $0xb8] sm:$0xf] %vm457, %v454
  %505 = vst.msk [vmem:[%s3 + $0xbc] sm:$0xf] %vm457, %v455
  %506 = vst.msk [vmem:[%s3 + $0xc0] sm:$0xf] %vm457, %v456
  // Predicated region
  $region14: #{resnet10_emnist_forward.22} parent=0 // pred_check
    _
  $region15: #{resnet10_emnist_forward.22} parent=0 // pred_check_branch
    %508 = sbr.rel (0) target = $region17
  $region16: #{resnet10_emnist_forward.22} parent=0 // pred_region
    _
  $region17: #{resnet10_emnist_forward.22} parent=0 // pred_fallthru
    _
  // Predicated region
  $region18: #{resnet10_emnist_forward.22} parent=0 // pred_check
    _
  $region19: #{resnet10_emnist_forward.22} parent=0 // pred_check_branch
    %510 = sbr.rel (0) target = $region21
  $region20: #{resnet10_emnist_forward.22} parent=0 // pred_region
    _
  $region21: #{resnet10_emnist_forward.22} parent=0 // pred_fallthru
    _

// kernel: resnet10_emnist_forward.23
$region0: #{resnet10_emnist_forward.23}
  #allocation0 [shape = 'u32[]', space=smem, size = 0x4, offset = 0x4, fixed_abs, tag = 'smem constant byte address 0x4 - core index']
  #allocation1 [shape = 'u32[72,128]{1,0:T(1,128)}', space=vmem, size = 0x9000, scoped, tag = 'internal scratch']
  %s0 = inlined_call_operand.vmem [shape: bf16[392,288], index: 0, kind: input, shape index: {}]
  %s1 = inlined_call_operand.vmem [shape: bf16[288,32], index: 1, kind: input, shape index: {}]
  %s2 = inlined_call_operand.vmem [shape: f32[1,32], index: 2, kind: input, shape index: {}]
  %s3 = inlined_call_operand.vmem [shape: bf16[392,32], index: 3, kind: input, shape index: {}]
  %s4 = inlined_call_operand.vmem [shape: bf16[392,32], index: 4, kind: output, shape index: {}]
  %s5 = sld [smem:[#allocation0]]
  $region26: #{resnet10_emnist_forward.23} parent=0
    _
  %s7 = ssub.s32 1, %s5
  %s8 = scalar_select 0, %s7, %s5
  // Predicated region
  $region2: #{resnet10_emnist_forward.23} parent=0 // pred_check
    _
  $region3: #{resnet10_emnist_forward.23} parent=0 // pred_check_branch
    %10 = sbr.rel (0) target = $region5
  $region4: #{resnet10_emnist_forward.23} parent=0 // pred_region
    _
  $region5: #{resnet10_emnist_forward.23} parent=0 // pred_fallthru
    _
  // Predicated region
  $region6: #{resnet10_emnist_forward.23} parent=0 // pred_check
    _
  $region7: #{resnet10_emnist_forward.23} parent=0 // pred_check_branch
    %12 = sbr.rel (0) target = $region9
  $region8: #{resnet10_emnist_forward.23} parent=0 // pred_region
    _
  $region9: #{resnet10_emnist_forward.23} parent=0 // pred_fallthru
    _
  // Predicated region
  $region10: #{resnet10_emnist_forward.23} parent=0 // pred_check
    _
  $region11: #{resnet10_emnist_forward.23} parent=0 // pred_check_branch
    %14 = sbr.rel (0) target = $region13
  $region12: #{resnet10_emnist_forward.23} parent=0 // pred_region
    _
  $region13: #{resnet10_emnist_forward.23} parent=0 // pred_fallthru
    _
  // Predicated region
  $region14: #{resnet10_emnist_forward.23} parent=0 // pred_check
    _
  $region15: #{resnet10_emnist_forward.23} parent=0 // pred_check_branch
    %16 = sbr.rel (0) target = $region17
  $region16: #{resnet10_emnist_forward.23} parent=0 // pred_region
    _
  $region17: #{resnet10_emnist_forward.23} parent=0 // pred_fallthru
    _
  %v18 = vld [vmem:[%s0] sm:$0xff]
  %v19 = vld [vmem:[%s0 + $0x8] sm:$0xf]
  %v20 = vld [vmem:[%s0 + $0xc] sm:$0xff]
  %v21 = vld [vmem:[%s0 + $0x14] sm:$0xf]
  %v22 = vld [vmem:[%s0 + $0x18] sm:$0xff]
  %v23 = vld [vmem:[%s0 + $0x20] sm:$0xf]
  %v24 = vld [vmem:[%s0 + $0x24] sm:$0xff]
  %v25 = vld [vmem:[%s0 + $0x2c] sm:$0xf]
  %v26 = vld [vmem:[%s0 + $0x30] sm:$0xff]
  %v27 = vld [vmem:[%s0 + $0x38] sm:$0xf]
  %v28 = vld [vmem:[%s0 + $0x3c] sm:$0xff]
  %v29 = vld [vmem:[%s0 + $0x44] sm:$0xf]
  %v30 = vld [vmem:[%s0 + $0x48] sm:$0xff]
  %v31 = vld [vmem:[%s0 + $0x50] sm:$0xf]
  %v32 = vld [vmem:[%s0 + $0x54] sm:$0xff]
  %v33 = vld [vmem:[%s0 + $0x5c] sm:$0xf]
  %v34 = vld [vmem:[%s0 + $0x60] sm:$0xff]
  %v35 = vld [vmem:[%s0 + $0x68] sm:$0xf]
  %v36 = vld [vmem:[%s0 + $0x6c] sm:$0xff]
  %v37 = vld [vmem:[%s0 + $0x74] sm:$0xf]
  %v38 = vld [vmem:[%s0 + $0x78] sm:$0xff]
  %v39 = vld [vmem:[%s0 + $0x80] sm:$0xf]
  %v40 = vld [vmem:[%s0 + $0x84] sm:$0xff]
  %v41 = vld [vmem:[%s0 + $0x8c] sm:$0xf]
  %v42 = vld [vmem:[%s0 + $0x90] sm:$0xff]
  %v43 = vld [vmem:[%s0 + $0x98] sm:$0xf]
  %v44 = vld [vmem:[%s0 + $0x9c] sm:$0xff]
  %v45 = vld [vmem:[%s0 + $0xa4] sm:$0xf]
  %v46 = vld [vmem:[%s0 + $0xa8] sm:$0xff]
  %v47 = vld [vmem:[%s0 + $0xb0] sm:$0xf]
  %v48 = vld [vmem:[%s0 + $0xb4] sm:$0xff]
  %v49 = vld [vmem:[%s0 + $0xbc] sm:$0xf]
  %v50 = vld [vmem:[%s0 + $0xc0] sm:$0xff]
  %v51 = vld [vmem:[%s0 + $0xc8] sm:$0xf]
  %v52 = vld [vmem:[%s0 + $0xcc] sm:$0xff]
  %v53 = vld [vmem:[%s0 + $0xd4] sm:$0xf]
  %v54 = vld [vmem:[%s0 + $0xd8] sm:$0xff]
  %v55 = vld [vmem:[%s0 + $0xe0] sm:$0xf]
  %v56 = vld [vmem:[%s0 + $0xe4] sm:$0xff]
  %v57 = vld [vmem:[%s0 + $0xec] sm:$0xf]
  %v58 = vld [vmem:[%s0 + $0xf0] sm:$0xff]
  %v59 = vld [vmem:[%s0 + $0xf8] sm:$0xf]
  %v60 = vld [vmem:[%s0 + $0xfc] sm:$0xff]
  %v61 = vld [vmem:[%s0 + $0x104] sm:$0xf]
  %v62 = vld [vmem:[%s0 + $0x108] sm:$0xff]
  %v63 = vld [vmem:[%s0 + $0x110] sm:$0xf]
  %v64 = vld [vmem:[%s0 + $0x114] sm:$0xff]
  %v65 = vld [vmem:[%s0 + $0x11c] sm:$0xf]
  %v66 = vld [vmem:[%s0 + $0x120] sm:$0xff]
  %v67 = vld [vmem:[%s0 + $0x128] sm:$0xf]
  %v68 = vld [vmem:[%s0 + $0x12c] sm:$0xff]
  %v69 = vld [vmem:[%s0 + $0x134] sm:$0xf]
  %v70 = vld [vmem:[%s0 + $0x138] sm:$0xff]
  %v71 = vld [vmem:[%s0 + $0x140] sm:$0xf]
  %v72 = vld [vmem:[%s0 + $0x144] sm:$0xff]
  %v73 = vld [vmem:[%s0 + $0x14c] sm:$0xf]
  %v74 = vld [vmem:[%s0 + $0x150] sm:$0xff]
  %v75 = vld [vmem:[%s0 + $0x158] sm:$0xf]
  %v76 = vld [vmem:[%s0 + $0x15c] sm:$0xff]
  %v77 = vld [vmem:[%s0 + $0x164] sm:$0xf]
  %v78 = vld [vmem:[%s0 + $0x168] sm:$0xff]
  %v79 = vld [vmem:[%s0 + $0x170] sm:$0xf]
  %v80 = vld [vmem:[%s0 + $0x174] sm:$0xff]
  %v81 = vld [vmem:[%s0 + $0x17c] sm:$0xf]
  %v82 = vld [vmem:[%s0 + $0x180] sm:$0xff]
  %v83 = vld [vmem:[%s0 + $0x188] sm:$0xf]
  %v84 = vld [vmem:[%s0 + $0x18c] sm:$0xff]
  %v85 = vld [vmem:[%s0 + $0x194] sm:$0xf]
  %v86 = vld [vmem:[%s0 + $0x198] sm:$0xff]
  %v87 = vld [vmem:[%s0 + $0x1a0] sm:$0xf]
  %v88 = vld [vmem:[%s0 + $0x1a4] sm:$0xff]
  %v89 = vld [vmem:[%s0 + $0x1ac] sm:$0xf]
  %v90 = vld [vmem:[%s0 + $0x1b0] sm:$0xff]
  %v91 = vld [vmem:[%s0 + $0x1b8] sm:$0xf]
  %v92 = vld [vmem:[%s0 + $0x1bc] sm:$0xff]
  %v93 = vld [vmem:[%s0 + $0x1c4] sm:$0xf]
  %v94 = vld [vmem:[%s0 + $0x1c8] sm:$0xff]
  %v95 = vld [vmem:[%s0 + $0x1d0] sm:$0xf]
  %v96 = vld [vmem:[%s0 + $0x1d4] sm:$0xff]
  %v97 = vld [vmem:[%s0 + $0x1dc] sm:$0xf]
  %v98 = vld [vmem:[%s0 + $0x1e0] sm:$0xff]
  %v99 = vld [vmem:[%s0 + $0x1e8] sm:$0xf]
  %v100 = vld [vmem:[%s0 + $0x1ec] sm:$0xff]
  %v101 = vld [vmem:[%s0 + $0x1f4] sm:$0xf]
  %v102 = vld [vmem:[%s0 + $0x1f8] sm:$0xff]
  %v103 = vld [vmem:[%s0 + $0x200] sm:$0xf]
  %v104 = vld [vmem:[%s0 + $0x204] sm:$0xff]
  %v105 = vld [vmem:[%s0 + $0x20c] sm:$0xf]
  %v106 = vld [vmem:[%s0 + $0x210] sm:$0xff]
  %v107 = vld [vmem:[%s0 + $0x218] sm:$0xf]
  %v108 = vld [vmem:[%s0 + $0x21c] sm:$0xff]
  %v109 = vld [vmem:[%s0 + $0x224] sm:$0xf]
  %v110 = vld [vmem:[%s0 + $0x228] sm:$0xff]
  %v111 = vld [vmem:[%s0 + $0x230] sm:$0xf]
  %v112 = vld [vmem:[%s0 + $0x234] sm:$0xff]
  %v113 = vld [vmem:[%s0 + $0x23c] sm:$0xf]
  %v114 = vld [vmem:[%s0 + $0x240] sm:$0xff]
  %v115 = vld [vmem:[%s0 + $0x248] sm:$0xf]
  %v116 = vld [vmem:[%s1] sm:$0xf]
  %v117 = vld [vmem:[%s1 + $0x4] sm:$0xf]
  %v118 = vld [vmem:[%s1 + $0x8] sm:$0xf]
  %v119 = vld [vmem:[%s1 + $0xc] sm:$0xf]
  %v120 = vld [vmem:[%s1 + $0x10] sm:$0xf]
  %v121 = vld [vmem:[%s1 + $0x14] sm:$0xf]
  %v122 = vld [vmem:[%s1 + $0x18] sm:$0xf]
  %v123 = vld [vmem:[%s1 + $0x1c] sm:$0xf]
  %v124 = vld [vmem:[%s1 + $0x20] sm:$0xf]
  %v125 = vld [vmem:[%s1 + $0x24] sm:$0xf]
  %v126 = vld [vmem:[%s1 + $0x28] sm:$0xf]
  %v127 = vld [vmem:[%s1 + $0x2c] sm:$0xf]
  %v128 = vld [vmem:[%s1 + $0x30] sm:$0xf]
  %v129 = vld [vmem:[%s1 + $0x34] sm:$0xf]
  %v130 = vld [vmem:[%s1 + $0x38] sm:$0xf]
  %v131 = vld [vmem:[%s1 + $0x3c] sm:$0xf]
  %v132 = vld [vmem:[%s1 + $0x40] sm:$0xf]
  %v133 = vld [vmem:[%s1 + $0x44] sm:$0xf]
  %v134 = vld [vmem:[%s1 + $0x48] sm:$0xf]
  %v135 = vld [vmem:[%s1 + $0x4c] sm:$0xf]
  %v136 = vld [vmem:[%s1 + $0x50] sm:$0xf]
  %v137 = vld [vmem:[%s1 + $0x54] sm:$0xf]
  %v138 = vld [vmem:[%s1 + $0x58] sm:$0xf]
  %v139 = vld [vmem:[%s1 + $0x5c] sm:$0xf]
  %v140 = vld [vmem:[%s1 + $0x60] sm:$0xf]
  %v141 = vld [vmem:[%s1 + $0x64] sm:$0xf]
  %v142 = vld [vmem:[%s1 + $0x68] sm:$0xf]
  %v143 = vld [vmem:[%s1 + $0x6c] sm:$0xf]
  %v144 = vld [vmem:[%s1 + $0x70] sm:$0xf]
  %v145 = vld [vmem:[%s1 + $0x74] sm:$0xf]
  %v146 = vld [vmem:[%s1 + $0x78] sm:$0xf]
  %v147 = vld [vmem:[%s1 + $0x7c] sm:$0xf]
  %v148 = vld [vmem:[%s1 + $0x80] sm:$0xf]
  %v149 = vld [vmem:[%s1 + $0x84] sm:$0xf]
  %v150 = vld [vmem:[%s1 + $0x88] sm:$0xf]
  %v151 = vld [vmem:[%s1 + $0x8c] sm:$0xf]
  %v152 = vld [vmem:[%s2] sm:$0x1]
  %v154 = vperm.slane %v152, 0
  %v254 = vunpack.c.l.b16 %v18
  %v255 = vunpack.c.h.b16 %v18
  %v256 = vunpack.c.l.b16 %v19
  %v257 = vunpack.c.l.b16 %v20
  %v258 = vunpack.c.h.b16 %v20
  %v259 = vunpack.c.l.b16 %v21
  %v260 = vunpack.c.l.b16 %v22
  %v261 = vunpack.c.h.b16 %v22
  %v262 = vunpack.c.l.b16 %v23
  %v263 = vunpack.c.l.b16 %v24
  %v264 = vunpack.c.h.b16 %v24
  %v265 = vunpack.c.l.b16 %v25
  %v266 = vunpack.c.l.b16 %v26
  %v267 = vunpack.c.h.b16 %v26
  %v268 = vunpack.c.l.b16 %v27
  %v269 = vunpack.c.l.b16 %v28
  %v270 = vunpack.c.h.b16 %v28
  %v271 = vunpack.c.l.b16 %v29
  %v272 = vunpack.c.l.b16 %v30
  %v273 = vunpack.c.h.b16 %v30
  %v274 = vunpack.c.l.b16 %v31
  %v275 = vunpack.c.l.b16 %v32
  %v276 = vunpack.c.h.b16 %v32
  %v277 = vunpack.c.l.b16 %v33
  %v278 = vunpack.c.l.b16 %v34
  %v279 = vunpack.c.h.b16 %v34
  %v280 = vunpack.c.l.b16 %v35
  %v281 = vunpack.c.l.b16 %v36
  %v282 = vunpack.c.h.b16 %v36
  %v283 = vunpack.c.l.b16 %v37
  %v284 = vunpack.c.l.b16 %v38
  %v285 = vunpack.c.h.b16 %v38
  %v286 = vunpack.c.l.b16 %v39
  %v287 = vunpack.c.l.b16 %v40
  %v288 = vunpack.c.h.b16 %v40
  %v289 = vunpack.c.l.b16 %v41
  %v290 = vunpack.c.l.b16 %v42
  %v291 = vunpack.c.h.b16 %v42
  %v292 = vunpack.c.l.b16 %v43
  %v293 = vunpack.c.l.b16 %v44
  %v294 = vunpack.c.h.b16 %v44
  %v295 = vunpack.c.l.b16 %v45
  %v296 = vunpack.c.l.b16 %v46
  %v297 = vunpack.c.h.b16 %v46
  %v298 = vunpack.c.l.b16 %v47
  %v299 = vunpack.c.l.b16 %v48
  %v300 = vunpack.c.h.b16 %v48
  %v301 = vunpack.c.l.b16 %v49
  %v302 = vunpack.c.l.b16 %v50
  %v303 = vunpack.c.h.b16 %v50
  %v304 = vunpack.c.l.b16 %v51
  %v305 = vunpack.c.l.b16 %v52
  %v306 = vunpack.c.h.b16 %v52
  %v307 = vunpack.c.l.b16 %v53
  %v308 = vunpack.c.l.b16 %v54
  %v309 = vunpack.c.h.b16 %v54
  %v310 = vunpack.c.l.b16 %v55
  %v311 = vunpack.c.l.b16 %v56
  %v312 = vunpack.c.h.b16 %v56
  %v313 = vunpack.c.l.b16 %v57
  %v314 = vunpack.c.l.b16 %v58
  %v315 = vunpack.c.h.b16 %v58
  %v316 = vunpack.c.l.b16 %v59
  %v317 = vunpack.c.l.b16 %v60
  %v318 = vunpack.c.h.b16 %v60
  %v319 = vunpack.c.l.b16 %v61
  %v320 = vunpack.c.l.b16 %v62
  %v321 = vunpack.c.h.b16 %v62
  %v322 = vunpack.c.l.b16 %v63
  %v323 = vunpack.c.l.b16 %v64
  %v324 = vunpack.c.h.b16 %v64
  %v325 = vunpack.c.l.b16 %v65
  %v326 = vunpack.c.l.b16 %v66
  %v327 = vunpack.c.h.b16 %v66
  %v328 = vunpack.c.l.b16 %v67
  %v329 = vunpack.c.l.b16 %v68
  %v330 = vunpack.c.h.b16 %v68
  %v331 = vunpack.c.l.b16 %v69
  %v332 = vunpack.c.l.b16 %v70
  %v333 = vunpack.c.h.b16 %v70
  %v334 = vunpack.c.l.b16 %v71
  %v335 = vunpack.c.l.b16 %v72
  %v336 = vunpack.c.h.b16 %v72
  %v337 = vunpack.c.l.b16 %v73
  %v338 = vunpack.c.l.b16 %v74
  %v339 = vunpack.c.h.b16 %v74
  %v340 = vunpack.c.l.b16 %v75
  %v341 = vunpack.c.l.b16 %v76
  %v342 = vunpack.c.h.b16 %v76
  %v343 = vunpack.c.l.b16 %v77
  %v344 = vunpack.c.l.b16 %v78
  %v345 = vunpack.c.h.b16 %v78
  %v346 = vunpack.c.l.b16 %v79
  %v347 = vunpack.c.l.b16 %v80
  %v348 = vunpack.c.h.b16 %v80
  %v349 = vunpack.c.l.b16 %v81
  %v350 = vunpack.c.l.b16 %v82
  %v351 = vunpack.c.h.b16 %v82
  %v352 = vunpack.c.l.b16 %v83
  %v353 = vunpack.c.l.b16 %v84
  %v354 = vunpack.c.h.b16 %v84
  %v355 = vunpack.c.l.b16 %v85
  %v356 = vunpack.c.l.b16 %v86
  %v357 = vunpack.c.h.b16 %v86
  %v358 = vunpack.c.l.b16 %v87
  %v359 = vunpack.c.l.b16 %v88
  %v360 = vunpack.c.h.b16 %v88
  %v361 = vunpack.c.l.b16 %v89
  %v362 = vunpack.c.l.b16 %v90
  %v363 = vunpack.c.h.b16 %v90
  %v364 = vunpack.c.l.b16 %v91
  %v365 = vunpack.c.l.b16 %v92
  %v366 = vunpack.c.h.b16 %v92
  %v367 = vunpack.c.l.b16 %v93
  %v368 = vunpack.c.l.b16 %v94
  %v369 = vunpack.c.h.b16 %v94
  %v370 = vunpack.c.l.b16 %v95
  %v371 = vunpack.c.l.b16 %v96
  %v372 = vunpack.c.h.b16 %v96
  %v373 = vunpack.c.l.b16 %v97
  %v374 = vunpack.c.l.b16 %v98
  %v375 = vunpack.c.h.b16 %v98
  %v376 = vunpack.c.l.b16 %v99
  %v377 = vunpack.c.l.b16 %v100
  %v378 = vunpack.c.h.b16 %v100
  %v379 = vunpack.c.l.b16 %v101
  %v380 = vunpack.c.l.b16 %v102
  %v381 = vunpack.c.h.b16 %v102
  %v382 = vunpack.c.l.b16 %v103
  %v383 = vunpack.c.l.b16 %v104
  %v384 = vunpack.c.h.b16 %v104
  %v385 = vunpack.c.l.b16 %v105
  %v386 = vunpack.c.l.b16 %v106
  %v387 = vunpack.c.h.b16 %v106
  %v388 = vunpack.c.l.b16 %v107
  %v389 = vunpack.c.l.b16 %v108
  %v390 = vunpack.c.h.b16 %v108
  %v391 = vunpack.c.l.b16 %v109
  %v392 = vunpack.c.l.b16 %v110
  %v393 = vunpack.c.h.b16 %v110
  %v394 = vunpack.c.l.b16 %v111
  %v395 = vunpack.c.l.b16 %v112
  %v396 = vunpack.c.h.b16 %v112
  %v397 = vunpack.c.l.b16 %v113
  %v398 = vunpack.c.l.b16 %v114
  %v399 = vunpack.c.h.b16 %v114
  %v400 = vunpack.c.l.b16 %v115
  %v401 = vpack.c.b16 %v257, %v254
  %v402 = vpack.c.b16 %v258, %v255
  %v403 = vpack.c.b16 %v259, %v256
  %v404 = vpack.c.b16 %v263, %v260
  %v405 = vpack.c.b16 %v264, %v261
  %v406 = vpack.c.b16 %v265, %v262
  %v407 = vpack.c.b16 %v269, %v266
  %v408 = vpack.c.b16 %v270, %v267
  %v409 = vpack.c.b16 %v271, %v268
  %v410 = vpack.c.b16 %v275, %v272
  %v411 = vpack.c.b16 %v276, %v273
  %v412 = vpack.c.b16 %v277, %v274
  %v413 = vpack.c.b16 %v281, %v278
  %v414 = vpack.c.b16 %v282, %v279
  %v415 = vpack.c.b16 %v283, %v280
  %v416 = vpack.c.b16 %v287, %v284
  %v417 = vpack.c.b16 %v288, %v285
  %v418 = vpack.c.b16 %v289, %v286
  %v419 = vpack.c.b16 %v293, %v290
  %v420 = vpack.c.b16 %v294, %v291
  %v421 = vpack.c.b16 %v295, %v292
  %v422 = vpack.c.b16 %v299, %v296
  %v423 = vpack.c.b16 %v300, %v297
  %v424 = vpack.c.b16 %v301, %v298
  %v425 = vpack.c.b16 %v305, %v302
  %v426 = vpack.c.b16 %v306, %v303
  %v427 = vpack.c.b16 %v307, %v304
  %v428 = vpack.c.b16 %v311, %v308
  %v429 = vpack.c.b16 %v312, %v309
  %v430 = vpack.c.b16 %v313, %v310
  %v431 = vpack.c.b16 %v317, %v314
  %v432 = vpack.c.b16 %v318, %v315
  %v433 = vpack.c.b16 %v319, %v316
  %v434 = vpack.c.b16 %v323, %v320
  %v435 = vpack.c.b16 %v324, %v321
  %v436 = vpack.c.b16 %v325, %v322
  %v437 = vpack.c.b16 %v329, %v326
  %v438 = vpack.c.b16 %v330, %v327
  %v439 = vpack.c.b16 %v331, %v328
  %v440 = vpack.c.b16 %v335, %v332
  %v441 = vpack.c.b16 %v336, %v333
  %v442 = vpack.c.b16 %v337, %v334
  %v443 = vpack.c.b16 %v341, %v338
  %v444 = vpack.c.b16 %v342, %v339
  %v445 = vpack.c.b16 %v343, %v340
  %v446 = vpack.c.b16 %v347, %v344
  %v447 = vpack.c.b16 %v348, %v345
  %v448 = vpack.c.b16 %v349, %v346
  %v449 = vpack.c.b16 %v353, %v350
  %v450 = vpack.c.b16 %v354, %v351
  %v451 = vpack.c.b16 %v355, %v352
  %v452 = vpack.c.b16 %v359, %v356
  %v453 = vpack.c.b16 %v360, %v357
  %v454 = vpack.c.b16 %v361, %v358
  %v455 = vpack.c.b16 %v365, %v362
  %v456 = vpack.c.b16 %v366, %v363
  %v457 = vpack.c.b16 %v367, %v364
  %v458 = vpack.c.b16 %v371, %v368
  %v459 = vpack.c.b16 %v372, %v369
  %v460 = vpack.c.b16 %v373, %v370
  %v461 = vpack.c.b16 %v377, %v374
  %v462 = vpack.c.b16 %v378, %v375
  %v463 = vpack.c.b16 %v379, %v376
  %v464 = vpack.c.b16 %v383, %v380
  %v465 = vpack.c.b16 %v384, %v381
  %v466 = vpack.c.b16 %v385, %v382
  %v467 = vpack.c.b16 %v389, %v386
  %v468 = vpack.c.b16 %v390, %v387
  %v469 = vpack.c.b16 %v391, %v388
  %v470 = vpack.c.b16 %v395, %v392
  %v471 = vpack.c.b16 %v396, %v393
  %v472 = vpack.c.b16 %v397, %v394
  %v473 = vpack.c.b16 %v398, %v398
  %v474 = vpack.c.b16 %v399, %v399
  %v475 = vpack.c.b16 %v400, %v400
  %v562 = vunpack.c.l.b16 %v116
  %v563 = vunpack.c.l.b16 %v117
  %v564 = vunpack.c.l.b16 %v118
  %v565 = vunpack.c.l.b16 %v119
  %v566 = vunpack.c.l.b16 %v120
  %v567 = vunpack.c.l.b16 %v121
  %v568 = vunpack.c.l.b16 %v122
  %v569 = vunpack.c.l.b16 %v123
  %v570 = vunpack.c.l.b16 %v124
  %v571 = vunpack.c.l.b16 %v125
  %v572 = vunpack.c.l.b16 %v126
  %v573 = vunpack.c.l.b16 %v127
  %v574 = vunpack.c.l.b16 %v128
  %v575 = vunpack.c.l.b16 %v129
  %v576 = vunpack.c.l.b16 %v130
  %v577 = vunpack.c.l.b16 %v131
  %v578 = vunpack.c.l.b16 %v132
  %v579 = vunpack.c.l.b16 %v133
  %v580 = vunpack.c.l.b16 %v134
  %v581 = vunpack.c.l.b16 %v135
  %v582 = vunpack.c.l.b16 %v136
  %v583 = vunpack.c.l.b16 %v137
  %v584 = vunpack.c.l.b16 %v138
  %v585 = vunpack.c.l.b16 %v139
  %v586 = vunpack.c.l.b16 %v140
  %v587 = vunpack.c.l.b16 %v141
  %v588 = vunpack.c.l.b16 %v142
  %v589 = vunpack.c.l.b16 %v143
  %v590 = vunpack.c.l.b16 %v144
  %v591 = vunpack.c.l.b16 %v145
  %v592 = vunpack.c.l.b16 %v146
  %v593 = vunpack.c.l.b16 %v147
  %v594 = vunpack.c.l.b16 %v148
  %v595 = vunpack.c.l.b16 %v149
  %v596 = vunpack.c.l.b16 %v150
  %v597 = vunpack.c.l.b16 %v151
  %v598 = vpack.c.b16 %v563, %v562
  %v599 = vpack.c.b16 %v565, %v564
  %v600 = vpack.c.b16 %v567, %v566
  %v601 = vpack.c.b16 %v569, %v568
  %v602 = vpack.c.b16 %v571, %v570
  %v603 = vpack.c.b16 %v573, %v572
  %v604 = vpack.c.b16 %v575, %v574
  %v605 = vpack.c.b16 %v577, %v576
  %v606 = vpack.c.b16 %v579, %v578
  %v607 = vpack.c.b16 %v581, %v580
  %v608 = vpack.c.b16 %v583, %v582
  %v609 = vpack.c.b16 %v585, %v584
  %v610 = vpack.c.b16 %v587, %v586
  %v611 = vpack.c.b16 %v589, %v588
  %v612 = vpack.c.b16 %v591, %v590
  %v613 = vpack.c.b16 %v593, %v592
  %v614 = vpack.c.b16 %v595, %v594
  %v615 = vpack.c.b16 %v597, %v596
  %vm634 = vcmask 261120
  %v636 = vsel %vm634, %v403, 0
  %v639 = vsel %vm634, %v406, 0
  %v642 = vsel %vm634, %v409, 0
  %v645 = vsel %vm634, %v412, 0
  %v648 = vsel %vm634, %v415, 0
  %v651 = vsel %vm634, %v418, 0
  %v654 = vsel %vm634, %v421, 0
  %v657 = vsel %vm634, %v424, 0
  %v660 = vsel %vm634, %v427, 0
  %v663 = vsel %vm634, %v430, 0
  %v666 = vsel %vm634, %v433, 0
  %v669 = vsel %vm634, %v436, 0
  %v672 = vsel %vm634, %v439, 0
  %v675 = vsel %vm634, %v442, 0
  %v678 = vsel %vm634, %v445, 0
  %v681 = vsel %vm634, %v448, 0
  %v684 = vsel %vm634, %v451, 0
  %v687 = vsel %vm634, %v454, 0
  %v690 = vsel %vm634, %v457, 0
  %v693 = vsel %vm634, %v460, 0
  %v696 = vsel %vm634, %v463, 0
  %v699 = vsel %vm634, %v466, 0
  %v702 = vsel %vm634, %v469, 0
  %v705 = vsel %vm634, %v472, 0
  %v708 = vsel %vm634, %v475, 0
  %710 = vmatpush.bf16.msra.mxu0 %v605
  %711 = vmatpush.bf16.msra.mxu0 %v604
  %712 = vmatpush.bf16.msra.mxu0 %v603
  %713 = vmatpush.bf16.msra.mxu0 %v602
  %714 = vmatpush.bf16.msra.mxu0 %v601
  %715 = vmatpush.bf16.msra.mxu0 %v600
  %716 = vmatpush.bf16.msra.mxu0 %v599
  %717 = vmatpush.bf16.msra.mxu0 %v598
  %718 = vmatmul.bf16.gmra.mxu0 %v401
  %v719 = vpop.f32.mrf.mxu0
  %v720 = vadd.f32 %v154, %v719
  %v721 = vpop.f32.mrf.mxu0
  %v722 = vadd.f32 %v154, %v721
  %723 = vmatmul.bf16.gmra.mxu0 %v404
  %v724 = vpop.f32.mrf.mxu0
  %v725 = vadd.f32 %v154, %v724
  %v726 = vpop.f32.mrf.mxu0
  %v727 = vadd.f32 %v154, %v726
  %728 = vmatmul.bf16.gmra.mxu0 %v407
  %v729 = vpop.f32.mrf.mxu0
  %v730 = vadd.f32 %v154, %v729
  %v731 = vpop.f32.mrf.mxu0
  %v732 = vadd.f32 %v154, %v731
  %733 = vmatmul.bf16.gmra.mxu0 %v410
  %v734 = vpop.f32.mrf.mxu0
  %v735 = vadd.f32 %v154, %v734
  %v736 = vpop.f32.mrf.mxu0
  %v737 = vadd.f32 %v154, %v736
  %738 = vmatmul.bf16.gmra.mxu0 %v413
  %v739 = vpop.f32.mrf.mxu0
  %v740 = vadd.f32 %v154, %v739
  %v741 = vpop.f32.mrf.mxu0
  %v742 = vadd.f32 %v154, %v741
  %743 = vmatmul.bf16.gmra.mxu0 %v416
  %v744 = vpop.f32.mrf.mxu0
  %v745 = vadd.f32 %v154, %v744
  %v746 = vpop.f32.mrf.mxu0
  %v747 = vadd.f32 %v154, %v746
  %748 = vmatmul.bf16.gmra.mxu0 %v419
  %v749 = vpop.f32.mrf.mxu0
  %v750 = vadd.f32 %v154, %v749
  %v751 = vpop.f32.mrf.mxu0
  %v752 = vadd.f32 %v154, %v751
  %753 = vmatmul.bf16.gmra.mxu0 %v422
  %v754 = vpop.f32.mrf.mxu0
  %v755 = vadd.f32 %v154, %v754
  %v756 = vpop.f32.mrf.mxu0
  %v757 = vadd.f32 %v154, %v756
  %758 = vmatmul.bf16.gmra.mxu0 %v425
  %v759 = vpop.f32.mrf.mxu0
  %v760 = vadd.f32 %v154, %v759
  %v761 = vpop.f32.mrf.mxu0
  %v762 = vadd.f32 %v154, %v761
  %763 = vmatmul.bf16.gmra.mxu0 %v428
  %v764 = vpop.f32.mrf.mxu0
  %v765 = vadd.f32 %v154, %v764
  %v766 = vpop.f32.mrf.mxu0
  %v767 = vadd.f32 %v154, %v766
  %768 = vmatmul.bf16.gmra.mxu0 %v431
  %v769 = vpop.f32.mrf.mxu0
  %v770 = vadd.f32 %v154, %v769
  %v771 = vpop.f32.mrf.mxu0
  %v772 = vadd.f32 %v154, %v771
  %773 = vmatmul.bf16.gmra.mxu0 %v434
  %v774 = vpop.f32.mrf.mxu0
  %v775 = vadd.f32 %v154, %v774
  %v776 = vpop.f32.mrf.mxu0
  %v777 = vadd.f32 %v154, %v776
  %778 = vmatmul.bf16.gmra.mxu0 %v437
  %v779 = vpop.f32.mrf.mxu0
  %v780 = vadd.f32 %v154, %v779
  %v781 = vpop.f32.mrf.mxu0
  %v782 = vadd.f32 %v154, %v781
  %783 = vmatmul.bf16.gmra.mxu0 %v440
  %v784 = vpop.f32.mrf.mxu0
  %v785 = vadd.f32 %v154, %v784
  %v786 = vpop.f32.mrf.mxu0
  %v787 = vadd.f32 %v154, %v786
  %788 = vmatmul.bf16.gmra.mxu0 %v443
  %v789 = vpop.f32.mrf.mxu0
  %v790 = vadd.f32 %v154, %v789
  %v791 = vpop.f32.mrf.mxu0
  %v792 = vadd.f32 %v154, %v791
  %793 = vmatmul.bf16.gmra.mxu0 %v446
  %v794 = vpop.f32.mrf.mxu0
  %v795 = vadd.f32 %v154, %v794
  %v796 = vpop.f32.mrf.mxu0
  %v797 = vadd.f32 %v154, %v796
  %798 = vmatmul.bf16.gmra.mxu0 %v449
  %v799 = vpop.f32.mrf.mxu0
  %v800 = vadd.f32 %v154, %v799
  %v801 = vpop.f32.mrf.mxu0
  %v802 = vadd.f32 %v154, %v801
  %803 = vmatmul.bf16.gmra.mxu0 %v452
  %v804 = vpop.f32.mrf.mxu0
  %v805 = vadd.f32 %v154, %v804
  %v806 = vpop.f32.mrf.mxu0
  %v807 = vadd.f32 %v154, %v806
  %808 = vmatmul.bf16.gmra.mxu0 %v455
  %v809 = vpop.f32.mrf.mxu0
  %v810 = vadd.f32 %v154, %v809
  %v811 = vpop.f32.mrf.mxu0
  %v812 = vadd.f32 %v154, %v811
  %813 = vmatmul.bf16.gmra.mxu0 %v458
  %v814 = vpop.f32.mrf.mxu0
  %v815 = vadd.f32 %v154, %v814
  %v816 = vpop.f32.mrf.mxu0
  %v817 = vadd.f32 %v154, %v816
  %818 = vmatmul.bf16.gmra.mxu0 %v461
  %v819 = vpop.f32.mrf.mxu0
  %v820 = vadd.f32 %v154, %v819
  %v821 = vpop.f32.mrf.mxu0
  %v822 = vadd.f32 %v154, %v821
  %823 = vmatmul.bf16.gmra.mxu0 %v464
  %v824 = vpop.f32.mrf.mxu0
  %v825 = vadd.f32 %v154, %v824
  %v826 = vpop.f32.mrf.mxu0
  %v827 = vadd.f32 %v154, %v826
  %828 = vmatmul.bf16.gmra.mxu0 %v467
  %v829 = vpop.f32.mrf.mxu0
  %v830 = vadd.f32 %v154, %v829
  %v831 = vpop.f32.mrf.mxu0
  %v832 = vadd.f32 %v154, %v831
  %833 = vmatmul.bf16.gmra.mxu0 %v470
  %v834 = vpop.f32.mrf.mxu0
  %v835 = vadd.f32 %v154, %v834
  %v836 = vpop.f32.mrf.mxu0
  %v837 = vadd.f32 %v154, %v836
  %838 = vmatmul.bf16.gmra.mxu0 %v473
  %v839 = vpop.f32.mrf.mxu0
  %v840 = vadd.f32 %v154, %v839
  %v841 = vpop.f32.mrf.mxu0
  %842 = vdwg.mxu0
  %843 = vmatpush.bf16.msra.mxu0 %v613
  %844 = vmatpush.bf16.msra.mxu0 %v612
  %845 = vmatpush.bf16.msra.mxu0 %v611
  %846 = vmatpush.bf16.msra.mxu0 %v610
  %847 = vmatpush.bf16.msra.mxu0 %v609
  %848 = vmatpush.bf16.msra.mxu0 %v608
  %849 = vmatpush.bf16.msra.mxu0 %v607
  %850 = vmatpush.bf16.msra.mxu0 %v606
  %851 = vmatmul.bf16.gmra.mxu0 %v402
  %v852 = vpop.f32.mrf.mxu0
  %v853 = vadd.f32 %v720, %v852
  %v854 = vpop.f32.mrf.mxu0
  %v855 = vadd.f32 %v722, %v854
  %856 = vmatmul.bf16.gmra.mxu0 %v405
  %v857 = vpop.f32.mrf.mxu0
  %v858 = vadd.f32 %v725, %v857
  %v859 = vpop.f32.mrf.mxu0
  %v860 = vadd.f32 %v727, %v859
  %861 = vmatmul.bf16.gmra.mxu0 %v408
  %v862 = vpop.f32.mrf.mxu0
  %v863 = vadd.f32 %v730, %v862
  %v864 = vpop.f32.mrf.mxu0
  %v865 = vadd.f32 %v732, %v864
  %866 = vmatmul.bf16.gmra.mxu0 %v411
  %v867 = vpop.f32.mrf.mxu0
  %v868 = vadd.f32 %v735, %v867
  %v869 = vpop.f32.mrf.mxu0
  %v870 = vadd.f32 %v737, %v869
  %871 = vmatmul.bf16.gmra.mxu0 %v414
  %v872 = vpop.f32.mrf.mxu0
  %v873 = vadd.f32 %v740, %v872
  %v874 = vpop.f32.mrf.mxu0
  %v875 = vadd.f32 %v742, %v874
  %876 = vmatmul.bf16.gmra.mxu0 %v417
  %v877 = vpop.f32.mrf.mxu0
  %v878 = vadd.f32 %v745, %v877
  %v879 = vpop.f32.mrf.mxu0
  %v880 = vadd.f32 %v747, %v879
  %881 = vmatmul.bf16.gmra.mxu0 %v420
  %v882 = vpop.f32.mrf.mxu0
  %v883 = vadd.f32 %v750, %v882
  %v884 = vpop.f32.mrf.mxu0
  %v885 = vadd.f32 %v752, %v884
  %886 = vmatmul.bf16.gmra.mxu0 %v423
  %v887 = vpop.f32.mrf.mxu0
  %v888 = vadd.f32 %v755, %v887
  %v889 = vpop.f32.mrf.mxu0
  %v890 = vadd.f32 %v757, %v889
  %891 = vmatmul.bf16.gmra.mxu0 %v426
  %v892 = vpop.f32.mrf.mxu0
  %v893 = vadd.f32 %v760, %v892
  %v894 = vpop.f32.mrf.mxu0
  %v895 = vadd.f32 %v762, %v894
  %896 = vmatmul.bf16.gmra.mxu0 %v429
  %v897 = vpop.f32.mrf.mxu0
  %v898 = vadd.f32 %v765, %v897
  %v899 = vpop.f32.mrf.mxu0
  %v900 = vadd.f32 %v767, %v899
  %901 = vmatmul.bf16.gmra.mxu0 %v432
  %v902 = vpop.f32.mrf.mxu0
  %v903 = vadd.f32 %v770, %v902
  %v904 = vpop.f32.mrf.mxu0
  %v905 = vadd.f32 %v772, %v904
  %906 = vmatmul.bf16.gmra.mxu0 %v435
  %v907 = vpop.f32.mrf.mxu0
  %v908 = vadd.f32 %v775, %v907
  %v909 = vpop.f32.mrf.mxu0
  %v910 = vadd.f32 %v777, %v909
  %911 = vmatmul.bf16.gmra.mxu0 %v438
  %v912 = vpop.f32.mrf.mxu0
  %v913 = vadd.f32 %v780, %v912
  %v914 = vpop.f32.mrf.mxu0
  %v915 = vadd.f32 %v782, %v914
  %916 = vmatmul.bf16.gmra.mxu0 %v441
  %v917 = vpop.f32.mrf.mxu0
  %v918 = vadd.f32 %v785, %v917
  %v919 = vpop.f32.mrf.mxu0
  %v920 = vadd.f32 %v787, %v919
  %921 = vmatmul.bf16.gmra.mxu0 %v444
  %v922 = vpop.f32.mrf.mxu0
  %v923 = vadd.f32 %v790, %v922
  %v924 = vpop.f32.mrf.mxu0
  %v925 = vadd.f32 %v792, %v924
  %926 = vmatmul.bf16.gmra.mxu0 %v447
  %v927 = vpop.f32.mrf.mxu0
  %v928 = vadd.f32 %v795, %v927
  %v929 = vpop.f32.mrf.mxu0
  %v930 = vadd.f32 %v797, %v929
  %931 = vmatmul.bf16.gmra.mxu0 %v450
  %v932 = vpop.f32.mrf.mxu0
  %v933 = vadd.f32 %v800, %v932
  %v934 = vpop.f32.mrf.mxu0
  %v935 = vadd.f32 %v802, %v934
  %936 = vmatmul.bf16.gmra.mxu0 %v453
  %v937 = vpop.f32.mrf.mxu0
  %v938 = vadd.f32 %v805, %v937
  %v939 = vpop.f32.mrf.mxu0
  %v940 = vadd.f32 %v807, %v939
  %941 = vmatmul.bf16.gmra.mxu0 %v456
  %v942 = vpop.f32.mrf.mxu0
  %v943 = vadd.f32 %v810, %v942
  %v944 = vpop.f32.mrf.mxu0
  %v945 = vadd.f32 %v812, %v944
  %946 = vmatmul.bf16.gmra.mxu0 %v459
  %v947 = vpop.f32.mrf.mxu0
  %v948 = vadd.f32 %v815, %v947
  %v949 = vpop.f32.mrf.mxu0
  %v950 = vadd.f32 %v817, %v949
  %951 = vmatmul.bf16.gmra.mxu0 %v462
  %v952 = vpop.f32.mrf.mxu0
  %v953 = vadd.f32 %v820, %v952
  %v954 = vpop.f32.mrf.mxu0
  %v955 = vadd.f32 %v822, %v954
  %956 = vmatmul.bf16.gmra.mxu0 %v465
  %v957 = vpop.f32.mrf.mxu0
  %v958 = vadd.f32 %v825, %v957
  %v959 = vpop.f32.mrf.mxu0
  %v960 = vadd.f32 %v827, %v959
  %961 = vmatmul.bf16.gmra.mxu0 %v468
  %v962 = vpop.f32.mrf.mxu0
  %v963 = vadd.f32 %v830, %v962
  %v964 = vpop.f32.mrf.mxu0
  %v965 = vadd.f32 %v832, %v964
  %966 = vmatmul.bf16.gmra.mxu0 %v471
  %v967 = vpop.f32.mrf.mxu0
  %v968 = vadd.f32 %v835, %v967
  %v969 = vpop.f32.mrf.mxu0
  %v970 = vadd.f32 %v837, %v969
  %971 = vmatmul.bf16.gmra.mxu0 %v474
  %v972 = vpop.f32.mrf.mxu0
  %v973 = vadd.f32 %v840, %v972
  %v974 = vpop.f32.mrf.mxu0
  %975 = vdwg.mxu0
  %976 = vmatpush.bf16.msra.mxu0 0
  %977 = vmatpush.bf16.msra.mxu0 0
  %978 = vmatpush.bf16.msra.mxu0 0
  %979 = vmatpush.bf16.msra.mxu0 0
  %980 = vmatpush.bf16.msra.mxu0 0
  %981 = vmatpush.bf16.msra.mxu0 0
  %982 = vmatpush.bf16.msra.mxu0 %v615
  %983 = vmatpush.bf16.msra.mxu0 %v614
  %984 = vmatmul.bf16.gmra.mxu0 %v636
  %v985 = vpop.f32.mrf.mxu0
  %v986 = vadd.f32 %v853, %v985
  %v987 = vpop.f32.mrf.mxu0
  %v988 = vadd.f32 %v855, %v987
  %989 = vmatmul.bf16.gmra.mxu0 %v639
  %v990 = vpop.f32.mrf.mxu0
  %v991 = vadd.f32 %v858, %v990
  %v992 = vpop.f32.mrf.mxu0
  %v993 = vadd.f32 %v860, %v992
  %994 = vmatmul.bf16.gmra.mxu0 %v642
  %v995 = vpop.f32.mrf.mxu0
  %v996 = vadd.f32 %v863, %v995
  %v997 = vpop.f32.mrf.mxu0
  %v998 = vadd.f32 %v865, %v997
  %999 = vmatmul.bf16.gmra.mxu0 %v645
  %v1000 = vpop.f32.mrf.mxu0
  %v1001 = vadd.f32 %v868, %v1000
  %v1002 = vpop.f32.mrf.mxu0
  %v1003 = vadd.f32 %v870, %v1002
  %1004 = vmatmul.bf16.gmra.mxu0 %v648
  %v1005 = vpop.f32.mrf.mxu0
  %v1006 = vadd.f32 %v873, %v1005
  %v1007 = vpop.f32.mrf.mxu0
  %v1008 = vadd.f32 %v875, %v1007
  %1009 = vmatmul.bf16.gmra.mxu0 %v651
  %v1010 = vpop.f32.mrf.mxu0
  %v1011 = vadd.f32 %v878, %v1010
  %v1012 = vpop.f32.mrf.mxu0
  %v1013 = vadd.f32 %v880, %v1012
  %1014 = vmatmul.bf16.gmra.mxu0 %v654
  %v1015 = vpop.f32.mrf.mxu0
  %v1016 = vadd.f32 %v883, %v1015
  %v1017 = vpop.f32.mrf.mxu0
  %v1018 = vadd.f32 %v885, %v1017
  %1019 = vmatmul.bf16.gmra.mxu0 %v657
  %v1020 = vpop.f32.mrf.mxu0
  %v1021 = vadd.f32 %v888, %v1020
  %v1022 = vpop.f32.mrf.mxu0
  %v1023 = vadd.f32 %v890, %v1022
  %1024 = vmatmul.bf16.gmra.mxu0 %v660
  %v1025 = vpop.f32.mrf.mxu0
  %v1026 = vadd.f32 %v893, %v1025
  %v1027 = vpop.f32.mrf.mxu0
  %v1028 = vadd.f32 %v895, %v1027
  %1029 = vmatmul.bf16.gmra.mxu0 %v663
  %v1030 = vpop.f32.mrf.mxu0
  %v1031 = vadd.f32 %v898, %v1030
  %v1032 = vpop.f32.mrf.mxu0
  %v1033 = vadd.f32 %v900, %v1032
  %1034 = vmatmul.bf16.gmra.mxu0 %v666
  %v1035 = vpop.f32.mrf.mxu0
  %v1036 = vadd.f32 %v903, %v1035
  %v1037 = vpop.f32.mrf.mxu0
  %v1038 = vadd.f32 %v905, %v1037
  %1039 = vmatmul.bf16.gmra.mxu0 %v669
  %v1040 = vpop.f32.mrf.mxu0
  %v1041 = vadd.f32 %v908, %v1040
  %v1042 = vpop.f32.mrf.mxu0
  %v1043 = vadd.f32 %v910, %v1042
  %1044 = vmatmul.bf16.gmra.mxu0 %v672
  %v1045 = vpop.f32.mrf.mxu0
  %v1046 = vadd.f32 %v913, %v1045
  %v1047 = vpop.f32.mrf.mxu0
  %v1048 = vadd.f32 %v915, %v1047
  %1049 = vmatmul.bf16.gmra.mxu0 %v675
  %v1050 = vpop.f32.mrf.mxu0
  %v1051 = vadd.f32 %v918, %v1050
  %v1052 = vpop.f32.mrf.mxu0
  %v1053 = vadd.f32 %v920, %v1052
  %1054 = vmatmul.bf16.gmra.mxu0 %v678
  %v1055 = vpop.f32.mrf.mxu0
  %v1056 = vadd.f32 %v923, %v1055
  %v1057 = vpop.f32.mrf.mxu0
  %v1058 = vadd.f32 %v925, %v1057
  %1059 = vmatmul.bf16.gmra.mxu0 %v681
  %v1060 = vpop.f32.mrf.mxu0
  %v1061 = vadd.f32 %v928, %v1060
  %v1062 = vpop.f32.mrf.mxu0
  %v1063 = vadd.f32 %v930, %v1062
  %1064 = vmatmul.bf16.gmra.mxu0 %v684
  %v1065 = vpop.f32.mrf.mxu0
  %v1066 = vadd.f32 %v933, %v1065
  %v1067 = vpop.f32.mrf.mxu0
  %v1068 = vadd.f32 %v935, %v1067
  %1069 = vmatmul.bf16.gmra.mxu0 %v687
  %v1070 = vpop.f32.mrf.mxu0
  %v1071 = vadd.f32 %v938, %v1070
  %v1072 = vpop.f32.mrf.mxu0
  %v1073 = vadd.f32 %v940, %v1072
  %1074 = vmatmul.bf16.gmra.mxu0 %v690
  %v1075 = vpop.f32.mrf.mxu0
  %v1076 = vadd.f32 %v943, %v1075
  %v1077 = vpop.f32.mrf.mxu0
  %v1078 = vadd.f32 %v945, %v1077
  %1079 = vmatmul.bf16.gmra.mxu0 %v693
  %v1080 = vpop.f32.mrf.mxu0
  %v1081 = vadd.f32 %v948, %v1080
  %v1082 = vpop.f32.mrf.mxu0
  %v1083 = vadd.f32 %v950, %v1082
  %1084 = vmatmul.bf16.gmra.mxu0 %v696
  %v1085 = vpop.f32.mrf.mxu0
  %v1086 = vadd.f32 %v953, %v1085
  %v1087 = vpop.f32.mrf.mxu0
  %v1088 = vadd.f32 %v955, %v1087
  %1089 = vmatmul.bf16.gmra.mxu0 %v699
  %v1090 = vpop.f32.mrf.mxu0
  %v1091 = vadd.f32 %v958, %v1090
  %v1092 = vpop.f32.mrf.mxu0
  %v1093 = vadd.f32 %v960, %v1092
  %1094 = vmatmul.bf16.gmra.mxu0 %v702
  %v1095 = vpop.f32.mrf.mxu0
  %v1096 = vadd.f32 %v963, %v1095
  %v1097 = vpop.f32.mrf.mxu0
  %v1098 = vadd.f32 %v965, %v1097
  %1099 = vmatmul.bf16.gmra.mxu0 %v705
  %v1100 = vpop.f32.mrf.mxu0
  %v1101 = vadd.f32 %v968, %v1100
  %v1102 = vpop.f32.mrf.mxu0
  %v1103 = vadd.f32 %v970, %v1102
  %1104 = vmatmul.bf16.gmra.mxu0 %v708
  %v1105 = vpop.f32.mrf.mxu0
  %v1106 = vadd.f32 %v973, %v1105
  %v1107 = vpop.f32.mrf.mxu0
  %1108 = vdwg.mxu0
  %v1109 = vld [vmem:[%s3] sm:$0xf]
  %v1110 = vld [vmem:[%s3 + $0x4] sm:$0xf]
  %v1111 = vld [vmem:[%s3 + $0x8] sm:$0xf]
  %v1112 = vld [vmem:[%s3 + $0xc] sm:$0xf]
  %v1113 = vld [vmem:[%s3 + $0x10] sm:$0xf]
  %v1114 = vld [vmem:[%s3 + $0x14] sm:$0xf]
  %v1115 = vld [vmem:[%s3 + $0x18] sm:$0xf]
  %v1116 = vld [vmem:[%s3 + $0x1c] sm:$0xf]
  %v1117 = vld [vmem:[%s3 + $0x20] sm:$0xf]
  %v1118 = vld [vmem:[%s3 + $0x24] sm:$0xf]
  %v1119 = vld [vmem:[%s3 + $0x28] sm:$0xf]
  %v1120 = vld [vmem:[%s3 + $0x2c] sm:$0xf]
  %v1121 = vld [vmem:[%s3 + $0x30] sm:$0xf]
  %v1122 = vld [vmem:[%s3 + $0x34] sm:$0xf]
  %v1123 = vld [vmem:[%s3 + $0x38] sm:$0xf]
  %v1124 = vld [vmem:[%s3 + $0x3c] sm:$0xf]
  %v1125 = vld [vmem:[%s3 + $0x40] sm:$0xf]
  %v1126 = vld [vmem:[%s3 + $0x44] sm:$0xf]
  %v1127 = vld [vmem:[%s3 + $0x48] sm:$0xf]
  %v1128 = vld [vmem:[%s3 + $0x4c] sm:$0xf]
  %v1129 = vld [vmem:[%s3 + $0x50] sm:$0xf]
  %v1130 = vld [vmem:[%s3 + $0x54] sm:$0xf]
  %v1131 = vld [vmem:[%s3 + $0x58] sm:$0xf]
  %v1132 = vld [vmem:[%s3 + $0x5c] sm:$0xf]
  %v1133 = vld [vmem:[%s3 + $0x60] sm:$0xf]
  %v1134 = vld [vmem:[%s3 + $0x64] sm:$0xf]
  %v1135 = vld [vmem:[%s3 + $0x68] sm:$0xf]
  %v1136 = vld [vmem:[%s3 + $0x6c] sm:$0xf]
  %v1137 = vld [vmem:[%s3 + $0x70] sm:$0xf]
  %v1138 = vld [vmem:[%s3 + $0x74] sm:$0xf]
  %v1139 = vld [vmem:[%s3 + $0x78] sm:$0xf]
  %v1140 = vld [vmem:[%s3 + $0x7c] sm:$0xf]
  %v1141 = vld [vmem:[%s3 + $0x80] sm:$0xf]
  %v1142 = vld [vmem:[%s3 + $0x84] sm:$0xf]
  %v1143 = vld [vmem:[%s3 + $0x88] sm:$0xf]
  %v1144 = vld [vmem:[%s3 + $0x8c] sm:$0xf]
  %v1145 = vld [vmem:[%s3 + $0x90] sm:$0xf]
  %v1146 = vld [vmem:[%s3 + $0x94] sm:$0xf]
  %v1147 = vld [vmem:[%s3 + $0x98] sm:$0xf]
  %v1148 = vld [vmem:[%s3 + $0x9c] sm:$0xf]
  %v1149 = vld [vmem:[%s3 + $0xa0] sm:$0xf]
  %v1150 = vld [vmem:[%s3 + $0xa4] sm:$0xf]
  %v1151 = vld [vmem:[%s3 + $0xa8] sm:$0xf]
  %v1152 = vld [vmem:[%s3 + $0xac] sm:$0xf]
  %v1153 = vld [vmem:[%s3 + $0xb0] sm:$0xf]
  %v1154 = vld [vmem:[%s3 + $0xb4] sm:$0xf]
  %v1155 = vld [vmem:[%s3 + $0xb8] sm:$0xf]
  %v1156 = vld [vmem:[%s3 + $0xbc] sm:$0xf]
  %v1157 = vld [vmem:[%s3 + $0xc0] sm:$0xf]
  %v1158 = vunpack.c.l.bf16 %v1109
  %v1159 = vunpack.c.l.bf16 %v1110
  %v1160 = vunpack.c.l.bf16 %v1111
  %v1161 = vunpack.c.l.bf16 %v1112
  %v1162 = vunpack.c.l.bf16 %v1113
  %v1163 = vunpack.c.l.bf16 %v1114
  %v1164 = vunpack.c.l.bf16 %v1115
  %v1165 = vunpack.c.l.bf16 %v1116
  %v1166 = vunpack.c.l.bf16 %v1117
  %v1167 = vunpack.c.l.bf16 %v1118
  %v1168 = vunpack.c.l.bf16 %v1119
  %v1169 = vunpack.c.l.bf16 %v1120
  %v1170 = vunpack.c.l.bf16 %v1121
  %v1171 = vunpack.c.l.bf16 %v1122
  %v1172 = vunpack.c.l.bf16 %v1123
  %v1173 = vunpack.c.l.bf16 %v1124
  %v1174 = vunpack.c.l.bf16 %v1125
  %v1175 = vunpack.c.l.bf16 %v1126
  %v1176 = vunpack.c.l.bf16 %v1127
  %v1177 = vunpack.c.l.bf16 %v1128
  %v1178 = vunpack.c.l.bf16 %v1129
  %v1179 = vunpack.c.l.bf16 %v1130
  %v1180 = vunpack.c.l.bf16 %v1131
  %v1181 = vunpack.c.l.bf16 %v1132
  %v1182 = vunpack.c.l.bf16 %v1133
  %v1183 = vunpack.c.l.bf16 %v1134
  %v1184 = vunpack.c.l.bf16 %v1135
  %v1185 = vunpack.c.l.bf16 %v1136
  %v1186 = vunpack.c.l.bf16 %v1137
  %v1187 = vunpack.c.l.bf16 %v1138
  %v1188 = vunpack.c.l.bf16 %v1139
  %v1189 = vunpack.c.l.bf16 %v1140
  %v1190 = vunpack.c.l.bf16 %v1141
  %v1191 = vunpack.c.l.bf16 %v1142
  %v1192 = vunpack.c.l.bf16 %v1143
  %v1193 = vunpack.c.l.bf16 %v1144
  %v1194 = vunpack.c.l.bf16 %v1145
  %v1195 = vunpack.c.l.bf16 %v1146
  %v1196 = vunpack.c.l.bf16 %v1147
  %v1197 = vunpack.c.l.bf16 %v1148
  %v1198 = vunpack.c.l.bf16 %v1149
  %v1199 = vunpack.c.l.bf16 %v1150
  %v1200 = vunpack.c.l.bf16 %v1151
  %v1201 = vunpack.c.l.bf16 %v1152
  %v1202 = vunpack.c.l.bf16 %v1153
  %v1203 = vunpack.c.l.bf16 %v1154
  %v1204 = vunpack.c.l.bf16 %v1155
  %v1205 = vunpack.c.l.bf16 %v1156
  %v1206 = vunpack.c.l.bf16 %v1157
  %v1207 = vadd.f32 %v986, %v1158
  %v1208 = vadd.f32 %v988, %v1159
  %v1209 = vadd.f32 %v991, %v1160
  %v1210 = vadd.f32 %v993, %v1161
  %v1211 = vadd.f32 %v996, %v1162
  %v1212 = vadd.f32 %v998, %v1163
  %v1213 = vadd.f32 %v1001, %v1164
  %v1214 = vadd.f32 %v1003, %v1165
  %v1215 = vadd.f32 %v1006, %v1166
  %v1216 = vadd.f32 %v1008, %v1167
  %v1217 = vadd.f32 %v1011, %v1168
  %v1218 = vadd.f32 %v1013, %v1169
  %v1219 = vadd.f32 %v1016, %v1170
  %v1220 = vadd.f32 %v1018, %v1171
  %v1221 = vadd.f32 %v1021, %v1172
  %v1222 = vadd.f32 %v1023, %v1173
  %v1223 = vadd.f32 %v1026, %v1174
  %v1224 = vadd.f32 %v1028, %v1175
  %v1225 = vadd.f32 %v1031, %v1176
  %v1226 = vadd.f32 %v1033, %v1177
  %v1227 = vadd.f32 %v1036, %v1178
  %v1228 = vadd.f32 %v1038, %v1179
  %v1229 = vadd.f32 %v1041, %v1180
  %v1230 = vadd.f32 %v1043, %v1181
  %v1231 = vadd.f32 %v1046, %v1182
  %v1232 = vadd.f32 %v1048, %v1183
  %v1233 = vadd.f32 %v1051, %v1184
  %v1234 = vadd.f32 %v1053, %v1185
  %v1235 = vadd.f32 %v1056, %v1186
  %v1236 = vadd.f32 %v1058, %v1187
  %v1237 = vadd.f32 %v1061, %v1188
  %v1238 = vadd.f32 %v1063, %v1189
  %v1239 = vadd.f32 %v1066, %v1190
  %v1240 = vadd.f32 %v1068, %v1191
  %v1241 = vadd.f32 %v1071, %v1192
  %v1242 = vadd.f32 %v1073, %v1193
  %v1243 = vadd.f32 %v1076, %v1194
  %v1244 = vadd.f32 %v1078, %v1195
  %v1245 = vadd.f32 %v1081, %v1196
  %v1246 = vadd.f32 %v1083, %v1197
  %v1247 = vadd.f32 %v1086, %v1198
  %v1248 = vadd.f32 %v1088, %v1199
  %v1249 = vadd.f32 %v1091, %v1200
  %v1250 = vadd.f32 %v1093, %v1201
  %v1251 = vadd.f32 %v1096, %v1202
  %v1252 = vadd.f32 %v1098, %v1203
  %v1253 = vadd.f32 %v1101, %v1204
  %v1254 = vadd.f32 %v1103, %v1205
  %v1255 = vadd.f32 %v1106, %v1206
  %v1256 = vmax.f32 %v1207, 0.0
  %v1257 = vmax.f32 %v1208, 0.0
  %v1258 = vmax.f32 %v1209, 0.0
  %v1259 = vmax.f32 %v1210, 0.0
  %v1260 = vmax.f32 %v1211, 0.0
  %v1261 = vmax.f32 %v1212, 0.0
  %v1262 = vmax.f32 %v1213, 0.0
  %v1263 = vmax.f32 %v1214, 0.0
  %v1264 = vmax.f32 %v1215, 0.0
  %v1265 = vmax.f32 %v1216, 0.0
  %v1266 = vmax.f32 %v1217, 0.0
  %v1267 = vmax.f32 %v1218, 0.0
  %v1268 = vmax.f32 %v1219, 0.0
  %v1269 = vmax.f32 %v1220, 0.0
  %v1270 = vmax.f32 %v1221, 0.0
  %v1271 = vmax.f32 %v1222, 0.0
  %v1272 = vmax.f32 %v1223, 0.0
  %v1273 = vmax.f32 %v1224, 0.0
  %v1274 = vmax.f32 %v1225, 0.0
  %v1275 = vmax.f32 %v1226, 0.0
  %v1276 = vmax.f32 %v1227, 0.0
  %v1277 = vmax.f32 %v1228, 0.0
  %v1278 = vmax.f32 %v1229, 0.0
  %v1279 = vmax.f32 %v1230, 0.0
  %v1280 = vmax.f32 %v1231, 0.0
  %v1281 = vmax.f32 %v1232, 0.0
  %v1282 = vmax.f32 %v1233, 0.0
  %v1283 = vmax.f32 %v1234, 0.0
  %v1284 = vmax.f32 %v1235, 0.0
  %v1285 = vmax.f32 %v1236, 0.0
  %v1286 = vmax.f32 %v1237, 0.0
  %v1287 = vmax.f32 %v1238, 0.0
  %v1288 = vmax.f32 %v1239, 0.0
  %v1289 = vmax.f32 %v1240, 0.0
  %v1290 = vmax.f32 %v1241, 0.0
  %v1291 = vmax.f32 %v1242, 0.0
  %v1292 = vmax.f32 %v1243, 0.0
  %v1293 = vmax.f32 %v1244, 0.0
  %v1294 = vmax.f32 %v1245, 0.0
  %v1295 = vmax.f32 %v1246, 0.0
  %v1296 = vmax.f32 %v1247, 0.0
  %v1297 = vmax.f32 %v1248, 0.0
  %v1298 = vmax.f32 %v1249, 0.0
  %v1299 = vmax.f32 %v1250, 0.0
  %v1300 = vmax.f32 %v1251, 0.0
  %v1301 = vmax.f32 %v1252, 0.0
  %v1302 = vmax.f32 %v1253, 0.0
  %v1303 = vmax.f32 %v1254, 0.0
  %v1304 = vmax.f32 %v1255, 0.0
  %v1305 = vpack.c.bf16 %v1256, %v1256
  %v1306 = vpack.c.bf16 %v1257, %v1257
  %v1307 = vpack.c.bf16 %v1258, %v1258
  %v1308 = vpack.c.bf16 %v1259, %v1259
  %v1309 = vpack.c.bf16 %v1260, %v1260
  %v1310 = vpack.c.bf16 %v1261, %v1261
  %v1311 = vpack.c.bf16 %v1262, %v1262
  %v1312 = vpack.c.bf16 %v1263, %v1263
  %v1313 = vpack.c.bf16 %v1264, %v1264
  %v1314 = vpack.c.bf16 %v1265, %v1265
  %v1315 = vpack.c.bf16 %v1266, %v1266
  %v1316 = vpack.c.bf16 %v1267, %v1267
  %v1317 = vpack.c.bf16 %v1268, %v1268
  %v1318 = vpack.c.bf16 %v1269, %v1269
  %v1319 = vpack.c.bf16 %v1270, %v1270
  %v1320 = vpack.c.bf16 %v1271, %v1271
  %v1321 = vpack.c.bf16 %v1272, %v1272
  %v1322 = vpack.c.bf16 %v1273, %v1273
  %v1323 = vpack.c.bf16 %v1274, %v1274
  %v1324 = vpack.c.bf16 %v1275, %v1275
  %v1325 = vpack.c.bf16 %v1276, %v1276
  %v1326 = vpack.c.bf16 %v1277, %v1277
  %v1327 = vpack.c.bf16 %v1278, %v1278
  %v1328 = vpack.c.bf16 %v1279, %v1279
  %v1329 = vpack.c.bf16 %v1280, %v1280
  %v1330 = vpack.c.bf16 %v1281, %v1281
  %v1331 = vpack.c.bf16 %v1282, %v1282
  %v1332 = vpack.c.bf16 %v1283, %v1283
  %v1333 = vpack.c.bf16 %v1284, %v1284
  %v1334 = vpack.c.bf16 %v1285, %v1285
  %v1335 = vpack.c.bf16 %v1286, %v1286
  %v1336 = vpack.c.bf16 %v1287, %v1287
  %v1337 = vpack.c.bf16 %v1288, %v1288
  %v1338 = vpack.c.bf16 %v1289, %v1289
  %v1339 = vpack.c.bf16 %v1290, %v1290
  %v1340 = vpack.c.bf16 %v1291, %v1291
  %v1341 = vpack.c.bf16 %v1292, %v1292
  %v1342 = vpack.c.bf16 %v1293, %v1293
  %v1343 = vpack.c.bf16 %v1294, %v1294
  %v1344 = vpack.c.bf16 %v1295, %v1295
  %v1345 = vpack.c.bf16 %v1296, %v1296
  %v1346 = vpack.c.bf16 %v1297, %v1297
  %v1347 = vpack.c.bf16 %v1298, %v1298
  %v1348 = vpack.c.bf16 %v1299, %v1299
  %v1349 = vpack.c.bf16 %v1300, %v1300
  %v1350 = vpack.c.bf16 %v1301, %v1301
  %v1351 = vpack.c.bf16 %v1302, %v1302
  %v1352 = vpack.c.bf16 %v1303, %v1303
  %v1353 = vpack.c.bf16 %v1304, %v1304
  %vm1354 = vcmask 257024
  %1355 = vst.msk [vmem:[%s4] sm:$0xf] %vm1354, %v1305
  %1356 = vst.msk [vmem:[%s4 + $0x4] sm:$0xf] %vm1354, %v1306
  %1357 = vst.msk [vmem:[%s4 + $0x8] sm:$0xf] %vm1354, %v1307
  %1358 = vst.msk [vmem:[%s4 + $0xc] sm:$0xf] %vm1354, %v1308
  %1359 = vst.msk [vmem:[%s4 + $0x10] sm:$0xf] %vm1354, %v1309
  %1360 = vst.msk [vmem:[%s4 + $0x14] sm:$0xf] %vm1354, %v1310
  %1361 = vst.msk [vmem:[%s4 + $0x18] sm:$0xf] %vm1354, %v1311
  %1362 = vst.msk [vmem:[%s4 + $0x1c] sm:$0xf] %vm1354, %v1312
  %1363 = vst.msk [vmem:[%s4 + $0x20] sm:$0xf] %vm1354, %v1313
  %1364 = vst.msk [vmem:[%s4 + $0x24] sm:$0xf] %vm1354, %v1314
  %1365 = vst.msk [vmem:[%s4 + $0x28] sm:$0xf] %vm1354, %v1315
  %1366 = vst.msk [vmem:[%s4 + $0x2c] sm:$0xf] %vm1354, %v1316
  %1367 = vst.msk [vmem:[%s4 + $0x30] sm:$0xf] %vm1354, %v1317
  %1368 = vst.msk [vmem:[%s4 + $0x34] sm:$0xf] %vm1354, %v1318
  %1369 = vst.msk [vmem:[%s4 + $0x38] sm:$0xf] %vm1354, %v1319
  %1370 = vst.msk [vmem:[%s4 + $0x3c] sm:$0xf] %vm1354, %v1320
  %1371 = vst.msk [vmem:[%s4 + $0x40] sm:$0xf] %vm1354, %v1321
  %1372 = vst.msk [vmem:[%s4 + $0x44] sm:$0xf] %vm1354, %v1322
  %1373 = vst.msk [vmem:[%s4 + $0x48] sm:$0xf] %vm1354, %v1323
  %1374 = vst.msk [vmem:[%s4 + $0x4c] sm:$0xf] %vm1354, %v1324
  %1375 = vst.msk [vmem:[%s4 + $0x50] sm:$0xf] %vm1354, %v1325
  %1376 = vst.msk [vmem:[%s4 + $0x54] sm:$0xf] %vm1354, %v1326
  %1377 = vst.msk [vmem:[%s4 + $0x58] sm:$0xf] %vm1354, %v1327
  %1378 = vst.msk [vmem:[%s4 + $0x5c] sm:$0xf] %vm1354, %v1328
  %1379 = vst.msk [vmem:[%s4 + $0x60] sm:$0xf] %vm1354, %v1329
  %1380 = vst.msk [vmem:[%s4 + $0x64] sm:$0xf] %vm1354, %v1330
  %1381 = vst.msk [vmem:[%s4 + $0x68] sm:$0xf] %vm1354, %v1331
  %1382 = vst.msk [vmem:[%s4 + $0x6c] sm:$0xf] %vm1354, %v1332
  %1383 = vst.msk [vmem:[%s4 + $0x70] sm:$0xf] %vm1354, %v1333
  %1384 = vst.msk [vmem:[%s4 + $0x74] sm:$0xf] %vm1354, %v1334
  %1385 = vst.msk [vmem:[%s4 + $0x78] sm:$0xf] %vm1354, %v1335
  %1386 = vst.msk [vmem:[%s4 + $0x7c] sm:$0xf] %vm1354, %v1336
  %1387 = vst.msk [vmem:[%s4 + $0x80] sm:$0xf] %vm1354, %v1337
  %1388 = vst.msk [vmem:[%s4 + $0x84] sm:$0xf] %vm1354, %v1338
  %1389 = vst.msk [vmem:[%s4 + $0x88] sm:$0xf] %vm1354, %v1339
  %1390 = vst.msk [vmem:[%s4 + $0x8c] sm:$0xf] %vm1354, %v1340
  %1391 = vst.msk [vmem:[%s4 + $0x90] sm:$0xf] %vm1354, %v1341
  %1392 = vst.msk [vmem:[%s4 + $0x94] sm:$0xf] %vm1354, %v1342
  %1393 = vst.msk [vmem:[%s4 + $0x98] sm:$0xf] %vm1354, %v1343
  %1394 = vst.msk [vmem:[%s4 + $0x9c] sm:$0xf] %vm1354, %v1344
  %1395 = vst.msk [vmem:[%s4 + $0xa0] sm:$0xf] %vm1354, %v1345
  %1396 = vst.msk [vmem:[%s4 + $0xa4] sm:$0xf] %vm1354, %v1346
  %1397 = vst.msk [vmem:[%s4 + $0xa8] sm:$0xf] %vm1354, %v1347
  %1398 = vst.msk [vmem:[%s4 + $0xac] sm:$0xf] %vm1354, %v1348
  %1399 = vst.msk [vmem:[%s4 + $0xb0] sm:$0xf] %vm1354, %v1349
  %1400 = vst.msk [vmem:[%s4 + $0xb4] sm:$0xf] %vm1354, %v1350
  %1401 = vst.msk [vmem:[%s4 + $0xb8] sm:$0xf] %vm1354, %v1351
  %1402 = vst.msk [vmem:[%s4 + $0xbc] sm:$0xf] %vm1354, %v1352
  %1403 = vst.msk [vmem:[%s4 + $0xc0] sm:$0xf] %vm1354, %v1353
  // Predicated region
  $region18: #{resnet10_emnist_forward.23} parent=0 // pred_check
    _
  $region19: #{resnet10_emnist_forward.23} parent=0 // pred_check_branch
    %1405 = sbr.rel (0) target = $region21
  $region20: #{resnet10_emnist_forward.23} parent=0 // pred_region
    _
  $region21: #{resnet10_emnist_forward.23} parent=0 // pred_fallthru
    _
  // Predicated region
  $region22: #{resnet10_emnist_forward.23} parent=0 // pred_check
    _
  $region23: #{resnet10_emnist_forward.23} parent=0 // pred_check_branch
    %1407 = sbr.rel (0) target = $region25
  $region24: #{resnet10_emnist_forward.23} parent=0 // pred_region
    _
  $region25: #{resnet10_emnist_forward.23} parent=0 // pred_fallthru
    _

// kernel: resnet10_emnist_forward.24
$region0: #{resnet10_emnist_forward.24}
  #allocation0 [shape = 'u32[]', space=smem, size = 0x4, offset = 0x4, fixed_abs, tag = 'smem constant byte address 0x4 - core index']
  #allocation1 [shape = 'u32[72,128]{1,0:T(1,128)}', space=vmem, size = 0x9000, scoped, tag = 'internal scratch']
  %s0 = inlined_call_operand.vmem [shape: bf16[392,288], index: 0, kind: input, shape index: {}]
  %s1 = inlined_call_operand.vmem [shape: bf16[288,32], index: 1, kind: input, shape index: {}]
  %s2 = inlined_call_operand.vmem [shape: f32[1,32], index: 2, kind: input, shape index: {}]
  %s3 = inlined_call_operand.vmem [shape: bf16[392,32], index: 3, kind: output, shape index: {}]
  %s4 = sld [smem:[#allocation0]]
  $region22: #{resnet10_emnist_forward.24} parent=0
    _
  %s6 = ssub.s32 1, %s4
  %s7 = scalar_select 0, %s6, %s4
  // Predicated region
  $region2: #{resnet10_emnist_forward.24} parent=0 // pred_check
    _
  $region3: #{resnet10_emnist_forward.24} parent=0 // pred_check_branch
    %9 = sbr.rel (0) target = $region5
  $region4: #{resnet10_emnist_forward.24} parent=0 // pred_region
    _
  $region5: #{resnet10_emnist_forward.24} parent=0 // pred_fallthru
    _
  // Predicated region
  $region6: #{resnet10_emnist_forward.24} parent=0 // pred_check
    _
  $region7: #{resnet10_emnist_forward.24} parent=0 // pred_check_branch
    %11 = sbr.rel (0) target = $region9
  $region8: #{resnet10_emnist_forward.24} parent=0 // pred_region
    _
  $region9: #{resnet10_emnist_forward.24} parent=0 // pred_fallthru
    _
  // Predicated region
  $region10: #{resnet10_emnist_forward.24} parent=0 // pred_check
    _
  $region11: #{resnet10_emnist_forward.24} parent=0 // pred_check_branch
    %13 = sbr.rel (0) target = $region13
  $region12: #{resnet10_emnist_forward.24} parent=0 // pred_region
    _
  $region13: #{resnet10_emnist_forward.24} parent=0 // pred_fallthru
    _
  %v15 = vld [vmem:[%s0] sm:$0xff]
  %v16 = vld [vmem:[%s0 + $0x8] sm:$0xf]
  %v17 = vld [vmem:[%s0 + $0xc] sm:$0xff]
  %v18 = vld [vmem:[%s0 + $0x14] sm:$0xf]
  %v19 = vld [vmem:[%s0 + $0x18] sm:$0xff]
  %v20 = vld [vmem:[%s0 + $0x20] sm:$0xf]
  %v21 = vld [vmem:[%s0 + $0x24] sm:$0xff]
  %v22 = vld [vmem:[%s0 + $0x2c] sm:$0xf]
  %v23 = vld [vmem:[%s0 + $0x30] sm:$0xff]
  %v24 = vld [vmem:[%s0 + $0x38] sm:$0xf]
  %v25 = vld [vmem:[%s0 + $0x3c] sm:$0xff]
  %v26 = vld [vmem:[%s0 + $0x44] sm:$0xf]
  %v27 = vld [vmem:[%s0 + $0x48] sm:$0xff]
  %v28 = vld [vmem:[%s0 + $0x50] sm:$0xf]
  %v29 = vld [vmem:[%s0 + $0x54] sm:$0xff]
  %v30 = vld [vmem:[%s0 + $0x5c] sm:$0xf]
  %v31 = vld [vmem:[%s0 + $0x60] sm:$0xff]
  %v32 = vld [vmem:[%s0 + $0x68] sm:$0xf]
  %v33 = vld [vmem:[%s0 + $0x6c] sm:$0xff]
  %v34 = vld [vmem:[%s0 + $0x74] sm:$0xf]
  %v35 = vld [vmem:[%s0 + $0x78] sm:$0xff]
  %v36 = vld [vmem:[%s0 + $0x80] sm:$0xf]
  %v37 = vld [vmem:[%s0 + $0x84] sm:$0xff]
  %v38 = vld [vmem:[%s0 + $0x8c] sm:$0xf]
  %v39 = vld [vmem:[%s0 + $0x90] sm:$0xff]
  %v40 = vld [vmem:[%s0 + $0x98] sm:$0xf]
  %v41 = vld [vmem:[%s0 + $0x9c] sm:$0xff]
  %v42 = vld [vmem:[%s0 + $0xa4] sm:$0xf]
  %v43 = vld [vmem:[%s0 + $0xa8] sm:$0xff]
  %v44 = vld [vmem:[%s0 + $0xb0] sm:$0xf]
  %v45 = vld [vmem:[%s0 + $0xb4] sm:$0xff]
  %v46 = vld [vmem:[%s0 + $0xbc] sm:$0xf]
  %v47 = vld [vmem:[%s0 + $0xc0] sm:$0xff]
  %v48 = vld [vmem:[%s0 + $0xc8] sm:$0xf]
  %v49 = vld [vmem:[%s0 + $0xcc] sm:$0xff]
  %v50 = vld [vmem:[%s0 + $0xd4] sm:$0xf]
  %v51 = vld [vmem:[%s0 + $0xd8] sm:$0xff]
  %v52 = vld [vmem:[%s0 + $0xe0] sm:$0xf]
  %v53 = vld [vmem:[%s0 + $0xe4] sm:$0xff]
  %v54 = vld [vmem:[%s0 + $0xec] sm:$0xf]
  %v55 = vld [vmem:[%s0 + $0xf0] sm:$0xff]
  %v56 = vld [vmem:[%s0 + $0xf8] sm:$0xf]
  %v57 = vld [vmem:[%s0 + $0xfc] sm:$0xff]
  %v58 = vld [vmem:[%s0 + $0x104] sm:$0xf]
  %v59 = vld [vmem:[%s0 + $0x108] sm:$0xff]
  %v60 = vld [vmem:[%s0 + $0x110] sm:$0xf]
  %v61 = vld [vmem:[%s0 + $0x114] sm:$0xff]
  %v62 = vld [vmem:[%s0 + $0x11c] sm:$0xf]
  %v63 = vld [vmem:[%s0 + $0x120] sm:$0xff]
  %v64 = vld [vmem:[%s0 + $0x128] sm:$0xf]
  %v65 = vld [vmem:[%s0 + $0x12c] sm:$0xff]
  %v66 = vld [vmem:[%s0 + $0x134] sm:$0xf]
  %v67 = vld [vmem:[%s0 + $0x138] sm:$0xff]
  %v68 = vld [vmem:[%s0 + $0x140] sm:$0xf]
  %v69 = vld [vmem:[%s0 + $0x144] sm:$0xff]
  %v70 = vld [vmem:[%s0 + $0x14c] sm:$0xf]
  %v71 = vld [vmem:[%s0 + $0x150] sm:$0xff]
  %v72 = vld [vmem:[%s0 + $0x158] sm:$0xf]
  %v73 = vld [vmem:[%s0 + $0x15c] sm:$0xff]
  %v74 = vld [vmem:[%s0 + $0x164] sm:$0xf]
  %v75 = vld [vmem:[%s0 + $0x168] sm:$0xff]
  %v76 = vld [vmem:[%s0 + $0x170] sm:$0xf]
  %v77 = vld [vmem:[%s0 + $0x174] sm:$0xff]
  %v78 = vld [vmem:[%s0 + $0x17c] sm:$0xf]
  %v79 = vld [vmem:[%s0 + $0x180] sm:$0xff]
  %v80 = vld [vmem:[%s0 + $0x188] sm:$0xf]
  %v81 = vld [vmem:[%s0 + $0x18c] sm:$0xff]
  %v82 = vld [vmem:[%s0 + $0x194] sm:$0xf]
  %v83 = vld [vmem:[%s0 + $0x198] sm:$0xff]
  %v84 = vld [vmem:[%s0 + $0x1a0] sm:$0xf]
  %v85 = vld [vmem:[%s0 + $0x1a4] sm:$0xff]
  %v86 = vld [vmem:[%s0 + $0x1ac] sm:$0xf]
  %v87 = vld [vmem:[%s0 + $0x1b0] sm:$0xff]
  %v88 = vld [vmem:[%s0 + $0x1b8] sm:$0xf]
  %v89 = vld [vmem:[%s0 + $0x1bc] sm:$0xff]
  %v90 = vld [vmem:[%s0 + $0x1c4] sm:$0xf]
  %v91 = vld [vmem:[%s0 + $0x1c8] sm:$0xff]
  %v92 = vld [vmem:[%s0 + $0x1d0] sm:$0xf]
  %v93 = vld [vmem:[%s0 + $0x1d4] sm:$0xff]
  %v94 = vld [vmem:[%s0 + $0x1dc] sm:$0xf]
  %v95 = vld [vmem:[%s0 + $0x1e0] sm:$0xff]
  %v96 = vld [vmem:[%s0 + $0x1e8] sm:$0xf]
  %v97 = vld [vmem:[%s0 + $0x1ec] sm:$0xff]
  %v98 = vld [vmem:[%s0 + $0x1f4] sm:$0xf]
  %v99 = vld [vmem:[%s0 + $0x1f8] sm:$0xff]
  %v100 = vld [vmem:[%s0 + $0x200] sm:$0xf]
  %v101 = vld [vmem:[%s0 + $0x204] sm:$0xff]
  %v102 = vld [vmem:[%s0 + $0x20c] sm:$0xf]
  %v103 = vld [vmem:[%s0 + $0x210] sm:$0xff]
  %v104 = vld [vmem:[%s0 + $0x218] sm:$0xf]
  %v105 = vld [vmem:[%s0 + $0x21c] sm:$0xff]
  %v106 = vld [vmem:[%s0 + $0x224] sm:$0xf]
  %v107 = vld [vmem:[%s0 + $0x228] sm:$0xff]
  %v108 = vld [vmem:[%s0 + $0x230] sm:$0xf]
  %v109 = vld [vmem:[%s0 + $0x234] sm:$0xff]
  %v110 = vld [vmem:[%s0 + $0x23c] sm:$0xf]
  %v111 = vld [vmem:[%s0 + $0x240] sm:$0xff]
  %v112 = vld [vmem:[%s0 + $0x248] sm:$0xf]
  %v113 = vld [vmem:[%s1] sm:$0xf]
  %v114 = vld [vmem:[%s1 + $0x4] sm:$0xf]
  %v115 = vld [vmem:[%s1 + $0x8] sm:$0xf]
  %v116 = vld [vmem:[%s1 + $0xc] sm:$0xf]
  %v117 = vld [vmem:[%s1 + $0x10] sm:$0xf]
  %v118 = vld [vmem:[%s1 + $0x14] sm:$0xf]
  %v119 = vld [vmem:[%s1 + $0x18] sm:$0xf]
  %v120 = vld [vmem:[%s1 + $0x1c] sm:$0xf]
  %v121 = vld [vmem:[%s1 + $0x20] sm:$0xf]
  %v122 = vld [vmem:[%s1 + $0x24] sm:$0xf]
  %v123 = vld [vmem:[%s1 + $0x28] sm:$0xf]
  %v124 = vld [vmem:[%s1 + $0x2c] sm:$0xf]
  %v125 = vld [vmem:[%s1 + $0x30] sm:$0xf]
  %v126 = vld [vmem:[%s1 + $0x34] sm:$0xf]
  %v127 = vld [vmem:[%s1 + $0x38] sm:$0xf]
  %v128 = vld [vmem:[%s1 + $0x3c] sm:$0xf]
  %v129 = vld [vmem:[%s1 + $0x40] sm:$0xf]
  %v130 = vld [vmem:[%s1 + $0x44] sm:$0xf]
  %v131 = vld [vmem:[%s1 + $0x48] sm:$0xf]
  %v132 = vld [vmem:[%s1 + $0x4c] sm:$0xf]
  %v133 = vld [vmem:[%s1 + $0x50] sm:$0xf]
  %v134 = vld [vmem:[%s1 + $0x54] sm:$0xf]
  %v135 = vld [vmem:[%s1 + $0x58] sm:$0xf]
  %v136 = vld [vmem:[%s1 + $0x5c] sm:$0xf]
  %v137 = vld [vmem:[%s1 + $0x60] sm:$0xf]
  %v138 = vld [vmem:[%s1 + $0x64] sm:$0xf]
  %v139 = vld [vmem:[%s1 + $0x68] sm:$0xf]
  %v140 = vld [vmem:[%s1 + $0x6c] sm:$0xf]
  %v141 = vld [vmem:[%s1 + $0x70] sm:$0xf]
  %v142 = vld [vmem:[%s1 + $0x74] sm:$0xf]
  %v143 = vld [vmem:[%s1 + $0x78] sm:$0xf]
  %v144 = vld [vmem:[%s1 + $0x7c] sm:$0xf]
  %v145 = vld [vmem:[%s1 + $0x80] sm:$0xf]
  %v146 = vld [vmem:[%s1 + $0x84] sm:$0xf]
  %v147 = vld [vmem:[%s1 + $0x88] sm:$0xf]
  %v148 = vld [vmem:[%s1 + $0x8c] sm:$0xf]
  %v149 = vld [vmem:[%s2] sm:$0x1]
  %v151 = vperm.slane %v149, 0
  %v251 = vunpack.c.l.b16 %v15
  %v252 = vunpack.c.h.b16 %v15
  %v253 = vunpack.c.l.b16 %v16
  %v254 = vunpack.c.l.b16 %v17
  %v255 = vunpack.c.h.b16 %v17
  %v256 = vunpack.c.l.b16 %v18
  %v257 = vunpack.c.l.b16 %v19
  %v258 = vunpack.c.h.b16 %v19
  %v259 = vunpack.c.l.b16 %v20
  %v260 = vunpack.c.l.b16 %v21
  %v261 = vunpack.c.h.b16 %v21
  %v262 = vunpack.c.l.b16 %v22
  %v263 = vunpack.c.l.b16 %v23
  %v264 = vunpack.c.h.b16 %v23
  %v265 = vunpack.c.l.b16 %v24
  %v266 = vunpack.c.l.b16 %v25
  %v267 = vunpack.c.h.b16 %v25
  %v268 = vunpack.c.l.b16 %v26
  %v269 = vunpack.c.l.b16 %v27
  %v270 = vunpack.c.h.b16 %v27
  %v271 = vunpack.c.l.b16 %v28
  %v272 = vunpack.c.l.b16 %v29
  %v273 = vunpack.c.h.b16 %v29
  %v274 = vunpack.c.l.b16 %v30
  %v275 = vunpack.c.l.b16 %v31
  %v276 = vunpack.c.h.b16 %v31
  %v277 = vunpack.c.l.b16 %v32
  %v278 = vunpack.c.l.b16 %v33
  %v279 = vunpack.c.h.b16 %v33
  %v280 = vunpack.c.l.b16 %v34
  %v281 = vunpack.c.l.b16 %v35
  %v282 = vunpack.c.h.b16 %v35
  %v283 = vunpack.c.l.b16 %v36
  %v284 = vunpack.c.l.b16 %v37
  %v285 = vunpack.c.h.b16 %v37
  %v286 = vunpack.c.l.b16 %v38
  %v287 = vunpack.c.l.b16 %v39
  %v288 = vunpack.c.h.b16 %v39
  %v289 = vunpack.c.l.b16 %v40
  %v290 = vunpack.c.l.b16 %v41
  %v291 = vunpack.c.h.b16 %v41
  %v292 = vunpack.c.l.b16 %v42
  %v293 = vunpack.c.l.b16 %v43
  %v294 = vunpack.c.h.b16 %v43
  %v295 = vunpack.c.l.b16 %v44
  %v296 = vunpack.c.l.b16 %v45
  %v297 = vunpack.c.h.b16 %v45
  %v298 = vunpack.c.l.b16 %v46
  %v299 = vunpack.c.l.b16 %v47
  %v300 = vunpack.c.h.b16 %v47
  %v301 = vunpack.c.l.b16 %v48
  %v302 = vunpack.c.l.b16 %v49
  %v303 = vunpack.c.h.b16 %v49
  %v304 = vunpack.c.l.b16 %v50
  %v305 = vunpack.c.l.b16 %v51
  %v306 = vunpack.c.h.b16 %v51
  %v307 = vunpack.c.l.b16 %v52
  %v308 = vunpack.c.l.b16 %v53
  %v309 = vunpack.c.h.b16 %v53
  %v310 = vunpack.c.l.b16 %v54
  %v311 = vunpack.c.l.b16 %v55
  %v312 = vunpack.c.h.b16 %v55
  %v313 = vunpack.c.l.b16 %v56
  %v314 = vunpack.c.l.b16 %v57
  %v315 = vunpack.c.h.b16 %v57
  %v316 = vunpack.c.l.b16 %v58
  %v317 = vunpack.c.l.b16 %v59
  %v318 = vunpack.c.h.b16 %v59
  %v319 = vunpack.c.l.b16 %v60
  %v320 = vunpack.c.l.b16 %v61
  %v321 = vunpack.c.h.b16 %v61
  %v322 = vunpack.c.l.b16 %v62
  %v323 = vunpack.c.l.b16 %v63
  %v324 = vunpack.c.h.b16 %v63
  %v325 = vunpack.c.l.b16 %v64
  %v326 = vunpack.c.l.b16 %v65
  %v327 = vunpack.c.h.b16 %v65
  %v328 = vunpack.c.l.b16 %v66
  %v329 = vunpack.c.l.b16 %v67
  %v330 = vunpack.c.h.b16 %v67
  %v331 = vunpack.c.l.b16 %v68
  %v332 = vunpack.c.l.b16 %v69
  %v333 = vunpack.c.h.b16 %v69
  %v334 = vunpack.c.l.b16 %v70
  %v335 = vunpack.c.l.b16 %v71
  %v336 = vunpack.c.h.b16 %v71
  %v337 = vunpack.c.l.b16 %v72
  %v338 = vunpack.c.l.b16 %v73
  %v339 = vunpack.c.h.b16 %v73
  %v340 = vunpack.c.l.b16 %v74
  %v341 = vunpack.c.l.b16 %v75
  %v342 = vunpack.c.h.b16 %v75
  %v343 = vunpack.c.l.b16 %v76
  %v344 = vunpack.c.l.b16 %v77
  %v345 = vunpack.c.h.b16 %v77
  %v346 = vunpack.c.l.b16 %v78
  %v347 = vunpack.c.l.b16 %v79
  %v348 = vunpack.c.h.b16 %v79
  %v349 = vunpack.c.l.b16 %v80
  %v350 = vunpack.c.l.b16 %v81
  %v351 = vunpack.c.h.b16 %v81
  %v352 = vunpack.c.l.b16 %v82
  %v353 = vunpack.c.l.b16 %v83
  %v354 = vunpack.c.h.b16 %v83
  %v355 = vunpack.c.l.b16 %v84
  %v356 = vunpack.c.l.b16 %v85
  %v357 = vunpack.c.h.b16 %v85
  %v358 = vunpack.c.l.b16 %v86
  %v359 = vunpack.c.l.b16 %v87
  %v360 = vunpack.c.h.b16 %v87
  %v361 = vunpack.c.l.b16 %v88
  %v362 = vunpack.c.l.b16 %v89
  %v363 = vunpack.c.h.b16 %v89
  %v364 = vunpack.c.l.b16 %v90
  %v365 = vunpack.c.l.b16 %v91
  %v366 = vunpack.c.h.b16 %v91
  %v367 = vunpack.c.l.b16 %v92
  %v368 = vunpack.c.l.b16 %v93
  %v369 = vunpack.c.h.b16 %v93
  %v370 = vunpack.c.l.b16 %v94
  %v371 = vunpack.c.l.b16 %v95
  %v372 = vunpack.c.h.b16 %v95
  %v373 = vunpack.c.l.b16 %v96
  %v374 = vunpack.c.l.b16 %v97
  %v375 = vunpack.c.h.b16 %v97
  %v376 = vunpack.c.l.b16 %v98
  %v377 = vunpack.c.l.b16 %v99
  %v378 = vunpack.c.h.b16 %v99
  %v379 = vunpack.c.l.b16 %v100
  %v380 = vunpack.c.l.b16 %v101
  %v381 = vunpack.c.h.b16 %v101
  %v382 = vunpack.c.l.b16 %v102
  %v383 = vunpack.c.l.b16 %v103
  %v384 = vunpack.c.h.b16 %v103
  %v385 = vunpack.c.l.b16 %v104
  %v386 = vunpack.c.l.b16 %v105
  %v387 = vunpack.c.h.b16 %v105
  %v388 = vunpack.c.l.b16 %v106
  %v389 = vunpack.c.l.b16 %v107
  %v390 = vunpack.c.h.b16 %v107
  %v391 = vunpack.c.l.b16 %v108
  %v392 = vunpack.c.l.b16 %v109
  %v393 = vunpack.c.h.b16 %v109
  %v394 = vunpack.c.l.b16 %v110
  %v395 = vunpack.c.l.b16 %v111
  %v396 = vunpack.c.h.b16 %v111
  %v397 = vunpack.c.l.b16 %v112
  %v398 = vpack.c.b16 %v254, %v251
  %v399 = vpack.c.b16 %v255, %v252
  %v400 = vpack.c.b16 %v256, %v253
  %v401 = vpack.c.b16 %v260, %v257
  %v402 = vpack.c.b16 %v261, %v258
  %v403 = vpack.c.b16 %v262, %v259
  %v404 = vpack.c.b16 %v266, %v263
  %v405 = vpack.c.b16 %v267, %v264
  %v406 = vpack.c.b16 %v268, %v265
  %v407 = vpack.c.b16 %v272, %v269
  %v408 = vpack.c.b16 %v273, %v270
  %v409 = vpack.c.b16 %v274, %v271
  %v410 = vpack.c.b16 %v278, %v275
  %v411 = vpack.c.b16 %v279, %v276
  %v412 = vpack.c.b16 %v280, %v277
  %v413 = vpack.c.b16 %v284, %v281
  %v414 = vpack.c.b16 %v285, %v282
  %v415 = vpack.c.b16 %v286, %v283
  %v416 = vpack.c.b16 %v290, %v287
  %v417 = vpack.c.b16 %v291, %v288
  %v418 = vpack.c.b16 %v292, %v289
  %v419 = vpack.c.b16 %v296, %v293
  %v420 = vpack.c.b16 %v297, %v294
  %v421 = vpack.c.b16 %v298, %v295
  %v422 = vpack.c.b16 %v302, %v299
  %v423 = vpack.c.b16 %v303, %v300
  %v424 = vpack.c.b16 %v304, %v301
  %v425 = vpack.c.b16 %v308, %v305
  %v426 = vpack.c.b16 %v309, %v306
  %v427 = vpack.c.b16 %v310, %v307
  %v428 = vpack.c.b16 %v314, %v311
  %v429 = vpack.c.b16 %v315, %v312
  %v430 = vpack.c.b16 %v316, %v313
  %v431 = vpack.c.b16 %v320, %v317
  %v432 = vpack.c.b16 %v321, %v318
  %v433 = vpack.c.b16 %v322, %v319
  %v434 = vpack.c.b16 %v326, %v323
  %v435 = vpack.c.b16 %v327, %v324
  %v436 = vpack.c.b16 %v328, %v325
  %v437 = vpack.c.b16 %v332, %v329
  %v438 = vpack.c.b16 %v333, %v330
  %v439 = vpack.c.b16 %v334, %v331
  %v440 = vpack.c.b16 %v338, %v335
  %v441 = vpack.c.b16 %v339, %v336
  %v442 = vpack.c.b16 %v340, %v337
  %v443 = vpack.c.b16 %v344, %v341
  %v444 = vpack.c.b16 %v345, %v342
  %v445 = vpack.c.b16 %v346, %v343
  %v446 = vpack.c.b16 %v350, %v347
  %v447 = vpack.c.b16 %v351, %v348
  %v448 = vpack.c.b16 %v352, %v349
  %v449 = vpack.c.b16 %v356, %v353
  %v450 = vpack.c.b16 %v357, %v354
  %v451 = vpack.c.b16 %v358, %v355
  %v452 = vpack.c.b16 %v362, %v359
  %v453 = vpack.c.b16 %v363, %v360
  %v454 = vpack.c.b16 %v364, %v361
  %v455 = vpack.c.b16 %v368, %v365
  %v456 = vpack.c.b16 %v369, %v366
  %v457 = vpack.c.b16 %v370, %v367
  %v458 = vpack.c.b16 %v374, %v371
  %v459 = vpack.c.b16 %v375, %v372
  %v460 = vpack.c.b16 %v376, %v373
  %v461 = vpack.c.b16 %v380, %v377
  %v462 = vpack.c.b16 %v381, %v378
  %v463 = vpack.c.b16 %v382, %v379
  %v464 = vpack.c.b16 %v386, %v383
  %v465 = vpack.c.b16 %v387, %v384
  %v466 = vpack.c.b16 %v388, %v385
  %v467 = vpack.c.b16 %v392, %v389
  %v468 = vpack.c.b16 %v393, %v390
  %v469 = vpack.c.b16 %v394, %v391
  %v470 = vpack.c.b16 %v395, %v395
  %v471 = vpack.c.b16 %v396, %v396
  %v472 = vpack.c.b16 %v397, %v397
  %v559 = vunpack.c.l.b16 %v113
  %v560 = vunpack.c.l.b16 %v114
  %v561 = vunpack.c.l.b16 %v115
  %v562 = vunpack.c.l.b16 %v116
  %v563 = vunpack.c.l.b16 %v117
  %v564 = vunpack.c.l.b16 %v118
  %v565 = vunpack.c.l.b16 %v119
  %v566 = vunpack.c.l.b16 %v120
  %v567 = vunpack.c.l.b16 %v121
  %v568 = vunpack.c.l.b16 %v122
  %v569 = vunpack.c.l.b16 %v123
  %v570 = vunpack.c.l.b16 %v124
  %v571 = vunpack.c.l.b16 %v125
  %v572 = vunpack.c.l.b16 %v126
  %v573 = vunpack.c.l.b16 %v127
  %v574 = vunpack.c.l.b16 %v128
  %v575 = vunpack.c.l.b16 %v129
  %v576 = vunpack.c.l.b16 %v130
  %v577 = vunpack.c.l.b16 %v131
  %v578 = vunpack.c.l.b16 %v132
  %v579 = vunpack.c.l.b16 %v133
  %v580 = vunpack.c.l.b16 %v134
  %v581 = vunpack.c.l.b16 %v135
  %v582 = vunpack.c.l.b16 %v136
  %v583 = vunpack.c.l.b16 %v137
  %v584 = vunpack.c.l.b16 %v138
  %v585 = vunpack.c.l.b16 %v139
  %v586 = vunpack.c.l.b16 %v140
  %v587 = vunpack.c.l.b16 %v141
  %v588 = vunpack.c.l.b16 %v142
  %v589 = vunpack.c.l.b16 %v143
  %v590 = vunpack.c.l.b16 %v144
  %v591 = vunpack.c.l.b16 %v145
  %v592 = vunpack.c.l.b16 %v146
  %v593 = vunpack.c.l.b16 %v147
  %v594 = vunpack.c.l.b16 %v148
  %v595 = vpack.c.b16 %v560, %v559
  %v596 = vpack.c.b16 %v562, %v561
  %v597 = vpack.c.b16 %v564, %v563
  %v598 = vpack.c.b16 %v566, %v565
  %v599 = vpack.c.b16 %v568, %v567
  %v600 = vpack.c.b16 %v570, %v569
  %v601 = vpack.c.b16 %v572, %v571
  %v602 = vpack.c.b16 %v574, %v573
  %v603 = vpack.c.b16 %v576, %v575
  %v604 = vpack.c.b16 %v578, %v577
  %v605 = vpack.c.b16 %v580, %v579
  %v606 = vpack.c.b16 %v582, %v581
  %v607 = vpack.c.b16 %v584, %v583
  %v608 = vpack.c.b16 %v586, %v585
  %v609 = vpack.c.b16 %v588, %v587
  %v610 = vpack.c.b16 %v590, %v589
  %v611 = vpack.c.b16 %v592, %v591
  %v612 = vpack.c.b16 %v594, %v593
  %vm631 = vcmask 261120
  %v633 = vsel %vm631, %v400, 0
  %v636 = vsel %vm631, %v403, 0
  %v639 = vsel %vm631, %v406, 0
  %v642 = vsel %vm631, %v409, 0
  %v645 = vsel %vm631, %v412, 0
  %v648 = vsel %vm631, %v415, 0
  %v651 = vsel %vm631, %v418, 0
  %v654 = vsel %vm631, %v421, 0
  %v657 = vsel %vm631, %v424, 0
  %v660 = vsel %vm631, %v427, 0
  %v663 = vsel %vm631, %v430, 0
  %v666 = vsel %vm631, %v433, 0
  %v669 = vsel %vm631, %v436, 0
  %v672 = vsel %vm631, %v439, 0
  %v675 = vsel %vm631, %v442, 0
  %v678 = vsel %vm631, %v445, 0
  %v681 = vsel %vm631, %v448, 0
  %v684 = vsel %vm631, %v451, 0
  %v687 = vsel %vm631, %v454, 0
  %v690 = vsel %vm631, %v457, 0
  %v693 = vsel %vm631, %v460, 0
  %v696 = vsel %vm631, %v463, 0
  %v699 = vsel %vm631, %v466, 0
  %v702 = vsel %vm631, %v469, 0
  %v705 = vsel %vm631, %v472, 0
  %707 = vmatpush.bf16.msra.mxu0 %v602
  %708 = vmatpush.bf16.msra.mxu0 %v601
  %709 = vmatpush.bf16.msra.mxu0 %v600
  %710 = vmatpush.bf16.msra.mxu0 %v599
  %711 = vmatpush.bf16.msra.mxu0 %v598
  %712 = vmatpush.bf16.msra.mxu0 %v597
  %713 = vmatpush.bf16.msra.mxu0 %v596
  %714 = vmatpush.bf16.msra.mxu0 %v595
  %715 = vmatmul.bf16.gmra.mxu0 %v398
  %v716 = vpop.f32.mrf.mxu0
  %v717 = vadd.f32 %v151, %v716
  %v718 = vpop.f32.mrf.mxu0
  %v719 = vadd.f32 %v151, %v718
  %720 = vmatmul.bf16.gmra.mxu0 %v401
  %v721 = vpop.f32.mrf.mxu0
  %v722 = vadd.f32 %v151, %v721
  %v723 = vpop.f32.mrf.mxu0
  %v724 = vadd.f32 %v151, %v723
  %725 = vmatmul.bf16.gmra.mxu0 %v404
  %v726 = vpop.f32.mrf.mxu0
  %v727 = vadd.f32 %v151, %v726
  %v728 = vpop.f32.mrf.mxu0
  %v729 = vadd.f32 %v151, %v728
  %730 = vmatmul.bf16.gmra.mxu0 %v407
  %v731 = vpop.f32.mrf.mxu0
  %v732 = vadd.f32 %v151, %v731
  %v733 = vpop.f32.mrf.mxu0
  %v734 = vadd.f32 %v151, %v733
  %735 = vmatmul.bf16.gmra.mxu0 %v410
  %v736 = vpop.f32.mrf.mxu0
  %v737 = vadd.f32 %v151, %v736
  %v738 = vpop.f32.mrf.mxu0
  %v739 = vadd.f32 %v151, %v738
  %740 = vmatmul.bf16.gmra.mxu0 %v413
  %v741 = vpop.f32.mrf.mxu0
  %v742 = vadd.f32 %v151, %v741
  %v743 = vpop.f32.mrf.mxu0
  %v744 = vadd.f32 %v151, %v743
  %745 = vmatmul.bf16.gmra.mxu0 %v416
  %v746 = vpop.f32.mrf.mxu0
  %v747 = vadd.f32 %v151, %v746
  %v748 = vpop.f32.mrf.mxu0
  %v749 = vadd.f32 %v151, %v748
  %750 = vmatmul.bf16.gmra.mxu0 %v419
  %v751 = vpop.f32.mrf.mxu0
  %v752 = vadd.f32 %v151, %v751
  %v753 = vpop.f32.mrf.mxu0
  %v754 = vadd.f32 %v151, %v753
  %755 = vmatmul.bf16.gmra.mxu0 %v422
  %v756 = vpop.f32.mrf.mxu0
  %v757 = vadd.f32 %v151, %v756
  %v758 = vpop.f32.mrf.mxu0
  %v759 = vadd.f32 %v151, %v758
  %760 = vmatmul.bf16.gmra.mxu0 %v425
  %v761 = vpop.f32.mrf.mxu0
  %v762 = vadd.f32 %v151, %v761
  %v763 = vpop.f32.mrf.mxu0
  %v764 = vadd.f32 %v151, %v763
  %765 = vmatmul.bf16.gmra.mxu0 %v428
  %v766 = vpop.f32.mrf.mxu0
  %v767 = vadd.f32 %v151, %v766
  %v768 = vpop.f32.mrf.mxu0
  %v769 = vadd.f32 %v151, %v768
  %770 = vmatmul.bf16.gmra.mxu0 %v431
  %v771 = vpop.f32.mrf.mxu0
  %v772 = vadd.f32 %v151, %v771
  %v773 = vpop.f32.mrf.mxu0
  %v774 = vadd.f32 %v151, %v773
  %775 = vmatmul.bf16.gmra.mxu0 %v434
  %v776 = vpop.f32.mrf.mxu0
  %v777 = vadd.f32 %v151, %v776
  %v778 = vpop.f32.mrf.mxu0
  %v779 = vadd.f32 %v151, %v778
  %780 = vmatmul.bf16.gmra.mxu0 %v437
  %v781 = vpop.f32.mrf.mxu0
  %v782 = vadd.f32 %v151, %v781
  %v783 = vpop.f32.mrf.mxu0
  %v784 = vadd.f32 %v151, %v783
  %785 = vmatmul.bf16.gmra.mxu0 %v440
  %v786 = vpop.f32.mrf.mxu0
  %v787 = vadd.f32 %v151, %v786
  %v788 = vpop.f32.mrf.mxu0
  %v789 = vadd.f32 %v151, %v788
  %790 = vmatmul.bf16.gmra.mxu0 %v443
  %v791 = vpop.f32.mrf.mxu0
  %v792 = vadd.f32 %v151, %v791
  %v793 = vpop.f32.mrf.mxu0
  %v794 = vadd.f32 %v151, %v793
  %795 = vmatmul.bf16.gmra.mxu0 %v446
  %v796 = vpop.f32.mrf.mxu0
  %v797 = vadd.f32 %v151, %v796
  %v798 = vpop.f32.mrf.mxu0
  %v799 = vadd.f32 %v151, %v798
  %800 = vmatmul.bf16.gmra.mxu0 %v449
  %v801 = vpop.f32.mrf.mxu0
  %v802 = vadd.f32 %v151, %v801
  %v803 = vpop.f32.mrf.mxu0
  %v804 = vadd.f32 %v151, %v803
  %805 = vmatmul.bf16.gmra.mxu0 %v452
  %v806 = vpop.f32.mrf.mxu0
  %v807 = vadd.f32 %v151, %v806
  %v808 = vpop.f32.mrf.mxu0
  %v809 = vadd.f32 %v151, %v808
  %810 = vmatmul.bf16.gmra.mxu0 %v455
  %v811 = vpop.f32.mrf.mxu0
  %v812 = vadd.f32 %v151, %v811
  %v813 = vpop.f32.mrf.mxu0
  %v814 = vadd.f32 %v151, %v813
  %815 = vmatmul.bf16.gmra.mxu0 %v458
  %v816 = vpop.f32.mrf.mxu0
  %v817 = vadd.f32 %v151, %v816
  %v818 = vpop.f32.mrf.mxu0
  %v819 = vadd.f32 %v151, %v818
  %820 = vmatmul.bf16.gmra.mxu0 %v461
  %v821 = vpop.f32.mrf.mxu0
  %v822 = vadd.f32 %v151, %v821
  %v823 = vpop.f32.mrf.mxu0
  %v824 = vadd.f32 %v151, %v823
  %825 = vmatmul.bf16.gmra.mxu0 %v464
  %v826 = vpop.f32.mrf.mxu0
  %v827 = vadd.f32 %v151, %v826
  %v828 = vpop.f32.mrf.mxu0
  %v829 = vadd.f32 %v151, %v828
  %830 = vmatmul.bf16.gmra.mxu0 %v467
  %v831 = vpop.f32.mrf.mxu0
  %v832 = vadd.f32 %v151, %v831
  %v833 = vpop.f32.mrf.mxu0
  %v834 = vadd.f32 %v151, %v833
  %835 = vmatmul.bf16.gmra.mxu0 %v470
  %v836 = vpop.f32.mrf.mxu0
  %v837 = vadd.f32 %v151, %v836
  %v838 = vpop.f32.mrf.mxu0
  %839 = vdwg.mxu0
  %840 = vmatpush.bf16.msra.mxu0 %v610
  %841 = vmatpush.bf16.msra.mxu0 %v609
  %842 = vmatpush.bf16.msra.mxu0 %v608
  %843 = vmatpush.bf16.msra.mxu0 %v607
  %844 = vmatpush.bf16.msra.mxu0 %v606
  %845 = vmatpush.bf16.msra.mxu0 %v605
  %846 = vmatpush.bf16.msra.mxu0 %v604
  %847 = vmatpush.bf16.msra.mxu0 %v603
  %848 = vmatmul.bf16.gmra.mxu0 %v399
  %v849 = vpop.f32.mrf.mxu0
  %v850 = vadd.f32 %v717, %v849
  %v851 = vpop.f32.mrf.mxu0
  %v852 = vadd.f32 %v719, %v851
  %853 = vmatmul.bf16.gmra.mxu0 %v402
  %v854 = vpop.f32.mrf.mxu0
  %v855 = vadd.f32 %v722, %v854
  %v856 = vpop.f32.mrf.mxu0
  %v857 = vadd.f32 %v724, %v856
  %858 = vmatmul.bf16.gmra.mxu0 %v405
  %v859 = vpop.f32.mrf.mxu0
  %v860 = vadd.f32 %v727, %v859
  %v861 = vpop.f32.mrf.mxu0
  %v862 = vadd.f32 %v729, %v861
  %863 = vmatmul.bf16.gmra.mxu0 %v408
  %v864 = vpop.f32.mrf.mxu0
  %v865 = vadd.f32 %v732, %v864
  %v866 = vpop.f32.mrf.mxu0
  %v867 = vadd.f32 %v734, %v866
  %868 = vmatmul.bf16.gmra.mxu0 %v411
  %v869 = vpop.f32.mrf.mxu0
  %v870 = vadd.f32 %v737, %v869
  %v871 = vpop.f32.mrf.mxu0
  %v872 = vadd.f32 %v739, %v871
  %873 = vmatmul.bf16.gmra.mxu0 %v414
  %v874 = vpop.f32.mrf.mxu0
  %v875 = vadd.f32 %v742, %v874
  %v876 = vpop.f32.mrf.mxu0
  %v877 = vadd.f32 %v744, %v876
  %878 = vmatmul.bf16.gmra.mxu0 %v417
  %v879 = vpop.f32.mrf.mxu0
  %v880 = vadd.f32 %v747, %v879
  %v881 = vpop.f32.mrf.mxu0
  %v882 = vadd.f32 %v749, %v881
  %883 = vmatmul.bf16.gmra.mxu0 %v420
  %v884 = vpop.f32.mrf.mxu0
  %v885 = vadd.f32 %v752, %v884
  %v886 = vpop.f32.mrf.mxu0
  %v887 = vadd.f32 %v754, %v886
  %888 = vmatmul.bf16.gmra.mxu0 %v423
  %v889 = vpop.f32.mrf.mxu0
  %v890 = vadd.f32 %v757, %v889
  %v891 = vpop.f32.mrf.mxu0
  %v892 = vadd.f32 %v759, %v891
  %893 = vmatmul.bf16.gmra.mxu0 %v426
  %v894 = vpop.f32.mrf.mxu0
  %v895 = vadd.f32 %v762, %v894
  %v896 = vpop.f32.mrf.mxu0
  %v897 = vadd.f32 %v764, %v896
  %898 = vmatmul.bf16.gmra.mxu0 %v429
  %v899 = vpop.f32.mrf.mxu0
  %v900 = vadd.f32 %v767, %v899
  %v901 = vpop.f32.mrf.mxu0
  %v902 = vadd.f32 %v769, %v901
  %903 = vmatmul.bf16.gmra.mxu0 %v432
  %v904 = vpop.f32.mrf.mxu0
  %v905 = vadd.f32 %v772, %v904
  %v906 = vpop.f32.mrf.mxu0
  %v907 = vadd.f32 %v774, %v906
  %908 = vmatmul.bf16.gmra.mxu0 %v435
  %v909 = vpop.f32.mrf.mxu0
  %v910 = vadd.f32 %v777, %v909
  %v911 = vpop.f32.mrf.mxu0
  %v912 = vadd.f32 %v779, %v911
  %913 = vmatmul.bf16.gmra.mxu0 %v438
  %v914 = vpop.f32.mrf.mxu0
  %v915 = vadd.f32 %v782, %v914
  %v916 = vpop.f32.mrf.mxu0
  %v917 = vadd.f32 %v784, %v916
  %918 = vmatmul.bf16.gmra.mxu0 %v441
  %v919 = vpop.f32.mrf.mxu0
  %v920 = vadd.f32 %v787, %v919
  %v921 = vpop.f32.mrf.mxu0
  %v922 = vadd.f32 %v789, %v921
  %923 = vmatmul.bf16.gmra.mxu0 %v444
  %v924 = vpop.f32.mrf.mxu0
  %v925 = vadd.f32 %v792, %v924
  %v926 = vpop.f32.mrf.mxu0
  %v927 = vadd.f32 %v794, %v926
  %928 = vmatmul.bf16.gmra.mxu0 %v447
  %v929 = vpop.f32.mrf.mxu0
  %v930 = vadd.f32 %v797, %v929
  %v931 = vpop.f32.mrf.mxu0
  %v932 = vadd.f32 %v799, %v931
  %933 = vmatmul.bf16.gmra.mxu0 %v450
  %v934 = vpop.f32.mrf.mxu0
  %v935 = vadd.f32 %v802, %v934
  %v936 = vpop.f32.mrf.mxu0
  %v937 = vadd.f32 %v804, %v936
  %938 = vmatmul.bf16.gmra.mxu0 %v453
  %v939 = vpop.f32.mrf.mxu0
  %v940 = vadd.f32 %v807, %v939
  %v941 = vpop.f32.mrf.mxu0
  %v942 = vadd.f32 %v809, %v941
  %943 = vmatmul.bf16.gmra.mxu0 %v456
  %v944 = vpop.f32.mrf.mxu0
  %v945 = vadd.f32 %v812, %v944
  %v946 = vpop.f32.mrf.mxu0
  %v947 = vadd.f32 %v814, %v946
  %948 = vmatmul.bf16.gmra.mxu0 %v459
  %v949 = vpop.f32.mrf.mxu0
  %v950 = vadd.f32 %v817, %v949
  %v951 = vpop.f32.mrf.mxu0
  %v952 = vadd.f32 %v819, %v951
  %953 = vmatmul.bf16.gmra.mxu0 %v462
  %v954 = vpop.f32.mrf.mxu0
  %v955 = vadd.f32 %v822, %v954
  %v956 = vpop.f32.mrf.mxu0
  %v957 = vadd.f32 %v824, %v956
  %958 = vmatmul.bf16.gmra.mxu0 %v465
  %v959 = vpop.f32.mrf.mxu0
  %v960 = vadd.f32 %v827, %v959
  %v961 = vpop.f32.mrf.mxu0
  %v962 = vadd.f32 %v829, %v961
  %963 = vmatmul.bf16.gmra.mxu0 %v468
  %v964 = vpop.f32.mrf.mxu0
  %v965 = vadd.f32 %v832, %v964
  %v966 = vpop.f32.mrf.mxu0
  %v967 = vadd.f32 %v834, %v966
  %968 = vmatmul.bf16.gmra.mxu0 %v471
  %v969 = vpop.f32.mrf.mxu0
  %v970 = vadd.f32 %v837, %v969
  %v971 = vpop.f32.mrf.mxu0
  %972 = vdwg.mxu0
  %973 = vmatpush.bf16.msra.mxu0 0
  %974 = vmatpush.bf16.msra.mxu0 0
  %975 = vmatpush.bf16.msra.mxu0 0
  %976 = vmatpush.bf16.msra.mxu0 0
  %977 = vmatpush.bf16.msra.mxu0 0
  %978 = vmatpush.bf16.msra.mxu0 0
  %979 = vmatpush.bf16.msra.mxu0 %v612
  %980 = vmatpush.bf16.msra.mxu0 %v611
  %981 = vmatmul.bf16.gmra.mxu0 %v633
  %v982 = vpop.f32.mrf.mxu0
  %v983 = vadd.f32 %v850, %v982
  %v984 = vpop.f32.mrf.mxu0
  %v985 = vadd.f32 %v852, %v984
  %986 = vmatmul.bf16.gmra.mxu0 %v636
  %v987 = vpop.f32.mrf.mxu0
  %v988 = vadd.f32 %v855, %v987
  %v989 = vpop.f32.mrf.mxu0
  %v990 = vadd.f32 %v857, %v989
  %991 = vmatmul.bf16.gmra.mxu0 %v639
  %v992 = vpop.f32.mrf.mxu0
  %v993 = vadd.f32 %v860, %v992
  %v994 = vpop.f32.mrf.mxu0
  %v995 = vadd.f32 %v862, %v994
  %996 = vmatmul.bf16.gmra.mxu0 %v642
  %v997 = vpop.f32.mrf.mxu0
  %v998 = vadd.f32 %v865, %v997
  %v999 = vpop.f32.mrf.mxu0
  %v1000 = vadd.f32 %v867, %v999
  %1001 = vmatmul.bf16.gmra.mxu0 %v645
  %v1002 = vpop.f32.mrf.mxu0
  %v1003 = vadd.f32 %v870, %v1002
  %v1004 = vpop.f32.mrf.mxu0
  %v1005 = vadd.f32 %v872, %v1004
  %1006 = vmatmul.bf16.gmra.mxu0 %v648
  %v1007 = vpop.f32.mrf.mxu0
  %v1008 = vadd.f32 %v875, %v1007
  %v1009 = vpop.f32.mrf.mxu0
  %v1010 = vadd.f32 %v877, %v1009
  %1011 = vmatmul.bf16.gmra.mxu0 %v651
  %v1012 = vpop.f32.mrf.mxu0
  %v1013 = vadd.f32 %v880, %v1012
  %v1014 = vpop.f32.mrf.mxu0
  %v1015 = vadd.f32 %v882, %v1014
  %1016 = vmatmul.bf16.gmra.mxu0 %v654
  %v1017 = vpop.f32.mrf.mxu0
  %v1018 = vadd.f32 %v885, %v1017
  %v1019 = vpop.f32.mrf.mxu0
  %v1020 = vadd.f32 %v887, %v1019
  %1021 = vmatmul.bf16.gmra.mxu0 %v657
  %v1022 = vpop.f32.mrf.mxu0
  %v1023 = vadd.f32 %v890, %v1022
  %v1024 = vpop.f32.mrf.mxu0
  %v1025 = vadd.f32 %v892, %v1024
  %1026 = vmatmul.bf16.gmra.mxu0 %v660
  %v1027 = vpop.f32.mrf.mxu0
  %v1028 = vadd.f32 %v895, %v1027
  %v1029 = vpop.f32.mrf.mxu0
  %v1030 = vadd.f32 %v897, %v1029
  %1031 = vmatmul.bf16.gmra.mxu0 %v663
  %v1032 = vpop.f32.mrf.mxu0
  %v1033 = vadd.f32 %v900, %v1032
  %v1034 = vpop.f32.mrf.mxu0
  %v1035 = vadd.f32 %v902, %v1034
  %1036 = vmatmul.bf16.gmra.mxu0 %v666
  %v1037 = vpop.f32.mrf.mxu0
  %v1038 = vadd.f32 %v905, %v1037
  %v1039 = vpop.f32.mrf.mxu0
  %v1040 = vadd.f32 %v907, %v1039
  %1041 = vmatmul.bf16.gmra.mxu0 %v669
  %v1042 = vpop.f32.mrf.mxu0
  %v1043 = vadd.f32 %v910, %v1042
  %v1044 = vpop.f32.mrf.mxu0
  %v1045 = vadd.f32 %v912, %v1044
  %1046 = vmatmul.bf16.gmra.mxu0 %v672
  %v1047 = vpop.f32.mrf.mxu0
  %v1048 = vadd.f32 %v915, %v1047
  %v1049 = vpop.f32.mrf.mxu0
  %v1050 = vadd.f32 %v917, %v1049
  %1051 = vmatmul.bf16.gmra.mxu0 %v675
  %v1052 = vpop.f32.mrf.mxu0
  %v1053 = vadd.f32 %v920, %v1052
  %v1054 = vpop.f32.mrf.mxu0
  %v1055 = vadd.f32 %v922, %v1054
  %1056 = vmatmul.bf16.gmra.mxu0 %v678
  %v1057 = vpop.f32.mrf.mxu0
  %v1058 = vadd.f32 %v925, %v1057
  %v1059 = vpop.f32.mrf.mxu0
  %v1060 = vadd.f32 %v927, %v1059
  %1061 = vmatmul.bf16.gmra.mxu0 %v681
  %v1062 = vpop.f32.mrf.mxu0
  %v1063 = vadd.f32 %v930, %v1062
  %v1064 = vpop.f32.mrf.mxu0
  %v1065 = vadd.f32 %v932, %v1064
  %1066 = vmatmul.bf16.gmra.mxu0 %v684
  %v1067 = vpop.f32.mrf.mxu0
  %v1068 = vadd.f32 %v935, %v1067
  %v1069 = vpop.f32.mrf.mxu0
  %v1070 = vadd.f32 %v937, %v1069
  %1071 = vmatmul.bf16.gmra.mxu0 %v687
  %v1072 = vpop.f32.mrf.mxu0
  %v1073 = vadd.f32 %v940, %v1072
  %v1074 = vpop.f32.mrf.mxu0
  %v1075 = vadd.f32 %v942, %v1074
  %1076 = vmatmul.bf16.gmra.mxu0 %v690
  %v1077 = vpop.f32.mrf.mxu0
  %v1078 = vadd.f32 %v945, %v1077
  %v1079 = vpop.f32.mrf.mxu0
  %v1080 = vadd.f32 %v947, %v1079
  %1081 = vmatmul.bf16.gmra.mxu0 %v693
  %v1082 = vpop.f32.mrf.mxu0
  %v1083 = vadd.f32 %v950, %v1082
  %v1084 = vpop.f32.mrf.mxu0
  %v1085 = vadd.f32 %v952, %v1084
  %1086 = vmatmul.bf16.gmra.mxu0 %v696
  %v1087 = vpop.f32.mrf.mxu0
  %v1088 = vadd.f32 %v955, %v1087
  %v1089 = vpop.f32.mrf.mxu0
  %v1090 = vadd.f32 %v957, %v1089
  %1091 = vmatmul.bf16.gmra.mxu0 %v699
  %v1092 = vpop.f32.mrf.mxu0
  %v1093 = vadd.f32 %v960, %v1092
  %v1094 = vpop.f32.mrf.mxu0
  %v1095 = vadd.f32 %v962, %v1094
  %1096 = vmatmul.bf16.gmra.mxu0 %v702
  %v1097 = vpop.f32.mrf.mxu0
  %v1098 = vadd.f32 %v965, %v1097
  %v1099 = vpop.f32.mrf.mxu0
  %v1100 = vadd.f32 %v967, %v1099
  %1101 = vmatmul.bf16.gmra.mxu0 %v705
  %v1102 = vpop.f32.mrf.mxu0
  %v1103 = vadd.f32 %v970, %v1102
  %v1104 = vpop.f32.mrf.mxu0
  %1105 = vdwg.mxu0
  %v1106 = vmax.f32 %v983, 0.0
  %v1107 = vmax.f32 %v985, 0.0
  %v1108 = vmax.f32 %v988, 0.0
  %v1109 = vmax.f32 %v990, 0.0
  %v1110 = vmax.f32 %v993, 0.0
  %v1111 = vmax.f32 %v995, 0.0
  %v1112 = vmax.f32 %v998, 0.0
  %v1113 = vmax.f32 %v1000, 0.0
  %v1114 = vmax.f32 %v1003, 0.0
  %v1115 = vmax.f32 %v1005, 0.0
  %v1116 = vmax.f32 %v1008, 0.0
  %v1117 = vmax.f32 %v1010, 0.0
  %v1118 = vmax.f32 %v1013, 0.0
  %v1119 = vmax.f32 %v1015, 0.0
  %v1120 = vmax.f32 %v1018, 0.0
  %v1121 = vmax.f32 %v1020, 0.0
  %v1122 = vmax.f32 %v1023, 0.0
  %v1123 = vmax.f32 %v1025, 0.0
  %v1124 = vmax.f32 %v1028, 0.0
  %v1125 = vmax.f32 %v1030, 0.0
  %v1126 = vmax.f32 %v1033, 0.0
  %v1127 = vmax.f32 %v1035, 0.0
  %v1128 = vmax.f32 %v1038, 0.0
  %v1129 = vmax.f32 %v1040, 0.0
  %v1130 = vmax.f32 %v1043, 0.0
  %v1131 = vmax.f32 %v1045, 0.0
  %v1132 = vmax.f32 %v1048, 0.0
  %v1133 = vmax.f32 %v1050, 0.0
  %v1134 = vmax.f32 %v1053, 0.0
  %v1135 = vmax.f32 %v1055, 0.0
  %v1136 = vmax.f32 %v1058, 0.0
  %v1137 = vmax.f32 %v1060, 0.0
  %v1138 = vmax.f32 %v1063, 0.0
  %v1139 = vmax.f32 %v1065, 0.0
  %v1140 = vmax.f32 %v1068, 0.0
  %v1141 = vmax.f32 %v1070, 0.0
  %v1142 = vmax.f32 %v1073, 0.0
  %v1143 = vmax.f32 %v1075, 0.0
  %v1144 = vmax.f32 %v1078, 0.0
  %v1145 = vmax.f32 %v1080, 0.0
  %v1146 = vmax.f32 %v1083, 0.0
  %v1147 = vmax.f32 %v1085, 0.0
  %v1148 = vmax.f32 %v1088, 0.0
  %v1149 = vmax.f32 %v1090, 0.0
  %v1150 = vmax.f32 %v1093, 0.0
  %v1151 = vmax.f32 %v1095, 0.0
  %v1152 = vmax.f32 %v1098, 0.0
  %v1153 = vmax.f32 %v1100, 0.0
  %v1154 = vmax.f32 %v1103, 0.0
  %v1155 = vpack.c.bf16 %v1106, %v1106
  %v1156 = vpack.c.bf16 %v1107, %v1107
  %v1157 = vpack.c.bf16 %v1108, %v1108
  %v1158 = vpack.c.bf16 %v1109, %v1109
  %v1159 = vpack.c.bf16 %v1110, %v1110
  %v1160 = vpack.c.bf16 %v1111, %v1111
  %v1161 = vpack.c.bf16 %v1112, %v1112
  %v1162 = vpack.c.bf16 %v1113, %v1113
  %v1163 = vpack.c.bf16 %v1114, %v1114
  %v1164 = vpack.c.bf16 %v1115, %v1115
  %v1165 = vpack.c.bf16 %v1116, %v1116
  %v1166 = vpack.c.bf16 %v1117, %v1117
  %v1167 = vpack.c.bf16 %v1118, %v1118
  %v1168 = vpack.c.bf16 %v1119, %v1119
  %v1169 = vpack.c.bf16 %v1120, %v1120
  %v1170 = vpack.c.bf16 %v1121, %v1121
  %v1171 = vpack.c.bf16 %v1122, %v1122
  %v1172 = vpack.c.bf16 %v1123, %v1123
  %v1173 = vpack.c.bf16 %v1124, %v1124
  %v1174 = vpack.c.bf16 %v1125, %v1125
  %v1175 = vpack.c.bf16 %v1126, %v1126
  %v1176 = vpack.c.bf16 %v1127, %v1127
  %v1177 = vpack.c.bf16 %v1128, %v1128
  %v1178 = vpack.c.bf16 %v1129, %v1129
  %v1179 = vpack.c.bf16 %v1130, %v1130
  %v1180 = vpack.c.bf16 %v1131, %v1131
  %v1181 = vpack.c.bf16 %v1132, %v1132
  %v1182 = vpack.c.bf16 %v1133, %v1133
  %v1183 = vpack.c.bf16 %v1134, %v1134
  %v1184 = vpack.c.bf16 %v1135, %v1135
  %v1185 = vpack.c.bf16 %v1136, %v1136
  %v1186 = vpack.c.bf16 %v1137, %v1137
  %v1187 = vpack.c.bf16 %v1138, %v1138
  %v1188 = vpack.c.bf16 %v1139, %v1139
  %v1189 = vpack.c.bf16 %v1140, %v1140
  %v1190 = vpack.c.bf16 %v1141, %v1141
  %v1191 = vpack.c.bf16 %v1142, %v1142
  %v1192 = vpack.c.bf16 %v1143, %v1143
  %v1193 = vpack.c.bf16 %v1144, %v1144
  %v1194 = vpack.c.bf16 %v1145, %v1145
  %v1195 = vpack.c.bf16 %v1146, %v1146
  %v1196 = vpack.c.bf16 %v1147, %v1147
  %v1197 = vpack.c.bf16 %v1148, %v1148
  %v1198 = vpack.c.bf16 %v1149, %v1149
  %v1199 = vpack.c.bf16 %v1150, %v1150
  %v1200 = vpack.c.bf16 %v1151, %v1151
  %v1201 = vpack.c.bf16 %v1152, %v1152
  %v1202 = vpack.c.bf16 %v1153, %v1153
  %v1203 = vpack.c.bf16 %v1154, %v1154
  %vm1204 = vcmask 257024
  %1205 = vst.msk [vmem:[%s3] sm:$0xf] %vm1204, %v1155
  %1206 = vst.msk [vmem:[%s3 + $0x4] sm:$0xf] %vm1204, %v1156
  %1207 = vst.msk [vmem:[%s3 + $0x8] sm:$0xf] %vm1204, %v1157
  %1208 = vst.msk [vmem:[%s3 + $0xc] sm:$0xf] %vm1204, %v1158
  %1209 = vst.msk [vmem:[%s3 + $0x10] sm:$0xf] %vm1204, %v1159
  %1210 = vst.msk [vmem:[%s3 + $0x14] sm:$0xf] %vm1204, %v1160
  %1211 = vst.msk [vmem:[%s3 + $0x18] sm:$0xf] %vm1204, %v1161
  %1212 = vst.msk [vmem:[%s3 + $0x1c] sm:$0xf] %vm1204, %v1162
  %1213 = vst.msk [vmem:[%s3 + $0x20] sm:$0xf] %vm1204, %v1163
  %1214 = vst.msk [vmem:[%s3 + $0x24] sm:$0xf] %vm1204, %v1164
  %1215 = vst.msk [vmem:[%s3 + $0x28] sm:$0xf] %vm1204, %v1165
  %1216 = vst.msk [vmem:[%s3 + $0x2c] sm:$0xf] %vm1204, %v1166
  %1217 = vst.msk [vmem:[%s3 + $0x30] sm:$0xf] %vm1204, %v1167
  %1218 = vst.msk [vmem:[%s3 + $0x34] sm:$0xf] %vm1204, %v1168
  %1219 = vst.msk [vmem:[%s3 + $0x38] sm:$0xf] %vm1204, %v1169
  %1220 = vst.msk [vmem:[%s3 + $0x3c] sm:$0xf] %vm1204, %v1170
  %1221 = vst.msk [vmem:[%s3 + $0x40] sm:$0xf] %vm1204, %v1171
  %1222 = vst.msk [vmem:[%s3 + $0x44] sm:$0xf] %vm1204, %v1172
  %1223 = vst.msk [vmem:[%s3 + $0x48] sm:$0xf] %vm1204, %v1173
  %1224 = vst.msk [vmem:[%s3 + $0x4c] sm:$0xf] %vm1204, %v1174
  %1225 = vst.msk [vmem:[%s3 + $0x50] sm:$0xf] %vm1204, %v1175
  %1226 = vst.msk [vmem:[%s3 + $0x54] sm:$0xf] %vm1204, %v1176
  %1227 = vst.msk [vmem:[%s3 + $0x58] sm:$0xf] %vm1204, %v1177
  %1228 = vst.msk [vmem:[%s3 + $0x5c] sm:$0xf] %vm1204, %v1178
  %1229 = vst.msk [vmem:[%s3 + $0x60] sm:$0xf] %vm1204, %v1179
  %1230 = vst.msk [vmem:[%s3 + $0x64] sm:$0xf] %vm1204, %v1180
  %1231 = vst.msk [vmem:[%s3 + $0x68] sm:$0xf] %vm1204, %v1181
  %1232 = vst.msk [vmem:[%s3 + $0x6c] sm:$0xf] %vm1204, %v1182
  %1233 = vst.msk [vmem:[%s3 + $0x70] sm:$0xf] %vm1204, %v1183
  %1234 = vst.msk [vmem:[%s3 + $0x74] sm:$0xf] %vm1204, %v1184
  %1235 = vst.msk [vmem:[%s3 + $0x78] sm:$0xf] %vm1204, %v1185
  %1236 = vst.msk [vmem:[%s3 + $0x7c] sm:$0xf] %vm1204, %v1186
  %1237 = vst.msk [vmem:[%s3 + $0x80] sm:$0xf] %vm1204, %v1187
  %1238 = vst.msk [vmem:[%s3 + $0x84] sm:$0xf] %vm1204, %v1188
  %1239 = vst.msk [vmem:[%s3 + $0x88] sm:$0xf] %vm1204, %v1189
  %1240 = vst.msk [vmem:[%s3 + $0x8c] sm:$0xf] %vm1204, %v1190
  %1241 = vst.msk [vmem:[%s3 + $0x90] sm:$0xf] %vm1204, %v1191
  %1242 = vst.msk [vmem:[%s3 + $0x94] sm:$0xf] %vm1204, %v1192
  %1243 = vst.msk [vmem:[%s3 + $0x98] sm:$0xf] %vm1204, %v1193
  %1244 = vst.msk [vmem:[%s3 + $0x9c] sm:$0xf] %vm1204, %v1194
  %1245 = vst.msk [vmem:[%s3 + $0xa0] sm:$0xf] %vm1204, %v1195
  %1246 = vst.msk [vmem:[%s3 + $0xa4] sm:$0xf] %vm1204, %v1196
  %1247 = vst.msk [vmem:[%s3 + $0xa8] sm:$0xf] %vm1204, %v1197
  %1248 = vst.msk [vmem:[%s3 + $0xac] sm:$0xf] %vm1204, %v1198
  %1249 = vst.msk [vmem:[%s3 + $0xb0] sm:$0xf] %vm1204, %v1199
  %1250 = vst.msk [vmem:[%s3 + $0xb4] sm:$0xf] %vm1204, %v1200
  %1251 = vst.msk [vmem:[%s3 + $0xb8] sm:$0xf] %vm1204, %v1201
  %1252 = vst.msk [vmem:[%s3 + $0xbc] sm:$0xf] %vm1204, %v1202
  %1253 = vst.msk [vmem:[%s3 + $0xc0] sm:$0xf] %vm1204, %v1203
  // Predicated region
  $region14: #{resnet10_emnist_forward.24} parent=0 // pred_check
    _
  $region15: #{resnet10_emnist_forward.24} parent=0 // pred_check_branch
    %1255 = sbr.rel (0) target = $region17
  $region16: #{resnet10_emnist_forward.24} parent=0 // pred_region
    _
  $region17: #{resnet10_emnist_forward.24} parent=0 // pred_fallthru
    _
  // Predicated region
  $region18: #{resnet10_emnist_forward.24} parent=0 // pred_check
    _
  $region19: #{resnet10_emnist_forward.24} parent=0 // pred_check_branch
    %1257 = sbr.rel (0) target = $region21
  $region20: #{resnet10_emnist_forward.24} parent=0 // pred_region
    _
  $region21: #{resnet10_emnist_forward.24} parent=0 // pred_fallthru
    _

// kernel: resnet10_emnist_forward.26
$region0: #{resnet10_emnist_forward.26}
  #allocation0 [shape = 'u32[]', space=smem, size = 0x4, offset = 0x4, fixed_abs, tag = 'smem constant byte address 0x4 - core index']
  #allocation1 [shape = 'u32[72,128]{1,0:T(1,128)}', space=vmem, size = 0x9000, scoped, tag = 'internal scratch']
  %s0 = inlined_call_operand.vmem [shape: bf16[98,288], index: 0, kind: input, shape index: {}]
  %s1 = inlined_call_operand.vmem [shape: bf16[288,64], index: 1, kind: input, shape index: {}]
  %s2 = inlined_call_operand.vmem [shape: f32[1,64], index: 2, kind: input, shape index: {}]
  %s3 = inlined_call_operand.vmem [shape: bf16[98,64], index: 3, kind: output, shape index: {}]
  %s4 = sld [smem:[#allocation0]]
  $region22: #{resnet10_emnist_forward.26} parent=0
    _
  %s6 = ssub.s32 1, %s4
  %s7 = scalar_select 0, %s6, %s4
  // Predicated region
  $region2: #{resnet10_emnist_forward.26} parent=0 // pred_check
    _
  $region3: #{resnet10_emnist_forward.26} parent=0 // pred_check_branch
    %9 = sbr.rel (0) target = $region5
  $region4: #{resnet10_emnist_forward.26} parent=0 // pred_region
    _
  $region5: #{resnet10_emnist_forward.26} parent=0 // pred_fallthru
    _
  // Predicated region
  $region6: #{resnet10_emnist_forward.26} parent=0 // pred_check
    _
  $region7: #{resnet10_emnist_forward.26} parent=0 // pred_check_branch
    %11 = sbr.rel (0) target = $region9
  $region8: #{resnet10_emnist_forward.26} parent=0 // pred_region
    _
  $region9: #{resnet10_emnist_forward.26} parent=0 // pred_fallthru
    _
  // Predicated region
  $region10: #{resnet10_emnist_forward.26} parent=0 // pred_check
    _
  $region11: #{resnet10_emnist_forward.26} parent=0 // pred_check_branch
    %13 = sbr.rel (0) target = $region13
  $region12: #{resnet10_emnist_forward.26} parent=0 // pred_region
    _
  $region13: #{resnet10_emnist_forward.26} parent=0 // pred_fallthru
    _
  %v15 = vld [vmem:[%s0] sm:$0xff]
  %v16 = vld [vmem:[%s0 + $0x8] sm:$0xf]
  %v17 = vld [vmem:[%s0 + $0xc] sm:$0xff]
  %v18 = vld [vmem:[%s0 + $0x14] sm:$0xf]
  %v19 = vld [vmem:[%s0 + $0x18] sm:$0xff]
  %v20 = vld [vmem:[%s0 + $0x20] sm:$0xf]
  %v21 = vld [vmem:[%s0 + $0x24] sm:$0xff]
  %v22 = vld [vmem:[%s0 + $0x2c] sm:$0xf]
  %v23 = vld [vmem:[%s0 + $0x30] sm:$0xff]
  %v24 = vld [vmem:[%s0 + $0x38] sm:$0xf]
  %v25 = vld [vmem:[%s0 + $0x3c] sm:$0xff]
  %v26 = vld [vmem:[%s0 + $0x44] sm:$0xf]
  %v27 = vld [vmem:[%s0 + $0x48] sm:$0xff]
  %v28 = vld [vmem:[%s0 + $0x50] sm:$0xf]
  %v29 = vld [vmem:[%s0 + $0x54] sm:$0xff]
  %v30 = vld [vmem:[%s0 + $0x5c] sm:$0xf]
  %v31 = vld [vmem:[%s0 + $0x60] sm:$0xff]
  %v32 = vld [vmem:[%s0 + $0x68] sm:$0xf]
  %v33 = vld [vmem:[%s0 + $0x6c] sm:$0xff]
  %v34 = vld [vmem:[%s0 + $0x74] sm:$0xf]
  %v35 = vld [vmem:[%s0 + $0x78] sm:$0xff]
  %v36 = vld [vmem:[%s0 + $0x80] sm:$0xf]
  %v37 = vld [vmem:[%s0 + $0x84] sm:$0xff]
  %v38 = vld [vmem:[%s0 + $0x8c] sm:$0xf]
  %v39 = vld [vmem:[%s0 + $0x90] sm:$0x11]
  %v40 = vld [vmem:[%s0 + $0x98] sm:$0x1]
  %v41 = vld [vmem:[%s1] sm:$0xf]
  %v42 = vld [vmem:[%s1 + $0x4] sm:$0xf]
  %v43 = vld [vmem:[%s1 + $0x8] sm:$0xf]
  %v44 = vld [vmem:[%s1 + $0xc] sm:$0xf]
  %v45 = vld [vmem:[%s1 + $0x10] sm:$0xf]
  %v46 = vld [vmem:[%s1 + $0x14] sm:$0xf]
  %v47 = vld [vmem:[%s1 + $0x18] sm:$0xf]
  %v48 = vld [vmem:[%s1 + $0x1c] sm:$0xf]
  %v49 = vld [vmem:[%s1 + $0x20] sm:$0xf]
  %v50 = vld [vmem:[%s1 + $0x24] sm:$0xf]
  %v51 = vld [vmem:[%s1 + $0x28] sm:$0xf]
  %v52 = vld [vmem:[%s1 + $0x2c] sm:$0xf]
  %v53 = vld [vmem:[%s1 + $0x30] sm:$0xf]
  %v54 = vld [vmem:[%s1 + $0x34] sm:$0xf]
  %v55 = vld [vmem:[%s1 + $0x38] sm:$0xf]
  %v56 = vld [vmem:[%s1 + $0x3c] sm:$0xf]
  %v57 = vld [vmem:[%s1 + $0x40] sm:$0xf]
  %v58 = vld [vmem:[%s1 + $0x44] sm:$0xf]
  %v59 = vld [vmem:[%s1 + $0x48] sm:$0xf]
  %v60 = vld [vmem:[%s1 + $0x4c] sm:$0xf]
  %v61 = vld [vmem:[%s1 + $0x50] sm:$0xf]
  %v62 = vld [vmem:[%s1 + $0x54] sm:$0xf]
  %v63 = vld [vmem:[%s1 + $0x58] sm:$0xf]
  %v64 = vld [vmem:[%s1 + $0x5c] sm:$0xf]
  %v65 = vld [vmem:[%s1 + $0x60] sm:$0xf]
  %v66 = vld [vmem:[%s1 + $0x64] sm:$0xf]
  %v67 = vld [vmem:[%s1 + $0x68] sm:$0xf]
  %v68 = vld [vmem:[%s1 + $0x6c] sm:$0xf]
  %v69 = vld [vmem:[%s1 + $0x70] sm:$0xf]
  %v70 = vld [vmem:[%s1 + $0x74] sm:$0xf]
  %v71 = vld [vmem:[%s1 + $0x78] sm:$0xf]
  %v72 = vld [vmem:[%s1 + $0x7c] sm:$0xf]
  %v73 = vld [vmem:[%s1 + $0x80] sm:$0xf]
  %v74 = vld [vmem:[%s1 + $0x84] sm:$0xf]
  %v75 = vld [vmem:[%s1 + $0x88] sm:$0xf]
  %v76 = vld [vmem:[%s1 + $0x8c] sm:$0xf]
  %v77 = vld [vmem:[%s2] sm:$0x1]
  %v79 = vperm.slane %v77, 0
  %v107 = vunpack.c.l.b16 %v15
  %v108 = vunpack.c.h.b16 %v15
  %v109 = vunpack.c.l.b16 %v16
  %v110 = vunpack.c.l.b16 %v17
  %v111 = vunpack.c.h.b16 %v17
  %v112 = vunpack.c.l.b16 %v18
  %v113 = vunpack.c.l.b16 %v19
  %v114 = vunpack.c.h.b16 %v19
  %v115 = vunpack.c.l.b16 %v20
  %v116 = vunpack.c.l.b16 %v21
  %v117 = vunpack.c.h.b16 %v21
  %v118 = vunpack.c.l.b16 %v22
  %v119 = vunpack.c.l.b16 %v23
  %v120 = vunpack.c.h.b16 %v23
  %v121 = vunpack.c.l.b16 %v24
  %v122 = vunpack.c.l.b16 %v25
  %v123 = vunpack.c.h.b16 %v25
  %v124 = vunpack.c.l.b16 %v26
  %v125 = vunpack.c.l.b16 %v27
  %v126 = vunpack.c.h.b16 %v27
  %v127 = vunpack.c.l.b16 %v28
  %v128 = vunpack.c.l.b16 %v29
  %v129 = vunpack.c.h.b16 %v29
  %v130 = vunpack.c.l.b16 %v30
  %v131 = vunpack.c.l.b16 %v31
  %v132 = vunpack.c.h.b16 %v31
  %v133 = vunpack.c.l.b16 %v32
  %v134 = vunpack.c.l.b16 %v33
  %v135 = vunpack.c.h.b16 %v33
  %v136 = vunpack.c.l.b16 %v34
  %v137 = vunpack.c.l.b16 %v35
  %v138 = vunpack.c.h.b16 %v35
  %v139 = vunpack.c.l.b16 %v36
  %v140 = vunpack.c.l.b16 %v37
  %v141 = vunpack.c.h.b16 %v37
  %v142 = vunpack.c.l.b16 %v38
  %v143 = vunpack.c.l.b16 %v39
  %v144 = vunpack.c.h.b16 %v39
  %v145 = vunpack.c.l.b16 %v40
  %v146 = vpack.c.b16 %v110, %v107
  %v147 = vpack.c.b16 %v111, %v108
  %v148 = vpack.c.b16 %v112, %v109
  %v149 = vpack.c.b16 %v116, %v113
  %v150 = vpack.c.b16 %v117, %v114
  %v151 = vpack.c.b16 %v118, %v115
  %v152 = vpack.c.b16 %v122, %v119
  %v153 = vpack.c.b16 %v123, %v120
  %v154 = vpack.c.b16 %v124, %v121
  %v155 = vpack.c.b16 %v128, %v125
  %v156 = vpack.c.b16 %v129, %v126
  %v157 = vpack.c.b16 %v130, %v127
  %v158 = vpack.c.b16 %v134, %v131
  %v159 = vpack.c.b16 %v135, %v132
  %v160 = vpack.c.b16 %v136, %v133
  %v161 = vpack.c.b16 %v140, %v137
  %v162 = vpack.c.b16 %v141, %v138
  %v163 = vpack.c.b16 %v142, %v139
  %v164 = vpack.c.b16 %v143, %v143
  %v165 = vpack.c.b16 %v144, %v144
  %v166 = vpack.c.b16 %v145, %v145
  %v217 = vunpack.c.l.b16 %v41
  %v218 = vunpack.c.l.b16 %v42
  %v219 = vunpack.c.l.b16 %v43
  %v220 = vunpack.c.l.b16 %v44
  %v221 = vunpack.c.l.b16 %v45
  %v222 = vunpack.c.l.b16 %v46
  %v223 = vunpack.c.l.b16 %v47
  %v224 = vunpack.c.l.b16 %v48
  %v225 = vunpack.c.l.b16 %v49
  %v226 = vunpack.c.l.b16 %v50
  %v227 = vunpack.c.l.b16 %v51
  %v228 = vunpack.c.l.b16 %v52
  %v229 = vunpack.c.l.b16 %v53
  %v230 = vunpack.c.l.b16 %v54
  %v231 = vunpack.c.l.b16 %v55
  %v232 = vunpack.c.l.b16 %v56
  %v233 = vunpack.c.l.b16 %v57
  %v234 = vunpack.c.l.b16 %v58
  %v235 = vunpack.c.l.b16 %v59
  %v236 = vunpack.c.l.b16 %v60
  %v237 = vunpack.c.l.b16 %v61
  %v238 = vunpack.c.l.b16 %v62
  %v239 = vunpack.c.l.b16 %v63
  %v240 = vunpack.c.l.b16 %v64
  %v241 = vunpack.c.l.b16 %v65
  %v242 = vunpack.c.l.b16 %v66
  %v243 = vunpack.c.l.b16 %v67
  %v244 = vunpack.c.l.b16 %v68
  %v245 = vunpack.c.l.b16 %v69
  %v246 = vunpack.c.l.b16 %v70
  %v247 = vunpack.c.l.b16 %v71
  %v248 = vunpack.c.l.b16 %v72
  %v249 = vunpack.c.l.b16 %v73
  %v250 = vunpack.c.l.b16 %v74
  %v251 = vunpack.c.l.b16 %v75
  %v252 = vunpack.c.l.b16 %v76
  %v253 = vpack.c.b16 %v218, %v217
  %v254 = vpack.c.b16 %v220, %v219
  %v255 = vpack.c.b16 %v222, %v221
  %v256 = vpack.c.b16 %v224, %v223
  %v257 = vpack.c.b16 %v226, %v225
  %v258 = vpack.c.b16 %v228, %v227
  %v259 = vpack.c.b16 %v230, %v229
  %v260 = vpack.c.b16 %v232, %v231
  %v261 = vpack.c.b16 %v234, %v233
  %v262 = vpack.c.b16 %v236, %v235
  %v263 = vpack.c.b16 %v238, %v237
  %v264 = vpack.c.b16 %v240, %v239
  %v265 = vpack.c.b16 %v242, %v241
  %v266 = vpack.c.b16 %v244, %v243
  %v267 = vpack.c.b16 %v246, %v245
  %v268 = vpack.c.b16 %v248, %v247
  %v269 = vpack.c.b16 %v250, %v249
  %v270 = vpack.c.b16 %v252, %v251
  %vm289 = vcmask 261120
  %v291 = vsel %vm289, %v148, 0
  %v294 = vsel %vm289, %v151, 0
  %v297 = vsel %vm289, %v154, 0
  %v300 = vsel %vm289, %v157, 0
  %v303 = vsel %vm289, %v160, 0
  %v306 = vsel %vm289, %v163, 0
  %v309 = vsel %vm289, %v166, 0
  %311 = vmatpush.bf16.msra.mxu0 %v260
  %312 = vmatpush.bf16.msra.mxu0 %v259
  %313 = vmatpush.bf16.msra.mxu0 %v258
  %314 = vmatpush.bf16.msra.mxu0 %v257
  %315 = vmatpush.bf16.msra.mxu0 %v256
  %316 = vmatpush.bf16.msra.mxu0 %v255
  %317 = vmatpush.bf16.msra.mxu0 %v254
  %318 = vmatpush.bf16.msra.mxu0 %v253
  %319 = vmatmul.bf16.gmra.mxu0 %v146
  %v320 = vpop.f32.mrf.mxu0
  %v321 = vadd.f32 %v79, %v320
  %v322 = vpop.f32.mrf.mxu0
  %v323 = vadd.f32 %v79, %v322
  %324 = vmatmul.bf16.gmra.mxu0 %v149
  %v325 = vpop.f32.mrf.mxu0
  %v326 = vadd.f32 %v79, %v325
  %v327 = vpop.f32.mrf.mxu0
  %v328 = vadd.f32 %v79, %v327
  %329 = vmatmul.bf16.gmra.mxu0 %v152
  %v330 = vpop.f32.mrf.mxu0
  %v331 = vadd.f32 %v79, %v330
  %v332 = vpop.f32.mrf.mxu0
  %v333 = vadd.f32 %v79, %v332
  %334 = vmatmul.bf16.gmra.mxu0 %v155
  %v335 = vpop.f32.mrf.mxu0
  %v336 = vadd.f32 %v79, %v335
  %v337 = vpop.f32.mrf.mxu0
  %v338 = vadd.f32 %v79, %v337
  %339 = vmatmul.bf16.gmra.mxu0 %v158
  %v340 = vpop.f32.mrf.mxu0
  %v341 = vadd.f32 %v79, %v340
  %v342 = vpop.f32.mrf.mxu0
  %v343 = vadd.f32 %v79, %v342
  %344 = vmatmul.bf16.gmra.mxu0 %v161
  %v345 = vpop.f32.mrf.mxu0
  %v346 = vadd.f32 %v79, %v345
  %v347 = vpop.f32.mrf.mxu0
  %v348 = vadd.f32 %v79, %v347
  %349 = vmatmul.bf16.gmra.mxu0 %v164
  %v350 = vpop.f32.mrf.mxu0
  %v351 = vadd.f32 %v79, %v350
  %v352 = vpop.f32.mrf.mxu0
  %353 = vdwg.mxu0
  %354 = vmatpush.bf16.msra.mxu0 %v268
  %355 = vmatpush.bf16.msra.mxu0 %v267
  %356 = vmatpush.bf16.msra.mxu0 %v266
  %357 = vmatpush.bf16.msra.mxu0 %v265
  %358 = vmatpush.bf16.msra.mxu0 %v264
  %359 = vmatpush.bf16.msra.mxu0 %v263
  %360 = vmatpush.bf16.msra.mxu0 %v262
  %361 = vmatpush.bf16.msra.mxu0 %v261
  %362 = vmatmul.bf16.gmra.mxu0 %v147
  %v363 = vpop.f32.mrf.mxu0
  %v364 = vadd.f32 %v321, %v363
  %v365 = vpop.f32.mrf.mxu0
  %v366 = vadd.f32 %v323, %v365
  %367 = vmatmul.bf16.gmra.mxu0 %v150
  %v368 = vpop.f32.mrf.mxu0
  %v369 = vadd.f32 %v326, %v368
  %v370 = vpop.f32.mrf.mxu0
  %v371 = vadd.f32 %v328, %v370
  %372 = vmatmul.bf16.gmra.mxu0 %v153
  %v373 = vpop.f32.mrf.mxu0
  %v374 = vadd.f32 %v331, %v373
  %v375 = vpop.f32.mrf.mxu0
  %v376 = vadd.f32 %v333, %v375
  %377 = vmatmul.bf16.gmra.mxu0 %v156
  %v378 = vpop.f32.mrf.mxu0
  %v379 = vadd.f32 %v336, %v378
  %v380 = vpop.f32.mrf.mxu0
  %v381 = vadd.f32 %v338, %v380
  %382 = vmatmul.bf16.gmra.mxu0 %v159
  %v383 = vpop.f32.mrf.mxu0
  %v384 = vadd.f32 %v341, %v383
  %v385 = vpop.f32.mrf.mxu0
  %v386 = vadd.f32 %v343, %v385
  %387 = vmatmul.bf16.gmra.mxu0 %v162
  %v388 = vpop.f32.mrf.mxu0
  %v389 = vadd.f32 %v346, %v388
  %v390 = vpop.f32.mrf.mxu0
  %v391 = vadd.f32 %v348, %v390
  %392 = vmatmul.bf16.gmra.mxu0 %v165
  %v393 = vpop.f32.mrf.mxu0
  %v394 = vadd.f32 %v351, %v393
  %v395 = vpop.f32.mrf.mxu0
  %396 = vdwg.mxu0
  %397 = vmatpush.bf16.msra.mxu0 0
  %398 = vmatpush.bf16.msra.mxu0 0
  %399 = vmatpush.bf16.msra.mxu0 0
  %400 = vmatpush.bf16.msra.mxu0 0
  %401 = vmatpush.bf16.msra.mxu0 0
  %402 = vmatpush.bf16.msra.mxu0 0
  %403 = vmatpush.bf16.msra.mxu0 %v270
  %404 = vmatpush.bf16.msra.mxu0 %v269
  %405 = vmatmul.bf16.gmra.mxu0 %v291
  %v406 = vpop.f32.mrf.mxu0
  %v407 = vadd.f32 %v364, %v406
  %v408 = vpop.f32.mrf.mxu0
  %v409 = vadd.f32 %v366, %v408
  %410 = vmatmul.bf16.gmra.mxu0 %v294
  %v411 = vpop.f32.mrf.mxu0
  %v412 = vadd.f32 %v369, %v411
  %v413 = vpop.f32.mrf.mxu0
  %v414 = vadd.f32 %v371, %v413
  %415 = vmatmul.bf16.gmra.mxu0 %v297
  %v416 = vpop.f32.mrf.mxu0
  %v417 = vadd.f32 %v374, %v416
  %v418 = vpop.f32.mrf.mxu0
  %v419 = vadd.f32 %v376, %v418
  %420 = vmatmul.bf16.gmra.mxu0 %v300
  %v421 = vpop.f32.mrf.mxu0
  %v422 = vadd.f32 %v379, %v421
  %v423 = vpop.f32.mrf.mxu0
  %v424 = vadd.f32 %v381, %v423
  %425 = vmatmul.bf16.gmra.mxu0 %v303
  %v426 = vpop.f32.mrf.mxu0
  %v427 = vadd.f32 %v384, %v426
  %v428 = vpop.f32.mrf.mxu0
  %v429 = vadd.f32 %v386, %v428
  %430 = vmatmul.bf16.gmra.mxu0 %v306
  %v431 = vpop.f32.mrf.mxu0
  %v432 = vadd.f32 %v389, %v431
  %v433 = vpop.f32.mrf.mxu0
  %v434 = vadd.f32 %v391, %v433
  %435 = vmatmul.bf16.gmra.mxu0 %v309
  %v436 = vpop.f32.mrf.mxu0
  %v437 = vadd.f32 %v394, %v436
  %v438 = vpop.f32.mrf.mxu0
  %439 = vdwg.mxu0
  %v440 = vmax.f32 %v407, 0.0
  %v441 = vmax.f32 %v409, 0.0
  %v442 = vmax.f32 %v412, 0.0
  %v443 = vmax.f32 %v414, 0.0
  %v444 = vmax.f32 %v417, 0.0
  %v445 = vmax.f32 %v419, 0.0
  %v446 = vmax.f32 %v422, 0.0
  %v447 = vmax.f32 %v424, 0.0
  %v448 = vmax.f32 %v427, 0.0
  %v449 = vmax.f32 %v429, 0.0
  %v450 = vmax.f32 %v432, 0.0
  %v451 = vmax.f32 %v434, 0.0
  %v452 = vmax.f32 %v437, 0.0
  %v453 = vpack.c.bf16 %v440, %v440
  %v454 = vpack.c.bf16 %v441, %v441
  %v455 = vpack.c.bf16 %v442, %v442
  %v456 = vpack.c.bf16 %v443, %v443
  %v457 = vpack.c.bf16 %v444, %v444
  %v458 = vpack.c.bf16 %v445, %v445
  %v459 = vpack.c.bf16 %v446, %v446
  %v460 = vpack.c.bf16 %v447, %v447
  %v461 = vpack.c.bf16 %v448, %v448
  %v462 = vpack.c.bf16 %v449, %v449
  %v463 = vpack.c.bf16 %v450, %v450
  %v464 = vpack.c.bf16 %v451, %v451
  %v465 = vpack.c.bf16 %v452, %v452
  %vm466 = vcmask 519168
  %467 = vst.msk [vmem:[%s3] sm:$0xf] %vm466, %v453
  %468 = vst.msk [vmem:[%s3 + $0x4] sm:$0xf] %vm466, %v454
  %469 = vst.msk [vmem:[%s3 + $0x8] sm:$0xf] %vm466, %v455
  %470 = vst.msk [vmem:[%s3 + $0xc] sm:$0xf] %vm466, %v456
  %471 = vst.msk [vmem:[%s3 + $0x10] sm:$0xf] %vm466, %v457
  %472 = vst.msk [vmem:[%s3 + $0x14] sm:$0xf] %vm466, %v458
  %473 = vst.msk [vmem:[%s3 + $0x18] sm:$0xf] %vm466, %v459
  %474 = vst.msk [vmem:[%s3 + $0x1c] sm:$0xf] %vm466, %v460
  %475 = vst.msk [vmem:[%s3 + $0x20] sm:$0xf] %vm466, %v461
  %476 = vst.msk [vmem:[%s3 + $0x24] sm:$0xf] %vm466, %v462
  %477 = vst.msk [vmem:[%s3 + $0x28] sm:$0xf] %vm466, %v463
  %478 = vst.msk [vmem:[%s3 + $0x2c] sm:$0xf] %vm466, %v464
  %vm479 = vcmask 516096
  %480 = vst.msk [vmem:[%s3 + $0x30] sm:$0x1] %vm479, %v465
  // Predicated region
  $region14: #{resnet10_emnist_forward.26} parent=0 // pred_check
    _
  $region15: #{resnet10_emnist_forward.26} parent=0 // pred_check_branch
    %482 = sbr.rel (0) target = $region17
  $region16: #{resnet10_emnist_forward.26} parent=0 // pred_region
    _
  $region17: #{resnet10_emnist_forward.26} parent=0 // pred_fallthru
    _
  // Predicated region
  $region18: #{resnet10_emnist_forward.26} parent=0 // pred_check
    _
  $region19: #{resnet10_emnist_forward.26} parent=0 // pred_check_branch
    %484 = sbr.rel (0) target = $region21
  $region20: #{resnet10_emnist_forward.26} parent=0 // pred_region
    _
  $region21: #{resnet10_emnist_forward.26} parent=0 // pred_fallthru
    _

// kernel: resnet10_emnist_forward.27
$region0: #{resnet10_emnist_forward.27}
  #allocation0 [shape = 'u32[]', space=smem, size = 0x4, offset = 0x4, fixed_abs, tag = 'smem constant byte address 0x4 - core index']
  #allocation1 [shape = 'u32[72,128]{1,0:T(1,128)}', space=vmem, size = 0x9000, scoped, tag = 'internal scratch']
  %s0 = inlined_call_operand.vmem [shape: bf16[98,32], index: 0, kind: input, shape index: {}]
  %s1 = inlined_call_operand.vmem [shape: bf16[32,64], index: 1, kind: input, shape index: {}]
  %s2 = inlined_call_operand.vmem [shape: f32[1,64], index: 2, kind: input, shape index: {}]
  %s3 = inlined_call_operand.vmem [shape: bf16[98,64], index: 3, kind: output, shape index: {}]
  %s4 = sld [smem:[#allocation0]]
  $region22: #{resnet10_emnist_forward.27} parent=0
    _
  %s6 = ssub.s32 1, %s4
  %s7 = scalar_select 0, %s6, %s4
  // Predicated region
  $region2: #{resnet10_emnist_forward.27} parent=0 // pred_check
    _
  $region3: #{resnet10_emnist_forward.27} parent=0 // pred_check_branch
    %9 = sbr.rel (0) target = $region5
  $region4: #{resnet10_emnist_forward.27} parent=0 // pred_region
    _
  $region5: #{resnet10_emnist_forward.27} parent=0 // pred_fallthru
    _
  // Predicated region
  $region6: #{resnet10_emnist_forward.27} parent=0 // pred_check
    _
  $region7: #{resnet10_emnist_forward.27} parent=0 // pred_check_branch
    %11 = sbr.rel (0) target = $region9
  $region8: #{resnet10_emnist_forward.27} parent=0 // pred_region
    _
  $region9: #{resnet10_emnist_forward.27} parent=0 // pred_fallthru
    _
  // Predicated region
  $region10: #{resnet10_emnist_forward.27} parent=0 // pred_check
    _
  $region11: #{resnet10_emnist_forward.27} parent=0 // pred_check_branch
    %13 = sbr.rel (0) target = $region13
  $region12: #{resnet10_emnist_forward.27} parent=0 // pred_region
    _
  $region13: #{resnet10_emnist_forward.27} parent=0 // pred_fallthru
    _
  %v15 = vld [vmem:[%s0] sm:$0xf]
  %v16 = vld [vmem:[%s0 + $0x4] sm:$0xf]
  %v17 = vld [vmem:[%s0 + $0x8] sm:$0xf]
  %v18 = vld [vmem:[%s0 + $0xc] sm:$0xf]
  %v19 = vld [vmem:[%s0 + $0x10] sm:$0xf]
  %v20 = vld [vmem:[%s0 + $0x14] sm:$0xf]
  %v21 = vld [vmem:[%s0 + $0x18] sm:$0xf]
  %v22 = vld [vmem:[%s0 + $0x1c] sm:$0xf]
  %v23 = vld [vmem:[%s0 + $0x20] sm:$0xf]
  %v24 = vld [vmem:[%s0 + $0x24] sm:$0xf]
  %v25 = vld [vmem:[%s0 + $0x28] sm:$0xf]
  %v26 = vld [vmem:[%s0 + $0x2c] sm:$0xf]
  %v27 = vld [vmem:[%s0 + $0x30] sm:$0x1]
  %v28 = vld [vmem:[%s1] sm:$0xf]
  %v29 = vld [vmem:[%s1 + $0x4] sm:$0xf]
  %v30 = vld [vmem:[%s1 + $0x8] sm:$0xf]
  %v31 = vld [vmem:[%s1 + $0xc] sm:$0xf]
  %v32 = vld [vmem:[%s2] sm:$0x1]
  %v34 = vperm.slane %v32, 0
  %v49 = vunpack.c.l.b16 %v15
  %v50 = vunpack.c.l.b16 %v16
  %v51 = vunpack.c.l.b16 %v17
  %v52 = vunpack.c.l.b16 %v18
  %v53 = vunpack.c.l.b16 %v19
  %v54 = vunpack.c.l.b16 %v20
  %v55 = vunpack.c.l.b16 %v21
  %v56 = vunpack.c.l.b16 %v22
  %v57 = vunpack.c.l.b16 %v23
  %v58 = vunpack.c.l.b16 %v24
  %v59 = vunpack.c.l.b16 %v25
  %v60 = vunpack.c.l.b16 %v26
  %v61 = vunpack.c.l.b16 %v27
  %v62 = vpack.c.b16 %v50, %v49
  %v63 = vpack.c.b16 %v52, %v51
  %v64 = vpack.c.b16 %v54, %v53
  %v65 = vpack.c.b16 %v56, %v55
  %v66 = vpack.c.b16 %v58, %v57
  %v67 = vpack.c.b16 %v60, %v59
  %v68 = vpack.c.b16 %v61, %v61
  %v73 = vunpack.c.l.b16 %v28
  %v74 = vunpack.c.l.b16 %v29
  %v75 = vunpack.c.l.b16 %v30
  %v76 = vunpack.c.l.b16 %v31
  %v77 = vpack.c.b16 %v74, %v73
  %v78 = vpack.c.b16 %v76, %v75
  %vm81 = vcmask 261120
  %v83 = vsel %vm81, %v62, 0
  %v86 = vsel %vm81, %v63, 0
  %v89 = vsel %vm81, %v64, 0
  %v92 = vsel %vm81, %v65, 0
  %v95 = vsel %vm81, %v66, 0
  %v98 = vsel %vm81, %v67, 0
  %v101 = vsel %vm81, %v68, 0
  %103 = vmatpush.bf16.msra.mxu0 0
  %104 = vmatpush.bf16.msra.mxu0 0
  %105 = vmatpush.bf16.msra.mxu0 0
  %106 = vmatpush.bf16.msra.mxu0 0
  %107 = vmatpush.bf16.msra.mxu0 0
  %108 = vmatpush.bf16.msra.mxu0 0
  %109 = vmatpush.bf16.msra.mxu0 %v78
  %110 = vmatpush.bf16.msra.mxu0 %v77
  %111 = vmatmul.bf16.gmra.mxu0 %v83
  %v112 = vpop.f32.mrf.mxu0
  %v113 = vadd.f32 %v34, %v112
  %v114 = vpop.f32.mrf.mxu0
  %v115 = vadd.f32 %v34, %v114
  %116 = vmatmul.bf16.gmra.mxu0 %v86
  %v117 = vpop.f32.mrf.mxu0
  %v118 = vadd.f32 %v34, %v117
  %v119 = vpop.f32.mrf.mxu0
  %v120 = vadd.f32 %v34, %v119
  %121 = vmatmul.bf16.gmra.mxu0 %v89
  %v122 = vpop.f32.mrf.mxu0
  %v123 = vadd.f32 %v34, %v122
  %v124 = vpop.f32.mrf.mxu0
  %v125 = vadd.f32 %v34, %v124
  %126 = vmatmul.bf16.gmra.mxu0 %v92
  %v127 = vpop.f32.mrf.mxu0
  %v128 = vadd.f32 %v34, %v127
  %v129 = vpop.f32.mrf.mxu0
  %v130 = vadd.f32 %v34, %v129
  %131 = vmatmul.bf16.gmra.mxu0 %v95
  %v132 = vpop.f32.mrf.mxu0
  %v133 = vadd.f32 %v34, %v132
  %v134 = vpop.f32.mrf.mxu0
  %v135 = vadd.f32 %v34, %v134
  %136 = vmatmul.bf16.gmra.mxu0 %v98
  %v137 = vpop.f32.mrf.mxu0
  %v138 = vadd.f32 %v34, %v137
  %v139 = vpop.f32.mrf.mxu0
  %v140 = vadd.f32 %v34, %v139
  %141 = vmatmul.bf16.gmra.mxu0 %v101
  %v142 = vpop.f32.mrf.mxu0
  %v143 = vadd.f32 %v34, %v142
  %v144 = vpop.f32.mrf.mxu0
  %145 = vdwg.mxu0
  %v146 = vpack.c.bf16 %v113, %v113
  %v147 = vpack.c.bf16 %v115, %v115
  %v148 = vpack.c.bf16 %v118, %v118
  %v149 = vpack.c.bf16 %v120, %v120
  %v150 = vpack.c.bf16 %v123, %v123
  %v151 = vpack.c.bf16 %v125, %v125
  %v152 = vpack.c.bf16 %v128, %v128
  %v153 = vpack.c.bf16 %v130, %v130
  %v154 = vpack.c.bf16 %v133, %v133
  %v155 = vpack.c.bf16 %v135, %v135
  %v156 = vpack.c.bf16 %v138, %v138
  %v157 = vpack.c.bf16 %v140, %v140
  %v158 = vpack.c.bf16 %v143, %v143
  %vm159 = vcmask 519168
  %160 = vst.msk [vmem:[%s3] sm:$0xf] %vm159, %v146
  %161 = vst.msk [vmem:[%s3 + $0x4] sm:$0xf] %vm159, %v147
  %162 = vst.msk [vmem:[%s3 + $0x8] sm:$0xf] %vm159, %v148
  %163 = vst.msk [vmem:[%s3 + $0xc] sm:$0xf] %vm159, %v149
  %164 = vst.msk [vmem:[%s3 + $0x10] sm:$0xf] %vm159, %v150
  %165 = vst.msk [vmem:[%s3 + $0x14] sm:$0xf] %vm159, %v151
  %166 = vst.msk [vmem:[%s3 + $0x18] sm:$0xf] %vm159, %v152
  %167 = vst.msk [vmem:[%s3 + $0x1c] sm:$0xf] %vm159, %v153
  %168 = vst.msk [vmem:[%s3 + $0x20] sm:$0xf] %vm159, %v154
  %169 = vst.msk [vmem:[%s3 + $0x24] sm:$0xf] %vm159, %v155
  %170 = vst.msk [vmem:[%s3 + $0x28] sm:$0xf] %vm159, %v156
  %171 = vst.msk [vmem:[%s3 + $0x2c] sm:$0xf] %vm159, %v157
  %vm172 = vcmask 516096
  %173 = vst.msk [vmem:[%s3 + $0x30] sm:$0x1] %vm172, %v158
  // Predicated region
  $region14: #{resnet10_emnist_forward.27} parent=0 // pred_check
    _
  $region15: #{resnet10_emnist_forward.27} parent=0 // pred_check_branch
    %175 = sbr.rel (0) target = $region17
  $region16: #{resnet10_emnist_forward.27} parent=0 // pred_region
    _
  $region17: #{resnet10_emnist_forward.27} parent=0 // pred_fallthru
    _
  // Predicated region
  $region18: #{resnet10_emnist_forward.27} parent=0 // pred_check
    _
  $region19: #{resnet10_emnist_forward.27} parent=0 // pred_check_branch
    %177 = sbr.rel (0) target = $region21
  $region20: #{resnet10_emnist_forward.27} parent=0 // pred_region
    _
  $region21: #{resnet10_emnist_forward.27} parent=0 // pred_fallthru
    _

// kernel: resnet10_emnist_forward.28
$region0: #{resnet10_emnist_forward.28}
  #allocation0 [shape = 'u32[]', space=smem, size = 0x4, offset = 0x4, fixed_abs, tag = 'smem constant byte address 0x4 - core index']
  #allocation1 [shape = 'u32[72,128]{1,0:T(1,128)}', space=vmem, size = 0x9000, scoped, tag = 'internal scratch']
  %s0 = inlined_call_operand.vmem [shape: bf16[98,576], index: 0, kind: input, shape index: {}]
  %s1 = inlined_call_operand.vmem [shape: bf16[576,64], index: 1, kind: input, shape index: {}]
  %s2 = inlined_call_operand.vmem [shape: f32[1,64], index: 2, kind: input, shape index: {}]
  %s3 = inlined_call_operand.vmem [shape: bf16[98,64], index: 3, kind: input, shape index: {}]
  %s4 = inlined_call_operand.vmem [shape: bf16[98,64], index: 4, kind: output, shape index: {}]
  %s5 = sld [smem:[#allocation0]]
  $region26: #{resnet10_emnist_forward.28} parent=0
    _
  %s7 = ssub.s32 1, %s5
  %s8 = scalar_select 0, %s7, %s5
  // Predicated region
  $region2: #{resnet10_emnist_forward.28} parent=0 // pred_check
    _
  $region3: #{resnet10_emnist_forward.28} parent=0 // pred_check_branch
    %10 = sbr.rel (0) target = $region5
  $region4: #{resnet10_emnist_forward.28} parent=0 // pred_region
    _
  $region5: #{resnet10_emnist_forward.28} parent=0 // pred_fallthru
    _
  // Predicated region
  $region6: #{resnet10_emnist_forward.28} parent=0 // pred_check
    _
  $region7: #{resnet10_emnist_forward.28} parent=0 // pred_check_branch
    %12 = sbr.rel (0) target = $region9
  $region8: #{resnet10_emnist_forward.28} parent=0 // pred_region
    _
  $region9: #{resnet10_emnist_forward.28} parent=0 // pred_fallthru
    _
  // Predicated region
  $region10: #{resnet10_emnist_forward.28} parent=0 // pred_check
    _
  $region11: #{resnet10_emnist_forward.28} parent=0 // pred_check_branch
    %14 = sbr.rel (0) target = $region13
  $region12: #{resnet10_emnist_forward.28} parent=0 // pred_region
    _
  $region13: #{resnet10_emnist_forward.28} parent=0 // pred_fallthru
    _
  // Predicated region
  $region14: #{resnet10_emnist_forward.28} parent=0 // pred_check
    _
  $region15: #{resnet10_emnist_forward.28} parent=0 // pred_check_branch
    %16 = sbr.rel (0) target = $region17
  $region16: #{resnet10_emnist_forward.28} parent=0 // pred_region
    _
  $region17: #{resnet10_emnist_forward.28} parent=0 // pred_fallthru
    _
  %v18 = vld [vmem:[%s0] sm:$0xff]
  %v19 = vld [vmem:[%s0 + $0x8] sm:$0xff]
  %v20 = vld [vmem:[%s0 + $0x10] sm:$0xf]
  %v21 = vld [vmem:[%s0 + $0x14] sm:$0xff]
  %v22 = vld [vmem:[%s0 + $0x1c] sm:$0xff]
  %v23 = vld [vmem:[%s0 + $0x24] sm:$0xf]
  %v24 = vld [vmem:[%s0 + $0x28] sm:$0xff]
  %v25 = vld [vmem:[%s0 + $0x30] sm:$0xff]
  %v26 = vld [vmem:[%s0 + $0x38] sm:$0xf]
  %v27 = vld [vmem:[%s0 + $0x3c] sm:$0xff]
  %v28 = vld [vmem:[%s0 + $0x44] sm:$0xff]
  %v29 = vld [vmem:[%s0 + $0x4c] sm:$0xf]
  %v30 = vld [vmem:[%s0 + $0x50] sm:$0xff]
  %v31 = vld [vmem:[%s0 + $0x58] sm:$0xff]
  %v32 = vld [vmem:[%s0 + $0x60] sm:$0xf]
  %v33 = vld [vmem:[%s0 + $0x64] sm:$0xff]
  %v34 = vld [vmem:[%s0 + $0x6c] sm:$0xff]
  %v35 = vld [vmem:[%s0 + $0x74] sm:$0xf]
  %v36 = vld [vmem:[%s0 + $0x78] sm:$0xff]
  %v37 = vld [vmem:[%s0 + $0x80] sm:$0xff]
  %v38 = vld [vmem:[%s0 + $0x88] sm:$0xf]
  %v39 = vld [vmem:[%s0 + $0x8c] sm:$0xff]
  %v40 = vld [vmem:[%s0 + $0x94] sm:$0xff]
  %v41 = vld [vmem:[%s0 + $0x9c] sm:$0xf]
  %v42 = vld [vmem:[%s0 + $0xa0] sm:$0xff]
  %v43 = vld [vmem:[%s0 + $0xa8] sm:$0xff]
  %v44 = vld [vmem:[%s0 + $0xb0] sm:$0xf]
  %v45 = vld [vmem:[%s0 + $0xb4] sm:$0xff]
  %v46 = vld [vmem:[%s0 + $0xbc] sm:$0xff]
  %v47 = vld [vmem:[%s0 + $0xc4] sm:$0xf]
  %v48 = vld [vmem:[%s0 + $0xc8] sm:$0xff]
  %v49 = vld [vmem:[%s0 + $0xd0] sm:$0xff]
  %v50 = vld [vmem:[%s0 + $0xd8] sm:$0xf]
  %v51 = vld [vmem:[%s0 + $0xdc] sm:$0xff]
  %v52 = vld [vmem:[%s0 + $0xe4] sm:$0xff]
  %v53 = vld [vmem:[%s0 + $0xec] sm:$0xf]
  %v54 = vld [vmem:[%s0 + $0xf0] sm:$0x11]
  %v55 = vld [vmem:[%s0 + $0xf8] sm:$0x11]
  %v56 = vld [vmem:[%s0 + $0x100] sm:$0x1]
  %v57 = vld [vmem:[%s1] sm:$0xf]
  %v58 = vld [vmem:[%s1 + $0x4] sm:$0xf]
  %v59 = vld [vmem:[%s1 + $0x8] sm:$0xf]
  %v60 = vld [vmem:[%s1 + $0xc] sm:$0xf]
  %v61 = vld [vmem:[%s1 + $0x10] sm:$0xf]
  %v62 = vld [vmem:[%s1 + $0x14] sm:$0xf]
  %v63 = vld [vmem:[%s1 + $0x18] sm:$0xf]
  %v64 = vld [vmem:[%s1 + $0x1c] sm:$0xf]
  %v65 = vld [vmem:[%s1 + $0x20] sm:$0xf]
  %v66 = vld [vmem:[%s1 + $0x24] sm:$0xf]
  %v67 = vld [vmem:[%s1 + $0x28] sm:$0xf]
  %v68 = vld [vmem:[%s1 + $0x2c] sm:$0xf]
  %v69 = vld [vmem:[%s1 + $0x30] sm:$0xf]
  %v70 = vld [vmem:[%s1 + $0x34] sm:$0xf]
  %v71 = vld [vmem:[%s1 + $0x38] sm:$0xf]
  %v72 = vld [vmem:[%s1 + $0x3c] sm:$0xf]
  %v73 = vld [vmem:[%s1 + $0x40] sm:$0xf]
  %v74 = vld [vmem:[%s1 + $0x44] sm:$0xf]
  %v75 = vld [vmem:[%s1 + $0x48] sm:$0xf]
  %v76 = vld [vmem:[%s1 + $0x4c] sm:$0xf]
  %v77 = vld [vmem:[%s1 + $0x50] sm:$0xf]
  %v78 = vld [vmem:[%s1 + $0x54] sm:$0xf]
  %v79 = vld [vmem:[%s1 + $0x58] sm:$0xf]
  %v80 = vld [vmem:[%s1 + $0x5c] sm:$0xf]
  %v81 = vld [vmem:[%s1 + $0x60] sm:$0xf]
  %v82 = vld [vmem:[%s1 + $0x64] sm:$0xf]
  %v83 = vld [vmem:[%s1 + $0x68] sm:$0xf]
  %v84 = vld [vmem:[%s1 + $0x6c] sm:$0xf]
  %v85 = vld [vmem:[%s1 + $0x70] sm:$0xf]
  %v86 = vld [vmem:[%s1 + $0x74] sm:$0xf]
  %v87 = vld [vmem:[%s1 + $0x78] sm:$0xf]
  %v88 = vld [vmem:[%s1 + $0x7c] sm:$0xf]
  %v89 = vld [vmem:[%s1 + $0x80] sm:$0xf]
  %v90 = vld [vmem:[%s1 + $0x84] sm:$0xf]
  %v91 = vld [vmem:[%s1 + $0x88] sm:$0xf]
  %v92 = vld [vmem:[%s1 + $0x8c] sm:$0xf]
  %v93 = vld [vmem:[%s1 + $0x90] sm:$0xf]
  %v94 = vld [vmem:[%s1 + $0x94] sm:$0xf]
  %v95 = vld [vmem:[%s1 + $0x98] sm:$0xf]
  %v96 = vld [vmem:[%s1 + $0x9c] sm:$0xf]
  %v97 = vld [vmem:[%s1 + $0xa0] sm:$0xf]
  %v98 = vld [vmem:[%s1 + $0xa4] sm:$0xf]
  %v99 = vld [vmem:[%s1 + $0xa8] sm:$0xf]
  %v100 = vld [vmem:[%s1 + $0xac] sm:$0xf]
  %v101 = vld [vmem:[%s1 + $0xb0] sm:$0xf]
  %v102 = vld [vmem:[%s1 + $0xb4] sm:$0xf]
  %v103 = vld [vmem:[%s1 + $0xb8] sm:$0xf]
  %v104 = vld [vmem:[%s1 + $0xbc] sm:$0xf]
  %v105 = vld [vmem:[%s1 + $0xc0] sm:$0xf]
  %v106 = vld [vmem:[%s1 + $0xc4] sm:$0xf]
  %v107 = vld [vmem:[%s1 + $0xc8] sm:$0xf]
  %v108 = vld [vmem:[%s1 + $0xcc] sm:$0xf]
  %v109 = vld [vmem:[%s1 + $0xd0] sm:$0xf]
  %v110 = vld [vmem:[%s1 + $0xd4] sm:$0xf]
  %v111 = vld [vmem:[%s1 + $0xd8] sm:$0xf]
  %v112 = vld [vmem:[%s1 + $0xdc] sm:$0xf]
  %v113 = vld [vmem:[%s1 + $0xe0] sm:$0xf]
  %v114 = vld [vmem:[%s1 + $0xe4] sm:$0xf]
  %v115 = vld [vmem:[%s1 + $0xe8] sm:$0xf]
  %v116 = vld [vmem:[%s1 + $0xec] sm:$0xf]
  %v117 = vld [vmem:[%s1 + $0xf0] sm:$0xf]
  %v118 = vld [vmem:[%s1 + $0xf4] sm:$0xf]
  %v119 = vld [vmem:[%s1 + $0xf8] sm:$0xf]
  %v120 = vld [vmem:[%s1 + $0xfc] sm:$0xf]
  %v121 = vld [vmem:[%s1 + $0x100] sm:$0xf]
  %v122 = vld [vmem:[%s1 + $0x104] sm:$0xf]
  %v123 = vld [vmem:[%s1 + $0x108] sm:$0xf]
  %v124 = vld [vmem:[%s1 + $0x10c] sm:$0xf]
  %v125 = vld [vmem:[%s1 + $0x110] sm:$0xf]
  %v126 = vld [vmem:[%s1 + $0x114] sm:$0xf]
  %v127 = vld [vmem:[%s1 + $0x118] sm:$0xf]
  %v128 = vld [vmem:[%s1 + $0x11c] sm:$0xf]
  %v129 = vld [vmem:[%s2] sm:$0x1]
  %v131 = vperm.slane %v129, 0
  %v172 = vunpack.c.l.b16 %v18
  %v173 = vunpack.c.h.b16 %v18
  %v174 = vunpack.c.l.b16 %v19
  %v175 = vunpack.c.h.b16 %v19
  %v176 = vunpack.c.l.b16 %v20
  %v177 = vunpack.c.l.b16 %v21
  %v178 = vunpack.c.h.b16 %v21
  %v179 = vunpack.c.l.b16 %v22
  %v180 = vunpack.c.h.b16 %v22
  %v181 = vunpack.c.l.b16 %v23
  %v182 = vunpack.c.l.b16 %v24
  %v183 = vunpack.c.h.b16 %v24
  %v184 = vunpack.c.l.b16 %v25
  %v185 = vunpack.c.h.b16 %v25
  %v186 = vunpack.c.l.b16 %v26
  %v187 = vunpack.c.l.b16 %v27
  %v188 = vunpack.c.h.b16 %v27
  %v189 = vunpack.c.l.b16 %v28
  %v190 = vunpack.c.h.b16 %v28
  %v191 = vunpack.c.l.b16 %v29
  %v192 = vunpack.c.l.b16 %v30
  %v193 = vunpack.c.h.b16 %v30
  %v194 = vunpack.c.l.b16 %v31
  %v195 = vunpack.c.h.b16 %v31
  %v196 = vunpack.c.l.b16 %v32
  %v197 = vunpack.c.l.b16 %v33
  %v198 = vunpack.c.h.b16 %v33
  %v199 = vunpack.c.l.b16 %v34
  %v200 = vunpack.c.h.b16 %v34
  %v201 = vunpack.c.l.b16 %v35
  %v202 = vunpack.c.l.b16 %v36
  %v203 = vunpack.c.h.b16 %v36
  %v204 = vunpack.c.l.b16 %v37
  %v205 = vunpack.c.h.b16 %v37
  %v206 = vunpack.c.l.b16 %v38
  %v207 = vunpack.c.l.b16 %v39
  %v208 = vunpack.c.h.b16 %v39
  %v209 = vunpack.c.l.b16 %v40
  %v210 = vunpack.c.h.b16 %v40
  %v211 = vunpack.c.l.b16 %v41
  %v212 = vunpack.c.l.b16 %v42
  %v213 = vunpack.c.h.b16 %v42
  %v214 = vunpack.c.l.b16 %v43
  %v215 = vunpack.c.h.b16 %v43
  %v216 = vunpack.c.l.b16 %v44
  %v217 = vunpack.c.l.b16 %v45
  %v218 = vunpack.c.h.b16 %v45
  %v219 = vunpack.c.l.b16 %v46
  %v220 = vunpack.c.h.b16 %v46
  %v221 = vunpack.c.l.b16 %v47
  %v222 = vunpack.c.l.b16 %v48
  %v223 = vunpack.c.h.b16 %v48
  %v224 = vunpack.c.l.b16 %v49
  %v225 = vunpack.c.h.b16 %v49
  %v226 = vunpack.c.l.b16 %v50
  %v227 = vunpack.c.l.b16 %v51
  %v228 = vunpack.c.h.b16 %v51
  %v229 = vunpack.c.l.b16 %v52
  %v230 = vunpack.c.h.b16 %v52
  %v231 = vunpack.c.l.b16 %v53
  %v232 = vunpack.c.l.b16 %v54
  %v233 = vunpack.c.h.b16 %v54
  %v234 = vunpack.c.l.b16 %v55
  %v235 = vunpack.c.h.b16 %v55
  %v236 = vunpack.c.l.b16 %v56
  %v237 = vpack.c.b16 %v177, %v172
  %v238 = vpack.c.b16 %v178, %v173
  %v239 = vpack.c.b16 %v179, %v174
  %v240 = vpack.c.b16 %v180, %v175
  %v241 = vpack.c.b16 %v181, %v176
  %v242 = vpack.c.b16 %v187, %v182
  %v243 = vpack.c.b16 %v188, %v183
  %v244 = vpack.c.b16 %v189, %v184
  %v245 = vpack.c.b16 %v190, %v185
  %v246 = vpack.c.b16 %v191, %v186
  %v247 = vpack.c.b16 %v197, %v192
  %v248 = vpack.c.b16 %v198, %v193
  %v249 = vpack.c.b16 %v199, %v194
  %v250 = vpack.c.b16 %v200, %v195
  %v251 = vpack.c.b16 %v201, %v196
  %v252 = vpack.c.b16 %v207, %v202
  %v253 = vpack.c.b16 %v208, %v203
  %v254 = vpack.c.b16 %v209, %v204
  %v255 = vpack.c.b16 %v210, %v205
  %v256 = vpack.c.b16 %v211, %v206
  %v257 = vpack.c.b16 %v217, %v212
  %v258 = vpack.c.b16 %v218, %v213
  %v259 = vpack.c.b16 %v219, %v214
  %v260 = vpack.c.b16 %v220, %v215
  %v261 = vpack.c.b16 %v221, %v216
  %v262 = vpack.c.b16 %v227, %v222
  %v263 = vpack.c.b16 %v228, %v223
  %v264 = vpack.c.b16 %v229, %v224
  %v265 = vpack.c.b16 %v230, %v225
  %v266 = vpack.c.b16 %v231, %v226
  %v267 = vpack.c.b16 %v232, %v232
  %v268 = vpack.c.b16 %v233, %v233
  %v269 = vpack.c.b16 %v234, %v234
  %v270 = vpack.c.b16 %v235, %v235
  %v271 = vpack.c.b16 %v236, %v236
  %v372 = vunpack.c.l.b16 %v57
  %v373 = vunpack.c.l.b16 %v58
  %v374 = vunpack.c.l.b16 %v59
  %v375 = vunpack.c.l.b16 %v60
  %v376 = vunpack.c.l.b16 %v61
  %v377 = vunpack.c.l.b16 %v62
  %v378 = vunpack.c.l.b16 %v63
  %v379 = vunpack.c.l.b16 %v64
  %v380 = vunpack.c.l.b16 %v65
  %v381 = vunpack.c.l.b16 %v66
  %v382 = vunpack.c.l.b16 %v67
  %v383 = vunpack.c.l.b16 %v68
  %v384 = vunpack.c.l.b16 %v69
  %v385 = vunpack.c.l.b16 %v70
  %v386 = vunpack.c.l.b16 %v71
  %v387 = vunpack.c.l.b16 %v72
  %v388 = vunpack.c.l.b16 %v73
  %v389 = vunpack.c.l.b16 %v74
  %v390 = vunpack.c.l.b16 %v75
  %v391 = vunpack.c.l.b16 %v76
  %v392 = vunpack.c.l.b16 %v77
  %v393 = vunpack.c.l.b16 %v78
  %v394 = vunpack.c.l.b16 %v79
  %v395 = vunpack.c.l.b16 %v80
  %v396 = vunpack.c.l.b16 %v81
  %v397 = vunpack.c.l.b16 %v82
  %v398 = vunpack.c.l.b16 %v83
  %v399 = vunpack.c.l.b16 %v84
  %v400 = vunpack.c.l.b16 %v85
  %v401 = vunpack.c.l.b16 %v86
  %v402 = vunpack.c.l.b16 %v87
  %v403 = vunpack.c.l.b16 %v88
  %v404 = vunpack.c.l.b16 %v89
  %v405 = vunpack.c.l.b16 %v90
  %v406 = vunpack.c.l.b16 %v91
  %v407 = vunpack.c.l.b16 %v92
  %v408 = vunpack.c.l.b16 %v93
  %v409 = vunpack.c.l.b16 %v94
  %v410 = vunpack.c.l.b16 %v95
  %v411 = vunpack.c.l.b16 %v96
  %v412 = vunpack.c.l.b16 %v97
  %v413 = vunpack.c.l.b16 %v98
  %v414 = vunpack.c.l.b16 %v99
  %v415 = vunpack.c.l.b16 %v100
  %v416 = vunpack.c.l.b16 %v101
  %v417 = vunpack.c.l.b16 %v102
  %v418 = vunpack.c.l.b16 %v103
  %v419 = vunpack.c.l.b16 %v104
  %v420 = vunpack.c.l.b16 %v105
  %v421 = vunpack.c.l.b16 %v106
  %v422 = vunpack.c.l.b16 %v107
  %v423 = vunpack.c.l.b16 %v108
  %v424 = vunpack.c.l.b16 %v109
  %v425 = vunpack.c.l.b16 %v110
  %v426 = vunpack.c.l.b16 %v111
  %v427 = vunpack.c.l.b16 %v112
  %v428 = vunpack.c.l.b16 %v113
  %v429 = vunpack.c.l.b16 %v114
  %v430 = vunpack.c.l.b16 %v115
  %v431 = vunpack.c.l.b16 %v116
  %v432 = vunpack.c.l.b16 %v117
  %v433 = vunpack.c.l.b16 %v118
  %v434 = vunpack.c.l.b16 %v119
  %v435 = vunpack.c.l.b16 %v120
  %v436 = vunpack.c.l.b16 %v121
  %v437 = vunpack.c.l.b16 %v122
  %v438 = vunpack.c.l.b16 %v123
  %v439 = vunpack.c.l.b16 %v124
  %v440 = vunpack.c.l.b16 %v125
  %v441 = vunpack.c.l.b16 %v126
  %v442 = vunpack.c.l.b16 %v127
  %v443 = vunpack.c.l.b16 %v128
  %v444 = vpack.c.b16 %v373, %v372
  %v445 = vpack.c.b16 %v375, %v374
  %v446 = vpack.c.b16 %v377, %v376
  %v447 = vpack.c.b16 %v379, %v378
  %v448 = vpack.c.b16 %v381, %v380
  %v449 = vpack.c.b16 %v383, %v382
  %v450 = vpack.c.b16 %v385, %v384
  %v451 = vpack.c.b16 %v387, %v386
  %v452 = vpack.c.b16 %v389, %v388
  %v453 = vpack.c.b16 %v391, %v390
  %v454 = vpack.c.b16 %v393, %v392
  %v455 = vpack.c.b16 %v395, %v394
  %v456 = vpack.c.b16 %v397, %v396
  %v457 = vpack.c.b16 %v399, %v398
  %v458 = vpack.c.b16 %v401, %v400
  %v459 = vpack.c.b16 %v403, %v402
  %v460 = vpack.c.b16 %v405, %v404
  %v461 = vpack.c.b16 %v407, %v406
  %v462 = vpack.c.b16 %v409, %v408
  %v463 = vpack.c.b16 %v411, %v410
  %v464 = vpack.c.b16 %v413, %v412
  %v465 = vpack.c.b16 %v415, %v414
  %v466 = vpack.c.b16 %v417, %v416
  %v467 = vpack.c.b16 %v419, %v418
  %v468 = vpack.c.b16 %v421, %v420
  %v469 = vpack.c.b16 %v423, %v422
  %v470 = vpack.c.b16 %v425, %v424
  %v471 = vpack.c.b16 %v427, %v426
  %v472 = vpack.c.b16 %v429, %v428
  %v473 = vpack.c.b16 %v431, %v430
  %v474 = vpack.c.b16 %v433, %v432
  %v475 = vpack.c.b16 %v435, %v434
  %v476 = vpack.c.b16 %v437, %v436
  %v477 = vpack.c.b16 %v439, %v438
  %v478 = vpack.c.b16 %v441, %v440
  %v479 = vpack.c.b16 %v443, %v442
  %vm516 = vcmask 523264
  %v518 = vsel %vm516, %v241, 0
  %v521 = vsel %vm516, %v246, 0
  %v524 = vsel %vm516, %v251, 0
  %v527 = vsel %vm516, %v256, 0
  %v530 = vsel %vm516, %v261, 0
  %v533 = vsel %vm516, %v266, 0
  %v536 = vsel %vm516, %v271, 0
  %538 = vmatpush.bf16.msra.mxu0 %v451
  %539 = vmatpush.bf16.msra.mxu0 %v450
  %540 = vmatpush.bf16.msra.mxu0 %v449
  %541 = vmatpush.bf16.msra.mxu0 %v448
  %542 = vmatpush.bf16.msra.mxu0 %v447
  %543 = vmatpush.bf16.msra.mxu0 %v446
  %544 = vmatpush.bf16.msra.mxu0 %v445
  %545 = vmatpush.bf16.msra.mxu0 %v444
  %546 = vmatmul.bf16.gmra.mxu0 %v237
  %v547 = vpop.f32.mrf.mxu0
  %v548 = vadd.f32 %v131, %v547
  %v549 = vpop.f32.mrf.mxu0
  %v550 = vadd.f32 %v131, %v549
  %551 = vmatmul.bf16.gmra.mxu0 %v242
  %v552 = vpop.f32.mrf.mxu0
  %v553 = vadd.f32 %v131, %v552
  %v554 = vpop.f32.mrf.mxu0
  %v555 = vadd.f32 %v131, %v554
  %556 = vmatmul.bf16.gmra.mxu0 %v247
  %v557 = vpop.f32.mrf.mxu0
  %v558 = vadd.f32 %v131, %v557
  %v559 = vpop.f32.mrf.mxu0
  %v560 = vadd.f32 %v131, %v559
  %561 = vmatmul.bf16.gmra.mxu0 %v252
  %v562 = vpop.f32.mrf.mxu0
  %v563 = vadd.f32 %v131, %v562
  %v564 = vpop.f32.mrf.mxu0
  %v565 = vadd.f32 %v131, %v564
  %566 = vmatmul.bf16.gmra.mxu0 %v257
  %v567 = vpop.f32.mrf.mxu0
  %v568 = vadd.f32 %v131, %v567
  %v569 = vpop.f32.mrf.mxu0
  %v570 = vadd.f32 %v131, %v569
  %571 = vmatmul.bf16.gmra.mxu0 %v262
  %v572 = vpop.f32.mrf.mxu0
  %v573 = vadd.f32 %v131, %v572
  %v574 = vpop.f32.mrf.mxu0
  %v575 = vadd.f32 %v131, %v574
  %576 = vmatmul.bf16.gmra.mxu0 %v267
  %v577 = vpop.f32.mrf.mxu0
  %v578 = vadd.f32 %v131, %v577
  %v579 = vpop.f32.mrf.mxu0
  %580 = vdwg.mxu0
  %581 = vmatpush.bf16.msra.mxu0 %v459
  %582 = vmatpush.bf16.msra.mxu0 %v458
  %583 = vmatpush.bf16.msra.mxu0 %v457
  %584 = vmatpush.bf16.msra.mxu0 %v456
  %585 = vmatpush.bf16.msra.mxu0 %v455
  %586 = vmatpush.bf16.msra.mxu0 %v454
  %587 = vmatpush.bf16.msra.mxu0 %v453
  %588 = vmatpush.bf16.msra.mxu0 %v452
  %589 = vmatmul.bf16.gmra.mxu0 %v238
  %v590 = vpop.f32.mrf.mxu0
  %v591 = vadd.f32 %v548, %v590
  %v592 = vpop.f32.mrf.mxu0
  %v593 = vadd.f32 %v550, %v592
  %594 = vmatmul.bf16.gmra.mxu0 %v243
  %v595 = vpop.f32.mrf.mxu0
  %v596 = vadd.f32 %v553, %v595
  %v597 = vpop.f32.mrf.mxu0
  %v598 = vadd.f32 %v555, %v597
  %599 = vmatmul.bf16.gmra.mxu0 %v248
  %v600 = vpop.f32.mrf.mxu0
  %v601 = vadd.f32 %v558, %v600
  %v602 = vpop.f32.mrf.mxu0
  %v603 = vadd.f32 %v560, %v602
  %604 = vmatmul.bf16.gmra.mxu0 %v253
  %v605 = vpop.f32.mrf.mxu0
  %v606 = vadd.f32 %v563, %v605
  %v607 = vpop.f32.mrf.mxu0
  %v608 = vadd.f32 %v565, %v607
  %609 = vmatmul.bf16.gmra.mxu0 %v258
  %v610 = vpop.f32.mrf.mxu0
  %v611 = vadd.f32 %v568, %v610
  %v612 = vpop.f32.mrf.mxu0
  %v613 = vadd.f32 %v570, %v612
  %614 = vmatmul.bf16.gmra.mxu0 %v263
  %v615 = vpop.f32.mrf.mxu0
  %v616 = vadd.f32 %v573, %v615
  %v617 = vpop.f32.mrf.mxu0
  %v618 = vadd.f32 %v575, %v617
  %619 = vmatmul.bf16.gmra.mxu0 %v268
  %v620 = vpop.f32.mrf.mxu0
  %v621 = vadd.f32 %v578, %v620
  %v622 = vpop.f32.mrf.mxu0
  %623 = vdwg.mxu0
  %624 = vmatpush.bf16.msra.mxu0 %v467
  %625 = vmatpush.bf16.msra.mxu0 %v466
  %626 = vmatpush.bf16.msra.mxu0 %v465
  %627 = vmatpush.bf16.msra.mxu0 %v464
  %628 = vmatpush.bf16.msra.mxu0 %v463
  %629 = vmatpush.bf16.msra.mxu0 %v462
  %630 = vmatpush.bf16.msra.mxu0 %v461
  %631 = vmatpush.bf16.msra.mxu0 %v460
  %632 = vmatmul.bf16.gmra.mxu0 %v239
  %v633 = vpop.f32.mrf.mxu0
  %v634 = vadd.f32 %v591, %v633
  %v635 = vpop.f32.mrf.mxu0
  %v636 = vadd.f32 %v593, %v635
  %637 = vmatmul.bf16.gmra.mxu0 %v244
  %v638 = vpop.f32.mrf.mxu0
  %v639 = vadd.f32 %v596, %v638
  %v640 = vpop.f32.mrf.mxu0
  %v641 = vadd.f32 %v598, %v640
  %642 = vmatmul.bf16.gmra.mxu0 %v249
  %v643 = vpop.f32.mrf.mxu0
  %v644 = vadd.f32 %v601, %v643
  %v645 = vpop.f32.mrf.mxu0
  %v646 = vadd.f32 %v603, %v645
  %647 = vmatmul.bf16.gmra.mxu0 %v254
  %v648 = vpop.f32.mrf.mxu0
  %v649 = vadd.f32 %v606, %v648
  %v650 = vpop.f32.mrf.mxu0
  %v651 = vadd.f32 %v608, %v650
  %652 = vmatmul.bf16.gmra.mxu0 %v259
  %v653 = vpop.f32.mrf.mxu0
  %v654 = vadd.f32 %v611, %v653
  %v655 = vpop.f32.mrf.mxu0
  %v656 = vadd.f32 %v613, %v655
  %657 = vmatmul.bf16.gmra.mxu0 %v264
  %v658 = vpop.f32.mrf.mxu0
  %v659 = vadd.f32 %v616, %v658
  %v660 = vpop.f32.mrf.mxu0
  %v661 = vadd.f32 %v618, %v660
  %662 = vmatmul.bf16.gmra.mxu0 %v269
  %v663 = vpop.f32.mrf.mxu0
  %v664 = vadd.f32 %v621, %v663
  %v665 = vpop.f32.mrf.mxu0
  %666 = vdwg.mxu0
  %667 = vmatpush.bf16.msra.mxu0 %v475
  %668 = vmatpush.bf16.msra.mxu0 %v474
  %669 = vmatpush.bf16.msra.mxu0 %v473
  %670 = vmatpush.bf16.msra.mxu0 %v472
  %671 = vmatpush.bf16.msra.mxu0 %v471
  %672 = vmatpush.bf16.msra.mxu0 %v470
  %673 = vmatpush.bf16.msra.mxu0 %v469
  %674 = vmatpush.bf16.msra.mxu0 %v468
  %675 = vmatmul.bf16.gmra.mxu0 %v240
  %v676 = vpop.f32.mrf.mxu0
  %v677 = vadd.f32 %v634, %v676
  %v678 = vpop.f32.mrf.mxu0
  %v679 = vadd.f32 %v636, %v678
  %680 = vmatmul.bf16.gmra.mxu0 %v245
  %v681 = vpop.f32.mrf.mxu0
  %v682 = vadd.f32 %v639, %v681
  %v683 = vpop.f32.mrf.mxu0
  %v684 = vadd.f32 %v641, %v683
  %685 = vmatmul.bf16.gmra.mxu0 %v250
  %v686 = vpop.f32.mrf.mxu0
  %v687 = vadd.f32 %v644, %v686
  %v688 = vpop.f32.mrf.mxu0
  %v689 = vadd.f32 %v646, %v688
  %690 = vmatmul.bf16.gmra.mxu0 %v255
  %v691 = vpop.f32.mrf.mxu0
  %v692 = vadd.f32 %v649, %v691
  %v693 = vpop.f32.mrf.mxu0
  %v694 = vadd.f32 %v651, %v693
  %695 = vmatmul.bf16.gmra.mxu0 %v260
  %v696 = vpop.f32.mrf.mxu0
  %v697 = vadd.f32 %v654, %v696
  %v698 = vpop.f32.mrf.mxu0
  %v699 = vadd.f32 %v656, %v698
  %700 = vmatmul.bf16.gmra.mxu0 %v265
  %v701 = vpop.f32.mrf.mxu0
  %v702 = vadd.f32 %v659, %v701
  %v703 = vpop.f32.mrf.mxu0
  %v704 = vadd.f32 %v661, %v703
  %705 = vmatmul.bf16.gmra.mxu0 %v270
  %v706 = vpop.f32.mrf.mxu0
  %v707 = vadd.f32 %v664, %v706
  %v708 = vpop.f32.mrf.mxu0
  %709 = vdwg.mxu0
  %710 = vmatpush.bf16.msra.mxu0 0
  %711 = vmatpush.bf16.msra.mxu0 0
  %712 = vmatpush.bf16.msra.mxu0 0
  %713 = vmatpush.bf16.msra.mxu0 0
  %714 = vmatpush.bf16.msra.mxu0 %v479
  %715 = vmatpush.bf16.msra.mxu0 %v478
  %716 = vmatpush.bf16.msra.mxu0 %v477
  %717 = vmatpush.bf16.msra.mxu0 %v476
  %718 = vmatmul.bf16.gmra.mxu0 %v518
  %v719 = vpop.f32.mrf.mxu0
  %v720 = vadd.f32 %v677, %v719
  %v721 = vpop.f32.mrf.mxu0
  %v722 = vadd.f32 %v679, %v721
  %723 = vmatmul.bf16.gmra.mxu0 %v521
  %v724 = vpop.f32.mrf.mxu0
  %v725 = vadd.f32 %v682, %v724
  %v726 = vpop.f32.mrf.mxu0
  %v727 = vadd.f32 %v684, %v726
  %728 = vmatmul.bf16.gmra.mxu0 %v524
  %v729 = vpop.f32.mrf.mxu0
  %v730 = vadd.f32 %v687, %v729
  %v731 = vpop.f32.mrf.mxu0
  %v732 = vadd.f32 %v689, %v731
  %733 = vmatmul.bf16.gmra.mxu0 %v527
  %v734 = vpop.f32.mrf.mxu0
  %v735 = vadd.f32 %v692, %v734
  %v736 = vpop.f32.mrf.mxu0
  %v737 = vadd.f32 %v694, %v736
  %738 = vmatmul.bf16.gmra.mxu0 %v530
  %v739 = vpop.f32.mrf.mxu0
  %v740 = vadd.f32 %v697, %v739
  %v741 = vpop.f32.mrf.mxu0
  %v742 = vadd.f32 %v699, %v741
  %743 = vmatmul.bf16.gmra.mxu0 %v533
  %v744 = vpop.f32.mrf.mxu0
  %v745 = vadd.f32 %v702, %v744
  %v746 = vpop.f32.mrf.mxu0
  %v747 = vadd.f32 %v704, %v746
  %748 = vmatmul.bf16.gmra.mxu0 %v536
  %v749 = vpop.f32.mrf.mxu0
  %v750 = vadd.f32 %v707, %v749
  %v751 = vpop.f32.mrf.mxu0
  %752 = vdwg.mxu0
  %v753 = vld [vmem:[%s3] sm:$0xf]
  %v754 = vld [vmem:[%s3 + $0x4] sm:$0xf]
  %v755 = vld [vmem:[%s3 + $0x8] sm:$0xf]
  %v756 = vld [vmem:[%s3 + $0xc] sm:$0xf]
  %v757 = vld [vmem:[%s3 + $0x10] sm:$0xf]
  %v758 = vld [vmem:[%s3 + $0x14] sm:$0xf]
  %v759 = vld [vmem:[%s3 + $0x18] sm:$0xf]
  %v760 = vld [vmem:[%s3 + $0x1c] sm:$0xf]
  %v761 = vld [vmem:[%s3 + $0x20] sm:$0xf]
  %v762 = vld [vmem:[%s3 + $0x24] sm:$0xf]
  %v763 = vld [vmem:[%s3 + $0x28] sm:$0xf]
  %v764 = vld [vmem:[%s3 + $0x2c] sm:$0xf]
  %v765 = vld [vmem:[%s3 + $0x30] sm:$0x1]
  %v766 = vunpack.c.l.bf16 %v753
  %v767 = vunpack.c.l.bf16 %v754
  %v768 = vunpack.c.l.bf16 %v755
  %v769 = vunpack.c.l.bf16 %v756
  %v770 = vunpack.c.l.bf16 %v757
  %v771 = vunpack.c.l.bf16 %v758
  %v772 = vunpack.c.l.bf16 %v759
  %v773 = vunpack.c.l.bf16 %v760
  %v774 = vunpack.c.l.bf16 %v761
  %v775 = vunpack.c.l.bf16 %v762
  %v776 = vunpack.c.l.bf16 %v763
  %v777 = vunpack.c.l.bf16 %v764
  %v778 = vunpack.c.l.bf16 %v765
  %v779 = vadd.f32 %v720, %v766
  %v780 = vadd.f32 %v722, %v767
  %v781 = vadd.f32 %v725, %v768
  %v782 = vadd.f32 %v727, %v769
  %v783 = vadd.f32 %v730, %v770
  %v784 = vadd.f32 %v732, %v771
  %v785 = vadd.f32 %v735, %v772
  %v786 = vadd.f32 %v737, %v773
  %v787 = vadd.f32 %v740, %v774
  %v788 = vadd.f32 %v742, %v775
  %v789 = vadd.f32 %v745, %v776
  %v790 = vadd.f32 %v747, %v777
  %v791 = vadd.f32 %v750, %v778
  %v792 = vmax.f32 %v779, 0.0
  %v793 = vmax.f32 %v780, 0.0
  %v794 = vmax.f32 %v781, 0.0
  %v795 = vmax.f32 %v782, 0.0
  %v796 = vmax.f32 %v783, 0.0
  %v797 = vmax.f32 %v784, 0.0
  %v798 = vmax.f32 %v785, 0.0
  %v799 = vmax.f32 %v786, 0.0
  %v800 = vmax.f32 %v787, 0.0
  %v801 = vmax.f32 %v788, 0.0
  %v802 = vmax.f32 %v789, 0.0
  %v803 = vmax.f32 %v790, 0.0
  %v804 = vmax.f32 %v791, 0.0
  %v805 = vpack.c.bf16 %v792, %v792
  %v806 = vpack.c.bf16 %v793, %v793
  %v807 = vpack.c.bf16 %v794, %v794
  %v808 = vpack.c.bf16 %v795, %v795
  %v809 = vpack.c.bf16 %v796, %v796
  %v810 = vpack.c.bf16 %v797, %v797
  %v811 = vpack.c.bf16 %v798, %v798
  %v812 = vpack.c.bf16 %v799, %v799
  %v813 = vpack.c.bf16 %v800, %v800
  %v814 = vpack.c.bf16 %v801, %v801
  %v815 = vpack.c.bf16 %v802, %v802
  %v816 = vpack.c.bf16 %v803, %v803
  %v817 = vpack.c.bf16 %v804, %v804
  %vm818 = vcmask 519168
  %819 = vst.msk [vmem:[%s4] sm:$0xf] %vm818, %v805
  %820 = vst.msk [vmem:[%s4 + $0x4] sm:$0xf] %vm818, %v806
  %821 = vst.msk [vmem:[%s4 + $0x8] sm:$0xf] %vm818, %v807
  %822 = vst.msk [vmem:[%s4 + $0xc] sm:$0xf] %vm818, %v808
  %823 = vst.msk [vmem:[%s4 + $0x10] sm:$0xf] %vm818, %v809
  %824 = vst.msk [vmem:[%s4 + $0x14] sm:$0xf] %vm818, %v810
  %825 = vst.msk [vmem:[%s4 + $0x18] sm:$0xf] %vm818, %v811
  %826 = vst.msk [vmem:[%s4 + $0x1c] sm:$0xf] %vm818, %v812
  %827 = vst.msk [vmem:[%s4 + $0x20] sm:$0xf] %vm818, %v813
  %828 = vst.msk [vmem:[%s4 + $0x24] sm:$0xf] %vm818, %v814
  %829 = vst.msk [vmem:[%s4 + $0x28] sm:$0xf] %vm818, %v815
  %830 = vst.msk [vmem:[%s4 + $0x2c] sm:$0xf] %vm818, %v816
  %vm831 = vcmask 516096
  %832 = vst.msk [vmem:[%s4 + $0x30] sm:$0x1] %vm831, %v817
  // Predicated region
  $region18: #{resnet10_emnist_forward.28} parent=0 // pred_check
    _
  $region19: #{resnet10_emnist_forward.28} parent=0 // pred_check_branch
    %834 = sbr.rel (0) target = $region21
  $region20: #{resnet10_emnist_forward.28} parent=0 // pred_region
    _
  $region21: #{resnet10_emnist_forward.28} parent=0 // pred_fallthru
    _
  // Predicated region
  $region22: #{resnet10_emnist_forward.28} parent=0 // pred_check
    _
  $region23: #{resnet10_emnist_forward.28} parent=0 // pred_check_branch
    %836 = sbr.rel (0) target = $region25
  $region24: #{resnet10_emnist_forward.28} parent=0 // pred_region
    _
  $region25: #{resnet10_emnist_forward.28} parent=0 // pred_fallthru
    _

// kernel: resnet10_emnist_forward.29
$region0: #{resnet10_emnist_forward.29}
  #allocation0 [shape = 'u32[]', space=smem, size = 0x4, offset = 0x4, fixed_abs, tag = 'smem constant byte address 0x4 - core index']
  #allocation1 [shape = 'u32[72,128]{1,0:T(1,128)}', space=vmem, size = 0x9000, scoped, tag = 'internal scratch']
  %s0 = inlined_call_operand.vmem [shape: bf16[98,576], index: 0, kind: input, shape index: {}]
  %s1 = inlined_call_operand.vmem [shape: bf16[576,64], index: 1, kind: input, shape index: {}]
  %s2 = inlined_call_operand.vmem [shape: f32[1,64], index: 2, kind: input, shape index: {}]
  %s3 = inlined_call_operand.vmem [shape: bf16[98,64], index: 3, kind: output, shape index: {}]
  %s4 = sld [smem:[#allocation0]]
  $region22: #{resnet10_emnist_forward.29} parent=0
    _
  %s6 = ssub.s32 1, %s4
  %s7 = scalar_select 0, %s6, %s4
  // Predicated region
  $region2: #{resnet10_emnist_forward.29} parent=0 // pred_check
    _
  $region3: #{resnet10_emnist_forward.29} parent=0 // pred_check_branch
    %9 = sbr.rel (0) target = $region5
  $region4: #{resnet10_emnist_forward.29} parent=0 // pred_region
    _
  $region5: #{resnet10_emnist_forward.29} parent=0 // pred_fallthru
    _
  // Predicated region
  $region6: #{resnet10_emnist_forward.29} parent=0 // pred_check
    _
  $region7: #{resnet10_emnist_forward.29} parent=0 // pred_check_branch
    %11 = sbr.rel (0) target = $region9
  $region8: #{resnet10_emnist_forward.29} parent=0 // pred_region
    _
  $region9: #{resnet10_emnist_forward.29} parent=0 // pred_fallthru
    _
  // Predicated region
  $region10: #{resnet10_emnist_forward.29} parent=0 // pred_check
    _
  $region11: #{resnet10_emnist_forward.29} parent=0 // pred_check_branch
    %13 = sbr.rel (0) target = $region13
  $region12: #{resnet10_emnist_forward.29} parent=0 // pred_region
    _
  $region13: #{resnet10_emnist_forward.29} parent=0 // pred_fallthru
    _
  %v15 = vld [vmem:[%s0] sm:$0xff]
  %v16 = vld [vmem:[%s0 + $0x8] sm:$0xff]
  %v17 = vld [vmem:[%s0 + $0x10] sm:$0xf]
  %v18 = vld [vmem:[%s0 + $0x14] sm:$0xff]
  %v19 = vld [vmem:[%s0 + $0x1c] sm:$0xff]
  %v20 = vld [vmem:[%s0 + $0x24] sm:$0xf]
  %v21 = vld [vmem:[%s0 + $0x28] sm:$0xff]
  %v22 = vld [vmem:[%s0 + $0x30] sm:$0xff]
  %v23 = vld [vmem:[%s0 + $0x38] sm:$0xf]
  %v24 = vld [vmem:[%s0 + $0x3c] sm:$0xff]
  %v25 = vld [vmem:[%s0 + $0x44] sm:$0xff]
  %v26 = vld [vmem:[%s0 + $0x4c] sm:$0xf]
  %v27 = vld [vmem:[%s0 + $0x50] sm:$0xff]
  %v28 = vld [vmem:[%s0 + $0x58] sm:$0xff]
  %v29 = vld [vmem:[%s0 + $0x60] sm:$0xf]
  %v30 = vld [vmem:[%s0 + $0x64] sm:$0xff]
  %v31 = vld [vmem:[%s0 + $0x6c] sm:$0xff]
  %v32 = vld [vmem:[%s0 + $0x74] sm:$0xf]
  %v33 = vld [vmem:[%s0 + $0x78] sm:$0xff]
  %v34 = vld [vmem:[%s0 + $0x80] sm:$0xff]
  %v35 = vld [vmem:[%s0 + $0x88] sm:$0xf]
  %v36 = vld [vmem:[%s0 + $0x8c] sm:$0xff]
  %v37 = vld [vmem:[%s0 + $0x94] sm:$0xff]
  %v38 = vld [vmem:[%s0 + $0x9c] sm:$0xf]
  %v39 = vld [vmem:[%s0 + $0xa0] sm:$0xff]
  %v40 = vld [vmem:[%s0 + $0xa8] sm:$0xff]
  %v41 = vld [vmem:[%s0 + $0xb0] sm:$0xf]
  %v42 = vld [vmem:[%s0 + $0xb4] sm:$0xff]
  %v43 = vld [vmem:[%s0 + $0xbc] sm:$0xff]
  %v44 = vld [vmem:[%s0 + $0xc4] sm:$0xf]
  %v45 = vld [vmem:[%s0 + $0xc8] sm:$0xff]
  %v46 = vld [vmem:[%s0 + $0xd0] sm:$0xff]
  %v47 = vld [vmem:[%s0 + $0xd8] sm:$0xf]
  %v48 = vld [vmem:[%s0 + $0xdc] sm:$0xff]
  %v49 = vld [vmem:[%s0 + $0xe4] sm:$0xff]
  %v50 = vld [vmem:[%s0 + $0xec] sm:$0xf]
  %v51 = vld [vmem:[%s0 + $0xf0] sm:$0x11]
  %v52 = vld [vmem:[%s0 + $0xf8] sm:$0x11]
  %v53 = vld [vmem:[%s0 + $0x100] sm:$0x1]
  %v54 = vld [vmem:[%s1] sm:$0xf]
  %v55 = vld [vmem:[%s1 + $0x4] sm:$0xf]
  %v56 = vld [vmem:[%s1 + $0x8] sm:$0xf]
  %v57 = vld [vmem:[%s1 + $0xc] sm:$0xf]
  %v58 = vld [vmem:[%s1 + $0x10] sm:$0xf]
  %v59 = vld [vmem:[%s1 + $0x14] sm:$0xf]
  %v60 = vld [vmem:[%s1 + $0x18] sm:$0xf]
  %v61 = vld [vmem:[%s1 + $0x1c] sm:$0xf]
  %v62 = vld [vmem:[%s1 + $0x20] sm:$0xf]
  %v63 = vld [vmem:[%s1 + $0x24] sm:$0xf]
  %v64 = vld [vmem:[%s1 + $0x28] sm:$0xf]
  %v65 = vld [vmem:[%s1 + $0x2c] sm:$0xf]
  %v66 = vld [vmem:[%s1 + $0x30] sm:$0xf]
  %v67 = vld [vmem:[%s1 + $0x34] sm:$0xf]
  %v68 = vld [vmem:[%s1 + $0x38] sm:$0xf]
  %v69 = vld [vmem:[%s1 + $0x3c] sm:$0xf]
  %v70 = vld [vmem:[%s1 + $0x40] sm:$0xf]
  %v71 = vld [vmem:[%s1 + $0x44] sm:$0xf]
  %v72 = vld [vmem:[%s1 + $0x48] sm:$0xf]
  %v73 = vld [vmem:[%s1 + $0x4c] sm:$0xf]
  %v74 = vld [vmem:[%s1 + $0x50] sm:$0xf]
  %v75 = vld [vmem:[%s1 + $0x54] sm:$0xf]
  %v76 = vld [vmem:[%s1 + $0x58] sm:$0xf]
  %v77 = vld [vmem:[%s1 + $0x5c] sm:$0xf]
  %v78 = vld [vmem:[%s1 + $0x60] sm:$0xf]
  %v79 = vld [vmem:[%s1 + $0x64] sm:$0xf]
  %v80 = vld [vmem:[%s1 + $0x68] sm:$0xf]
  %v81 = vld [vmem:[%s1 + $0x6c] sm:$0xf]
  %v82 = vld [vmem:[%s1 + $0x70] sm:$0xf]
  %v83 = vld [vmem:[%s1 + $0x74] sm:$0xf]
  %v84 = vld [vmem:[%s1 + $0x78] sm:$0xf]
  %v85 = vld [vmem:[%s1 + $0x7c] sm:$0xf]
  %v86 = vld [vmem:[%s1 + $0x80] sm:$0xf]
  %v87 = vld [vmem:[%s1 + $0x84] sm:$0xf]
  %v88 = vld [vmem:[%s1 + $0x88] sm:$0xf]
  %v89 = vld [vmem:[%s1 + $0x8c] sm:$0xf]
  %v90 = vld [vmem:[%s1 + $0x90] sm:$0xf]
  %v91 = vld [vmem:[%s1 + $0x94] sm:$0xf]
  %v92 = vld [vmem:[%s1 + $0x98] sm:$0xf]
  %v93 = vld [vmem:[%s1 + $0x9c] sm:$0xf]
  %v94 = vld [vmem:[%s1 + $0xa0] sm:$0xf]
  %v95 = vld [vmem:[%s1 + $0xa4] sm:$0xf]
  %v96 = vld [vmem:[%s1 + $0xa8] sm:$0xf]
  %v97 = vld [vmem:[%s1 + $0xac] sm:$0xf]
  %v98 = vld [vmem:[%s1 + $0xb0] sm:$0xf]
  %v99 = vld [vmem:[%s1 + $0xb4] sm:$0xf]
  %v100 = vld [vmem:[%s1 + $0xb8] sm:$0xf]
  %v101 = vld [vmem:[%s1 + $0xbc] sm:$0xf]
  %v102 = vld [vmem:[%s1 + $0xc0] sm:$0xf]
  %v103 = vld [vmem:[%s1 + $0xc4] sm:$0xf]
  %v104 = vld [vmem:[%s1 + $0xc8] sm:$0xf]
  %v105 = vld [vmem:[%s1 + $0xcc] sm:$0xf]
  %v106 = vld [vmem:[%s1 + $0xd0] sm:$0xf]
  %v107 = vld [vmem:[%s1 + $0xd4] sm:$0xf]
  %v108 = vld [vmem:[%s1 + $0xd8] sm:$0xf]
  %v109 = vld [vmem:[%s1 + $0xdc] sm:$0xf]
  %v110 = vld [vmem:[%s1 + $0xe0] sm:$0xf]
  %v111 = vld [vmem:[%s1 + $0xe4] sm:$0xf]
  %v112 = vld [vmem:[%s1 + $0xe8] sm:$0xf]
  %v113 = vld [vmem:[%s1 + $0xec] sm:$0xf]
  %v114 = vld [vmem:[%s1 + $0xf0] sm:$0xf]
  %v115 = vld [vmem:[%s1 + $0xf4] sm:$0xf]
  %v116 = vld [vmem:[%s1 + $0xf8] sm:$0xf]
  %v117 = vld [vmem:[%s1 + $0xfc] sm:$0xf]
  %v118 = vld [vmem:[%s1 + $0x100] sm:$0xf]
  %v119 = vld [vmem:[%s1 + $0x104] sm:$0xf]
  %v120 = vld [vmem:[%s1 + $0x108] sm:$0xf]
  %v121 = vld [vmem:[%s1 + $0x10c] sm:$0xf]
  %v122 = vld [vmem:[%s1 + $0x110] sm:$0xf]
  %v123 = vld [vmem:[%s1 + $0x114] sm:$0xf]
  %v124 = vld [vmem:[%s1 + $0x118] sm:$0xf]
  %v125 = vld [vmem:[%s1 + $0x11c] sm:$0xf]
  %v126 = vld [vmem:[%s2] sm:$0x1]
  %v128 = vperm.slane %v126, 0
  %v169 = vunpack.c.l.b16 %v15
  %v170 = vunpack.c.h.b16 %v15
  %v171 = vunpack.c.l.b16 %v16
  %v172 = vunpack.c.h.b16 %v16
  %v173 = vunpack.c.l.b16 %v17
  %v174 = vunpack.c.l.b16 %v18
  %v175 = vunpack.c.h.b16 %v18
  %v176 = vunpack.c.l.b16 %v19
  %v177 = vunpack.c.h.b16 %v19
  %v178 = vunpack.c.l.b16 %v20
  %v179 = vunpack.c.l.b16 %v21
  %v180 = vunpack.c.h.b16 %v21
  %v181 = vunpack.c.l.b16 %v22
  %v182 = vunpack.c.h.b16 %v22
  %v183 = vunpack.c.l.b16 %v23
  %v184 = vunpack.c.l.b16 %v24
  %v185 = vunpack.c.h.b16 %v24
  %v186 = vunpack.c.l.b16 %v25
  %v187 = vunpack.c.h.b16 %v25
  %v188 = vunpack.c.l.b16 %v26
  %v189 = vunpack.c.l.b16 %v27
  %v190 = vunpack.c.h.b16 %v27
  %v191 = vunpack.c.l.b16 %v28
  %v192 = vunpack.c.h.b16 %v28
  %v193 = vunpack.c.l.b16 %v29
  %v194 = vunpack.c.l.b16 %v30
  %v195 = vunpack.c.h.b16 %v30
  %v196 = vunpack.c.l.b16 %v31
  %v197 = vunpack.c.h.b16 %v31
  %v198 = vunpack.c.l.b16 %v32
  %v199 = vunpack.c.l.b16 %v33
  %v200 = vunpack.c.h.b16 %v33
  %v201 = vunpack.c.l.b16 %v34
  %v202 = vunpack.c.h.b16 %v34
  %v203 = vunpack.c.l.b16 %v35
  %v204 = vunpack.c.l.b16 %v36
  %v205 = vunpack.c.h.b16 %v36
  %v206 = vunpack.c.l.b16 %v37
  %v207 = vunpack.c.h.b16 %v37
  %v208 = vunpack.c.l.b16 %v38
  %v209 = vunpack.c.l.b16 %v39
  %v210 = vunpack.c.h.b16 %v39
  %v211 = vunpack.c.l.b16 %v40
  %v212 = vunpack.c.h.b16 %v40
  %v213 = vunpack.c.l.b16 %v41
  %v214 = vunpack.c.l.b16 %v42
  %v215 = vunpack.c.h.b16 %v42
  %v216 = vunpack.c.l.b16 %v43
  %v217 = vunpack.c.h.b16 %v43
  %v218 = vunpack.c.l.b16 %v44
  %v219 = vunpack.c.l.b16 %v45
  %v220 = vunpack.c.h.b16 %v45
  %v221 = vunpack.c.l.b16 %v46
  %v222 = vunpack.c.h.b16 %v46
  %v223 = vunpack.c.l.b16 %v47
  %v224 = vunpack.c.l.b16 %v48
  %v225 = vunpack.c.h.b16 %v48
  %v226 = vunpack.c.l.b16 %v49
  %v227 = vunpack.c.h.b16 %v49
  %v228 = vunpack.c.l.b16 %v50
  %v229 = vunpack.c.l.b16 %v51
  %v230 = vunpack.c.h.b16 %v51
  %v231 = vunpack.c.l.b16 %v52
  %v232 = vunpack.c.h.b16 %v52
  %v233 = vunpack.c.l.b16 %v53
  %v234 = vpack.c.b16 %v174, %v169
  %v235 = vpack.c.b16 %v175, %v170
  %v236 = vpack.c.b16 %v176, %v171
  %v237 = vpack.c.b16 %v177, %v172
  %v238 = vpack.c.b16 %v178, %v173
  %v239 = vpack.c.b16 %v184, %v179
  %v240 = vpack.c.b16 %v185, %v180
  %v241 = vpack.c.b16 %v186, %v181
  %v242 = vpack.c.b16 %v187, %v182
  %v243 = vpack.c.b16 %v188, %v183
  %v244 = vpack.c.b16 %v194, %v189
  %v245 = vpack.c.b16 %v195, %v190
  %v246 = vpack.c.b16 %v196, %v191
  %v247 = vpack.c.b16 %v197, %v192
  %v248 = vpack.c.b16 %v198, %v193
  %v249 = vpack.c.b16 %v204, %v199
  %v250 = vpack.c.b16 %v205, %v200
  %v251 = vpack.c.b16 %v206, %v201
  %v252 = vpack.c.b16 %v207, %v202
  %v253 = vpack.c.b16 %v208, %v203
  %v254 = vpack.c.b16 %v214, %v209
  %v255 = vpack.c.b16 %v215, %v210
  %v256 = vpack.c.b16 %v216, %v211
  %v257 = vpack.c.b16 %v217, %v212
  %v258 = vpack.c.b16 %v218, %v213
  %v259 = vpack.c.b16 %v224, %v219
  %v260 = vpack.c.b16 %v225, %v220
  %v261 = vpack.c.b16 %v226, %v221
  %v262 = vpack.c.b16 %v227, %v222
  %v263 = vpack.c.b16 %v228, %v223
  %v264 = vpack.c.b16 %v229, %v229
  %v265 = vpack.c.b16 %v230, %v230
  %v266 = vpack.c.b16 %v231, %v231
  %v267 = vpack.c.b16 %v232, %v232
  %v268 = vpack.c.b16 %v233, %v233
  %v369 = vunpack.c.l.b16 %v54
  %v370 = vunpack.c.l.b16 %v55
  %v371 = vunpack.c.l.b16 %v56
  %v372 = vunpack.c.l.b16 %v57
  %v373 = vunpack.c.l.b16 %v58
  %v374 = vunpack.c.l.b16 %v59
  %v375 = vunpack.c.l.b16 %v60
  %v376 = vunpack.c.l.b16 %v61
  %v377 = vunpack.c.l.b16 %v62
  %v378 = vunpack.c.l.b16 %v63
  %v379 = vunpack.c.l.b16 %v64
  %v380 = vunpack.c.l.b16 %v65
  %v381 = vunpack.c.l.b16 %v66
  %v382 = vunpack.c.l.b16 %v67
  %v383 = vunpack.c.l.b16 %v68
  %v384 = vunpack.c.l.b16 %v69
  %v385 = vunpack.c.l.b16 %v70
  %v386 = vunpack.c.l.b16 %v71
  %v387 = vunpack.c.l.b16 %v72
  %v388 = vunpack.c.l.b16 %v73
  %v389 = vunpack.c.l.b16 %v74
  %v390 = vunpack.c.l.b16 %v75
  %v391 = vunpack.c.l.b16 %v76
  %v392 = vunpack.c.l.b16 %v77
  %v393 = vunpack.c.l.b16 %v78
  %v394 = vunpack.c.l.b16 %v79
  %v395 = vunpack.c.l.b16 %v80
  %v396 = vunpack.c.l.b16 %v81
  %v397 = vunpack.c.l.b16 %v82
  %v398 = vunpack.c.l.b16 %v83
  %v399 = vunpack.c.l.b16 %v84
  %v400 = vunpack.c.l.b16 %v85
  %v401 = vunpack.c.l.b16 %v86
  %v402 = vunpack.c.l.b16 %v87
  %v403 = vunpack.c.l.b16 %v88
  %v404 = vunpack.c.l.b16 %v89
  %v405 = vunpack.c.l.b16 %v90
  %v406 = vunpack.c.l.b16 %v91
  %v407 = vunpack.c.l.b16 %v92
  %v408 = vunpack.c.l.b16 %v93
  %v409 = vunpack.c.l.b16 %v94
  %v410 = vunpack.c.l.b16 %v95
  %v411 = vunpack.c.l.b16 %v96
  %v412 = vunpack.c.l.b16 %v97
  %v413 = vunpack.c.l.b16 %v98
  %v414 = vunpack.c.l.b16 %v99
  %v415 = vunpack.c.l.b16 %v100
  %v416 = vunpack.c.l.b16 %v101
  %v417 = vunpack.c.l.b16 %v102
  %v418 = vunpack.c.l.b16 %v103
  %v419 = vunpack.c.l.b16 %v104
  %v420 = vunpack.c.l.b16 %v105
  %v421 = vunpack.c.l.b16 %v106
  %v422 = vunpack.c.l.b16 %v107
  %v423 = vunpack.c.l.b16 %v108
  %v424 = vunpack.c.l.b16 %v109
  %v425 = vunpack.c.l.b16 %v110
  %v426 = vunpack.c.l.b16 %v111
  %v427 = vunpack.c.l.b16 %v112
  %v428 = vunpack.c.l.b16 %v113
  %v429 = vunpack.c.l.b16 %v114
  %v430 = vunpack.c.l.b16 %v115
  %v431 = vunpack.c.l.b16 %v116
  %v432 = vunpack.c.l.b16 %v117
  %v433 = vunpack.c.l.b16 %v118
  %v434 = vunpack.c.l.b16 %v119
  %v435 = vunpack.c.l.b16 %v120
  %v436 = vunpack.c.l.b16 %v121
  %v437 = vunpack.c.l.b16 %v122
  %v438 = vunpack.c.l.b16 %v123
  %v439 = vunpack.c.l.b16 %v124
  %v440 = vunpack.c.l.b16 %v125
  %v441 = vpack.c.b16 %v370, %v369
  %v442 = vpack.c.b16 %v372, %v371
  %v443 = vpack.c.b16 %v374, %v373
  %v444 = vpack.c.b16 %v376, %v375
  %v445 = vpack.c.b16 %v378, %v377
  %v446 = vpack.c.b16 %v380, %v379
  %v447 = vpack.c.b16 %v382, %v381
  %v448 = vpack.c.b16 %v384, %v383
  %v449 = vpack.c.b16 %v386, %v385
  %v450 = vpack.c.b16 %v388, %v387
  %v451 = vpack.c.b16 %v390, %v389
  %v452 = vpack.c.b16 %v392, %v391
  %v453 = vpack.c.b16 %v394, %v393
  %v454 = vpack.c.b16 %v396, %v395
  %v455 = vpack.c.b16 %v398, %v397
  %v456 = vpack.c.b16 %v400, %v399
  %v457 = vpack.c.b16 %v402, %v401
  %v458 = vpack.c.b16 %v404, %v403
  %v459 = vpack.c.b16 %v406, %v405
  %v460 = vpack.c.b16 %v408, %v407
  %v461 = vpack.c.b16 %v410, %v409
  %v462 = vpack.c.b16 %v412, %v411
  %v463 = vpack.c.b16 %v414, %v413
  %v464 = vpack.c.b16 %v416, %v415
  %v465 = vpack.c.b16 %v418, %v417
  %v466 = vpack.c.b16 %v420, %v419
  %v467 = vpack.c.b16 %v422, %v421
  %v468 = vpack.c.b16 %v424, %v423
  %v469 = vpack.c.b16 %v426, %v425
  %v470 = vpack.c.b16 %v428, %v427
  %v471 = vpack.c.b16 %v430, %v429
  %v472 = vpack.c.b16 %v432, %v431
  %v473 = vpack.c.b16 %v434, %v433
  %v474 = vpack.c.b16 %v436, %v435
  %v475 = vpack.c.b16 %v438, %v437
  %v476 = vpack.c.b16 %v440, %v439
  %vm513 = vcmask 523264
  %v515 = vsel %vm513, %v238, 0
  %v518 = vsel %vm513, %v243, 0
  %v521 = vsel %vm513, %v248, 0
  %v524 = vsel %vm513, %v253, 0
  %v527 = vsel %vm513, %v258, 0
  %v530 = vsel %vm513, %v263, 0
  %v533 = vsel %vm513, %v268, 0
  %535 = vmatpush.bf16.msra.mxu0 %v448
  %536 = vmatpush.bf16.msra.mxu0 %v447
  %537 = vmatpush.bf16.msra.mxu0 %v446
  %538 = vmatpush.bf16.msra.mxu0 %v445
  %539 = vmatpush.bf16.msra.mxu0 %v444
  %540 = vmatpush.bf16.msra.mxu0 %v443
  %541 = vmatpush.bf16.msra.mxu0 %v442
  %542 = vmatpush.bf16.msra.mxu0 %v441
  %543 = vmatmul.bf16.gmra.mxu0 %v234
  %v544 = vpop.f32.mrf.mxu0
  %v545 = vadd.f32 %v128, %v544
  %v546 = vpop.f32.mrf.mxu0
  %v547 = vadd.f32 %v128, %v546
  %548 = vmatmul.bf16.gmra.mxu0 %v239
  %v549 = vpop.f32.mrf.mxu0
  %v550 = vadd.f32 %v128, %v549
  %v551 = vpop.f32.mrf.mxu0
  %v552 = vadd.f32 %v128, %v551
  %553 = vmatmul.bf16.gmra.mxu0 %v244
  %v554 = vpop.f32.mrf.mxu0
  %v555 = vadd.f32 %v128, %v554
  %v556 = vpop.f32.mrf.mxu0
  %v557 = vadd.f32 %v128, %v556
  %558 = vmatmul.bf16.gmra.mxu0 %v249
  %v559 = vpop.f32.mrf.mxu0
  %v560 = vadd.f32 %v128, %v559
  %v561 = vpop.f32.mrf.mxu0
  %v562 = vadd.f32 %v128, %v561
  %563 = vmatmul.bf16.gmra.mxu0 %v254
  %v564 = vpop.f32.mrf.mxu0
  %v565 = vadd.f32 %v128, %v564
  %v566 = vpop.f32.mrf.mxu0
  %v567 = vadd.f32 %v128, %v566
  %568 = vmatmul.bf16.gmra.mxu0 %v259
  %v569 = vpop.f32.mrf.mxu0
  %v570 = vadd.f32 %v128, %v569
  %v571 = vpop.f32.mrf.mxu0
  %v572 = vadd.f32 %v128, %v571
  %573 = vmatmul.bf16.gmra.mxu0 %v264
  %v574 = vpop.f32.mrf.mxu0
  %v575 = vadd.f32 %v128, %v574
  %v576 = vpop.f32.mrf.mxu0
  %577 = vdwg.mxu0
  %578 = vmatpush.bf16.msra.mxu0 %v456
  %579 = vmatpush.bf16.msra.mxu0 %v455
  %580 = vmatpush.bf16.msra.mxu0 %v454
  %581 = vmatpush.bf16.msra.mxu0 %v453
  %582 = vmatpush.bf16.msra.mxu0 %v452
  %583 = vmatpush.bf16.msra.mxu0 %v451
  %584 = vmatpush.bf16.msra.mxu0 %v450
  %585 = vmatpush.bf16.msra.mxu0 %v449
  %586 = vmatmul.bf16.gmra.mxu0 %v235
  %v587 = vpop.f32.mrf.mxu0
  %v588 = vadd.f32 %v545, %v587
  %v589 = vpop.f32.mrf.mxu0
  %v590 = vadd.f32 %v547, %v589
  %591 = vmatmul.bf16.gmra.mxu0 %v240
  %v592 = vpop.f32.mrf.mxu0
  %v593 = vadd.f32 %v550, %v592
  %v594 = vpop.f32.mrf.mxu0
  %v595 = vadd.f32 %v552, %v594
  %596 = vmatmul.bf16.gmra.mxu0 %v245
  %v597 = vpop.f32.mrf.mxu0
  %v598 = vadd.f32 %v555, %v597
  %v599 = vpop.f32.mrf.mxu0
  %v600 = vadd.f32 %v557, %v599
  %601 = vmatmul.bf16.gmra.mxu0 %v250
  %v602 = vpop.f32.mrf.mxu0
  %v603 = vadd.f32 %v560, %v602
  %v604 = vpop.f32.mrf.mxu0
  %v605 = vadd.f32 %v562, %v604
  %606 = vmatmul.bf16.gmra.mxu0 %v255
  %v607 = vpop.f32.mrf.mxu0
  %v608 = vadd.f32 %v565, %v607
  %v609 = vpop.f32.mrf.mxu0
  %v610 = vadd.f32 %v567, %v609
  %611 = vmatmul.bf16.gmra.mxu0 %v260
  %v612 = vpop.f32.mrf.mxu0
  %v613 = vadd.f32 %v570, %v612
  %v614 = vpop.f32.mrf.mxu0
  %v615 = vadd.f32 %v572, %v614
  %616 = vmatmul.bf16.gmra.mxu0 %v265
  %v617 = vpop.f32.mrf.mxu0
  %v618 = vadd.f32 %v575, %v617
  %v619 = vpop.f32.mrf.mxu0
  %620 = vdwg.mxu0
  %621 = vmatpush.bf16.msra.mxu0 %v464
  %622 = vmatpush.bf16.msra.mxu0 %v463
  %623 = vmatpush.bf16.msra.mxu0 %v462
  %624 = vmatpush.bf16.msra.mxu0 %v461
  %625 = vmatpush.bf16.msra.mxu0 %v460
  %626 = vmatpush.bf16.msra.mxu0 %v459
  %627 = vmatpush.bf16.msra.mxu0 %v458
  %628 = vmatpush.bf16.msra.mxu0 %v457
  %629 = vmatmul.bf16.gmra.mxu0 %v236
  %v630 = vpop.f32.mrf.mxu0
  %v631 = vadd.f32 %v588, %v630
  %v632 = vpop.f32.mrf.mxu0
  %v633 = vadd.f32 %v590, %v632
  %634 = vmatmul.bf16.gmra.mxu0 %v241
  %v635 = vpop.f32.mrf.mxu0
  %v636 = vadd.f32 %v593, %v635
  %v637 = vpop.f32.mrf.mxu0
  %v638 = vadd.f32 %v595, %v637
  %639 = vmatmul.bf16.gmra.mxu0 %v246
  %v640 = vpop.f32.mrf.mxu0
  %v641 = vadd.f32 %v598, %v640
  %v642 = vpop.f32.mrf.mxu0
  %v643 = vadd.f32 %v600, %v642
  %644 = vmatmul.bf16.gmra.mxu0 %v251
  %v645 = vpop.f32.mrf.mxu0
  %v646 = vadd.f32 %v603, %v645
  %v647 = vpop.f32.mrf.mxu0
  %v648 = vadd.f32 %v605, %v647
  %649 = vmatmul.bf16.gmra.mxu0 %v256
  %v650 = vpop.f32.mrf.mxu0
  %v651 = vadd.f32 %v608, %v650
  %v652 = vpop.f32.mrf.mxu0
  %v653 = vadd.f32 %v610, %v652
  %654 = vmatmul.bf16.gmra.mxu0 %v261
  %v655 = vpop.f32.mrf.mxu0
  %v656 = vadd.f32 %v613, %v655
  %v657 = vpop.f32.mrf.mxu0
  %v658 = vadd.f32 %v615, %v657
  %659 = vmatmul.bf16.gmra.mxu0 %v266
  %v660 = vpop.f32.mrf.mxu0
  %v661 = vadd.f32 %v618, %v660
  %v662 = vpop.f32.mrf.mxu0
  %663 = vdwg.mxu0
  %664 = vmatpush.bf16.msra.mxu0 %v472
  %665 = vmatpush.bf16.msra.mxu0 %v471
  %666 = vmatpush.bf16.msra.mxu0 %v470
  %667 = vmatpush.bf16.msra.mxu0 %v469
  %668 = vmatpush.bf16.msra.mxu0 %v468
  %669 = vmatpush.bf16.msra.mxu0 %v467
  %670 = vmatpush.bf16.msra.mxu0 %v466
  %671 = vmatpush.bf16.msra.mxu0 %v465
  %672 = vmatmul.bf16.gmra.mxu0 %v237
  %v673 = vpop.f32.mrf.mxu0
  %v674 = vadd.f32 %v631, %v673
  %v675 = vpop.f32.mrf.mxu0
  %v676 = vadd.f32 %v633, %v675
  %677 = vmatmul.bf16.gmra.mxu0 %v242
  %v678 = vpop.f32.mrf.mxu0
  %v679 = vadd.f32 %v636, %v678
  %v680 = vpop.f32.mrf.mxu0
  %v681 = vadd.f32 %v638, %v680
  %682 = vmatmul.bf16.gmra.mxu0 %v247
  %v683 = vpop.f32.mrf.mxu0
  %v684 = vadd.f32 %v641, %v683
  %v685 = vpop.f32.mrf.mxu0
  %v686 = vadd.f32 %v643, %v685
  %687 = vmatmul.bf16.gmra.mxu0 %v252
  %v688 = vpop.f32.mrf.mxu0
  %v689 = vadd.f32 %v646, %v688
  %v690 = vpop.f32.mrf.mxu0
  %v691 = vadd.f32 %v648, %v690
  %692 = vmatmul.bf16.gmra.mxu0 %v257
  %v693 = vpop.f32.mrf.mxu0
  %v694 = vadd.f32 %v651, %v693
  %v695 = vpop.f32.mrf.mxu0
  %v696 = vadd.f32 %v653, %v695
  %697 = vmatmul.bf16.gmra.mxu0 %v262
  %v698 = vpop.f32.mrf.mxu0
  %v699 = vadd.f32 %v656, %v698
  %v700 = vpop.f32.mrf.mxu0
  %v701 = vadd.f32 %v658, %v700
  %702 = vmatmul.bf16.gmra.mxu0 %v267
  %v703 = vpop.f32.mrf.mxu0
  %v704 = vadd.f32 %v661, %v703
  %v705 = vpop.f32.mrf.mxu0
  %706 = vdwg.mxu0
  %707 = vmatpush.bf16.msra.mxu0 0
  %708 = vmatpush.bf16.msra.mxu0 0
  %709 = vmatpush.bf16.msra.mxu0 0
  %710 = vmatpush.bf16.msra.mxu0 0
  %711 = vmatpush.bf16.msra.mxu0 %v476
  %712 = vmatpush.bf16.msra.mxu0 %v475
  %713 = vmatpush.bf16.msra.mxu0 %v474
  %714 = vmatpush.bf16.msra.mxu0 %v473
  %715 = vmatmul.bf16.gmra.mxu0 %v515
  %v716 = vpop.f32.mrf.mxu0
  %v717 = vadd.f32 %v674, %v716
  %v718 = vpop.f32.mrf.mxu0
  %v719 = vadd.f32 %v676, %v718
  %720 = vmatmul.bf16.gmra.mxu0 %v518
  %v721 = vpop.f32.mrf.mxu0
  %v722 = vadd.f32 %v679, %v721
  %v723 = vpop.f32.mrf.mxu0
  %v724 = vadd.f32 %v681, %v723
  %725 = vmatmul.bf16.gmra.mxu0 %v521
  %v726 = vpop.f32.mrf.mxu0
  %v727 = vadd.f32 %v684, %v726
  %v728 = vpop.f32.mrf.mxu0
  %v729 = vadd.f32 %v686, %v728
  %730 = vmatmul.bf16.gmra.mxu0 %v524
  %v731 = vpop.f32.mrf.mxu0
  %v732 = vadd.f32 %v689, %v731
  %v733 = vpop.f32.mrf.mxu0
  %v734 = vadd.f32 %v691, %v733
  %735 = vmatmul.bf16.gmra.mxu0 %v527
  %v736 = vpop.f32.mrf.mxu0
  %v737 = vadd.f32 %v694, %v736
  %v738 = vpop.f32.mrf.mxu0
  %v739 = vadd.f32 %v696, %v738
  %740 = vmatmul.bf16.gmra.mxu0 %v530
  %v741 = vpop.f32.mrf.mxu0
  %v742 = vadd.f32 %v699, %v741
  %v743 = vpop.f32.mrf.mxu0
  %v744 = vadd.f32 %v701, %v743
  %745 = vmatmul.bf16.gmra.mxu0 %v533
  %v746 = vpop.f32.mrf.mxu0
  %v747 = vadd.f32 %v704, %v746
  %v748 = vpop.f32.mrf.mxu0
  %749 = vdwg.mxu0
  %v750 = vmax.f32 %v717, 0.0
  %v751 = vmax.f32 %v719, 0.0
  %v752 = vmax.f32 %v722, 0.0
  %v753 = vmax.f32 %v724, 0.0
  %v754 = vmax.f32 %v727, 0.0
  %v755 = vmax.f32 %v729, 0.0
  %v756 = vmax.f32 %v732, 0.0
  %v757 = vmax.f32 %v734, 0.0
  %v758 = vmax.f32 %v737, 0.0
  %v759 = vmax.f32 %v739, 0.0
  %v760 = vmax.f32 %v742, 0.0
  %v761 = vmax.f32 %v744, 0.0
  %v762 = vmax.f32 %v747, 0.0
  %v763 = vpack.c.bf16 %v750, %v750
  %v764 = vpack.c.bf16 %v751, %v751
  %v765 = vpack.c.bf16 %v752, %v752
  %v766 = vpack.c.bf16 %v753, %v753
  %v767 = vpack.c.bf16 %v754, %v754
  %v768 = vpack.c.bf16 %v755, %v755
  %v769 = vpack.c.bf16 %v756, %v756
  %v770 = vpack.c.bf16 %v757, %v757
  %v771 = vpack.c.bf16 %v758, %v758
  %v772 = vpack.c.bf16 %v759, %v759
  %v773 = vpack.c.bf16 %v760, %v760
  %v774 = vpack.c.bf16 %v761, %v761
  %v775 = vpack.c.bf16 %v762, %v762
  %vm776 = vcmask 519168
  %777 = vst.msk [vmem:[%s3] sm:$0xf] %vm776, %v763
  %778 = vst.msk [vmem:[%s3 + $0x4] sm:$0xf] %vm776, %v764
  %779 = vst.msk [vmem:[%s3 + $0x8] sm:$0xf] %vm776, %v765
  %780 = vst.msk [vmem:[%s3 + $0xc] sm:$0xf] %vm776, %v766
  %781 = vst.msk [vmem:[%s3 + $0x10] sm:$0xf] %vm776, %v767
  %782 = vst.msk [vmem:[%s3 + $0x14] sm:$0xf] %vm776, %v768
  %783 = vst.msk [vmem:[%s3 + $0x18] sm:$0xf] %vm776, %v769
  %784 = vst.msk [vmem:[%s3 + $0x1c] sm:$0xf] %vm776, %v770
  %785 = vst.msk [vmem:[%s3 + $0x20] sm:$0xf] %vm776, %v771
  %786 = vst.msk [vmem:[%s3 + $0x24] sm:$0xf] %vm776, %v772
  %787 = vst.msk [vmem:[%s3 + $0x28] sm:$0xf] %vm776, %v773
  %788 = vst.msk [vmem:[%s3 + $0x2c] sm:$0xf] %vm776, %v774
  %vm789 = vcmask 516096
  %790 = vst.msk [vmem:[%s3 + $0x30] sm:$0x1] %vm789, %v775
  // Predicated region
  $region14: #{resnet10_emnist_forward.29} parent=0 // pred_check
    _
  $region15: #{resnet10_emnist_forward.29} parent=0 // pred_check_branch
    %792 = sbr.rel (0) target = $region17
  $region16: #{resnet10_emnist_forward.29} parent=0 // pred_region
    _
  $region17: #{resnet10_emnist_forward.29} parent=0 // pred_fallthru
    _
  // Predicated region
  $region18: #{resnet10_emnist_forward.29} parent=0 // pred_check
    _
  $region19: #{resnet10_emnist_forward.29} parent=0 // pred_check_branch
    %794 = sbr.rel (0) target = $region21
  $region20: #{resnet10_emnist_forward.29} parent=0 // pred_region
    _
  $region21: #{resnet10_emnist_forward.29} parent=0 // pred_fallthru
    _

// kernel: resnet10_emnist_forward.31
$region0: #{resnet10_emnist_forward.31}
  #allocation0 [shape = 'u32[]', space=smem, size = 0x4, offset = 0x4, fixed_abs, tag = 'smem constant byte address 0x4 - core index']
  #allocation1 [shape = 'u32[72,128]{1,0:T(1,128)}', space=vmem, size = 0x9000, scoped, tag = 'internal scratch']
  %s0 = inlined_call_operand.vmem [shape: bf16[2,64], index: 0, kind: input, shape index: {}]
  %s1 = inlined_call_operand.vmem [shape: bf16[64,47], index: 1, kind: input, shape index: {}]
  %s2 = inlined_call_operand.vmem [shape: f32[1,47], index: 2, kind: input, shape index: {}]
  %s3 = inlined_call_operand.hbm [shape: f32[2,47], index: 3, kind: output, shape index: {}]
  %s4 = sld [smem:[#allocation0]]
  $region22: #{resnet10_emnist_forward.31} parent=0
    _
  %s6 = ssub.s32 1, %s4
  %s7 = scalar_select 0, %s6, %s4
  $region1: #{resnet10_emnist_forward.31} parent=0
    #allocation2 [shape = 'u8[1024]{0}', space=vmem, size = 0x400, scoped, tag = 'output window, operand 0, single buffered']
    #allocation3 [shape = 's32[1]{0}', space=sflag, size = 0x4, scoped, tag = 'scoped memory for resnet10_emnist_forward.31']
    %8 = vsyncpa [#allocation3], 0
    // Predicated region
    $region2: #{resnet10_emnist_forward.31} parent=1 // pred_check
      _
    $region3: #{resnet10_emnist_forward.31} parent=1 // pred_check_branch
      %10 = sbr.rel (0) target = $region5
    $region4: #{resnet10_emnist_forward.31} parent=1 // pred_region
      _
    $region5: #{resnet10_emnist_forward.31} parent=1 // pred_fallthru
      _
    // Predicated region
    $region6: #{resnet10_emnist_forward.31} parent=1 // pred_check
      _
    $region7: #{resnet10_emnist_forward.31} parent=1 // pred_check_branch
      %12 = sbr.rel (0) target = $region9
    $region8: #{resnet10_emnist_forward.31} parent=1 // pred_region
      _
    $region9: #{resnet10_emnist_forward.31} parent=1 // pred_fallthru
      _
    // Predicated region
    $region10: #{resnet10_emnist_forward.31} parent=1 // pred_check
      _
    $region11: #{resnet10_emnist_forward.31} parent=1 // pred_check_branch
      %14 = sbr.rel (0) target = $region13
    $region12: #{resnet10_emnist_forward.31} parent=1 // pred_region
      _
    $region13: #{resnet10_emnist_forward.31} parent=1 // pred_fallthru
      _
    %v16 = vld [vmem:[%s0] sm:$0x1]
    %v17 = vld [vmem:[%s1] sm:$0xf]
    %v18 = vld [vmem:[%s1 + $0x4] sm:$0xf]
    %v19 = vld [vmem:[%s1 + $0x8] sm:$0xf]
    %v20 = vld [vmem:[%s1 + $0xc] sm:$0xf]
    %v21 = vld [vmem:[%s1 + $0x10] sm:$0xf]
    %v22 = vld [vmem:[%s1 + $0x14] sm:$0xf]
    %v23 = vld [vmem:[%s1 + $0x18] sm:$0xf]
    %v24 = vld [vmem:[%s1 + $0x1c] sm:$0xf]
    %v25 = vld [vmem:[%s2] sm:$0x1]
    %v27 = vperm.slane %v25, 0
    %v37 = vunpack.c.l.b16 %v17
    %v38 = vunpack.c.l.b16 %v18
    %v39 = vunpack.c.l.b16 %v19
    %v40 = vunpack.c.l.b16 %v20
    %v41 = vunpack.c.l.b16 %v21
    %v42 = vunpack.c.l.b16 %v22
    %v43 = vunpack.c.l.b16 %v23
    %v44 = vunpack.c.l.b16 %v24
    %v45 = vpack.c.b16 %v38, %v37
    %v46 = vpack.c.b16 %v40, %v39
    %v47 = vpack.c.b16 %v42, %v41
    %v48 = vpack.c.b16 %v44, %v43
    %vm53 = vcmask 523264
    %v55 = vsel %vm53, %v16, 0
    %57 = vmatpush.bf16.msra.mxu0 0
    %58 = vmatpush.bf16.msra.mxu0 0
    %59 = vmatpush.bf16.msra.mxu0 0
    %60 = vmatpush.bf16.msra.mxu0 0
    %61 = vmatpush.bf16.msra.mxu0 %v48
    %62 = vmatpush.bf16.msra.mxu0 %v47
    %63 = vmatpush.bf16.msra.mxu0 %v46
    %64 = vmatpush.bf16.msra.mxu0 %v45
    %65 = vmatmul.bf16.gmra.mxu0 %v55
    %v66 = vpop.f32.mrf.mxu0
    %v67 = vadd.f32 %v27, %v66
    %v68 = vpop.f32.mrf.mxu0
    %69 = vdwg.mxu0
    %vm70 = vcmask 377856
    %v71 = vsel %vm70, %v67, -inf
    %72 = vmax.xlane.f32.xlu0 %v71
    %v73 = vpop.xlane.xlu0 %72
    %v74 = vsub.f32 %v67, %v73
    %v75 = vmul.f32 %v74, 1.442695
    %v76 = vpow.pop %v75
    %v77 = vsel %vm70, %v76, 0.0
    %78 = vadd.xlane.f32.xlu0 %v77
    %v79 = vpop.xlane.xlu0 %78
    %v80 = vlog2.pop %v79
    %v81 = vmul.f32 %v80, 0.6931472
    %v82 = vadd.f32 %v73, %v81
    %v83 = vsub.f32 %v67, %v82
    %84 = vst.msk [vmem:[#allocation2] sm:$0x3] %vm70, %v83
    // Predicated region
    $region14: #{resnet10_emnist_forward.31} parent=1 // pred_check
      _
    $region15: #{resnet10_emnist_forward.31} parent=1 // pred_check_branch
      %86 = sbr.rel (0) target = $region17
    $region16: #{resnet10_emnist_forward.31} parent=1 // pred_region
      %88 = vsyncadd [#allocation3], 0
      %s90 = sshll.u32 [#allocation2], 4
      %s91 = int_to_ptr.vmem [resolvable:$true] %s90
      %s92 = sshll.u32 %s3, 4
      %s93 = int_to_ptr.hbm [resolvable:$true] %s92
      %95 = dma.vmem_to_hbm [thread:$0]  %s91, 32, %s93, [#allocation3]
    $region17: #{resnet10_emnist_forward.31} parent=1 // pred_fallthru
      _
    // Predicated region
    $region18: #{resnet10_emnist_forward.31} parent=1 // pred_check
      _
    $region19: #{resnet10_emnist_forward.31} parent=1 // pred_check_branch
      %97 = sbr.rel (0) target = $region21
    $region20: #{resnet10_emnist_forward.31} parent=1 // pred_region
      %99 = dma.done [#allocation3], 32
    $region21: #{resnet10_emnist_forward.31} parent=1 // pred_fallthru
      _
    %100 = vsyncpa [#allocation3], 1

</llo_original>
